<compile_context>
chip_gen: v5e
topology: v5e:2x2
jax: 0.10.0
libtpu: 0.0.40
codegen_flags: <defaults>
</compile_context>

<pallas_src>
import jax
import jax.numpy as jnp
from jax import lax
from jax.experimental import pallas as pl
from jax.experimental.pallas import tpu as pltpu

NEG_SLOPE = 0.01    # nn.LeakyReLU default
BN_EPS = 1e-5       # nn.BatchNorm2d default
LANE = 128          # output-channel padding (lane-dense stores, full MXU columns)


def _round_up(x, m):
    return ((x + m - 1) // m) * m


def _vmem_capacity_bytes():
    try:
        info = pltpu.get_tpu_info()
        cap = getattr(info, "vmem_capacity_bytes", None)
        if cap:
            return int(cap)
    except Exception:
        pass
    return 64 * 1024 * 1024


def _vmem_limit(need_bytes):
    # ~80% of physical VMEM (about 51 MiB on v7x, 102 MiB on v5e/v6e); never below the 32 MiB
    # scoped default and never more than ~2x what the kernel actually needs.
    cap = _vmem_capacity_bytes()
    return int(max(32 * 1024 * 1024, min(int(0.8 * cap), 2 * int(need_bytes))))


def _pick_row_tile(ho, wo, target_elems=4096):
    """Even row tile dividing ho, preferring multiples of 8 and >=2 tiles (megacore)."""
    cap = ho // 2 if ho >= 4 else ho
    cands = [t for t in range(2, cap + 1, 2) if ho % t == 0]
    if not cands:
        return ho
    fit = [t for t in cands if t * wo <= target_elems]
    pool = fit if fit else [min(cands)]
    al8 = [t for t in pool if t % 8 == 0]
    return max(al8) if al8 else max(pool)


# --------------------------- kernel 1: upsample(rows) + conv1 + concat ------------------------
def _make_up_conv1_kernel(th, ho, wo, cin, cs, c1, nf_out):
    nhalf = th // 2 + 1

    def kernel(xcp_ref, skip_ref, w1_ref, b1_ref, o_ref):
        # xcp_ref : (H+2, Wo+2, Cin) bf16  column-upsampled low-res frame, replicate-padded rows
        #                                  (bilinear clamp) and zero-padded cols (conv halo);
        #                                  resident across the row-tile grid axis.
        # skip_ref: (th, Wo, Cs)      f32  skip row tile (packed into y1cat's padded lanes).
        # w1_ref  : (9*Cin, C1)       bf16 BN-scale-folded conv1 weights, 9-tap packed (dy,dx,ci).
        # b1_ref  : (1, C1)           f32
        # o_ref   : (th, Wo, C1)      bf16 y1cat = [ conv1(up(x)) | skip | zero pad ]
        j = pl.program_id(1)
        row0 = j * th
        q = pl.multiple_of(j * (th // 2), th // 2)

        # -- in-kernel 2x bilinear ROW upsample (gather free, align_corners=False) --------------
        s0 = xcp_ref[pl.ds(q, nhalf)].astype(jnp.float32)        # low rows clamp(q-1 .. q+th/2-1)
        s1 = xcp_ref[pl.ds(q + 1, nhalf)].astype(jnp.float32)    # low rows clamp(q   .. q+th/2)
        odd_rows = 0.75 * s0 + 0.25 * s1       # upsampled rows row0-1, row0+1, ...
        even_rows = 0.25 * s0 + 0.75 * s1      # upsampled rows row0,   row0+2, ...
        u = jnp.stack([odd_rows, even_rows], axis=1).reshape(th + 2, wo + 2, cin)
        # zero the conv 'same' row halo where it falls outside the upsampled image
        ridx = lax.broadcasted_iota(jnp.int32, (th + 2, 1, 1), 0) + (row0 - 1)
        u = jnp.where((ridx >= 0) & (ridx < ho), u, 0.0).astype(w1_ref.dtype)

        # -- fused 9-tap conv1: one deep-K matmul (K = 9*Cin), no per-tap accumulator chain -----
        lhs = jnp.concatenate(
            [u[dy:dy + th, dx:dx + wo, :] for dy in range(3) for dx in range(3)],
            axis=-1).reshape(th * wo, 9 * cin)
        y = jnp.dot(lhs, w1_ref[...], preferred_element_type=jnp.float32)
        y = y + b1_ref[...]                                   # folded BN bias
        y = jnp.where(y >= 0.0, y, NEG_SLOPE * y).reshape(th, wo, c1)

        # -- fuse the channel concat: drop the skip tile into the (zero) padded output lanes ----
        skip = jnp.pad(skip_ref[...], ((0, 0), (0, 0), (nf_out, c1 - nf_out - cs)))
        o_ref[...] = (y + skip).astype(o_ref.dtype)

    return kernel


def _up_conv1(xcp, skip, w1, b1, *, th, ho, wo, nf_out, out_dtype=jnp.bfloat16):
    n, hp, wp, cin = xcp.shape
    cs = int(skip.shape[-1])
    c1 = int(w1.shape[-1])
    ntiles = ho // th

    need = (2 * hp * wp * cin * 2 + 2 * th * wo * cs * 4
            + int(w1.size) * 2 + c1 * 4 + 2 * th * wo * c1 * 2
            + th * wo * 9 * cin * 2 + (th + 2) * (wo + 2) * cin * 6
            + 3 * th * wo * c1 * 4)

    kernel = _make_up_conv1_kernel(th, ho, wo, cin, cs, c1, nf_out)
    return pl.pallas_call(
        kernel,
        out_shape=jax.ShapeDtypeStruct((n, ho, wo, c1), out_dtype),
        grid=(n, ntiles),
        in_specs=[
            pl.BlockSpec((None, hp, wp, cin), lambda b, j: (b, 0, 0, 0)),   # low-res frame, resident
            pl.BlockSpec((None, th, wo, cs), lambda b, j: (b, j, 0, 0)),    # skip row tile
            pl.BlockSpec((9 * cin, c1), lambda b, j: (0, 0)),
            pl.BlockSpec((1, c1), lambda b, j: (0, 0)),
        ],
        out_specs=pl.BlockSpec((None, th, wo, c1), lambda b, j: (b, j, 0, 0)),
        compiler_params=pltpu.CompilerParams(
            dimension_semantics=("parallel", "parallel"),
            vmem_limit_bytes=_vmem_limit(need)),
    )(xcp, skip, w1, b1)


# --------------------------- kernel 2: conv2 over y1cat (row-tiled, halo rows) -----------------
def _make_conv2_kernel(th, wo, c1, c2):
    def kernel(y_ref, top_ref, bot_ref, w2_ref, b2_ref, o_ref, acc_ref):
        # y_ref  : (th, Wo, C1) bf16   current row tile of y1cat
        # top_ref: (1, Wo, C1)  bf16   y1cat row (row0-1)  (zeros at the top image edge)
        # bot_ref: (1, Wo, C1)  bf16   y1cat row (row0+th) (zeros at the bottom image edge)
        # w2_ref : (3, 3*C1, C2) bf16  per-dy packed (dx, cin) weights, BN scale folded
        # b2_ref : (1, C2)       f32
        # o_ref  : (th, Wo, C2)
        # acc_ref: VMEM scratch (th*Wo, C2) f32
        win = jnp.concatenate([top_ref[...], y_ref[...], bot_ref[...]], axis=0)
        win = jnp.pad(win, ((0, 0), (1, 1), (0, 0)))      # zero col halo -> (th+2, Wo+2, C1)

        acc_ref[...] = jnp.broadcast_to(b2_ref[...], acc_ref.shape)   # bias-initialized accumulator
        for dy in range(3):
            # per-dy im2col row in VMEM: K = 3*C1 (lane-aligned concat of 128-ch pieces)
            lhs = jnp.concatenate(
                [win[dy:dy + th, dx:dx + wo, :] for dx in range(3)],
                axis=-1).reshape(th * wo, 3 * c1)
            acc_ref[...] += jnp.dot(lhs, w2_ref[dy], preferred_element_type=jnp.float32)

        y = acc_ref[...]
        y = jnp.where(y >= 0.0, y, NEG_SLOPE * y)
        o_ref[...] = y.reshape(th, wo, c2).astype(o_ref.dtype)

    return kernel


def _conv2(y1cat, w2, b2, *, th, out_dtype=jnp.float32):
    n, ho, wo, c1 = y1cat.shape
    c2 = int(w2.shape[-1])
    ntiles = ho // th

    # 1-row halo tensors (tiny, ~2/th of y1cat): row (j*th-1) and row ((j+1)*th) per tile.
    yt = y1cat.reshape(n, ntiles, th, wo, c1)
    zrow = jnp.zeros((n, 1, wo, c1), y1cat.dtype)
    top = jnp.concatenate([zrow, yt[:, :-1, th - 1]], axis=1)     # (n, ntiles, wo, c1)
    bot = jnp.concatenate([yt[:, 1:, 0], zrow], axis=1)

    need = (2 * th * wo * c1 * 2 + 4 * wo * c1 * 2 + int(w2.size) * 2 + c2 * 4
            + 2 * th * wo * c2 * jnp.dtype(out_dtype).itemsize
            + (th + 2) * (wo + 2) * c1 * 2 + th * wo * 3 * c1 * 2 + th * wo * c2 * 4)

    kernel = _make_conv2_kernel(th, wo, c1, c2)
    return pl.pallas_call(
        kernel,
        out_shape=jax.ShapeDtypeStruct((n, ho, wo, c2), out_dtype),
        grid=(n, ntiles),
        in_specs=[
            pl.BlockSpec((None, th, wo, c1), lambda b, j: (b, j, 0, 0)),
            pl.BlockSpec((None, 1, wo, c1), lambda b, j: (b, j, 0, 0)),
            pl.BlockSpec((None, 1, wo, c1), lambda b, j: (b, j, 0, 0)),
            pl.BlockSpec((3, 3 * c1, c2), lambda b, j: (0, 0, 0)),
            pl.BlockSpec((1, c2), lambda b, j: (0, 0)),
        ],
        out_specs=pl.BlockSpec((None, th, wo, c2), lambda b, j: (b, j, 0, 0)),
        scratch_shapes=[pltpu.VMEM((th * wo, c2), jnp.float32)],
        compiler_params=pltpu.CompilerParams(
            dimension_semantics=("parallel", "parallel"),
            vmem_limit_bytes=_vmem_limit(need)),
    )(y1cat, top, bot, w2, b2)


# --------------------------------- JAX glue ----------------------------------------------------
def _col_upsample2x(x):
    """2x bilinear (align_corners=False) upsample along W only, gather free (slice/blend)."""
    n, h, w, c = x.shape
    left = jnp.concatenate([x[:, :, :1], x[:, :, :w - 1]], axis=2)   # x[:, :, clamp(t-1)]
    right = jnp.concatenate([x[:, :, 1:], x[:, :, w - 1:]], axis=2)  # x[:, :, clamp(t+1)]
    even = 0.25 * left + 0.75 * x
    odd = 0.75 * x + 0.25 * right
    return jnp.stack([even, odd], axis=3).reshape(n, h, 2 * w, c)


def _fold_conv_bn(p, cin_pad, cout_pad, dtype):
    """torch (Cout,Cin,3,3) conv + eval BN -> (3,3,cin_pad,cout_pad) scaled weights, (1,cout_pad) bias."""
    w = jnp.asarray(p["w"], jnp.float32)
    cout, cin = int(w.shape[0]), int(w.shape[1])
    scale = p["gamma"] * lax.rsqrt(p["var"] + BN_EPS)
    whwio = jnp.transpose(w, (2, 3, 1, 0)) * scale                   # scale along Cout
    whwio = jnp.pad(whwio, ((0, 0), (0, 0), (0, cin_pad - cin), (0, cout_pad - cout)))
    bias = (p["b"] - p["mean"]) * scale + p["beta"]
    bias = jnp.pad(bias, (0, cout_pad - cout)).reshape(1, -1).astype(jnp.float32)
    return whwio.astype(dtype), bias


def unet_up_forward(x_nchw, skip_nchw, p1, p2, *, compute_dtype=jnp.bfloat16):
    """UNet_Up forward.  Inputs/outputs NCHW (PyTorch convention)."""
    nf_out, nf_in = int(p1["w"].shape[0]), int(p1["w"].shape[1])
    nf_skip = int(p2["w"].shape[1]) - nf_out
    assert skip_nchw.shape[1] == nf_skip

    x = jnp.transpose(x_nchw, (0, 2, 3, 1)).astype(jnp.float32)      # NCHW -> NHWC
    skip = jnp.transpose(skip_nchw, (0, 2, 3, 1)).astype(jnp.float32)

    n, h, w, _ = x.shape
    ho, wo = 2 * h, 2 * w
    th = _pick_row_tile(ho, wo)

    # Column upsample + bilinear row clamp-pad + conv column zero-halo, all in one small XLA pass
    # over the LOW-RES frame (the 4x-size upsampled tensor is never materialized in HBM).
    xc = _col_upsample2x(x)                                          # (N, H, Wo, Cin) f32
    xc = jnp.concatenate([xc[:, :1], xc, xc[:, -1:]], axis=1)        # replicate rows (clamp)
    xcp = jnp.pad(xc, ((0, 0), (0, 0), (1, 1), (0, 0))).astype(compute_dtype)  # (N, H+2, Wo+2, Cin)

    c1 = _round_up(nf_out + nf_skip, LANE)   # y1cat channels: [conv1 out | skip | zero pad]
    c2 = _round_up(nf_out, LANE)

    w1, b1 = _fold_conv_bn(p1, nf_in, c1, compute_dtype)
    w1 = w1.reshape(9 * nf_in, c1)                                   # 9-tap packed (dy,dx,ci)
    w2, b2 = _fold_conv_bn(p2, c1, c2, compute_dtype)
    w2 = w2.reshape(3, 3 * c1, c2)                                   # per-dy packed (dx,ci)

    y1cat = _up_conv1(xcp, skip, w1, b1, th=th, ho=ho, wo=wo, nf_out=nf_out,
                      out_dtype=compute_dtype)
    out = _conv2(y1cat, w2, b2, th=th, out_dtype=jnp.float32)
    return jnp.transpose(out[..., :nf_out], (0, 3, 1, 2))            # NHWC -> NCHW


# ------------------------------ pure-JAX reference ---------------------------------------------
def _upsample2x_bilinear_ref(x_nhwc):
    def up_axis(x, axis, size):
        out = jnp.arange(2 * size, dtype=jnp.float32)
        src = (out + 0.5) / 2.0 - 0.5
        lo = jnp.floor(src)
        frac = src - lo
        lo_i = jnp.clip(lo.astype(jnp.int32), 0, size - 1)
        hi_i = jnp.clip(lo.astype(jnp.int32) + 1, 0, size - 1)
        shape = [1, 1, 1, 1]
        shape[axis] = 2 * size
        f = frac.reshape(shape)
        return jnp.take(x, lo_i, axis=axis) * (1.0 - f) + jnp.take(x, hi_i, axis=axis) * f

    _, h, w, _ = x_nhwc.shape
    x = up_axis(x_nhwc, 1, h)
    x = up_axis(x, 2, w)
    return x


def _conv_block_ref(x_nhwc, p):
    y = lax.conv_general_dilated(
        x_nhwc, jnp.transpose(p["w"], (2, 3, 1, 0)),   # HWIO
        window_strides=(1, 1), padding="SAME",
        dimension_numbers=("NHWC", "HWIO", "NHWC"))
    y = y + p["b"]
    y = (y - p["mean"]) / jnp.sqrt(p["var"] + BN_EPS) * p["gamma"] + p["beta"]
    return jnp.where(y >= 0, y, NEG_SLOPE * y)


def unet_up_reference(x_nchw, skip_nchw, p1, p2):
    x = jnp.transpose(x_nchw, (0, 2, 3, 1))
    skip = jnp.transpose(skip_nchw, (0, 2, 3, 1))
    x = _upsample2x_bilinear_ref(x)
    x = _conv_block_ref(x, p1)
    x = jnp.concatenate([x, skip], axis=-1)
    x = _conv_block_ref(x, p2)
    return jnp.transpose(x, (0, 3, 1, 2))


# ------------------------------ parameter init -------------------------------------------------
def make_conv_block_params(key, c_in, c_out):
    k1, k2, k3, k4, k5, k6 = jax.random.split(key, 6)
    return dict(
        w=0.1 * jax.random.normal(k1, (c_out, c_in, 3, 3), jnp.float32),
        b=0.1 * jax.random.normal(k2, (c_out,), jnp.float32),
        gamma=1.0 + 0.1 * jax.random.normal(k3, (c_out,), jnp.float32),
        beta=0.1 * jax.random.normal(k4, (c_out,), jnp.float32),
        mean=0.1 * jax.random.normal(k5, (c_out,), jnp.float32),
        var=0.5 + jnp.abs(jax.random.normal(k6, (c_out,), jnp.float32)),
    )


if __name__ == "__main__":
    nf_in, nf_skip, nf_out = 8, 4, 8
    N, H, W = 2, 16, 16         # x at half resolution; skip at 2H x 2W

    key = jax.random.PRNGKey(0)
    kx, ks, kp1, kp2 = jax.random.split(key, 4)

    x = jax.random.normal(kx, (N, nf_in, H, W), jnp.float32)                 # NCHW
    x_skip = jax.random.normal(ks, (N, nf_skip, 2 * H, 2 * W), jnp.float32)

    p1 = make_conv_block_params(kp1, nf_in, nf_out)
    p2 = make_conv_block_params(kp2, nf_skip + nf_out, nf_out)

    out = jax.block_until_ready(jax.jit(unet_up_forward)(x, x_skip, p1, p2))
    ref = jax.block_until_ready(unet_up_reference(x, x_skip, p1, p2))

    assert out.shape == (N, nf_out, 2 * H, 2 * W), out.shape
    # bf16 MXU operands / bf16 intermediate y1cat with f32 accumulation -> bf16-level tolerance.
    assert jnp.allclose(out, ref, rtol=5e-2, atol=5e-2), float(jnp.max(jnp.abs(out - ref)))
    print("KERNEL_OK")
</pallas_src>

<mosaic_0001>
module attributes {stable_mosaic.version = 11 : i64} {
  func.func @kernel(%arg0: i32, %arg1: i32, %arg2: memref<1x18x34x8xbf16, #tpu.memory_space<vmem>>, %arg3: memref<1x16x32x4xf32, #tpu.memory_space<vmem>>, %arg4: memref<72x128xbf16, #tpu.memory_space<vmem>>, %arg5: memref<1x128xf32, #tpu.memory_space<vmem>>, %arg6: memref<1x16x32x128xbf16, #tpu.memory_space<vmem>>) attributes {dimension_semantics = [#tpu.dimension_semantics<parallel>, #tpu.dimension_semantics<parallel>], iteration_bounds = array<i64: 2, 2>, scalar_prefetch = 0 : i64, scratch_operands = 0 : i64, tpu.core_type = #tpu.core_type<tc>, window_params = [{transform_indices = @transform_0, window_bounds = array<i64: 1, 18, 34, 8>}, {transform_indices = @transform_1, window_bounds = array<i64: 1, 16, 32, 4>}, {pipeline_mode = #tpu.pipeline_mode<synchronous>, transform_indices = @transform_2, window_bounds = array<i64: 72, 128>}, {pipeline_mode = #tpu.pipeline_mode<synchronous>, transform_indices = @transform_3, window_bounds = array<i64: 1, 128>}, {transform_indices = @transform_4, window_bounds = array<i64: 1, 16, 32, 128>}]} {
    %c16_i32 = arith.constant 16 : i32
    %0 = arith.muli %arg1, %c16_i32 : i32
    %c8_i32 = arith.constant 8 : i32
    %1 = arith.muli %arg1, %c8_i32 : i32
    %2 = tpu.assume_multiple %1, 8 : i32
    %c0 = arith.constant 0 : index
    %3 = arith.index_cast %2 : i32 to index
    %c0_0 = arith.constant 0 : index
    %c0_1 = arith.constant 0 : index
    %4 = vector.load %arg2[%c0, %3, %c0_0, %c0_1] : memref<1x18x34x8xbf16, #tpu.memory_space<vmem>>, vector<1x9x34x8xbf16>
    %5 = vector.shape_cast %4 : vector<1x9x34x8xbf16> to vector<9x34x8xbf16>
    %6 = arith.extf %5 : vector<9x34x8xbf16> to vector<9x34x8xf32>
    %c1_i32 = arith.constant 1 : i32
    %7 = arith.addi %2, %c1_i32 : i32
    %c0_2 = arith.constant 0 : index
    %8 = arith.index_cast %7 : i32 to index
    %c0_3 = arith.constant 0 : index
    %c0_4 = arith.constant 0 : index
    %9 = vector.load %arg2[%c0_2, %8, %c0_3, %c0_4] : memref<1x18x34x8xbf16, #tpu.memory_space<vmem>>, vector<1x9x34x8xbf16>
    %10 = vector.shape_cast %9 : vector<1x9x34x8xbf16> to vector<9x34x8xbf16>
    %11 = arith.extf %10 : vector<9x34x8xbf16> to vector<9x34x8xf32>
    %cst = arith.constant 7.500000e-01 : f32
    %12 = vector.broadcast %cst : f32 to vector<9x34x8xf32>
    %13 = arith.mulf %12, %6 : vector<9x34x8xf32>
    %cst_5 = arith.constant 2.500000e-01 : f32
    %14 = vector.broadcast %cst_5 : f32 to vector<9x34x8xf32>
    %15 = arith.mulf %14, %11 : vector<9x34x8xf32>
    %16 = arith.addf %13, %15 : vector<9x34x8xf32>
    %cst_6 = arith.constant 2.500000e-01 : f32
    %17 = vector.broadcast %cst_6 : f32 to vector<9x34x8xf32>
    %18 = arith.mulf %17, %6 : vector<9x34x8xf32>
    %cst_7 = arith.constant 7.500000e-01 : f32
    %19 = vector.broadcast %cst_7 : f32 to vector<9x34x8xf32>
    %20 = arith.mulf %19, %11 : vector<9x34x8xf32>
    %21 = arith.addf %18, %20 : vector<9x34x8xf32>
    %22 = vector.shape_cast %16 : vector<9x34x8xf32> to vector<9x1x34x8xf32>
    %23 = vector.shape_cast %21 : vector<9x34x8xf32> to vector<9x1x34x8xf32>
    %24 = tpu.concatenate %22, %23 in 1 : vector<9x1x34x8xf32>, vector<9x1x34x8xf32> -> vector<9x2x34x8xf32>
    %25 = vector.shape_cast %24 : vector<9x2x34x8xf32> to vector<18x34x8xf32>
    %26 = tpu.iota {dimensions = array<i32: 0>} : vector<18x1x1xi32>
    %c1_i32_8 = arith.constant 1 : i32
    %27 = arith.subi %0, %c1_i32_8 : i32
    %28 = vector.broadcast %27 : i32 to vector<18x1x1xi32>
    %29 = arith.addi %26, %28 : vector<18x1x1xi32>
    %c0_i32 = arith.constant 0 : i32
    %30 = vector.broadcast %c0_i32 : i32 to vector<18x1x1xi32>
    %31 = arith.cmpi sge, %29, %30 : vector<18x1x1xi32>
    %c32_i32 = arith.constant 32 : i32
    %32 = vector.broadcast %c32_i32 : i32 to vector<18x1x1xi32>
    %33 = arith.cmpi slt, %29, %32 : vector<18x1x1xi32>
    %34 = arith.andi %31, %33 : vector<18x1x1xi1>
    %cst_9 = arith.constant 0.000000e+00 : f32
    %35 = vector.shape_cast %34 : vector<18x1x1xi1> to vector<18x1x1xi1>
    %36 = vector.broadcast %35 : vector<18x1x1xi1> to vector<18x34x8xi1>
    %37 = vector.broadcast %cst_9 : f32 to vector<18x34x8xf32>
    %38 = arith.select %36, %25, %37 : vector<18x34x8xi1>, vector<18x34x8xf32>
    %39 = arith.truncf %38 : vector<18x34x8xf32> to vector<18x34x8xbf16>
    %40 = vector.extract_strided_slice %39 {offsets = [0, 0, 0], sizes = [16, 32, 8], strides = [1, 1, 1]} : vector<18x34x8xbf16> to vector<16x32x8xbf16>
    %41 = vector.extract_strided_slice %39 {offsets = [0, 1, 0], sizes = [16, 32, 8], strides = [1, 1, 1]} : vector<18x34x8xbf16> to vector<16x32x8xbf16>
    %42 = vector.extract_strided_slice %39 {offsets = [0, 2, 0], sizes = [16, 32, 8], strides = [1, 1, 1]} : vector<18x34x8xbf16> to vector<16x32x8xbf16>
    %43 = vector.extract_strided_slice %39 {offsets = [1, 0, 0], sizes = [16, 32, 8], strides = [1, 1, 1]} : vector<18x34x8xbf16> to vector<16x32x8xbf16>
    %44 = vector.extract_strided_slice %39 {offsets = [1, 1, 0], sizes = [16, 32, 8], strides = [1, 1, 1]} : vector<18x34x8xbf16> to vector<16x32x8xbf16>
    %45 = vector.extract_strided_slice %39 {offsets = [1, 2, 0], sizes = [16, 32, 8], strides = [1, 1, 1]} : vector<18x34x8xbf16> to vector<16x32x8xbf16>
    %46 = vector.extract_strided_slice %39 {offsets = [2, 0, 0], sizes = [16, 32, 8], strides = [1, 1, 1]} : vector<18x34x8xbf16> to vector<16x32x8xbf16>
    %47 = vector.extract_strided_slice %39 {offsets = [2, 1, 0], sizes = [16, 32, 8], strides = [1, 1, 1]} : vector<18x34x8xbf16> to vector<16x32x8xbf16>
    %48 = vector.extract_strided_slice %39 {offsets = [2, 2, 0], sizes = [16, 32, 8], strides = [1, 1, 1]} : vector<18x34x8xbf16> to vector<16x32x8xbf16>
    %49 = tpu.concatenate %40, %41, %42, %43, %44, %45, %46, %47, %48 in 2 : vector<16x32x8xbf16>, vector<16x32x8xbf16>, vector<16x32x8xbf16>, vector<16x32x8xbf16>, vector<16x32x8xbf16>, vector<16x32x8xbf16>, vector<16x32x8xbf16>, vector<16x32x8xbf16>, vector<16x32x8xbf16> -> vector<16x32x72xbf16>
    %50 = vector.shape_cast %49 : vector<16x32x72xbf16> to vector<512x72xbf16>
    %c0_10 = arith.constant 0 : index
    %c0_11 = arith.constant 0 : index
    %51 = vector.load %arg4[%c0_10, %c0_11] : memref<72x128xbf16, #tpu.memory_space<vmem>>, vector<72x128xbf16>
    %cst_12 = arith.constant dense<0.000000e+00> : vector<512x128xf32>
    %52 = tpu.matmul %50, %51, %cst_12 {dimension_numbers = #tpu.dot_dimension_numbers<[1], [0], [0], [1], [0, 0, 1, 1], [], []>} : vector<512x72xbf16>, vector<72x128xbf16>, vector<512x128xf32> -> vector<512x128xf32>
    %c0_13 = arith.constant 0 : index
    %c0_14 = arith.constant 0 : index
    %53 = vector.load %arg5[%c0_13, %c0_14] : memref<1x128xf32, #tpu.memory_space<vmem>>, vector<1x128xf32>
    %54 = vector.broadcast %53 : vector<1x128xf32> to vector<512x128xf32>
    %55 = arith.addf %52, %54 : vector<512x128xf32>
    %cst_15 = arith.constant 0.000000e+00 : f32
    %56 = vector.broadcast %cst_15 : f32 to vector<512x128xf32>
    %57 = arith.cmpf oge, %55, %56 : vector<512x128xf32>
    %cst_16 = arith.constant 0.00999999977 : f32
    %58 = vector.broadcast %cst_16 : f32 to vector<512x128xf32>
    %59 = arith.mulf %58, %55 : vector<512x128xf32>
    %60 = arith.select %57, %55, %59 : vector<512x128xi1>, vector<512x128xf32>
    %61 = vector.shape_cast %60 : vector<512x128xf32> to vector<16x32x128xf32>
    %c0_17 = arith.constant 0 : index
    %c0_18 = arith.constant 0 : index
    %c0_19 = arith.constant 0 : index
    %c0_20 = arith.constant 0 : index
    %62 = vector.load %arg3[%c0_17, %c0_18, %c0_19, %c0_20] : memref<1x16x32x4xf32, #tpu.memory_space<vmem>>, vector<1x16x32x4xf32>
    %63 = vector.shape_cast %62 : vector<1x16x32x4xf32> to vector<16x32x4xf32>
    %c0_i32_21 = arith.constant 0 : i32
    %64 = arith.sitofp %c0_i32_21 : i32 to f32
    %65 = vector.broadcast %64 : f32 to vector<16x32x8xf32>
    %66 = tpu.concatenate %65, %63 in 2 : vector<16x32x8xf32>, vector<16x32x4xf32> -> vector<16x32x12xf32>
    %67 = vector.broadcast %64 : f32 to vector<16x32x116xf32>
    %68 = tpu.concatenate %66, %67 in 2 : vector<16x32x12xf32>, vector<16x32x116xf32> -> vector<16x32x128xf32>
    %69 = arith.addf %61, %68 : vector<16x32x128xf32>
    %70 = arith.truncf %69 : vector<16x32x128xf32> to vector<16x32x128xbf16>
    %c0_22 = arith.constant 0 : index
    %c0_23 = arith.constant 0 : index
    %c0_24 = arith.constant 0 : index
    %c0_25 = arith.constant 0 : index
    %71 = vector.load %arg6[%c0_22, %c0_23, %c0_24, %c0_25] : memref<1x16x32x128xbf16, #tpu.memory_space<vmem>>, vector<1x16x32x128xbf16>
    %72 = vector.shape_cast %71 : vector<1x16x32x128xbf16> to vector<16x32x128xbf16>
    %73 = vector.shape_cast %70 : vector<16x32x128xbf16> to vector<1x16x32x128xbf16>
    tpu.vector_store %arg6[%c0_22, %c0_23, %c0_24, %c0_25], %73 {strides = array<i32>} : memref<1x16x32x128xbf16, #tpu.memory_space<vmem>>, vector<1x16x32x128xbf16>,
    return
  }
  func.func @transform_0(%arg0: i32, %arg1: i32) -> (i32, i32, i32, i32) {
    %c0_i32 = arith.constant 0 : i32
    %c0_i32_0 = arith.constant 0 : i32
    %c0_i32_1 = arith.constant 0 : i32
    %c0_i32_2 = arith.constant 0 : i32
    return %arg0, %c0_i32, %c0_i32_0, %c0_i32_1 : i32, i32, i32, i32
  }
  func.func @transform_1(%arg0: i32, %arg1: i32) -> (i32, i32, i32, i32) {
    %c0_i32 = arith.constant 0 : i32
    %c0_i32_0 = arith.constant 0 : i32
    %c0_i32_1 = arith.constant 0 : i32
    return %arg0, %arg1, %c0_i32, %c0_i32_0 : i32, i32, i32, i32
  }
  func.func @transform_2(%arg0: i32, %arg1: i32) -> (i32, i32) {
    %c0_i32 = arith.constant 0 : i32
    %c0_i32_0 = arith.constant 0 : i32
    %c0_i32_1 = arith.constant 0 : i32
    return %c0_i32, %c0_i32_0 : i32, i32
  }
  func.func @transform_3(%arg0: i32, %arg1: i32) -> (i32, i32) {
    %c0_i32 = arith.constant 0 : i32
    %c0_i32_0 = arith.constant 0 : i32
    %c0_i32_1 = arith.constant 0 : i32
    return %c0_i32, %c0_i32_0 : i32, i32
  }
  func.func @transform_4(%arg0: i32, %arg1: i32) -> (i32, i32, i32, i32) {
    %c0_i32 = arith.constant 0 : i32
    %c0_i32_0 = arith.constant 0 : i32
    %c0_i32_1 = arith.constant 0 : i32
    return %arg0, %arg1, %c0_i32, %c0_i32_0 : i32, i32, i32, i32
  }
}

module attributes {stable_mosaic.version = 11 : i64} {
  func.func @kernel(%arg0: i32, %arg1: i32, %arg2: memref<1x16x32x128xbf16, #tpu.memory_space<vmem>>, %arg3: memref<1x1x32x128xbf16, #tpu.memory_space<vmem>>, %arg4: memref<1x1x32x128xbf16, #tpu.memory_space<vmem>>, %arg5: memref<3x384x128xbf16, #tpu.memory_space<vmem>>, %arg6: memref<1x128xf32, #tpu.memory_space<vmem>>, %arg7: memref<1x16x32x128xf32, #tpu.memory_space<vmem>>, %arg8: memref<512x128xf32, #tpu.memory_space<vmem>>) attributes {dimension_semantics = [#tpu.dimension_semantics<parallel>, #tpu.dimension_semantics<parallel>], iteration_bounds = array<i64: 2, 2>, scalar_prefetch = 0 : i64, scratch_operands = 1 : i64, tpu.core_type = #tpu.core_type<tc>, window_params = [{transform_indices = @transform_0, window_bounds = array<i64: 1, 16, 32, 128>}, {transform_indices = @transform_1, window_bounds = array<i64: 1, 1, 32, 128>}, {transform_indices = @transform_2, window_bounds = array<i64: 1, 1, 32, 128>}, {pipeline_mode = #tpu.pipeline_mode<synchronous>, transform_indices = @transform_3, window_bounds = array<i64: 3, 384, 128>}, {pipeline_mode = #tpu.pipeline_mode<synchronous>, transform_indices = @transform_4, window_bounds = array<i64: 1, 128>}, {transform_indices = @transform_5, window_bounds = array<i64: 1, 16, 32, 128>}]} {
    %c0 = arith.constant 0 : index
    %c0_0 = arith.constant 0 : index
    %c0_1 = arith.constant 0 : index
    %c0_2 = arith.constant 0 : index
    %0 = vector.load %arg3[%c0, %c0_0, %c0_1, %c0_2] : memref<1x1x32x128xbf16, #tpu.memory_space<vmem>>, vector<1x1x32x128xbf16>
    %1 = vector.shape_cast %0 : vector<1x1x32x128xbf16> to vector<1x32x128xbf16>
    %c0_3 = arith.constant 0 : index
    %c0_4 = arith.constant 0 : index
    %c0_5 = arith.constant 0 : index
    %c0_6 = arith.constant 0 : index
    %2 = vector.load %arg2[%c0_3, %c0_4, %c0_5, %c0_6] : memref<1x16x32x128xbf16, #tpu.memory_space<vmem>>, vector<1x16x32x128xbf16>
    %3 = vector.shape_cast %2 : vector<1x16x32x128xbf16> to vector<16x32x128xbf16>
    %c0_7 = arith.constant 0 : index
    %c0_8 = arith.constant 0 : index
    %c0_9 = arith.constant 0 : index
    %c0_10 = arith.constant 0 : index
    %4 = vector.load %arg4[%c0_7, %c0_8, %c0_9, %c0_10] : memref<1x1x32x128xbf16, #tpu.memory_space<vmem>>, vector<1x1x32x128xbf16>
    %5 = vector.shape_cast %4 : vector<1x1x32x128xbf16> to vector<1x32x128xbf16>
    %6 = tpu.concatenate %1, %3, %5 in 0 : vector<1x32x128xbf16>, vector<16x32x128xbf16>, vector<1x32x128xbf16> -> vector<18x32x128xbf16>
    %c0_i32 = arith.constant 0 : i32
    %7 = arith.sitofp %c0_i32 : i32 to bf16
    %8 = vector.broadcast %7 : bf16 to vector<18x1x128xbf16>
    %9 = tpu.concatenate %8, %6 in 1 : vector<18x1x128xbf16>, vector<18x32x128xbf16> -> vector<18x33x128xbf16>
    %10 = vector.broadcast %7 : bf16 to vector<18x1x128xbf16>
    %11 = tpu.concatenate %9, %10 in 1 : vector<18x33x128xbf16>, vector<18x1x128xbf16> -> vector<18x34x128xbf16>
    %c0_11 = arith.constant 0 : index
    %c0_12 = arith.constant 0 : index
    %12 = vector.load %arg6[%c0_11, %c0_12] : memref<1x128xf32, #tpu.memory_space<vmem>>, vector<1x128xf32>
    %13 = vector.shape_cast %12 : vector<1x128xf32> to vector<1x128xf32>
    %14 = vector.broadcast %13 : vector<1x128xf32> to vector<512x128xf32>
    %c0_13 = arith.constant 0 : index
    %c0_14 = arith.constant 0 : index
    %15 = vector.load %arg8[%c0_13, %c0_14] : memref<512x128xf32, #tpu.memory_space<vmem>>, vector<512x128xf32>
    tpu.vector_store %arg8[%c0_13, %c0_14], %14 {strides = array<i32>} : memref<512x128xf32, #tpu.memory_space<vmem>>, vector<512x128xf32>,
    %16 = vector.extract_strided_slice %11 {offsets = [0, 0, 0], sizes = [16, 32, 128], strides = [1, 1, 1]} : vector<18x34x128xbf16> to vector<16x32x128xbf16>
    %17 = vector.extract_strided_slice %11 {offsets = [0, 1, 0], sizes = [16, 32, 128], strides = [1, 1, 1]} : vector<18x34x128xbf16> to vector<16x32x128xbf16>
    %18 = vector.extract_strided_slice %11 {offsets = [0, 2, 0], sizes = [16, 32, 128], strides = [1, 1, 1]} : vector<18x34x128xbf16> to vector<16x32x128xbf16>
    %19 = tpu.concatenate %16, %17, %18 in 2 : vector<16x32x128xbf16>, vector<16x32x128xbf16>, vector<16x32x128xbf16> -> vector<16x32x384xbf16>
    %20 = vector.shape_cast %19 : vector<16x32x384xbf16> to vector<512x384xbf16>
    %c0_15 = arith.constant 0 : index
    %c0_16 = arith.constant 0 : index
    %21 = vector.load %arg8[%c0_15, %c0_16] : memref<512x128xf32, #tpu.memory_space<vmem>>, vector<512x128xf32>
    %c0_17 = arith.constant 0 : index
    %c0_18 = arith.constant 0 : index
    %c0_19 = arith.constant 0 : index
    %22 = vector.load %arg5[%c0_17, %c0_18, %c0_19] : memref<3x384x128xbf16, #tpu.memory_space<vmem>>, vector<1x384x128xbf16>
    %23 = vector.shape_cast %22 : vector<1x384x128xbf16> to vector<384x128xbf16>
    %cst = arith.constant dense<0.000000e+00> : vector<512x128xf32>
    %24 = tpu.matmul %20, %23, %cst {dimension_numbers = #tpu.dot_dimension_numbers<[1], [0], [0], [1], [0, 0, 1, 1], [], []>} : vector<512x384xbf16>, vector<384x128xbf16>, vector<512x128xf32> -> vector<512x128xf32>
    %25 = arith.addf %21, %24 : vector<512x128xf32>
    %c0_20 = arith.constant 0 : index
    %c0_21 = arith.constant 0 : index
    %26 = vector.load %arg8[%c0_20, %c0_21] : memref<512x128xf32, #tpu.memory_space<vmem>>, vector<512x128xf32>
    tpu.vector_store %arg8[%c0_20, %c0_21], %25 {strides = array<i32>} : memref<512x128xf32, #tpu.memory_space<vmem>>, vector<512x128xf32>,
    %27 = vector.extract_strided_slice %11 {offsets = [1, 0, 0], sizes = [16, 32, 128], strides = [1, 1, 1]} : vector<18x34x128xbf16> to vector<16x32x128xbf16>
    %28 = vector.extract_strided_slice %11 {offsets = [1, 1, 0], sizes = [16, 32, 128], strides = [1, 1, 1]} : vector<18x34x128xbf16> to vector<16x32x128xbf16>
    %29 = vector.extract_strided_slice %11 {offsets = [1, 2, 0], sizes = [16, 32, 128], strides = [1, 1, 1]} : vector<18x34x128xbf16> to vector<16x32x128xbf16>
    %30 = tpu.concatenate %27, %28, %29 in 2 : vector<16x32x128xbf16>, vector<16x32x128xbf16>, vector<16x32x128xbf16> -> vector<16x32x384xbf16>
    %31 = vector.shape_cast %30 : vector<16x32x384xbf16> to vector<512x384xbf16>
    %c0_22 = arith.constant 0 : index
    %c0_23 = arith.constant 0 : index
    %32 = vector.load %arg8[%c0_22, %c0_23] : memref<512x128xf32, #tpu.memory_space<vmem>>, vector<512x128xf32>
    %c1 = arith.constant 1 : index
    %c0_24 = arith.constant 0 : index
    %c0_25 = arith.constant 0 : index
    %33 = vector.load %arg5[%c1, %c0_24, %c0_25] : memref<3x384x128xbf16, #tpu.memory_space<vmem>>, vector<1x384x128xbf16>
    %34 = vector.shape_cast %33 : vector<1x384x128xbf16> to vector<384x128xbf16>
    %cst_26 = arith.constant dense<0.000000e+00> : vector<512x128xf32>
    %35 = tpu.matmul %31, %34, %cst_26 {dimension_numbers = #tpu.dot_dimension_numbers<[1], [0], [0], [1], [0, 0, 1, 1], [], []>} : vector<512x384xbf16>, vector<384x128xbf16>, vector<512x128xf32> -> vector<512x128xf32>
    %36 = arith.addf %32, %35 : vector<512x128xf32>
    %c0_27 = arith.constant 0 : index
    %c0_28 = arith.constant 0 : index
    %37 = vector.load %arg8[%c0_27, %c0_28] : memref<512x128xf32, #tpu.memory_space<vmem>>, vector<512x128xf32>
    tpu.vector_store %arg8[%c0_27, %c0_28], %36 {strides = array<i32>} : memref<512x128xf32, #tpu.memory_space<vmem>>, vector<512x128xf32>,
    %38 = vector.extract_strided_slice %11 {offsets = [2, 0, 0], sizes = [16, 32, 128], strides = [1, 1, 1]} : vector<18x34x128xbf16> to vector<16x32x128xbf16>
    %39 = vector.extract_strided_slice %11 {offsets = [2, 1, 0], sizes = [16, 32, 128], strides = [1, 1, 1]} : vector<18x34x128xbf16> to vector<16x32x128xbf16>
    %40 = vector.extract_strided_slice %11 {offsets = [2, 2, 0], sizes = [16, 32, 128], strides = [1, 1, 1]} : vector<18x34x128xbf16> to vector<16x32x128xbf16>
    %41 = tpu.concatenate %38, %39, %40 in 2 : vector<16x32x128xbf16>, vector<16x32x128xbf16>, vector<16x32x128xbf16> -> vector<16x32x384xbf16>
    %42 = vector.shape_cast %41 : vector<16x32x384xbf16> to vector<512x384xbf16>
    %c0_29 = arith.constant 0 : index
    %c0_30 = arith.constant 0 : index
    %43 = vector.load %arg8[%c0_29, %c0_30] : memref<512x128xf32, #tpu.memory_space<vmem>>, vector<512x128xf32>
    %c2 = arith.constant 2 : index
    %c0_31 = arith.constant 0 : index
    %c0_32 = arith.constant 0 : index
    %44 = vector.load %arg5[%c2, %c0_31, %c0_32] : memref<3x384x128xbf16, #tpu.memory_space<vmem>>, vector<1x384x128xbf16>
    %45 = vector.shape_cast %44 : vector<1x384x128xbf16> to vector<384x128xbf16>
    %cst_33 = arith.constant dense<0.000000e+00> : vector<512x128xf32>
    %46 = tpu.matmul %42, %45, %cst_33 {dimension_numbers = #tpu.dot_dimension_numbers<[1], [0], [0], [1], [0, 0, 1, 1], [], []>} : vector<512x384xbf16>, vector<384x128xbf16>, vector<512x128xf32> -> vector<512x128xf32>
    %47 = arith.addf %43, %46 : vector<512x128xf32>
    %c0_34 = arith.constant 0 : index
    %c0_35 = arith.constant 0 : index
    %48 = vector.load %arg8[%c0_34, %c0_35] : memref<512x128xf32, #tpu.memory_space<vmem>>, vector<512x128xf32>
    tpu.vector_store %arg8[%c0_34, %c0_35], %47 {strides = array<i32>} : memref<512x128xf32, #tpu.memory_space<vmem>>, vector<512x128xf32>,
    %c0_36 = arith.constant 0 : index
    %c0_37 = arith.constant 0 : index
    %49 = vector.load %arg8[%c0_36, %c0_37] : memref<512x128xf32, #tpu.memory_space<vmem>>, vector<512x128xf32>
    %cst_38 = arith.constant 0.000000e+00 : f32
    %50 = vector.broadcast %cst_38 : f32 to vector<512x128xf32>
    %51 = arith.cmpf oge, %49, %50 : vector<512x128xf32>
    %cst_39 = arith.constant 0.00999999977 : f32
    %52 = vector.broadcast %cst_39 : f32 to vector<512x128xf32>
    %53 = arith.mulf %52, %49 : vector<512x128xf32>
    %54 = arith.select %51, %49, %53 : vector<512x128xi1>, vector<512x128xf32>
    %55 = vector.shape_cast %54 : vector<512x128xf32> to vector<16x32x128xf32>
    %c0_40 = arith.constant 0 : index
    %c0_41 = arith.constant 0 : index
    %c0_42 = arith.constant 0 : index
    %c0_43 = arith.constant 0 : index
    %56 = vector.load %arg7[%c0_40, %c0_41, %c0_42, %c0_43] : memref<1x16x32x128xf32, #tpu.memory_space<vmem>>, vector<1x16x32x128xf32>
    %57 = vector.shape_cast %56 : vector<1x16x32x128xf32> to vector<16x32x128xf32>
    %58 = vector.shape_cast %55 : vector<16x32x128xf32> to vector<1x16x32x128xf32>
    tpu.vector_store %arg7[%c0_40, %c0_41, %c0_42, %c0_43], %58 {strides = array<i32>} : memref<1x16x32x128xf32, #tpu.memory_space<vmem>>, vector<1x16x32x128xf32>,
    return
  }
  func.func @transform_0(%arg0: i32, %arg1: i32) -> (i32, i32, i32, i32) {
    %c0_i32 = arith.constant 0 : i32
    %c0_i32_0 = arith.constant 0 : i32
    %c0_i32_1 = arith.constant 0 : i32
    return %arg0, %arg1, %c0_i32, %c0_i32_0 : i32, i32, i32, i32
  }
  func.func @transform_1(%arg0: i32, %arg1: i32) -> (i32, i32, i32, i32) {
    %c0_i32 = arith.constant 0 : i32
    %c0_i32_0 = arith.constant 0 : i32
    %c0_i32_1 = arith.constant 0 : i32
    return %arg0, %arg1, %c0_i32, %c0_i32_0 : i32, i32, i32, i32
  }
  func.func @transform_2(%arg0: i32, %arg1: i32) -> (i32, i32, i32, i32) {
    %c0_i32 = arith.constant 0 : i32
    %c0_i32_0 = arith.constant 0 : i32
    %c0_i32_1 = arith.constant 0 : i32
    return %arg0, %arg1, %c0_i32, %c0_i32_0 : i32, i32, i32, i32
  }
  func.func @transform_3(%arg0: i32, %arg1: i32) -> (i32, i32, i32) {
    %c0_i32 = arith.constant 0 : i32
    %c0_i32_0 = arith.constant 0 : i32
    %c0_i32_1 = arith.constant 0 : i32
    %c0_i32_2 = arith.constant 0 : i32
    return %c0_i32, %c0_i32_0, %c0_i32_1 : i32, i32, i32
  }
  func.func @transform_4(%arg0: i32, %arg1: i32) -> (i32, i32) {
    %c0_i32 = arith.constant 0 : i32
    %c0_i32_0 = arith.constant 0 : i32
    %c0_i32_1 = arith.constant 0 : i32
    return %c0_i32, %c0_i32_0 : i32, i32
  }
  func.func @transform_5(%arg0: i32, %arg1: i32) -> (i32, i32, i32, i32) {
    %c0_i32 = arith.constant 0 : i32
    %c0_i32_0 = arith.constant 0 : i32
    %c0_i32_1 = arith.constant 0 : i32
    return %arg0, %arg1, %c0_i32, %c0_i32_0 : i32, i32, i32, i32
  }
}

</mosaic_0001>

<llo_original>
// kernel: unet_up_forward.2
$region0: #{unet_up_forward.2}
  #allocation0 [shape = 'u32[]', space=smem, size = 0x4, offset = 0x4, fixed_abs, tag = 'smem constant byte address 0x4 - core index']
  #allocation1 [shape = 'u32[72,128]{1,0:T(1,128)}', space=vmem, size = 0x9000, scoped, tag = 'internal scratch']
  %s0 = inlined_call_operand.vmem [shape: bf16[2,18,34,8], index: 0, kind: input, shape index: {}]
  %s1 = inlined_call_operand.vmem [shape: f32[2,32,32,4], index: 1, kind: input, shape index: {}]
  %s2 = inlined_call_operand.vmem [shape: bf16[72,128], index: 2, kind: input, shape index: {}]
  %s3 = inlined_call_operand.vmem [shape: f32[1,128], index: 3, kind: input, shape index: {}]
  %s4 = inlined_call_operand.vmem [shape: bf16[2,32,32,128], index: 4, kind: output, shape index: {}]
  %s5 = sld [smem:[#allocation0]]
  $region49: #{unet_up_forward.2} parent=0
    _
  %s7 = ssub.s32 1, %s5
  %s8 = scalar_select 0, %s7, %s5
  loop: start=0, step=1, limit=6
  $region2: #{unet_up_forward.2} parent=0 // loop_pre_header
    _
  $region3: #{unet_up_forward.2} parent=0 // loop_header
    %s10 = sphi 0, %s14
    %p11 = scmp.ge.s32.totalorder %s10, 6
    %s17 = sphi 0, %s29
    %s18 = sphi 0, %s25
    %s19 = sphi 0, %s17
    %s20 = sphi 0, %s18
    %s21 = sphi 0, %s19
    %s22 = sphi 0, %s20
    %s32 = sphi 0, %s34
    %s35 = sphi 0, %s32
    %s36 = sphi 0, %s35
    %s52 = sphi 0, %s36
    %s60 = sphi 0, %s62
    %s63 = sphi 0, %s60
    %s64 = sphi 0, %s63
    %s80 = sphi 0, %s64
    %s84 = sphi 0, %s84
    %s86 = sphi 0, %s84
    %s87 = sphi 0, %s86
    %s101 = sphi 0, %s87
    %s105 = sphi 0, %s105
    %s107 = sphi 0, %s105
    %s108 = sphi 0, %s107
    %s122 = sphi 0, %s108
    %s130 = sphi 0, %s132
    %s133 = sphi 0, %s130
    %s134 = sphi 0, %s133
    %s150 = sphi 0, %s134
  $region4: #{unet_up_forward.2} parent=0 // loop_header_branch
    %13 = sbr.rel (%p11) target = $region8
  $region5: #{unet_up_forward.2} parent=0 // loop_body
    %s15 = ssub.s32 %s10, 1
    %s16 = ssub.s32 %s10, 2
    %s23 = sadd.s32 1, %s18
    %p24 = scmp.ge.s32.totalorder %s23, 2
    %s25 = scalar_select %p24, 0, %s23
    %s26 = sadd.s32 1, %s17
    %s27 = scalar_select %p24, %s26, %s17
    %p28 = scmp.ge.s32.totalorder %s27, 2
    %s29 = scalar_select %p28, 0, %s27
    %s30 = ssub.s32 %s17, %s29
    %p31 = scmp.eq.s32.totalorder %s30, 0
    %s33 = sadd.s32 %s32, 1
    %s34 = scalar_select %p31, %s32, %s33
    %p37 = pneg %p31
    %p38 = scmp.eq.s32.totalorder %s10, 3
    %p39 = por %p37, %p38
    %p40 = scmp.ne.s32.totalorder %s32, %s35
    %p41 = scmp.eq.s32.totalorder %s10, 0
    %p42 = por %p40, %p41
    %p43 = scmp.ne.s32.totalorder %s32, %s35
    %p44 = scmp.eq.s32.totalorder %s15, 3
    %p45 = por %p43, %p44
    %p46 = scmp.ne.s32.totalorder %s35, %s36
    %p47 = scmp.eq.s32.totalorder %s15, 0
    %p48 = por %p46, %p47
    %p49 = scmp.ne.s32.totalorder %s35, %s36
    %p50 = scmp.eq.s32.totalorder %s16, 3
    %p51 = por %p49, %p50
    %p53 = scmp.ne.s32.totalorder %s36, %s52
    %p54 = scmp.eq.s32.totalorder %s16, 0
    %p55 = por %p53, %p54
    %s56 = ssub.s32 %s17, %s29
    %s57 = ssub.s32 %s18, %s25
    %s58 = sor.u32 %s56, %s57
    %p59 = scmp.eq.s32.totalorder %s58, 0
    %s61 = sadd.s32 %s60, 1
    %s62 = scalar_select %p59, %s60, %s61
    %p65 = pneg %p59
    %p66 = scmp.eq.s32.totalorder %s10, 3
    %p67 = por %p65, %p66
    %p68 = scmp.ne.s32.totalorder %s60, %s63
    %p69 = scmp.eq.s32.totalorder %s10, 0
    %p70 = por %p68, %p69
    %p71 = scmp.ne.s32.totalorder %s60, %s63
    %p72 = scmp.eq.s32.totalorder %s15, 3
    %p73 = por %p71, %p72
    %p74 = scmp.ne.s32.totalorder %s63, %s64
    %p75 = scmp.eq.s32.totalorder %s15, 0
    %p76 = por %p74, %p75
    %p77 = scmp.ne.s32.totalorder %s63, %s64
    %p78 = scmp.eq.s32.totalorder %s16, 3
    %p79 = por %p77, %p78
    %p81 = scmp.ne.s32.totalorder %s64, %s80
    %p82 = scmp.eq.s32.totalorder %s16, 0
    %p83 = por %p81, %p82
    %s85 = sadd.s32 %s84, 1
    %p88 = scmp.eq.s32.totalorder %s10, 3
    %p89 = scmp.ne.s32.totalorder %s84, %s86
    %p90 = scmp.eq.s32.totalorder %s10, 0
    %p91 = por %p89, %p90
    %p92 = scmp.ne.s32.totalorder %s84, %s86
    %p93 = scmp.eq.s32.totalorder %s15, 3
    %p94 = por %p92, %p93
    %p95 = scmp.ne.s32.totalorder %s86, %s87
    %p96 = scmp.eq.s32.totalorder %s15, 0
    %p97 = por %p95, %p96
    %p98 = scmp.ne.s32.totalorder %s86, %s87
    %p99 = scmp.eq.s32.totalorder %s16, 3
    %p100 = por %p98, %p99
    %p102 = scmp.ne.s32.totalorder %s87, %s101
    %p103 = scmp.eq.s32.totalorder %s16, 0
    %p104 = por %p102, %p103
    %s106 = sadd.s32 %s105, 1
    %p109 = scmp.eq.s32.totalorder %s10, 3
    %p110 = scmp.ne.s32.totalorder %s105, %s107
    %p111 = scmp.eq.s32.totalorder %s10, 0
    %p112 = por %p110, %p111
    %p113 = scmp.ne.s32.totalorder %s105, %s107
    %p114 = scmp.eq.s32.totalorder %s15, 3
    %p115 = por %p113, %p114
    %p116 = scmp.ne.s32.totalorder %s107, %s108
    %p117 = scmp.eq.s32.totalorder %s15, 0
    %p118 = por %p116, %p117
    %p119 = scmp.ne.s32.totalorder %s107, %s108
    %p120 = scmp.eq.s32.totalorder %s16, 3
    %p121 = por %p119, %p120
    %p123 = scmp.ne.s32.totalorder %s108, %s122
    %p124 = scmp.eq.s32.totalorder %s16, 0
    %p125 = por %p123, %p124
    %s126 = ssub.s32 %s17, %s29
    %s127 = ssub.s32 %s18, %s25
    %s128 = sor.u32 %s126, %s127
    %p129 = scmp.eq.s32.totalorder %s128, 0
    %s131 = sadd.s32 %s130, 1
    %s132 = scalar_select %p129, %s130, %s131
    %p135 = pneg %p129
    %p136 = scmp.eq.s32.totalorder %s10, 3
    %p137 = por %p135, %p136
    %p138 = scmp.ne.s32.totalorder %s130, %s133
    %p139 = scmp.eq.s32.totalorder %s10, 0
    %p140 = por %p138, %p139
    %p141 = scmp.ne.s32.totalorder %s130, %s133
    %p142 = scmp.eq.s32.totalorder %s15, 3
    %p143 = por %p141, %p142
    %p144 = scmp.ne.s32.totalorder %s133, %s134
    %p145 = scmp.eq.s32.totalorder %s15, 0
    %p146 = por %p144, %p145
    %p147 = scmp.ne.s32.totalorder %s133, %s134
    %p148 = scmp.eq.s32.totalorder %s16, 3
    %p149 = por %p147, %p148
    %p151 = scmp.ne.s32.totalorder %s134, %s150
    %p152 = scmp.eq.s32.totalorder %s16, 0
    %p153 = por %p151, %p152
    %p154 = scmp.le.s32.totalorder 1, %s10
    %p155 = scmp.lt.s32.totalorder %s10, 5
    %p156 = pnand %p154, %p155
    %p157 = pneg %p156
    // Predicated region
    $region9: #{unet_up_forward.2} parent=5 // pred_check
      _
    $region10: #{unet_up_forward.2} parent=5 // pred_check_branch
      %159 = sbr.rel (%p156) target = $region12
    $region11: #{unet_up_forward.2} parent=5 // pred_region
      %s160 = ssub.s32 %s10, 1
      // Predicated region
      $region13: #{unet_up_forward.2} parent=11 // pred_check
        %p161 = pneg %p97
      $region14: #{unet_up_forward.2} parent=11 // pred_check_branch
        %163 = sbr.rel (%p161) target = $region16
      $region15: #{unet_up_forward.2} parent=11 // pred_region
        _
      $region16: #{unet_up_forward.2} parent=11 // pred_fallthru
        _
      // Predicated region
      $region17: #{unet_up_forward.2} parent=11 // pred_check
        %p164 = pneg %p118
      $region18: #{unet_up_forward.2} parent=11 // pred_check_branch
        %166 = sbr.rel (%p164) target = $region20
      $region19: #{unet_up_forward.2} parent=11 // pred_region
        _
      $region20: #{unet_up_forward.2} parent=11 // pred_fallthru
        _
    $region12: #{unet_up_forward.2} parent=5 // pred_fallthru
      _
    %p167 = scmp.lt.s32.totalorder %s10, 4
    // Predicated region
    $region21: #{unet_up_forward.2} parent=5 // pred_check
      %p168 = pneg %p167
    $region22: #{unet_up_forward.2} parent=5 // pred_check_branch
      %170 = sbr.rel (%p168) target = $region24
    $region23: #{unet_up_forward.2} parent=5 // pred_region
      // Predicated region
      $region25: #{unet_up_forward.2} parent=23 // pred_check
        %p171 = pneg %p42
      $region26: #{unet_up_forward.2} parent=23 // pred_check_branch
        %173 = sbr.rel (%p171) target = $region28
      $region27: #{unet_up_forward.2} parent=23 // pred_region
        %p174 = scmp.lt.s32.totalorder %s17, 1
        %s175 = scalar_select %p174, %s17, 1
        %s176 = smul.addr %s175, 90
        %s177 = smul.addr %s176, 4
        %s178 = scalar_lea.vmem %s0, %s177
      $region28: #{unet_up_forward.2} parent=23 // pred_fallthru
        _
      // Predicated region
      $region29: #{unet_up_forward.2} parent=23 // pred_check
        %p179 = pneg %p70
      $region30: #{unet_up_forward.2} parent=23 // pred_check_branch
        %181 = sbr.rel (%p179) target = $region32
      $region31: #{unet_up_forward.2} parent=23 // pred_region
        %s182 = smul.u32 16, %s18
        %p183 = scmp.lt.s32.totalorder %s17, 1
        %s184 = scalar_select %p183, %s17, 1
        %p185 = scmp.lt.s32.totalorder %s182, 31
        %s186 = scalar_select %p185, %s182, 31
        %s187 = smul.addr %s186, 4
        %s188 = smul.addr %s184, 128
        %s189 = sadd.s32 %s187, %s188
        %s190 = smul.addr %s189, 8
        %s191 = scalar_lea.vmem %s1, %s190
        %s192 = smul.u32 16, %s18
      $region32: #{unet_up_forward.2} parent=23 // pred_fallthru
        _
    $region24: #{unet_up_forward.2} parent=5 // pred_fallthru
      _
    %p193 = scmp.le.s32.totalorder 1, %s10
    %p194 = scmp.lt.s32.totalorder %s10, 5
    %p195 = pnand %p193, %p194
    %p196 = pneg %p195
    // Predicated region
    $region33: #{unet_up_forward.2} parent=5 // pred_check
      _
    $region34: #{unet_up_forward.2} parent=5 // pred_check_branch
      %198 = sbr.rel (%p195) target = $region36
    $region35: #{unet_up_forward.2} parent=5 // pred_region
      %s199 = ssub.s32 %s10, 1
      %p200 = scmp.lt.s32.totalorder %s19, 1
      %s201 = scalar_select %p200, %s19, 1
      %s202 = smul.addr %s201, 90
      %s203 = smul.addr %s202, 4
      %s204 = scalar_lea.vmem %s0, %s203
      %p205 = pneg %p48
      %p206 = pneg %p45
      %s207 = smul.u32 16, %s20
      %p208 = scmp.lt.s32.totalorder %s19, 1
      %s209 = scalar_select %p208, %s19, 1
      %p210 = scmp.lt.s32.totalorder %s207, 31
      %s211 = scalar_select %p210, %s207, 31
      %s212 = smul.addr %s211, 4
      %s213 = smul.addr %s209, 128
      %s214 = sadd.s32 %s212, %s213
      %s215 = smul.addr %s214, 8
      %s216 = scalar_lea.vmem %s1, %s215
      %p217 = pneg %p76
      %p218 = pneg %p73
      %p219 = pneg %p97
      %p220 = pneg %p94
      %p221 = pneg %p118
      %p222 = pneg %p115
      %p223 = pneg %p146
      %p224 = pneg %p143
      %s225 = smul.u32 16, %s20
      %p226 = scmp.lt.s32.totalorder %s19, 1
      %s227 = scalar_select %p226, %s19, 1
      %p228 = scmp.lt.s32.totalorder %s225, 31
      %s229 = scalar_select %p228, %s225, 31
      %s230 = smul.addr %s229, 4
      %s231 = smul.addr %s227, 128
      %s232 = sadd.s32 %s230, %s231
      %s233 = smul.addr %s232, 4
      %s234 = scalar_lea.vmem %s4, %s233
      %p235 = scmp.lt.s32.totalorder %s19, 1
      %s236 = scalar_select %p235, %s19, 1
      %s237 = smul.addr %s236, 90
      %s238 = smul.addr %s237, 4
      %s239 = scalar_lea.vmem %s0, %s238
      %s240 = smul.u32 16, %s20
      %p241 = scmp.lt.s32.totalorder %s19, 1
      %s242 = scalar_select %p241, %s19, 1
      %p243 = scmp.lt.s32.totalorder %s240, 31
      %s244 = scalar_select %p243, %s240, 31
      %s245 = smul.addr %s244, 4
      %s246 = smul.addr %s242, 128
      %s247 = sadd.s32 %s245, %s246
      %s248 = smul.addr %s247, 8
      %s249 = scalar_lea.vmem %s1, %s248
      %s250 = smul.u32 16, %s20
      %s251 = smul.u32 16, %s20
      %p252 = scmp.lt.s32.totalorder %s19, 1
      %s253 = scalar_select %p252, %s19, 1
      %p254 = scmp.lt.s32.totalorder %s251, 31
      %s255 = scalar_select %p254, %s251, 31
      %s256 = smul.addr %s255, 4
      %s257 = smul.addr %s253, 128
      %s258 = sadd.s32 %s256, %s257
      %s259 = smul.addr %s258, 4
      %s260 = scalar_lea.vmem %s4, %s259
      %s261 = smul.u32 16, %s20
      %s263 = smul.u32 %s20, 16
      %s264 = smul.u32 %s20, 8
      %s265 = smul.u32 %s264, 5
      %s266 = smul.addr %s265, 4
      %s267 = scalar_lea.vmem %s239, %s266
      %v268 = vld [vmem:[%s267] sm:$0xf]
      %v269 = vld [vmem:[%s267 + $0x4] sm:$0xf]
      %v270 = vld [vmem:[%s267 + $0x8] sm:$0xf]
      %v271 = vld [vmem:[%s267 + $0xc] sm:$0xf]
      %v272 = vld [vmem:[%s267 + $0x10] sm:$0x1]
      %v273 = vld [vmem:[%s267 + $0x14] sm:$0xf]
      %v274 = vld [vmem:[%s267 + $0x18] sm:$0xf]
      %v275 = vld [vmem:[%s267 + $0x1c] sm:$0xf]
      %v276 = vld [vmem:[%s267 + $0x20] sm:$0xf]
      %v277 = vld [vmem:[%s267 + $0x24] sm:$0x1]
      %v278 = vld [vmem:[%s267 + $0x28] sm:$0xf]
      %v279 = vld [vmem:[%s267 + $0x2c] sm:$0xf]
      %v280 = vld [vmem:[%s267 + $0x30] sm:$0xf]
      %v281 = vld [vmem:[%s267 + $0x34] sm:$0xf]
      %v282 = vld [vmem:[%s267 + $0x38] sm:$0x1]
      %v283 = vld [vmem:[%s267 + $0x3c] sm:$0xf]
      %v284 = vld [vmem:[%s267 + $0x40] sm:$0xf]
      %v285 = vld [vmem:[%s267 + $0x44] sm:$0xf]
      %v286 = vld [vmem:[%s267 + $0x48] sm:$0xf]
      %v287 = vld [vmem:[%s267 + $0x4c] sm:$0x1]
      %v288 = vld [vmem:[%s267 + $0x50] sm:$0xf]
      %v289 = vld [vmem:[%s267 + $0x54] sm:$0xf]
      %v290 = vld [vmem:[%s267 + $0x58] sm:$0xf]
      %v291 = vld [vmem:[%s267 + $0x5c] sm:$0xf]
      %v292 = vld [vmem:[%s267 + $0x60] sm:$0x1]
      %v293 = vld [vmem:[%s267 + $0x64] sm:$0xf]
      %v294 = vld [vmem:[%s267 + $0x68] sm:$0xf]
      %v295 = vld [vmem:[%s267 + $0x6c] sm:$0xf]
      %v296 = vld [vmem:[%s267 + $0x70] sm:$0xf]
      %v297 = vld [vmem:[%s267 + $0x74] sm:$0x1]
      %v298 = vld [vmem:[%s267 + $0x78] sm:$0xf]
      %v299 = vld [vmem:[%s267 + $0x7c] sm:$0xf]
      %v300 = vld [vmem:[%s267 + $0x80] sm:$0xf]
      %v301 = vld [vmem:[%s267 + $0x84] sm:$0xf]
      %v302 = vld [vmem:[%s267 + $0x88] sm:$0x1]
      %v303 = vld [vmem:[%s267 + $0x8c] sm:$0xf]
      %v304 = vld [vmem:[%s267 + $0x90] sm:$0xf]
      %v305 = vld [vmem:[%s267 + $0x94] sm:$0xf]
      %v306 = vld [vmem:[%s267 + $0x98] sm:$0xf]
      %v307 = vld [vmem:[%s267 + $0x9c] sm:$0x1]
      %v308 = vld [vmem:[%s267 + $0xa0] sm:$0xf]
      %v309 = vld [vmem:[%s267 + $0xa4] sm:$0xf]
      %v310 = vld [vmem:[%s267 + $0xa8] sm:$0xf]
      %v311 = vld [vmem:[%s267 + $0xac] sm:$0xf]
      %v312 = vld [vmem:[%s267 + $0xb0] sm:$0x1]
      %v313 = vunpack.c.l.bf16 %v268
      %v314 = vunpack.c.l.bf16 %v269
      %v315 = vunpack.c.l.bf16 %v270
      %v316 = vunpack.c.l.bf16 %v271
      %v317 = vunpack.c.l.bf16 %v272
      %v318 = vunpack.c.l.bf16 %v273
      %v319 = vunpack.c.l.bf16 %v274
      %v320 = vunpack.c.l.bf16 %v275
      %v321 = vunpack.c.l.bf16 %v276
      %v322 = vunpack.c.l.bf16 %v277
      %v323 = vunpack.c.l.bf16 %v278
      %v324 = vunpack.c.l.bf16 %v279
      %v325 = vunpack.c.l.bf16 %v280
      %v326 = vunpack.c.l.bf16 %v281
      %v327 = vunpack.c.l.bf16 %v282
      %v328 = vunpack.c.l.bf16 %v283
      %v329 = vunpack.c.l.bf16 %v284
      %v330 = vunpack.c.l.bf16 %v285
      %v331 = vunpack.c.l.bf16 %v286
      %v332 = vunpack.c.l.bf16 %v287
      %v333 = vunpack.c.l.bf16 %v288
      %v334 = vunpack.c.l.bf16 %v289
      %v335 = vunpack.c.l.bf16 %v290
      %v336 = vunpack.c.l.bf16 %v291
      %v337 = vunpack.c.l.bf16 %v292
      %v338 = vunpack.c.l.bf16 %v293
      %v339 = vunpack.c.l.bf16 %v294
      %v340 = vunpack.c.l.bf16 %v295
      %v341 = vunpack.c.l.bf16 %v296
      %v342 = vunpack.c.l.bf16 %v297
      %v343 = vunpack.c.l.bf16 %v298
      %v344 = vunpack.c.l.bf16 %v299
      %v345 = vunpack.c.l.bf16 %v300
      %v346 = vunpack.c.l.bf16 %v301
      %v347 = vunpack.c.l.bf16 %v302
      %v348 = vunpack.c.l.bf16 %v303
      %v349 = vunpack.c.l.bf16 %v304
      %v350 = vunpack.c.l.bf16 %v305
      %v351 = vunpack.c.l.bf16 %v306
      %v352 = vunpack.c.l.bf16 %v307
      %v353 = vunpack.c.l.bf16 %v308
      %v354 = vunpack.c.l.bf16 %v309
      %v355 = vunpack.c.l.bf16 %v310
      %v356 = vunpack.c.l.bf16 %v311
      %v357 = vunpack.c.l.bf16 %v312
      %s358 = sadd.s32 %s264, 1
      %s359 = smul.u32 %s358, 5
      %s360 = smul.addr %s359, 4
      %s361 = scalar_lea.vmem %s239, %s360
      %v362 = vld [vmem:[%s361] sm:$0xf]
      %v363 = vld [vmem:[%s361 + $0x4] sm:$0xf]
      %v364 = vld [vmem:[%s361 + $0x8] sm:$0xf]
      %v365 = vld [vmem:[%s361 + $0xc] sm:$0xf]
      %v366 = vld [vmem:[%s361 + $0x10] sm:$0x1]
      %v367 = vld [vmem:[%s361 + $0x14] sm:$0xf]
      %v368 = vld [vmem:[%s361 + $0x18] sm:$0xf]
      %v369 = vld [vmem:[%s361 + $0x1c] sm:$0xf]
      %v370 = vld [vmem:[%s361 + $0x20] sm:$0xf]
      %v371 = vld [vmem:[%s361 + $0x24] sm:$0x1]
      %v372 = vld [vmem:[%s361 + $0x28] sm:$0xf]
      %v373 = vld [vmem:[%s361 + $0x2c] sm:$0xf]
      %v374 = vld [vmem:[%s361 + $0x30] sm:$0xf]
      %v375 = vld [vmem:[%s361 + $0x34] sm:$0xf]
      %v376 = vld [vmem:[%s361 + $0x38] sm:$0x1]
      %v377 = vld [vmem:[%s361 + $0x3c] sm:$0xf]
      %v378 = vld [vmem:[%s361 + $0x40] sm:$0xf]
      %v379 = vld [vmem:[%s361 + $0x44] sm:$0xf]
      %v380 = vld [vmem:[%s361 + $0x48] sm:$0xf]
      %v381 = vld [vmem:[%s361 + $0x4c] sm:$0x1]
      %v382 = vld [vmem:[%s361 + $0x50] sm:$0xf]
      %v383 = vld [vmem:[%s361 + $0x54] sm:$0xf]
      %v384 = vld [vmem:[%s361 + $0x58] sm:$0xf]
      %v385 = vld [vmem:[%s361 + $0x5c] sm:$0xf]
      %v386 = vld [vmem:[%s361 + $0x60] sm:$0x1]
      %v387 = vld [vmem:[%s361 + $0x64] sm:$0xf]
      %v388 = vld [vmem:[%s361 + $0x68] sm:$0xf]
      %v389 = vld [vmem:[%s361 + $0x6c] sm:$0xf]
      %v390 = vld [vmem:[%s361 + $0x70] sm:$0xf]
      %v391 = vld [vmem:[%s361 + $0x74] sm:$0x1]
      %v392 = vld [vmem:[%s361 + $0x78] sm:$0xf]
      %v393 = vld [vmem:[%s361 + $0x7c] sm:$0xf]
      %v394 = vld [vmem:[%s361 + $0x80] sm:$0xf]
      %v395 = vld [vmem:[%s361 + $0x84] sm:$0xf]
      %v396 = vld [vmem:[%s361 + $0x88] sm:$0x1]
      %v397 = vld [vmem:[%s361 + $0x8c] sm:$0xf]
      %v398 = vld [vmem:[%s361 + $0x90] sm:$0xf]
      %v399 = vld [vmem:[%s361 + $0x94] sm:$0xf]
      %v400 = vld [vmem:[%s361 + $0x98] sm:$0xf]
      %v401 = vld [vmem:[%s361 + $0x9c] sm:$0x1]
      %v402 = vld [vmem:[%s361 + $0xa0] sm:$0xf]
      %v403 = vld [vmem:[%s361 + $0xa4] sm:$0xf]
      %v404 = vld [vmem:[%s361 + $0xa8] sm:$0xf]
      %v405 = vld [vmem:[%s361 + $0xac] sm:$0xf]
      %v406 = vld [vmem:[%s361 + $0xb0] sm:$0x1]
      %v407 = vunpack.c.l.bf16 %v362
      %v408 = vunpack.c.l.bf16 %v363
      %v409 = vunpack.c.l.bf16 %v364
      %v410 = vunpack.c.l.bf16 %v365
      %v411 = vunpack.c.l.bf16 %v366
      %v412 = vunpack.c.l.bf16 %v367
      %v413 = vunpack.c.l.bf16 %v368
      %v414 = vunpack.c.l.bf16 %v369
      %v415 = vunpack.c.l.bf16 %v370
      %v416 = vunpack.c.l.bf16 %v371
      %v417 = vunpack.c.l.bf16 %v372
      %v418 = vunpack.c.l.bf16 %v373
      %v419 = vunpack.c.l.bf16 %v374
      %v420 = vunpack.c.l.bf16 %v375
      %v421 = vunpack.c.l.bf16 %v376
      %v422 = vunpack.c.l.bf16 %v377
      %v423 = vunpack.c.l.bf16 %v378
      %v424 = vunpack.c.l.bf16 %v379
      %v425 = vunpack.c.l.bf16 %v380
      %v426 = vunpack.c.l.bf16 %v381
      %v427 = vunpack.c.l.bf16 %v382
      %v428 = vunpack.c.l.bf16 %v383
      %v429 = vunpack.c.l.bf16 %v384
      %v430 = vunpack.c.l.bf16 %v385
      %v431 = vunpack.c.l.bf16 %v386
      %v432 = vunpack.c.l.bf16 %v387
      %v433 = vunpack.c.l.bf16 %v388
      %v434 = vunpack.c.l.bf16 %v389
      %v435 = vunpack.c.l.bf16 %v390
      %v436 = vunpack.c.l.bf16 %v391
      %v437 = vunpack.c.l.bf16 %v392
      %v438 = vunpack.c.l.bf16 %v393
      %v439 = vunpack.c.l.bf16 %v394
      %v440 = vunpack.c.l.bf16 %v395
      %v441 = vunpack.c.l.bf16 %v396
      %v442 = vunpack.c.l.bf16 %v397
      %v443 = vunpack.c.l.bf16 %v398
      %v444 = vunpack.c.l.bf16 %v399
      %v445 = vunpack.c.l.bf16 %v400
      %v446 = vunpack.c.l.bf16 %v401
      %v447 = vunpack.c.l.bf16 %v402
      %v448 = vunpack.c.l.bf16 %v403
      %v449 = vunpack.c.l.bf16 %v404
      %v450 = vunpack.c.l.bf16 %v405
      %v451 = vunpack.c.l.bf16 %v406
      %v452 = vmul.f32 %v313, 0.75
      %v453 = vmul.f32 %v314, 0.75
      %v454 = vmul.f32 %v315, 0.75
      %v455 = vmul.f32 %v316, 0.75
      %v456 = vmul.f32 %v317, 0.75
      %v457 = vmul.f32 %v318, 0.75
      %v458 = vmul.f32 %v319, 0.75
      %v459 = vmul.f32 %v320, 0.75
      %v460 = vmul.f32 %v321, 0.75
      %v461 = vmul.f32 %v322, 0.75
      %v462 = vmul.f32 %v323, 0.75
      %v463 = vmul.f32 %v324, 0.75
      %v464 = vmul.f32 %v325, 0.75
      %v465 = vmul.f32 %v326, 0.75
      %v466 = vmul.f32 %v327, 0.75
      %v467 = vmul.f32 %v328, 0.75
      %v468 = vmul.f32 %v329, 0.75
      %v469 = vmul.f32 %v330, 0.75
      %v470 = vmul.f32 %v331, 0.75
      %v471 = vmul.f32 %v332, 0.75
      %v472 = vmul.f32 %v333, 0.75
      %v473 = vmul.f32 %v334, 0.75
      %v474 = vmul.f32 %v335, 0.75
      %v475 = vmul.f32 %v336, 0.75
      %v476 = vmul.f32 %v337, 0.75
      %v477 = vmul.f32 %v338, 0.75
      %v478 = vmul.f32 %v339, 0.75
      %v479 = vmul.f32 %v340, 0.75
      %v480 = vmul.f32 %v341, 0.75
      %v481 = vmul.f32 %v342, 0.75
      %v482 = vmul.f32 %v343, 0.75
      %v483 = vmul.f32 %v344, 0.75
      %v484 = vmul.f32 %v345, 0.75
      %v485 = vmul.f32 %v346, 0.75
      %v486 = vmul.f32 %v347, 0.75
      %v487 = vmul.f32 %v348, 0.75
      %v488 = vmul.f32 %v349, 0.75
      %v489 = vmul.f32 %v350, 0.75
      %v490 = vmul.f32 %v351, 0.75
      %v491 = vmul.f32 %v352, 0.75
      %v492 = vmul.f32 %v353, 0.75
      %v493 = vmul.f32 %v354, 0.75
      %v494 = vmul.f32 %v355, 0.75
      %v495 = vmul.f32 %v356, 0.75
      %v496 = vmul.f32 %v357, 0.75
      %v497 = vmul.f32 %v407, 0.25
      %v498 = vmul.f32 %v408, 0.25
      %v499 = vmul.f32 %v409, 0.25
      %v500 = vmul.f32 %v410, 0.25
      %v501 = vmul.f32 %v411, 0.25
      %v502 = vmul.f32 %v412, 0.25
      %v503 = vmul.f32 %v413, 0.25
      %v504 = vmul.f32 %v414, 0.25
      %v505 = vmul.f32 %v415, 0.25
      %v506 = vmul.f32 %v416, 0.25
      %v507 = vmul.f32 %v417, 0.25
      %v508 = vmul.f32 %v418, 0.25
      %v509 = vmul.f32 %v419, 0.25
      %v510 = vmul.f32 %v420, 0.25
      %v511 = vmul.f32 %v421, 0.25
      %v512 = vmul.f32 %v422, 0.25
      %v513 = vmul.f32 %v423, 0.25
      %v514 = vmul.f32 %v424, 0.25
      %v515 = vmul.f32 %v425, 0.25
      %v516 = vmul.f32 %v426, 0.25
      %v517 = vmul.f32 %v427, 0.25
      %v518 = vmul.f32 %v428, 0.25
      %v519 = vmul.f32 %v429, 0.25
      %v520 = vmul.f32 %v430, 0.25
      %v521 = vmul.f32 %v431, 0.25
      %v522 = vmul.f32 %v432, 0.25
      %v523 = vmul.f32 %v433, 0.25
      %v524 = vmul.f32 %v434, 0.25
      %v525 = vmul.f32 %v435, 0.25
      %v526 = vmul.f32 %v436, 0.25
      %v527 = vmul.f32 %v437, 0.25
      %v528 = vmul.f32 %v438, 0.25
      %v529 = vmul.f32 %v439, 0.25
      %v530 = vmul.f32 %v440, 0.25
      %v531 = vmul.f32 %v441, 0.25
      %v532 = vmul.f32 %v442, 0.25
      %v533 = vmul.f32 %v443, 0.25
      %v534 = vmul.f32 %v444, 0.25
      %v535 = vmul.f32 %v445, 0.25
      %v536 = vmul.f32 %v446, 0.25
      %v537 = vmul.f32 %v447, 0.25
      %v538 = vmul.f32 %v448, 0.25
      %v539 = vmul.f32 %v449, 0.25
      %v540 = vmul.f32 %v450, 0.25
      %v541 = vmul.f32 %v451, 0.25
      %v542 = vadd.f32 %v452, %v497
      %v543 = vadd.f32 %v453, %v498
      %v544 = vadd.f32 %v454, %v499
      %v545 = vadd.f32 %v455, %v500
      %v546 = vadd.f32 %v456, %v501
      %v547 = vadd.f32 %v457, %v502
      %v548 = vadd.f32 %v458, %v503
      %v549 = vadd.f32 %v459, %v504
      %v550 = vadd.f32 %v460, %v505
      %v551 = vadd.f32 %v461, %v506
      %v552 = vadd.f32 %v462, %v507
      %v553 = vadd.f32 %v463, %v508
      %v554 = vadd.f32 %v464, %v509
      %v555 = vadd.f32 %v465, %v510
      %v556 = vadd.f32 %v466, %v511
      %v557 = vadd.f32 %v467, %v512
      %v558 = vadd.f32 %v468, %v513
      %v559 = vadd.f32 %v469, %v514
      %v560 = vadd.f32 %v470, %v515
      %v561 = vadd.f32 %v471, %v516
      %v562 = vadd.f32 %v472, %v517
      %v563 = vadd.f32 %v473, %v518
      %v564 = vadd.f32 %v474, %v519
      %v565 = vadd.f32 %v475, %v520
      %v566 = vadd.f32 %v476, %v521
      %v567 = vadd.f32 %v477, %v522
      %v568 = vadd.f32 %v478, %v523
      %v569 = vadd.f32 %v479, %v524
      %v570 = vadd.f32 %v480, %v525
      %v571 = vadd.f32 %v481, %v526
      %v572 = vadd.f32 %v482, %v527
      %v573 = vadd.f32 %v483, %v528
      %v574 = vadd.f32 %v484, %v529
      %v575 = vadd.f32 %v485, %v530
      %v576 = vadd.f32 %v486, %v531
      %v577 = vadd.f32 %v487, %v532
      %v578 = vadd.f32 %v488, %v533
      %v579 = vadd.f32 %v489, %v534
      %v580 = vadd.f32 %v490, %v535
      %v581 = vadd.f32 %v491, %v536
      %v582 = vadd.f32 %v492, %v537
      %v583 = vadd.f32 %v493, %v538
      %v584 = vadd.f32 %v494, %v539
      %v585 = vadd.f32 %v495, %v540
      %v586 = vadd.f32 %v496, %v541
      %v587 = vmul.f32 %v313, 0.25
      %v588 = vmul.f32 %v314, 0.25
      %v589 = vmul.f32 %v315, 0.25
      %v590 = vmul.f32 %v316, 0.25
      %v591 = vmul.f32 %v317, 0.25
      %v592 = vmul.f32 %v318, 0.25
      %v593 = vmul.f32 %v319, 0.25
      %v594 = vmul.f32 %v320, 0.25
      %v595 = vmul.f32 %v321, 0.25
      %v596 = vmul.f32 %v322, 0.25
      %v597 = vmul.f32 %v323, 0.25
      %v598 = vmul.f32 %v324, 0.25
      %v599 = vmul.f32 %v325, 0.25
      %v600 = vmul.f32 %v326, 0.25
      %v601 = vmul.f32 %v327, 0.25
      %v602 = vmul.f32 %v328, 0.25
      %v603 = vmul.f32 %v329, 0.25
      %v604 = vmul.f32 %v330, 0.25
      %v605 = vmul.f32 %v331, 0.25
      %v606 = vmul.f32 %v332, 0.25
      %v607 = vmul.f32 %v333, 0.25
      %v608 = vmul.f32 %v334, 0.25
      %v609 = vmul.f32 %v335, 0.25
      %v610 = vmul.f32 %v336, 0.25
      %v611 = vmul.f32 %v337, 0.25
      %v612 = vmul.f32 %v338, 0.25
      %v613 = vmul.f32 %v339, 0.25
      %v614 = vmul.f32 %v340, 0.25
      %v615 = vmul.f32 %v341, 0.25
      %v616 = vmul.f32 %v342, 0.25
      %v617 = vmul.f32 %v343, 0.25
      %v618 = vmul.f32 %v344, 0.25
      %v619 = vmul.f32 %v345, 0.25
      %v620 = vmul.f32 %v346, 0.25
      %v621 = vmul.f32 %v347, 0.25
      %v622 = vmul.f32 %v348, 0.25
      %v623 = vmul.f32 %v349, 0.25
      %v624 = vmul.f32 %v350, 0.25
      %v625 = vmul.f32 %v351, 0.25
      %v626 = vmul.f32 %v352, 0.25
      %v627 = vmul.f32 %v353, 0.25
      %v628 = vmul.f32 %v354, 0.25
      %v629 = vmul.f32 %v355, 0.25
      %v630 = vmul.f32 %v356, 0.25
      %v631 = vmul.f32 %v357, 0.25
      %v632 = vmul.f32 %v407, 0.75
      %v633 = vmul.f32 %v408, 0.75
      %v634 = vmul.f32 %v409, 0.75
      %v635 = vmul.f32 %v410, 0.75
      %v636 = vmul.f32 %v411, 0.75
      %v637 = vmul.f32 %v412, 0.75
      %v638 = vmul.f32 %v413, 0.75
      %v639 = vmul.f32 %v414, 0.75
      %v640 = vmul.f32 %v415, 0.75
      %v641 = vmul.f32 %v416, 0.75
      %v642 = vmul.f32 %v417, 0.75
      %v643 = vmul.f32 %v418, 0.75
      %v644 = vmul.f32 %v419, 0.75
      %v645 = vmul.f32 %v420, 0.75
      %v646 = vmul.f32 %v421, 0.75
      %v647 = vmul.f32 %v422, 0.75
      %v648 = vmul.f32 %v423, 0.75
      %v649 = vmul.f32 %v424, 0.75
      %v650 = vmul.f32 %v425, 0.75
      %v651 = vmul.f32 %v426, 0.75
      %v652 = vmul.f32 %v427, 0.75
      %v653 = vmul.f32 %v428, 0.75
      %v654 = vmul.f32 %v429, 0.75
      %v655 = vmul.f32 %v430, 0.75
      %v656 = vmul.f32 %v431, 0.75
      %v657 = vmul.f32 %v432, 0.75
      %v658 = vmul.f32 %v433, 0.75
      %v659 = vmul.f32 %v434, 0.75
      %v660 = vmul.f32 %v435, 0.75
      %v661 = vmul.f32 %v436, 0.75
      %v662 = vmul.f32 %v437, 0.75
      %v663 = vmul.f32 %v438, 0.75
      %v664 = vmul.f32 %v439, 0.75
      %v665 = vmul.f32 %v440, 0.75
      %v666 = vmul.f32 %v441, 0.75
      %v667 = vmul.f32 %v442, 0.75
      %v668 = vmul.f32 %v443, 0.75
      %v669 = vmul.f32 %v444, 0.75
      %v670 = vmul.f32 %v445, 0.75
      %v671 = vmul.f32 %v446, 0.75
      %v672 = vmul.f32 %v447, 0.75
      %v673 = vmul.f32 %v448, 0.75
      %v674 = vmul.f32 %v449, 0.75
      %v675 = vmul.f32 %v450, 0.75
      %v676 = vmul.f32 %v451, 0.75
      %v677 = vadd.f32 %v587, %v632
      %v678 = vadd.f32 %v588, %v633
      %v679 = vadd.f32 %v589, %v634
      %v680 = vadd.f32 %v590, %v635
      %v681 = vadd.f32 %v591, %v636
      %v682 = vadd.f32 %v592, %v637
      %v683 = vadd.f32 %v593, %v638
      %v684 = vadd.f32 %v594, %v639
      %v685 = vadd.f32 %v595, %v640
      %v686 = vadd.f32 %v596, %v641
      %v687 = vadd.f32 %v597, %v642
      %v688 = vadd.f32 %v598, %v643
      %v689 = vadd.f32 %v599, %v644
      %v690 = vadd.f32 %v600, %v645
      %v691 = vadd.f32 %v601, %v646
      %v692 = vadd.f32 %v602, %v647
      %v693 = vadd.f32 %v603, %v648
      %v694 = vadd.f32 %v604, %v649
      %v695 = vadd.f32 %v605, %v650
      %v696 = vadd.f32 %v606, %v651
      %v697 = vadd.f32 %v607, %v652
      %v698 = vadd.f32 %v608, %v653
      %v699 = vadd.f32 %v609, %v654
      %v700 = vadd.f32 %v610, %v655
      %v701 = vadd.f32 %v611, %v656
      %v702 = vadd.f32 %v612, %v657
      %v703 = vadd.f32 %v613, %v658
      %v704 = vadd.f32 %v614, %v659
      %v705 = vadd.f32 %v615, %v660
      %v706 = vadd.f32 %v616, %v661
      %v707 = vadd.f32 %v617, %v662
      %v708 = vadd.f32 %v618, %v663
      %v709 = vadd.f32 %v619, %v664
      %v710 = vadd.f32 %v620, %v665
      %v711 = vadd.f32 %v621, %v666
      %v712 = vadd.f32 %v622, %v667
      %v713 = vadd.f32 %v623, %v668
      %v714 = vadd.f32 %v624, %v669
      %v715 = vadd.f32 %v625, %v670
      %v716 = vadd.f32 %v626, %v671
      %v717 = vadd.f32 %v627, %v672
      %v718 = vadd.f32 %v628, %v673
      %v719 = vadd.f32 %v629, %v674
      %v720 = vadd.f32 %v630, %v675
      %v721 = vadd.f32 %v631, %v676
      %s722 = ssub.s32 %s263, 1
      %v723 = vstv %s722
      %v724 = vadd.s32 %v723, 1
      %v725 = vadd.s32 %v723, 2
      %v726 = vadd.s32 %v723, 3
      %v727 = vadd.s32 %v723, 4
      %v728 = vadd.s32 %v723, 5
      %v729 = vadd.s32 %v723, 6
      %v730 = vadd.s32 %v723, 7
      %v731 = vadd.s32 %v723, 8
      %v732 = vadd.s32 %v723, 9
      %v733 = vadd.s32 %v723, 10
      %v734 = vadd.s32 %v723, 11
      %v735 = vadd.s32 %v723, 12
      %v736 = vadd.s32 %v723, 13
      %v737 = vadd.s32 %v723, 14
      %v738 = vadd.s32 %v723, 15
      %v739 = vadd.s32 %v723, 16
      %v740 = vadd.s32 %v723, 17
      %vm741 = vcmp.ge.s32.totalorder %v723, 0
      %vm742 = vcmp.ge.s32.totalorder %v724, 0
      %vm743 = vcmp.ge.s32.totalorder %v725, 0
      %vm744 = vcmp.ge.s32.totalorder %v726, 0
      %vm745 = vcmp.ge.s32.totalorder %v727, 0
      %vm746 = vcmp.ge.s32.totalorder %v728, 0
      %vm747 = vcmp.ge.s32.totalorder %v729, 0
      %vm748 = vcmp.ge.s32.totalorder %v730, 0
      %vm749 = vcmp.ge.s32.totalorder %v731, 0
      %vm750 = vcmp.ge.s32.totalorder %v732, 0
      %vm751 = vcmp.ge.s32.totalorder %v733, 0
      %vm752 = vcmp.ge.s32.totalorder %v734, 0
      %vm753 = vcmp.ge.s32.totalorder %v735, 0
      %vm754 = vcmp.ge.s32.totalorder %v736, 0
      %vm755 = vcmp.ge.s32.totalorder %v737, 0
      %vm756 = vcmp.ge.s32.totalorder %v738, 0
      %vm757 = vcmp.ge.s32.totalorder %v739, 0
      %vm758 = vcmp.ge.s32.totalorder %v740, 0
      %vm759 = vcmp.lt.s32.totalorder %v723, 32
      %vm760 = vcmp.lt.s32.totalorder %v724, 32
      %vm761 = vcmp.lt.s32.totalorder %v725, 32
      %vm762 = vcmp.lt.s32.totalorder %v726, 32
      %vm763 = vcmp.lt.s32.totalorder %v727, 32
      %vm764 = vcmp.lt.s32.totalorder %v728, 32
      %vm765 = vcmp.lt.s32.totalorder %v729, 32
      %vm766 = vcmp.lt.s32.totalorder %v730, 32
      %vm767 = vcmp.lt.s32.totalorder %v731, 32
      %vm768 = vcmp.lt.s32.totalorder %v732, 32
      %vm769 = vcmp.lt.s32.totalorder %v733, 32
      %vm770 = vcmp.lt.s32.totalorder %v734, 32
      %vm771 = vcmp.lt.s32.totalorder %v735, 32
      %vm772 = vcmp.lt.s32.totalorder %v736, 32
      %vm773 = vcmp.lt.s32.totalorder %v737, 32
      %vm774 = vcmp.lt.s32.totalorder %v738, 32
      %vm775 = vcmp.lt.s32.totalorder %v739, 32
      %vm776 = vcmp.lt.s32.totalorder %v740, 32
      %vm777 = vmand %vm741, %vm759
      %vm778 = vmand %vm742, %vm760
      %vm779 = vmand %vm743, %vm761
      %vm780 = vmand %vm744, %vm762
      %vm781 = vmand %vm745, %vm763
      %vm782 = vmand %vm746, %vm764
      %vm783 = vmand %vm747, %vm765
      %vm784 = vmand %vm748, %vm766
      %vm785 = vmand %vm749, %vm767
      %vm786 = vmand %vm750, %vm768
      %vm787 = vmand %vm751, %vm769
      %vm788 = vmand %vm752, %vm770
      %vm789 = vmand %vm753, %vm771
      %vm790 = vmand %vm754, %vm772
      %vm791 = vmand %vm755, %vm773
      %vm792 = vmand %vm756, %vm774
      %vm793 = vmand %vm757, %vm775
      %vm794 = vmand %vm758, %vm776
      %v795 = vsel %vm777, 1, 0
      %v796 = vsel %vm778, 1, 0
      %v797 = vsel %vm779, 1, 0
      %v798 = vsel %vm780, 1, 0
      %v799 = vsel %vm781, 1, 0
      %v800 = vsel %vm782, 1, 0
      %v801 = vsel %vm783, 1, 0
      %v802 = vsel %vm784, 1, 0
      %v803 = vsel %vm785, 1, 0
      %v804 = vsel %vm786, 1, 0
      %v805 = vsel %vm787, 1, 0
      %v806 = vsel %vm788, 1, 0
      %v807 = vsel %vm789, 1, 0
      %v808 = vsel %vm790, 1, 0
      %v809 = vsel %vm791, 1, 0
      %v810 = vsel %vm792, 1, 0
      %v811 = vsel %vm793, 1, 0
      %v812 = vsel %vm794, 1, 0
      %vm813 = vcmp.eq.s32.totalorder %v795, 1
      %vm814 = vcmp.eq.s32.totalorder %v796, 1
      %vm815 = vcmp.eq.s32.totalorder %v797, 1
      %vm816 = vcmp.eq.s32.totalorder %v798, 1
      %vm817 = vcmp.eq.s32.totalorder %v799, 1
      %vm818 = vcmp.eq.s32.totalorder %v800, 1
      %vm819 = vcmp.eq.s32.totalorder %v801, 1
      %vm820 = vcmp.eq.s32.totalorder %v802, 1
      %vm821 = vcmp.eq.s32.totalorder %v803, 1
      %vm822 = vcmp.eq.s32.totalorder %v804, 1
      %vm823 = vcmp.eq.s32.totalorder %v805, 1
      %vm824 = vcmp.eq.s32.totalorder %v806, 1
      %vm825 = vcmp.eq.s32.totalorder %v807, 1
      %vm826 = vcmp.eq.s32.totalorder %v808, 1
      %vm827 = vcmp.eq.s32.totalorder %v809, 1
      %vm828 = vcmp.eq.s32.totalorder %v810, 1
      %vm829 = vcmp.eq.s32.totalorder %v811, 1
      %vm830 = vcmp.eq.s32.totalorder %v812, 1
      %v831 = vsel %vm813, %v542, 0.0
      %v832 = vsel %vm813, %v543, 0.0
      %v833 = vsel %vm813, %v544, 0.0
      %v834 = vsel %vm813, %v545, 0.0
      %v835 = vsel %vm813, %v546, 0.0
      %v836 = vsel %vm814, %v677, 0.0
      %v837 = vsel %vm814, %v678, 0.0
      %v838 = vsel %vm814, %v679, 0.0
      %v839 = vsel %vm814, %v680, 0.0
      %v840 = vsel %vm814, %v681, 0.0
      %v841 = vsel %vm815, %v547, 0.0
      %v842 = vsel %vm815, %v548, 0.0
      %v843 = vsel %vm815, %v549, 0.0
      %v844 = vsel %vm815, %v550, 0.0
      %v845 = vsel %vm815, %v551, 0.0
      %v846 = vsel %vm816, %v682, 0.0
      %v847 = vsel %vm816, %v683, 0.0
      %v848 = vsel %vm816, %v684, 0.0
      %v849 = vsel %vm816, %v685, 0.0
      %v850 = vsel %vm816, %v686, 0.0
      %v851 = vsel %vm817, %v552, 0.0
      %v852 = vsel %vm817, %v553, 0.0
      %v853 = vsel %vm817, %v554, 0.0
      %v854 = vsel %vm817, %v555, 0.0
      %v855 = vsel %vm817, %v556, 0.0
      %v856 = vsel %vm818, %v687, 0.0
      %v857 = vsel %vm818, %v688, 0.0
      %v858 = vsel %vm818, %v689, 0.0
      %v859 = vsel %vm818, %v690, 0.0
      %v860 = vsel %vm818, %v691, 0.0
      %v861 = vsel %vm819, %v557, 0.0
      %v862 = vsel %vm819, %v558, 0.0
      %v863 = vsel %vm819, %v559, 0.0
      %v864 = vsel %vm819, %v560, 0.0
      %v865 = vsel %vm819, %v561, 0.0
      %v866 = vsel %vm820, %v692, 0.0
      %v867 = vsel %vm820, %v693, 0.0
      %v868 = vsel %vm820, %v694, 0.0
      %v869 = vsel %vm820, %v695, 0.0
      %v870 = vsel %vm820, %v696, 0.0
      %v871 = vsel %vm821, %v562, 0.0
      %v872 = vsel %vm821, %v563, 0.0
      %v873 = vsel %vm821, %v564, 0.0
      %v874 = vsel %vm821, %v565, 0.0
      %v875 = vsel %vm821, %v566, 0.0
      %v876 = vsel %vm822, %v697, 0.0
      %v877 = vsel %vm822, %v698, 0.0
      %v878 = vsel %vm822, %v699, 0.0
      %v879 = vsel %vm822, %v700, 0.0
      %v880 = vsel %vm822, %v701, 0.0
      %v881 = vsel %vm823, %v567, 0.0
      %v882 = vsel %vm823, %v568, 0.0
      %v883 = vsel %vm823, %v569, 0.0
      %v884 = vsel %vm823, %v570, 0.0
      %v885 = vsel %vm823, %v571, 0.0
      %v886 = vsel %vm824, %v702, 0.0
      %v887 = vsel %vm824, %v703, 0.0
      %v888 = vsel %vm824, %v704, 0.0
      %v889 = vsel %vm824, %v705, 0.0
      %v890 = vsel %vm824, %v706, 0.0
      %v891 = vsel %vm825, %v572, 0.0
      %v892 = vsel %vm825, %v573, 0.0
      %v893 = vsel %vm825, %v574, 0.0
      %v894 = vsel %vm825, %v575, 0.0
      %v895 = vsel %vm825, %v576, 0.0
      %v896 = vsel %vm826, %v707, 0.0
      %v897 = vsel %vm826, %v708, 0.0
      %v898 = vsel %vm826, %v709, 0.0
      %v899 = vsel %vm826, %v710, 0.0
      %v900 = vsel %vm826, %v711, 0.0
      %v901 = vsel %vm827, %v577, 0.0
      %v902 = vsel %vm827, %v578, 0.0
      %v903 = vsel %vm827, %v579, 0.0
      %v904 = vsel %vm827, %v580, 0.0
      %v905 = vsel %vm827, %v581, 0.0
      %v906 = vsel %vm828, %v712, 0.0
      %v907 = vsel %vm828, %v713, 0.0
      %v908 = vsel %vm828, %v714, 0.0
      %v909 = vsel %vm828, %v715, 0.0
      %v910 = vsel %vm828, %v716, 0.0
      %v911 = vsel %vm829, %v582, 0.0
      %v912 = vsel %vm829, %v583, 0.0
      %v913 = vsel %vm829, %v584, 0.0
      %v914 = vsel %vm829, %v585, 0.0
      %v915 = vsel %vm829, %v586, 0.0
      %v916 = vsel %vm830, %v717, 0.0
      %v917 = vsel %vm830, %v718, 0.0
      %v918 = vsel %vm830, %v719, 0.0
      %v919 = vsel %vm830, %v720, 0.0
      %v920 = vsel %vm830, %v721, 0.0
      %v921 = vpack.c.bf16 %v831, %v831
      %v922 = vpack.c.bf16 %v832, %v832
      %v923 = vpack.c.bf16 %v833, %v833
      %v924 = vpack.c.bf16 %v834, %v834
      %v925 = vpack.c.bf16 %v835, %v835
      %v926 = vpack.c.bf16 %v836, %v836
      %v927 = vpack.c.bf16 %v837, %v837
      %v928 = vpack.c.bf16 %v838, %v838
      %v929 = vpack.c.bf16 %v839, %v839
      %v930 = vpack.c.bf16 %v840, %v840
      %v931 = vpack.c.bf16 %v841, %v841
      %v932 = vpack.c.bf16 %v842, %v842
      %v933 = vpack.c.bf16 %v843, %v843
      %v934 = vpack.c.bf16 %v844, %v844
      %v935 = vpack.c.bf16 %v845, %v845
      %v936 = vpack.c.bf16 %v846, %v846
      %v937 = vpack.c.bf16 %v847, %v847
      %v938 = vpack.c.bf16 %v848, %v848
      %v939 = vpack.c.bf16 %v849, %v849
      %v940 = vpack.c.bf16 %v850, %v850
      %v941 = vpack.c.bf16 %v851, %v851
      %v942 = vpack.c.bf16 %v852, %v852
      %v943 = vpack.c.bf16 %v853, %v853
      %v944 = vpack.c.bf16 %v854, %v854
      %v945 = vpack.c.bf16 %v855, %v855
      %v946 = vpack.c.bf16 %v856, %v856
      %v947 = vpack.c.bf16 %v857, %v857
      %v948 = vpack.c.bf16 %v858, %v858
      %v949 = vpack.c.bf16 %v859, %v859
      %v950 = vpack.c.bf16 %v860, %v860
      %v951 = vpack.c.bf16 %v861, %v861
      %v952 = vpack.c.bf16 %v862, %v862
      %v953 = vpack.c.bf16 %v863, %v863
      %v954 = vpack.c.bf16 %v864, %v864
      %v955 = vpack.c.bf16 %v865, %v865
      %v956 = vpack.c.bf16 %v866, %v866
      %v957 = vpack.c.bf16 %v867, %v867
      %v958 = vpack.c.bf16 %v868, %v868
      %v959 = vpack.c.bf16 %v869, %v869
      %v960 = vpack.c.bf16 %v870, %v870
      %v961 = vpack.c.bf16 %v871, %v871
      %v962 = vpack.c.bf16 %v872, %v872
      %v963 = vpack.c.bf16 %v873, %v873
      %v964 = vpack.c.bf16 %v874, %v874
      %v965 = vpack.c.bf16 %v875, %v875
      %v966 = vpack.c.bf16 %v876, %v876
      %v967 = vpack.c.bf16 %v877, %v877
      %v968 = vpack.c.bf16 %v878, %v878
      %v969 = vpack.c.bf16 %v879, %v879
      %v970 = vpack.c.bf16 %v880, %v880
      %v971 = vpack.c.bf16 %v881, %v881
      %v972 = vpack.c.bf16 %v882, %v882
      %v973 = vpack.c.bf16 %v883, %v883
      %v974 = vpack.c.bf16 %v884, %v884
      %v975 = vpack.c.bf16 %v885, %v885
      %v976 = vpack.c.bf16 %v886, %v886
      %v977 = vpack.c.bf16 %v887, %v887
      %v978 = vpack.c.bf16 %v888, %v888
      %v979 = vpack.c.bf16 %v889, %v889
      %v980 = vpack.c.bf16 %v890, %v890
      %v981 = vpack.c.bf16 %v891, %v891
      %v982 = vpack.c.bf16 %v892, %v892
      %v983 = vpack.c.bf16 %v893, %v893
      %v984 = vpack.c.bf16 %v894, %v894
      %v985 = vpack.c.bf16 %v895, %v895
      %v986 = vpack.c.bf16 %v896, %v896
      %v987 = vpack.c.bf16 %v897, %v897
      %v988 = vpack.c.bf16 %v898, %v898
      %v989 = vpack.c.bf16 %v899, %v899
      %v990 = vpack.c.bf16 %v900, %v900
      %v991 = vpack.c.bf16 %v901, %v901
      %v992 = vpack.c.bf16 %v902, %v902
      %v993 = vpack.c.bf16 %v903, %v903
      %v994 = vpack.c.bf16 %v904, %v904
      %v995 = vpack.c.bf16 %v905, %v905
      %v996 = vpack.c.bf16 %v906, %v906
      %v997 = vpack.c.bf16 %v907, %v907
      %v998 = vpack.c.bf16 %v908, %v908
      %v999 = vpack.c.bf16 %v909, %v909
      %v1000 = vpack.c.bf16 %v910, %v910
      %v1001 = vpack.c.bf16 %v911, %v911
      %v1002 = vpack.c.bf16 %v912, %v912
      %v1003 = vpack.c.bf16 %v913, %v913
      %v1004 = vpack.c.bf16 %v914, %v914
      %v1005 = vpack.c.bf16 %v915, %v915
      %v1006 = vpack.c.bf16 %v916, %v916
      %v1007 = vpack.c.bf16 %v917, %v917
      %v1008 = vpack.c.bf16 %v918, %v918
      %v1009 = vpack.c.bf16 %v919, %v919
      %v1010 = vpack.c.bf16 %v920, %v920
      %v1075 = vunpack.c.l.b16 %v921
      %v1076 = vunpack.c.l.b16 %v922
      %v1077 = vunpack.c.l.b16 %v923
      %v1078 = vunpack.c.l.b16 %v924
      %v1079 = vunpack.c.l.b16 %v926
      %v1080 = vunpack.c.l.b16 %v927
      %v1081 = vunpack.c.l.b16 %v928
      %v1082 = vunpack.c.l.b16 %v929
      %v1083 = vunpack.c.l.b16 %v931
      %v1084 = vunpack.c.l.b16 %v932
      %v1085 = vunpack.c.l.b16 %v933
      %v1086 = vunpack.c.l.b16 %v934
      %v1087 = vunpack.c.l.b16 %v936
      %v1088 = vunpack.c.l.b16 %v937
      %v1089 = vunpack.c.l.b16 %v938
      %v1090 = vunpack.c.l.b16 %v939
      %v1091 = vunpack.c.l.b16 %v941
      %v1092 = vunpack.c.l.b16 %v942
      %v1093 = vunpack.c.l.b16 %v943
      %v1094 = vunpack.c.l.b16 %v944
      %v1095 = vunpack.c.l.b16 %v946
      %v1096 = vunpack.c.l.b16 %v947
      %v1097 = vunpack.c.l.b16 %v948
      %v1098 = vunpack.c.l.b16 %v949
      %v1099 = vunpack.c.l.b16 %v951
      %v1100 = vunpack.c.l.b16 %v952
      %v1101 = vunpack.c.l.b16 %v953
      %v1102 = vunpack.c.l.b16 %v954
      %v1103 = vunpack.c.l.b16 %v956
      %v1104 = vunpack.c.l.b16 %v957
      %v1105 = vunpack.c.l.b16 %v958
      %v1106 = vunpack.c.l.b16 %v959
      %v1107 = vunpack.c.l.b16 %v961
      %v1108 = vunpack.c.l.b16 %v962
      %v1109 = vunpack.c.l.b16 %v963
      %v1110 = vunpack.c.l.b16 %v964
      %v1111 = vunpack.c.l.b16 %v966
      %v1112 = vunpack.c.l.b16 %v967
      %v1113 = vunpack.c.l.b16 %v968
      %v1114 = vunpack.c.l.b16 %v969
      %v1115 = vunpack.c.l.b16 %v971
      %v1116 = vunpack.c.l.b16 %v972
      %v1117 = vunpack.c.l.b16 %v973
      %v1118 = vunpack.c.l.b16 %v974
      %v1119 = vunpack.c.l.b16 %v976
      %v1120 = vunpack.c.l.b16 %v977
      %v1121 = vunpack.c.l.b16 %v978
      %v1122 = vunpack.c.l.b16 %v979
      %v1123 = vunpack.c.l.b16 %v981
      %v1124 = vunpack.c.l.b16 %v982
      %v1125 = vunpack.c.l.b16 %v983
      %v1126 = vunpack.c.l.b16 %v984
      %v1127 = vunpack.c.l.b16 %v986
      %v1128 = vunpack.c.l.b16 %v987
      %v1129 = vunpack.c.l.b16 %v988
      %v1130 = vunpack.c.l.b16 %v989
      %v1131 = vunpack.c.l.b16 %v991
      %v1132 = vunpack.c.l.b16 %v992
      %v1133 = vunpack.c.l.b16 %v993
      %v1134 = vunpack.c.l.b16 %v994
      %v1135 = vunpack.c.l.b16 %v996
      %v1136 = vunpack.c.l.b16 %v997
      %v1137 = vunpack.c.l.b16 %v998
      %v1138 = vunpack.c.l.b16 %v999
      %v1139 = vpack.c.b16 %v1076, %v1075
      %v1140 = vpack.c.b16 %v1078, %v1077
      %v1141 = vpack.c.b16 %v1080, %v1079
      %v1142 = vpack.c.b16 %v1082, %v1081
      %v1143 = vpack.c.b16 %v1084, %v1083
      %v1144 = vpack.c.b16 %v1086, %v1085
      %v1145 = vpack.c.b16 %v1088, %v1087
      %v1146 = vpack.c.b16 %v1090, %v1089
      %v1147 = vpack.c.b16 %v1092, %v1091
      %v1148 = vpack.c.b16 %v1094, %v1093
      %v1149 = vpack.c.b16 %v1096, %v1095
      %v1150 = vpack.c.b16 %v1098, %v1097
      %v1151 = vpack.c.b16 %v1100, %v1099
      %v1152 = vpack.c.b16 %v1102, %v1101
      %v1153 = vpack.c.b16 %v1104, %v1103
      %v1154 = vpack.c.b16 %v1106, %v1105
      %v1155 = vpack.c.b16 %v1108, %v1107
      %v1156 = vpack.c.b16 %v1110, %v1109
      %v1157 = vpack.c.b16 %v1112, %v1111
      %v1158 = vpack.c.b16 %v1114, %v1113
      %v1159 = vpack.c.b16 %v1116, %v1115
      %v1160 = vpack.c.b16 %v1118, %v1117
      %v1161 = vpack.c.b16 %v1120, %v1119
      %v1162 = vpack.c.b16 %v1122, %v1121
      %v1163 = vpack.c.b16 %v1124, %v1123
      %v1164 = vpack.c.b16 %v1126, %v1125
      %v1165 = vpack.c.b16 %v1128, %v1127
      %v1166 = vpack.c.b16 %v1130, %v1129
      %v1167 = vpack.c.b16 %v1132, %v1131
      %v1168 = vpack.c.b16 %v1134, %v1133
      %v1169 = vpack.c.b16 %v1136, %v1135
      %v1170 = vpack.c.b16 %v1138, %v1137
      %v1187 = vunpack.c.l.b16 %v925
      %v1188 = vunpack.c.l.b16 %v930
      %v1189 = vunpack.c.l.b16 %v935
      %v1190 = vunpack.c.l.b16 %v940
      %v1191 = vunpack.c.l.b16 %v945
      %v1192 = vunpack.c.l.b16 %v950
      %v1193 = vunpack.c.l.b16 %v955
      %v1194 = vunpack.c.l.b16 %v960
      %v1195 = vunpack.c.l.b16 %v965
      %v1196 = vunpack.c.l.b16 %v970
      %v1197 = vunpack.c.l.b16 %v975
      %v1198 = vunpack.c.l.b16 %v980
      %v1199 = vunpack.c.l.b16 %v985
      %v1200 = vunpack.c.l.b16 %v990
      %v1201 = vunpack.c.l.b16 %v995
      %v1202 = vunpack.c.l.b16 %v1000
      %v1203 = vpack.c.b16 %v1187, %v1187
      %v1204 = vpack.c.b16 %v1188, %v1188
      %v1205 = vpack.c.b16 %v1189, %v1189
      %v1206 = vpack.c.b16 %v1190, %v1190
      %v1207 = vpack.c.b16 %v1191, %v1191
      %v1208 = vpack.c.b16 %v1192, %v1192
      %v1209 = vpack.c.b16 %v1193, %v1193
      %v1210 = vpack.c.b16 %v1194, %v1194
      %v1211 = vpack.c.b16 %v1195, %v1195
      %v1212 = vpack.c.b16 %v1196, %v1196
      %v1213 = vpack.c.b16 %v1197, %v1197
      %v1214 = vpack.c.b16 %v1198, %v1198
      %v1215 = vpack.c.b16 %v1199, %v1199
      %v1216 = vpack.c.b16 %v1200, %v1200
      %v1217 = vpack.c.b16 %v1201, %v1201
      %v1218 = vpack.c.b16 %v1202, %v1202
      %vm1219 = vsmask.f32 7424
      %v1221 = vshrl.u32 %v1139, 16
      %v1223 = vshll.u32 %v1139, 16
      %v1225 = vrot.slane %v1223, 1
      %v1226 = vor.u32 %v1221, %v1225
      %v1228 = vshll.u32 %v1140, 16
      %v1230 = vrot.slane %v1228, 1
      %v1231 = vsel %vm1219, %v1226, %v1230
      %v1232 = vshrl.u32 %v1140, 16
      %v1234 = vor.u32 %v1232, %v1230
      %v1236 = vshll.u32 %v1203, 16
      %v1238 = vrot.slane %v1236, 1
      %v1239 = vsel %vm1219, %v1234, %v1238
      %v1241 = vshrl.u32 %v1141, 16
      %v1243 = vshll.u32 %v1141, 16
      %v1245 = vrot.slane %v1243, 1
      %v1246 = vor.u32 %v1241, %v1245
      %v1248 = vshll.u32 %v1142, 16
      %v1250 = vrot.slane %v1248, 1
      %v1251 = vsel %vm1219, %v1246, %v1250
      %v1252 = vshrl.u32 %v1142, 16
      %v1254 = vor.u32 %v1252, %v1250
      %v1256 = vshll.u32 %v1204, 16
      %v1258 = vrot.slane %v1256, 1
      %v1259 = vsel %vm1219, %v1254, %v1258
      %v1261 = vshrl.u32 %v1143, 16
      %v1263 = vshll.u32 %v1143, 16
      %v1265 = vrot.slane %v1263, 1
      %v1266 = vor.u32 %v1261, %v1265
      %v1268 = vshll.u32 %v1144, 16
      %v1270 = vrot.slane %v1268, 1
      %v1271 = vsel %vm1219, %v1266, %v1270
      %v1272 = vshrl.u32 %v1144, 16
      %v1274 = vor.u32 %v1272, %v1270
      %v1276 = vshll.u32 %v1205, 16
      %v1278 = vrot.slane %v1276, 1
      %v1279 = vsel %vm1219, %v1274, %v1278
      %v1281 = vshrl.u32 %v1145, 16
      %v1283 = vshll.u32 %v1145, 16
      %v1285 = vrot.slane %v1283, 1
      %v1286 = vor.u32 %v1281, %v1285
      %v1288 = vshll.u32 %v1146, 16
      %v1290 = vrot.slane %v1288, 1
      %v1291 = vsel %vm1219, %v1286, %v1290
      %v1292 = vshrl.u32 %v1146, 16
      %v1294 = vor.u32 %v1292, %v1290
      %v1296 = vshll.u32 %v1206, 16
      %v1298 = vrot.slane %v1296, 1
      %v1299 = vsel %vm1219, %v1294, %v1298
      %v1301 = vshrl.u32 %v1147, 16
      %v1303 = vshll.u32 %v1147, 16
      %v1305 = vrot.slane %v1303, 1
      %v1306 = vor.u32 %v1301, %v1305
      %v1308 = vshll.u32 %v1148, 16
      %v1310 = vrot.slane %v1308, 1
      %v1311 = vsel %vm1219, %v1306, %v1310
      %v1312 = vshrl.u32 %v1148, 16
      %v1314 = vor.u32 %v1312, %v1310
      %v1316 = vshll.u32 %v1207, 16
      %v1318 = vrot.slane %v1316, 1
      %v1319 = vsel %vm1219, %v1314, %v1318
      %v1321 = vshrl.u32 %v1149, 16
      %v1323 = vshll.u32 %v1149, 16
      %v1325 = vrot.slane %v1323, 1
      %v1326 = vor.u32 %v1321, %v1325
      %v1328 = vshll.u32 %v1150, 16
      %v1330 = vrot.slane %v1328, 1
      %v1331 = vsel %vm1219, %v1326, %v1330
      %v1332 = vshrl.u32 %v1150, 16
      %v1334 = vor.u32 %v1332, %v1330
      %v1336 = vshll.u32 %v1208, 16
      %v1338 = vrot.slane %v1336, 1
      %v1339 = vsel %vm1219, %v1334, %v1338
      %v1341 = vshrl.u32 %v1151, 16
      %v1343 = vshll.u32 %v1151, 16
      %v1345 = vrot.slane %v1343, 1
      %v1346 = vor.u32 %v1341, %v1345
      %v1348 = vshll.u32 %v1152, 16
      %v1350 = vrot.slane %v1348, 1
      %v1351 = vsel %vm1219, %v1346, %v1350
      %v1352 = vshrl.u32 %v1152, 16
      %v1354 = vor.u32 %v1352, %v1350
      %v1356 = vshll.u32 %v1209, 16
      %v1358 = vrot.slane %v1356, 1
      %v1359 = vsel %vm1219, %v1354, %v1358
      %v1361 = vshrl.u32 %v1153, 16
      %v1363 = vshll.u32 %v1153, 16
      %v1365 = vrot.slane %v1363, 1
      %v1366 = vor.u32 %v1361, %v1365
      %v1368 = vshll.u32 %v1154, 16
      %v1370 = vrot.slane %v1368, 1
      %v1371 = vsel %vm1219, %v1366, %v1370
      %v1372 = vshrl.u32 %v1154, 16
      %v1374 = vor.u32 %v1372, %v1370
      %v1376 = vshll.u32 %v1210, 16
      %v1378 = vrot.slane %v1376, 1
      %v1379 = vsel %vm1219, %v1374, %v1378
      %v1381 = vshrl.u32 %v1155, 16
      %v1383 = vshll.u32 %v1155, 16
      %v1385 = vrot.slane %v1383, 1
      %v1386 = vor.u32 %v1381, %v1385
      %v1388 = vshll.u32 %v1156, 16
      %v1390 = vrot.slane %v1388, 1
      %v1391 = vsel %vm1219, %v1386, %v1390
      %v1392 = vshrl.u32 %v1156, 16
      %v1394 = vor.u32 %v1392, %v1390
      %v1396 = vshll.u32 %v1211, 16
      %v1398 = vrot.slane %v1396, 1
      %v1399 = vsel %vm1219, %v1394, %v1398
      %v1401 = vshrl.u32 %v1157, 16
      %v1403 = vshll.u32 %v1157, 16
      %v1405 = vrot.slane %v1403, 1
      %v1406 = vor.u32 %v1401, %v1405
      %v1408 = vshll.u32 %v1158, 16
      %v1410 = vrot.slane %v1408, 1
      %v1411 = vsel %vm1219, %v1406, %v1410
      %v1412 = vshrl.u32 %v1158, 16
      %v1414 = vor.u32 %v1412, %v1410
      %v1416 = vshll.u32 %v1212, 16
      %v1418 = vrot.slane %v1416, 1
      %v1419 = vsel %vm1219, %v1414, %v1418
      %v1421 = vshrl.u32 %v1159, 16
      %v1423 = vshll.u32 %v1159, 16
      %v1425 = vrot.slane %v1423, 1
      %v1426 = vor.u32 %v1421, %v1425
      %v1428 = vshll.u32 %v1160, 16
      %v1430 = vrot.slane %v1428, 1
      %v1431 = vsel %vm1219, %v1426, %v1430
      %v1432 = vshrl.u32 %v1160, 16
      %v1434 = vor.u32 %v1432, %v1430
      %v1436 = vshll.u32 %v1213, 16
      %v1438 = vrot.slane %v1436, 1
      %v1439 = vsel %vm1219, %v1434, %v1438
      %v1441 = vshrl.u32 %v1161, 16
      %v1443 = vshll.u32 %v1161, 16
      %v1445 = vrot.slane %v1443, 1
      %v1446 = vor.u32 %v1441, %v1445
      %v1448 = vshll.u32 %v1162, 16
      %v1450 = vrot.slane %v1448, 1
      %v1451 = vsel %vm1219, %v1446, %v1450
      %v1452 = vshrl.u32 %v1162, 16
      %v1454 = vor.u32 %v1452, %v1450
      %v1456 = vshll.u32 %v1214, 16
      %v1458 = vrot.slane %v1456, 1
      %v1459 = vsel %vm1219, %v1454, %v1458
      %v1461 = vshrl.u32 %v1163, 16
      %v1463 = vshll.u32 %v1163, 16
      %v1465 = vrot.slane %v1463, 1
      %v1466 = vor.u32 %v1461, %v1465
      %v1468 = vshll.u32 %v1164, 16
      %v1470 = vrot.slane %v1468, 1
      %v1471 = vsel %vm1219, %v1466, %v1470
      %v1472 = vshrl.u32 %v1164, 16
      %v1474 = vor.u32 %v1472, %v1470
      %v1476 = vshll.u32 %v1215, 16
      %v1478 = vrot.slane %v1476, 1
      %v1479 = vsel %vm1219, %v1474, %v1478
      %v1481 = vshrl.u32 %v1165, 16
      %v1483 = vshll.u32 %v1165, 16
      %v1485 = vrot.slane %v1483, 1
      %v1486 = vor.u32 %v1481, %v1485
      %v1488 = vshll.u32 %v1166, 16
      %v1490 = vrot.slane %v1488, 1
      %v1491 = vsel %vm1219, %v1486, %v1490
      %v1492 = vshrl.u32 %v1166, 16
      %v1494 = vor.u32 %v1492, %v1490
      %v1496 = vshll.u32 %v1216, 16
      %v1498 = vrot.slane %v1496, 1
      %v1499 = vsel %vm1219, %v1494, %v1498
      %v1501 = vshrl.u32 %v1167, 16
      %v1503 = vshll.u32 %v1167, 16
      %v1505 = vrot.slane %v1503, 1
      %v1506 = vor.u32 %v1501, %v1505
      %v1508 = vshll.u32 %v1168, 16
      %v1510 = vrot.slane %v1508, 1
      %v1511 = vsel %vm1219, %v1506, %v1510
      %v1512 = vshrl.u32 %v1168, 16
      %v1514 = vor.u32 %v1512, %v1510
      %v1516 = vshll.u32 %v1217, 16
      %v1518 = vrot.slane %v1516, 1
      %v1519 = vsel %vm1219, %v1514, %v1518
      %v1521 = vshrl.u32 %v1169, 16
      %v1523 = vshll.u32 %v1169, 16
      %v1525 = vrot.slane %v1523, 1
      %v1526 = vor.u32 %v1521, %v1525
      %v1528 = vshll.u32 %v1170, 16
      %v1530 = vrot.slane %v1528, 1
      %v1531 = vsel %vm1219, %v1526, %v1530
      %v1532 = vshrl.u32 %v1170, 16
      %v1534 = vor.u32 %v1532, %v1530
      %v1536 = vshll.u32 %v1218, 16
      %v1538 = vrot.slane %v1536, 1
      %v1539 = vsel %vm1219, %v1534, %v1538
      %1540 = vrot.lane.b32.xlu0 %v1231, 8
      %v1541 = vpop.permute.xlu0 %1540
      %1542 = vrot.lane.b32.xlu0 %v1239, 8
      %v1543 = vpop.permute.xlu0 %1542
      %1544 = vrot.lane.b32.xlu0 %v1251, 8
      %v1545 = vpop.permute.xlu0 %1544
      %1546 = vrot.lane.b32.xlu0 %v1259, 8
      %v1547 = vpop.permute.xlu0 %1546
      %1548 = vrot.lane.b32.xlu0 %v1271, 8
      %v1549 = vpop.permute.xlu0 %1548
      %1550 = vrot.lane.b32.xlu0 %v1279, 8
      %v1551 = vpop.permute.xlu0 %1550
      %1552 = vrot.lane.b32.xlu0 %v1291, 8
      %v1553 = vpop.permute.xlu0 %1552
      %1554 = vrot.lane.b32.xlu0 %v1299, 8
      %v1555 = vpop.permute.xlu0 %1554
      %1556 = vrot.lane.b32.xlu0 %v1311, 8
      %v1557 = vpop.permute.xlu0 %1556
      %1558 = vrot.lane.b32.xlu0 %v1319, 8
      %v1559 = vpop.permute.xlu0 %1558
      %1560 = vrot.lane.b32.xlu0 %v1331, 8
      %v1561 = vpop.permute.xlu0 %1560
      %1562 = vrot.lane.b32.xlu0 %v1339, 8
      %v1563 = vpop.permute.xlu0 %1562
      %1564 = vrot.lane.b32.xlu0 %v1351, 8
      %v1565 = vpop.permute.xlu0 %1564
      %1566 = vrot.lane.b32.xlu0 %v1359, 8
      %v1567 = vpop.permute.xlu0 %1566
      %1568 = vrot.lane.b32.xlu0 %v1371, 8
      %v1569 = vpop.permute.xlu0 %1568
      %1570 = vrot.lane.b32.xlu0 %v1379, 8
      %v1571 = vpop.permute.xlu0 %1570
      %1572 = vrot.lane.b32.xlu0 %v1391, 8
      %v1573 = vpop.permute.xlu0 %1572
      %1574 = vrot.lane.b32.xlu0 %v1399, 8
      %v1575 = vpop.permute.xlu0 %1574
      %1576 = vrot.lane.b32.xlu0 %v1411, 8
      %v1577 = vpop.permute.xlu0 %1576
      %1578 = vrot.lane.b32.xlu0 %v1419, 8
      %v1579 = vpop.permute.xlu0 %1578
      %1580 = vrot.lane.b32.xlu0 %v1431, 8
      %v1581 = vpop.permute.xlu0 %1580
      %1582 = vrot.lane.b32.xlu0 %v1439, 8
      %v1583 = vpop.permute.xlu0 %1582
      %1584 = vrot.lane.b32.xlu0 %v1451, 8
      %v1585 = vpop.permute.xlu0 %1584
      %1586 = vrot.lane.b32.xlu0 %v1459, 8
      %v1587 = vpop.permute.xlu0 %1586
      %1588 = vrot.lane.b32.xlu0 %v1471, 8
      %v1589 = vpop.permute.xlu0 %1588
      %1590 = vrot.lane.b32.xlu0 %v1479, 8
      %v1591 = vpop.permute.xlu0 %1590
      %1592 = vrot.lane.b32.xlu0 %v1491, 8
      %v1593 = vpop.permute.xlu0 %1592
      %1594 = vrot.lane.b32.xlu0 %v1499, 8
      %v1595 = vpop.permute.xlu0 %1594
      %1596 = vrot.lane.b32.xlu0 %v1511, 8
      %v1597 = vpop.permute.xlu0 %1596
      %1598 = vrot.lane.b32.xlu0 %v1519, 8
      %v1599 = vpop.permute.xlu0 %1598
      %1600 = vrot.lane.b32.xlu0 %v1531, 8
      %v1601 = vpop.permute.xlu0 %1600
      %1602 = vrot.lane.b32.xlu0 %v1539, 8
      %v1603 = vpop.permute.xlu0 %1602
      %vm1604 = vcmask 1046528
      %v1605 = vrot.slane %v1139, 1
      %v1606 = vrot.slane %v1140, 1
      %v1607 = vsel %vm1604, %v1605, %v1606
      %v1608 = vrot.slane %v1203, 1
      %v1609 = vsel %vm1604, %v1606, %v1608
      %v1610 = vrot.slane %v1141, 1
      %v1611 = vrot.slane %v1142, 1
      %v1612 = vsel %vm1604, %v1610, %v1611
      %v1613 = vrot.slane %v1204, 1
      %v1614 = vsel %vm1604, %v1611, %v1613
      %v1615 = vrot.slane %v1143, 1
      %v1616 = vrot.slane %v1144, 1
      %v1617 = vsel %vm1604, %v1615, %v1616
      %v1618 = vrot.slane %v1205, 1
      %v1619 = vsel %vm1604, %v1616, %v1618
      %v1620 = vrot.slane %v1145, 1
      %v1621 = vrot.slane %v1146, 1
      %v1622 = vsel %vm1604, %v1620, %v1621
      %v1623 = vrot.slane %v1206, 1
      %v1624 = vsel %vm1604, %v1621, %v1623
      %v1625 = vrot.slane %v1147, 1
      %v1626 = vrot.slane %v1148, 1
      %v1627 = vsel %vm1604, %v1625, %v1626
      %v1628 = vrot.slane %v1207, 1
      %v1629 = vsel %vm1604, %v1626, %v1628
      %v1630 = vrot.slane %v1149, 1
      %v1631 = vrot.slane %v1150, 1
      %v1632 = vsel %vm1604, %v1630, %v1631
      %v1633 = vrot.slane %v1208, 1
      %v1634 = vsel %vm1604, %v1631, %v1633
      %v1635 = vrot.slane %v1151, 1
      %v1636 = vrot.slane %v1152, 1
      %v1637 = vsel %vm1604, %v1635, %v1636
      %v1638 = vrot.slane %v1209, 1
      %v1639 = vsel %vm1604, %v1636, %v1638
      %v1640 = vrot.slane %v1153, 1
      %v1641 = vrot.slane %v1154, 1
      %v1642 = vsel %vm1604, %v1640, %v1641
      %v1643 = vrot.slane %v1210, 1
      %v1644 = vsel %vm1604, %v1641, %v1643
      %v1645 = vrot.slane %v1155, 1
      %v1646 = vrot.slane %v1156, 1
      %v1647 = vsel %vm1604, %v1645, %v1646
      %v1648 = vrot.slane %v1211, 1
      %v1649 = vsel %vm1604, %v1646, %v1648
      %v1650 = vrot.slane %v1157, 1
      %v1651 = vrot.slane %v1158, 1
      %v1652 = vsel %vm1604, %v1650, %v1651
      %v1653 = vrot.slane %v1212, 1
      %v1654 = vsel %vm1604, %v1651, %v1653
      %v1655 = vrot.slane %v1159, 1
      %v1656 = vrot.slane %v1160, 1
      %v1657 = vsel %vm1604, %v1655, %v1656
      %v1658 = vrot.slane %v1213, 1
      %v1659 = vsel %vm1604, %v1656, %v1658
      %v1660 = vrot.slane %v1161, 1
      %v1661 = vrot.slane %v1162, 1
      %v1662 = vsel %vm1604, %v1660, %v1661
      %v1663 = vrot.slane %v1214, 1
      %v1664 = vsel %vm1604, %v1661, %v1663
      %v1665 = vrot.slane %v1163, 1
      %v1666 = vrot.slane %v1164, 1
      %v1667 = vsel %vm1604, %v1665, %v1666
      %v1668 = vrot.slane %v1215, 1
      %v1669 = vsel %vm1604, %v1666, %v1668
      %v1670 = vrot.slane %v1165, 1
      %v1671 = vrot.slane %v1166, 1
      %v1672 = vsel %vm1604, %v1670, %v1671
      %v1673 = vrot.slane %v1216, 1
      %v1674 = vsel %vm1604, %v1671, %v1673
      %v1675 = vrot.slane %v1167, 1
      %v1676 = vrot.slane %v1168, 1
      %v1677 = vsel %vm1604, %v1675, %v1676
      %v1678 = vrot.slane %v1217, 1
      %v1679 = vsel %vm1604, %v1676, %v1678
      %v1680 = vrot.slane %v1169, 1
      %v1681 = vrot.slane %v1170, 1
      %v1682 = vsel %vm1604, %v1680, %v1681
      %v1683 = vrot.slane %v1218, 1
      %v1684 = vsel %vm1604, %v1681, %v1683
      %1685 = vrot.lane.b32.xlu0 %v1607, 16
      %v1686 = vpop.permute.xlu0 %1685
      %1687 = vrot.lane.b32.xlu0 %v1609, 16
      %v1688 = vpop.permute.xlu0 %1687
      %1689 = vrot.lane.b32.xlu0 %v1612, 16
      %v1690 = vpop.permute.xlu0 %1689
      %1691 = vrot.lane.b32.xlu0 %v1614, 16
      %v1692 = vpop.permute.xlu0 %1691
      %1693 = vrot.lane.b32.xlu0 %v1617, 16
      %v1694 = vpop.permute.xlu0 %1693
      %1695 = vrot.lane.b32.xlu0 %v1619, 16
      %v1696 = vpop.permute.xlu0 %1695
      %1697 = vrot.lane.b32.xlu0 %v1622, 16
      %v1698 = vpop.permute.xlu0 %1697
      %1699 = vrot.lane.b32.xlu0 %v1624, 16
      %v1700 = vpop.permute.xlu0 %1699
      %1701 = vrot.lane.b32.xlu0 %v1627, 16
      %v1702 = vpop.permute.xlu0 %1701
      %1703 = vrot.lane.b32.xlu0 %v1629, 16
      %v1704 = vpop.permute.xlu0 %1703
      %1705 = vrot.lane.b32.xlu0 %v1632, 16
      %v1706 = vpop.permute.xlu0 %1705
      %1707 = vrot.lane.b32.xlu0 %v1634, 16
      %v1708 = vpop.permute.xlu0 %1707
      %1709 = vrot.lane.b32.xlu0 %v1637, 16
      %v1710 = vpop.permute.xlu0 %1709
      %1711 = vrot.lane.b32.xlu0 %v1639, 16
      %v1712 = vpop.permute.xlu0 %1711
      %1713 = vrot.lane.b32.xlu0 %v1642, 16
      %v1714 = vpop.permute.xlu0 %1713
      %1715 = vrot.lane.b32.xlu0 %v1644, 16
      %v1716 = vpop.permute.xlu0 %1715
      %1717 = vrot.lane.b32.xlu0 %v1647, 16
      %v1718 = vpop.permute.xlu0 %1717
      %1719 = vrot.lane.b32.xlu0 %v1649, 16
      %v1720 = vpop.permute.xlu0 %1719
      %1721 = vrot.lane.b32.xlu0 %v1652, 16
      %v1722 = vpop.permute.xlu0 %1721
      %1723 = vrot.lane.b32.xlu0 %v1654, 16
      %v1724 = vpop.permute.xlu0 %1723
      %1725 = vrot.lane.b32.xlu0 %v1657, 16
      %v1726 = vpop.permute.xlu0 %1725
      %1727 = vrot.lane.b32.xlu0 %v1659, 16
      %v1728 = vpop.permute.xlu0 %1727
      %1729 = vrot.lane.b32.xlu0 %v1662, 16
      %v1730 = vpop.permute.xlu0 %1729
      %1731 = vrot.lane.b32.xlu0 %v1664, 16
      %v1732 = vpop.permute.xlu0 %1731
      %1733 = vrot.lane.b32.xlu0 %v1667, 16
      %v1734 = vpop.permute.xlu0 %1733
      %1735 = vrot.lane.b32.xlu0 %v1669, 16
      %v1736 = vpop.permute.xlu0 %1735
      %1737 = vrot.lane.b32.xlu0 %v1672, 16
      %v1738 = vpop.permute.xlu0 %1737
      %1739 = vrot.lane.b32.xlu0 %v1674, 16
      %v1740 = vpop.permute.xlu0 %1739
      %1741 = vrot.lane.b32.xlu0 %v1677, 16
      %v1742 = vpop.permute.xlu0 %1741
      %1743 = vrot.lane.b32.xlu0 %v1679, 16
      %v1744 = vpop.permute.xlu0 %1743
      %1745 = vrot.lane.b32.xlu0 %v1682, 16
      %v1746 = vpop.permute.xlu0 %1745
      %1747 = vrot.lane.b32.xlu0 %v1684, 16
      %v1748 = vpop.permute.xlu0 %1747
      %v1753 = vunpack.c.l.b16 %v1001
      %v1754 = vunpack.c.l.b16 %v1002
      %v1755 = vunpack.c.l.b16 %v1003
      %v1756 = vunpack.c.l.b16 %v1004
      %v1757 = vpack.c.b16 %v1754, %v1753
      %v1758 = vpack.c.b16 %v1756, %v1755
      %1759 = vrot.lane.b32.xlu0 %v1141, 24
      %v1760 = vpop.permute.xlu0 %1759
      %1761 = vrot.lane.b32.xlu0 %v1142, 24
      %v1762 = vpop.permute.xlu0 %1761
      %1763 = vrot.lane.b32.xlu0 %v1143, 24
      %v1764 = vpop.permute.xlu0 %1763
      %1765 = vrot.lane.b32.xlu0 %v1144, 24
      %v1766 = vpop.permute.xlu0 %1765
      %1767 = vrot.lane.b32.xlu0 %v1145, 24
      %v1768 = vpop.permute.xlu0 %1767
      %1769 = vrot.lane.b32.xlu0 %v1146, 24
      %v1770 = vpop.permute.xlu0 %1769
      %1771 = vrot.lane.b32.xlu0 %v1147, 24
      %v1772 = vpop.permute.xlu0 %1771
      %1773 = vrot.lane.b32.xlu0 %v1148, 24
      %v1774 = vpop.permute.xlu0 %1773
      %1775 = vrot.lane.b32.xlu0 %v1149, 24
      %v1776 = vpop.permute.xlu0 %1775
      %1777 = vrot.lane.b32.xlu0 %v1150, 24
      %v1778 = vpop.permute.xlu0 %1777
      %1779 = vrot.lane.b32.xlu0 %v1151, 24
      %v1780 = vpop.permute.xlu0 %1779
      %1781 = vrot.lane.b32.xlu0 %v1152, 24
      %v1782 = vpop.permute.xlu0 %1781
      %1783 = vrot.lane.b32.xlu0 %v1153, 24
      %v1784 = vpop.permute.xlu0 %1783
      %1785 = vrot.lane.b32.xlu0 %v1154, 24
      %v1786 = vpop.permute.xlu0 %1785
      %1787 = vrot.lane.b32.xlu0 %v1155, 24
      %v1788 = vpop.permute.xlu0 %1787
      %1789 = vrot.lane.b32.xlu0 %v1156, 24
      %v1790 = vpop.permute.xlu0 %1789
      %1791 = vrot.lane.b32.xlu0 %v1157, 24
      %v1792 = vpop.permute.xlu0 %1791
      %1793 = vrot.lane.b32.xlu0 %v1158, 24
      %v1794 = vpop.permute.xlu0 %1793
      %1795 = vrot.lane.b32.xlu0 %v1159, 24
      %v1796 = vpop.permute.xlu0 %1795
      %1797 = vrot.lane.b32.xlu0 %v1160, 24
      %v1798 = vpop.permute.xlu0 %1797
      %1799 = vrot.lane.b32.xlu0 %v1161, 24
      %v1800 = vpop.permute.xlu0 %1799
      %1801 = vrot.lane.b32.xlu0 %v1162, 24
      %v1802 = vpop.permute.xlu0 %1801
      %1803 = vrot.lane.b32.xlu0 %v1163, 24
      %v1804 = vpop.permute.xlu0 %1803
      %1805 = vrot.lane.b32.xlu0 %v1164, 24
      %v1806 = vpop.permute.xlu0 %1805
      %1807 = vrot.lane.b32.xlu0 %v1165, 24
      %v1808 = vpop.permute.xlu0 %1807
      %1809 = vrot.lane.b32.xlu0 %v1166, 24
      %v1810 = vpop.permute.xlu0 %1809
      %1811 = vrot.lane.b32.xlu0 %v1167, 24
      %v1812 = vpop.permute.xlu0 %1811
      %1813 = vrot.lane.b32.xlu0 %v1168, 24
      %v1814 = vpop.permute.xlu0 %1813
      %1815 = vrot.lane.b32.xlu0 %v1169, 24
      %v1816 = vpop.permute.xlu0 %1815
      %1817 = vrot.lane.b32.xlu0 %v1170, 24
      %v1818 = vpop.permute.xlu0 %1817
      %1819 = vrot.lane.b32.xlu0 %v1757, 24
      %v1820 = vpop.permute.xlu0 %1819
      %1821 = vrot.lane.b32.xlu0 %v1758, 24
      %v1822 = vpop.permute.xlu0 %1821
      %v1824 = vunpack.c.l.b16 %v1005
      %v1825 = vpack.c.b16 %v1824, %v1824
      %v1827 = vshrl.u32 %v1757, 16
      %v1829 = vshll.u32 %v1757, 16
      %v1831 = vrot.slane %v1829, 1
      %v1832 = vor.u32 %v1827, %v1831
      %v1834 = vshll.u32 %v1758, 16
      %v1836 = vrot.slane %v1834, 1
      %v1837 = vsel %vm1219, %v1832, %v1836
      %v1838 = vshrl.u32 %v1758, 16
      %v1840 = vor.u32 %v1838, %v1836
      %v1842 = vshll.u32 %v1825, 16
      %v1844 = vrot.slane %v1842, 1
      %v1845 = vsel %vm1219, %v1840, %v1844
      %1846 = vrot.lane.b32.xlu0 %v1251, 32
      %v1847 = vpop.permute.xlu0 %1846
      %1848 = vrot.lane.b32.xlu0 %v1259, 32
      %v1849 = vpop.permute.xlu0 %1848
      %1850 = vrot.lane.b32.xlu0 %v1271, 32
      %v1851 = vpop.permute.xlu0 %1850
      %1852 = vrot.lane.b32.xlu0 %v1279, 32
      %v1853 = vpop.permute.xlu0 %1852
      %1854 = vrot.lane.b32.xlu0 %v1291, 32
      %v1855 = vpop.permute.xlu0 %1854
      %1856 = vrot.lane.b32.xlu0 %v1299, 32
      %v1857 = vpop.permute.xlu0 %1856
      %1858 = vrot.lane.b32.xlu0 %v1311, 32
      %v1859 = vpop.permute.xlu0 %1858
      %1860 = vrot.lane.b32.xlu0 %v1319, 32
      %v1861 = vpop.permute.xlu0 %1860
      %1862 = vrot.lane.b32.xlu0 %v1331, 32
      %v1863 = vpop.permute.xlu0 %1862
      %1864 = vrot.lane.b32.xlu0 %v1339, 32
      %v1865 = vpop.permute.xlu0 %1864
      %1866 = vrot.lane.b32.xlu0 %v1351, 32
      %v1867 = vpop.permute.xlu0 %1866
      %1868 = vrot.lane.b32.xlu0 %v1359, 32
      %v1869 = vpop.permute.xlu0 %1868
      %1870 = vrot.lane.b32.xlu0 %v1371, 32
      %v1871 = vpop.permute.xlu0 %1870
      %1872 = vrot.lane.b32.xlu0 %v1379, 32
      %v1873 = vpop.permute.xlu0 %1872
      %1874 = vrot.lane.b32.xlu0 %v1391, 32
      %v1875 = vpop.permute.xlu0 %1874
      %1876 = vrot.lane.b32.xlu0 %v1399, 32
      %v1877 = vpop.permute.xlu0 %1876
      %1878 = vrot.lane.b32.xlu0 %v1411, 32
      %v1879 = vpop.permute.xlu0 %1878
      %1880 = vrot.lane.b32.xlu0 %v1419, 32
      %v1881 = vpop.permute.xlu0 %1880
      %1882 = vrot.lane.b32.xlu0 %v1431, 32
      %v1883 = vpop.permute.xlu0 %1882
      %1884 = vrot.lane.b32.xlu0 %v1439, 32
      %v1885 = vpop.permute.xlu0 %1884
      %1886 = vrot.lane.b32.xlu0 %v1451, 32
      %v1887 = vpop.permute.xlu0 %1886
      %1888 = vrot.lane.b32.xlu0 %v1459, 32
      %v1889 = vpop.permute.xlu0 %1888
      %1890 = vrot.lane.b32.xlu0 %v1471, 32
      %v1891 = vpop.permute.xlu0 %1890
      %1892 = vrot.lane.b32.xlu0 %v1479, 32
      %v1893 = vpop.permute.xlu0 %1892
      %1894 = vrot.lane.b32.xlu0 %v1491, 32
      %v1895 = vpop.permute.xlu0 %1894
      %1896 = vrot.lane.b32.xlu0 %v1499, 32
      %v1897 = vpop.permute.xlu0 %1896
      %1898 = vrot.lane.b32.xlu0 %v1511, 32
      %v1899 = vpop.permute.xlu0 %1898
      %1900 = vrot.lane.b32.xlu0 %v1519, 32
      %v1901 = vpop.permute.xlu0 %1900
      %1902 = vrot.lane.b32.xlu0 %v1531, 32
      %v1903 = vpop.permute.xlu0 %1902
      %1904 = vrot.lane.b32.xlu0 %v1539, 32
      %v1905 = vpop.permute.xlu0 %1904
      %1906 = vrot.lane.b32.xlu0 %v1837, 32
      %v1907 = vpop.permute.xlu0 %1906
      %1908 = vrot.lane.b32.xlu0 %v1845, 32
      %v1909 = vpop.permute.xlu0 %1908
      %v1910 = vrot.slane %v1757, 1
      %v1911 = vrot.slane %v1758, 1
      %v1912 = vsel %vm1604, %v1910, %v1911
      %v1913 = vrot.slane %v1825, 1
      %v1914 = vsel %vm1604, %v1911, %v1913
      %1915 = vrot.lane.b32.xlu0 %v1612, 40
      %v1916 = vpop.permute.xlu0 %1915
      %1917 = vrot.lane.b32.xlu0 %v1614, 40
      %v1918 = vpop.permute.xlu0 %1917
      %1919 = vrot.lane.b32.xlu0 %v1617, 40
      %v1920 = vpop.permute.xlu0 %1919
      %1921 = vrot.lane.b32.xlu0 %v1619, 40
      %v1922 = vpop.permute.xlu0 %1921
      %1923 = vrot.lane.b32.xlu0 %v1622, 40
      %v1924 = vpop.permute.xlu0 %1923
      %1925 = vrot.lane.b32.xlu0 %v1624, 40
      %v1926 = vpop.permute.xlu0 %1925
      %1927 = vrot.lane.b32.xlu0 %v1627, 40
      %v1928 = vpop.permute.xlu0 %1927
      %1929 = vrot.lane.b32.xlu0 %v1629, 40
      %v1930 = vpop.permute.xlu0 %1929
      %1931 = vrot.lane.b32.xlu0 %v1632, 40
      %v1932 = vpop.permute.xlu0 %1931
      %1933 = vrot.lane.b32.xlu0 %v1634, 40
      %v1934 = vpop.permute.xlu0 %1933
      %1935 = vrot.lane.b32.xlu0 %v1637, 40
      %v1936 = vpop.permute.xlu0 %1935
      %1937 = vrot.lane.b32.xlu0 %v1639, 40
      %v1938 = vpop.permute.xlu0 %1937
      %1939 = vrot.lane.b32.xlu0 %v1642, 40
      %v1940 = vpop.permute.xlu0 %1939
      %1941 = vrot.lane.b32.xlu0 %v1644, 40
      %v1942 = vpop.permute.xlu0 %1941
      %1943 = vrot.lane.b32.xlu0 %v1647, 40
      %v1944 = vpop.permute.xlu0 %1943
      %1945 = vrot.lane.b32.xlu0 %v1649, 40
      %v1946 = vpop.permute.xlu0 %1945
      %1947 = vrot.lane.b32.xlu0 %v1652, 40
      %v1948 = vpop.permute.xlu0 %1947
      %1949 = vrot.lane.b32.xlu0 %v1654, 40
      %v1950 = vpop.permute.xlu0 %1949
      %1951 = vrot.lane.b32.xlu0 %v1657, 40
      %v1952 = vpop.permute.xlu0 %1951
      %1953 = vrot.lane.b32.xlu0 %v1659, 40
      %v1954 = vpop.permute.xlu0 %1953
      %1955 = vrot.lane.b32.xlu0 %v1662, 40
      %v1956 = vpop.permute.xlu0 %1955
      %1957 = vrot.lane.b32.xlu0 %v1664, 40
      %v1958 = vpop.permute.xlu0 %1957
      %1959 = vrot.lane.b32.xlu0 %v1667, 40
      %v1960 = vpop.permute.xlu0 %1959
      %1961 = vrot.lane.b32.xlu0 %v1669, 40
      %v1962 = vpop.permute.xlu0 %1961
      %1963 = vrot.lane.b32.xlu0 %v1672, 40
      %v1964 = vpop.permute.xlu0 %1963
      %1965 = vrot.lane.b32.xlu0 %v1674, 40
      %v1966 = vpop.permute.xlu0 %1965
      %1967 = vrot.lane.b32.xlu0 %v1677, 40
      %v1968 = vpop.permute.xlu0 %1967
      %1969 = vrot.lane.b32.xlu0 %v1679, 40
      %v1970 = vpop.permute.xlu0 %1969
      %1971 = vrot.lane.b32.xlu0 %v1682, 40
      %v1972 = vpop.permute.xlu0 %1971
      %1973 = vrot.lane.b32.xlu0 %v1684, 40
      %v1974 = vpop.permute.xlu0 %1973
      %1975 = vrot.lane.b32.xlu0 %v1912, 40
      %v1976 = vpop.permute.xlu0 %1975
      %1977 = vrot.lane.b32.xlu0 %v1914, 40
      %v1978 = vpop.permute.xlu0 %1977
      %v1983 = vunpack.c.l.b16 %v1006
      %v1984 = vunpack.c.l.b16 %v1007
      %v1985 = vunpack.c.l.b16 %v1008
      %v1986 = vunpack.c.l.b16 %v1009
      %v1987 = vpack.c.b16 %v1984, %v1983
      %v1988 = vpack.c.b16 %v1986, %v1985
      %1989 = vrot.lane.b32.xlu0 %v1143, 48
      %v1990 = vpop.permute.xlu0 %1989
      %1991 = vrot.lane.b32.xlu0 %v1144, 48
      %v1992 = vpop.permute.xlu0 %1991
      %1993 = vrot.lane.b32.xlu0 %v1145, 48
      %v1994 = vpop.permute.xlu0 %1993
      %1995 = vrot.lane.b32.xlu0 %v1146, 48
      %v1996 = vpop.permute.xlu0 %1995
      %1997 = vrot.lane.b32.xlu0 %v1147, 48
      %v1998 = vpop.permute.xlu0 %1997
      %1999 = vrot.lane.b32.xlu0 %v1148, 48
      %v2000 = vpop.permute.xlu0 %1999
      %2001 = vrot.lane.b32.xlu0 %v1149, 48
      %v2002 = vpop.permute.xlu0 %2001
      %2003 = vrot.lane.b32.xlu0 %v1150, 48
      %v2004 = vpop.permute.xlu0 %2003
      %2005 = vrot.lane.b32.xlu0 %v1151, 48
      %v2006 = vpop.permute.xlu0 %2005
      %2007 = vrot.lane.b32.xlu0 %v1152, 48
      %v2008 = vpop.permute.xlu0 %2007
      %2009 = vrot.lane.b32.xlu0 %v1153, 48
      %v2010 = vpop.permute.xlu0 %2009
      %2011 = vrot.lane.b32.xlu0 %v1154, 48
      %v2012 = vpop.permute.xlu0 %2011
      %2013 = vrot.lane.b32.xlu0 %v1155, 48
      %v2014 = vpop.permute.xlu0 %2013
      %2015 = vrot.lane.b32.xlu0 %v1156, 48
      %v2016 = vpop.permute.xlu0 %2015
      %2017 = vrot.lane.b32.xlu0 %v1157, 48
      %v2018 = vpop.permute.xlu0 %2017
      %2019 = vrot.lane.b32.xlu0 %v1158, 48
      %v2020 = vpop.permute.xlu0 %2019
      %2021 = vrot.lane.b32.xlu0 %v1159, 48
      %v2022 = vpop.permute.xlu0 %2021
      %2023 = vrot.lane.b32.xlu0 %v1160, 48
      %v2024 = vpop.permute.xlu0 %2023
      %2025 = vrot.lane.b32.xlu0 %v1161, 48
      %v2026 = vpop.permute.xlu0 %2025
      %2027 = vrot.lane.b32.xlu0 %v1162, 48
      %v2028 = vpop.permute.xlu0 %2027
      %2029 = vrot.lane.b32.xlu0 %v1163, 48
      %v2030 = vpop.permute.xlu0 %2029
      %2031 = vrot.lane.b32.xlu0 %v1164, 48
      %v2032 = vpop.permute.xlu0 %2031
      %2033 = vrot.lane.b32.xlu0 %v1165, 48
      %v2034 = vpop.permute.xlu0 %2033
      %2035 = vrot.lane.b32.xlu0 %v1166, 48
      %v2036 = vpop.permute.xlu0 %2035
      %2037 = vrot.lane.b32.xlu0 %v1167, 48
      %v2038 = vpop.permute.xlu0 %2037
      %2039 = vrot.lane.b32.xlu0 %v1168, 48
      %v2040 = vpop.permute.xlu0 %2039
      %2041 = vrot.lane.b32.xlu0 %v1169, 48
      %v2042 = vpop.permute.xlu0 %2041
      %2043 = vrot.lane.b32.xlu0 %v1170, 48
      %v2044 = vpop.permute.xlu0 %2043
      %2045 = vrot.lane.b32.xlu0 %v1757, 48
      %v2046 = vpop.permute.xlu0 %2045
      %2047 = vrot.lane.b32.xlu0 %v1758, 48
      %v2048 = vpop.permute.xlu0 %2047
      %2049 = vrot.lane.b32.xlu0 %v1987, 48
      %v2050 = vpop.permute.xlu0 %2049
      %2051 = vrot.lane.b32.xlu0 %v1988, 48
      %v2052 = vpop.permute.xlu0 %2051
      %v2054 = vunpack.c.l.b16 %v1010
      %v2055 = vpack.c.b16 %v2054, %v2054
      %v2057 = vshrl.u32 %v1987, 16
      %v2059 = vshll.u32 %v1987, 16
      %v2061 = vrot.slane %v2059, 1
      %v2062 = vor.u32 %v2057, %v2061
      %v2064 = vshll.u32 %v1988, 16
      %v2066 = vrot.slane %v2064, 1
      %v2067 = vsel %vm1219, %v2062, %v2066
      %v2068 = vshrl.u32 %v1988, 16
      %v2070 = vor.u32 %v2068, %v2066
      %v2072 = vshll.u32 %v2055, 16
      %v2074 = vrot.slane %v2072, 1
      %v2075 = vsel %vm1219, %v2070, %v2074
      %2076 = vrot.lane.b32.xlu0 %v1271, 56
      %v2077 = vpop.permute.xlu0 %2076
      %2078 = vrot.lane.b32.xlu0 %v1279, 56
      %v2079 = vpop.permute.xlu0 %2078
      %2080 = vrot.lane.b32.xlu0 %v1291, 56
      %v2081 = vpop.permute.xlu0 %2080
      %2082 = vrot.lane.b32.xlu0 %v1299, 56
      %v2083 = vpop.permute.xlu0 %2082
      %2084 = vrot.lane.b32.xlu0 %v1311, 56
      %v2085 = vpop.permute.xlu0 %2084
      %2086 = vrot.lane.b32.xlu0 %v1319, 56
      %v2087 = vpop.permute.xlu0 %2086
      %2088 = vrot.lane.b32.xlu0 %v1331, 56
      %v2089 = vpop.permute.xlu0 %2088
      %2090 = vrot.lane.b32.xlu0 %v1339, 56
      %v2091 = vpop.permute.xlu0 %2090
      %2092 = vrot.lane.b32.xlu0 %v1351, 56
      %v2093 = vpop.permute.xlu0 %2092
      %2094 = vrot.lane.b32.xlu0 %v1359, 56
      %v2095 = vpop.permute.xlu0 %2094
      %2096 = vrot.lane.b32.xlu0 %v1371, 56
      %v2097 = vpop.permute.xlu0 %2096
      %2098 = vrot.lane.b32.xlu0 %v1379, 56
      %v2099 = vpop.permute.xlu0 %2098
      %2100 = vrot.lane.b32.xlu0 %v1391, 56
      %v2101 = vpop.permute.xlu0 %2100
      %2102 = vrot.lane.b32.xlu0 %v1399, 56
      %v2103 = vpop.permute.xlu0 %2102
      %2104 = vrot.lane.b32.xlu0 %v1411, 56
      %v2105 = vpop.permute.xlu0 %2104
      %2106 = vrot.lane.b32.xlu0 %v1419, 56
      %v2107 = vpop.permute.xlu0 %2106
      %2108 = vrot.lane.b32.xlu0 %v1431, 56
      %v2109 = vpop.permute.xlu0 %2108
      %2110 = vrot.lane.b32.xlu0 %v1439, 56
      %v2111 = vpop.permute.xlu0 %2110
      %2112 = vrot.lane.b32.xlu0 %v1451, 56
      %v2113 = vpop.permute.xlu0 %2112
      %2114 = vrot.lane.b32.xlu0 %v1459, 56
      %v2115 = vpop.permute.xlu0 %2114
      %2116 = vrot.lane.b32.xlu0 %v1471, 56
      %v2117 = vpop.permute.xlu0 %2116
      %2118 = vrot.lane.b32.xlu0 %v1479, 56
      %v2119 = vpop.permute.xlu0 %2118
      %2120 = vrot.lane.b32.xlu0 %v1491, 56
      %v2121 = vpop.permute.xlu0 %2120
      %2122 = vrot.lane.b32.xlu0 %v1499, 56
      %v2123 = vpop.permute.xlu0 %2122
      %2124 = vrot.lane.b32.xlu0 %v1511, 56
      %v2125 = vpop.permute.xlu0 %2124
      %2126 = vrot.lane.b32.xlu0 %v1519, 56
      %v2127 = vpop.permute.xlu0 %2126
      %2128 = vrot.lane.b32.xlu0 %v1531, 56
      %v2129 = vpop.permute.xlu0 %2128
      %2130 = vrot.lane.b32.xlu0 %v1539, 56
      %v2131 = vpop.permute.xlu0 %2130
      %2132 = vrot.lane.b32.xlu0 %v1837, 56
      %v2133 = vpop.permute.xlu0 %2132
      %2134 = vrot.lane.b32.xlu0 %v1845, 56
      %v2135 = vpop.permute.xlu0 %2134
      %2136 = vrot.lane.b32.xlu0 %v2067, 56
      %v2137 = vpop.permute.xlu0 %2136
      %2138 = vrot.lane.b32.xlu0 %v2075, 56
      %v2139 = vpop.permute.xlu0 %2138
      %v2140 = vrot.slane %v1987, 1
      %v2141 = vrot.slane %v1988, 1
      %v2142 = vsel %vm1604, %v2140, %v2141
      %v2143 = vrot.slane %v2055, 1
      %v2144 = vsel %vm1604, %v2141, %v2143
      %2145 = vrot.lane.b32.xlu0 %v1617, 64
      %v2146 = vpop.permute.xlu0 %2145
      %2147 = vrot.lane.b32.xlu0 %v1619, 64
      %v2148 = vpop.permute.xlu0 %2147
      %2149 = vrot.lane.b32.xlu0 %v1622, 64
      %v2150 = vpop.permute.xlu0 %2149
      %2151 = vrot.lane.b32.xlu0 %v1624, 64
      %v2152 = vpop.permute.xlu0 %2151
      %2153 = vrot.lane.b32.xlu0 %v1627, 64
      %v2154 = vpop.permute.xlu0 %2153
      %2155 = vrot.lane.b32.xlu0 %v1629, 64
      %v2156 = vpop.permute.xlu0 %2155
      %2157 = vrot.lane.b32.xlu0 %v1632, 64
      %v2158 = vpop.permute.xlu0 %2157
      %2159 = vrot.lane.b32.xlu0 %v1634, 64
      %v2160 = vpop.permute.xlu0 %2159
      %2161 = vrot.lane.b32.xlu0 %v1637, 64
      %v2162 = vpop.permute.xlu0 %2161
      %2163 = vrot.lane.b32.xlu0 %v1639, 64
      %v2164 = vpop.permute.xlu0 %2163
      %2165 = vrot.lane.b32.xlu0 %v1642, 64
      %v2166 = vpop.permute.xlu0 %2165
      %2167 = vrot.lane.b32.xlu0 %v1644, 64
      %v2168 = vpop.permute.xlu0 %2167
      %2169 = vrot.lane.b32.xlu0 %v1647, 64
      %v2170 = vpop.permute.xlu0 %2169
      %2171 = vrot.lane.b32.xlu0 %v1649, 64
      %v2172 = vpop.permute.xlu0 %2171
      %2173 = vrot.lane.b32.xlu0 %v1652, 64
      %v2174 = vpop.permute.xlu0 %2173
      %2175 = vrot.lane.b32.xlu0 %v1654, 64
      %v2176 = vpop.permute.xlu0 %2175
      %2177 = vrot.lane.b32.xlu0 %v1657, 64
      %v2178 = vpop.permute.xlu0 %2177
      %2179 = vrot.lane.b32.xlu0 %v1659, 64
      %v2180 = vpop.permute.xlu0 %2179
      %2181 = vrot.lane.b32.xlu0 %v1662, 64
      %v2182 = vpop.permute.xlu0 %2181
      %2183 = vrot.lane.b32.xlu0 %v1664, 64
      %v2184 = vpop.permute.xlu0 %2183
      %2185 = vrot.lane.b32.xlu0 %v1667, 64
      %v2186 = vpop.permute.xlu0 %2185
      %2187 = vrot.lane.b32.xlu0 %v1669, 64
      %v2188 = vpop.permute.xlu0 %2187
      %2189 = vrot.lane.b32.xlu0 %v1672, 64
      %v2190 = vpop.permute.xlu0 %2189
      %2191 = vrot.lane.b32.xlu0 %v1674, 64
      %v2192 = vpop.permute.xlu0 %2191
      %2193 = vrot.lane.b32.xlu0 %v1677, 64
      %v2194 = vpop.permute.xlu0 %2193
      %2195 = vrot.lane.b32.xlu0 %v1679, 64
      %v2196 = vpop.permute.xlu0 %2195
      %2197 = vrot.lane.b32.xlu0 %v1682, 64
      %v2198 = vpop.permute.xlu0 %2197
      %2199 = vrot.lane.b32.xlu0 %v1684, 64
      %v2200 = vpop.permute.xlu0 %2199
      %2201 = vrot.lane.b32.xlu0 %v1912, 64
      %v2202 = vpop.permute.xlu0 %2201
      %2203 = vrot.lane.b32.xlu0 %v1914, 64
      %v2204 = vpop.permute.xlu0 %2203
      %2205 = vrot.lane.b32.xlu0 %v2142, 64
      %v2206 = vpop.permute.xlu0 %2205
      %2207 = vrot.lane.b32.xlu0 %v2144, 64
      %v2208 = vpop.permute.xlu0 %2207
      %vm2209 = vcmask 64512
      %v2211 = vsel %vm2209, %v1139, %v1541
      %v2213 = vsel %vm2209, %v1140, %v1543
      %v2215 = vsel %vm2209, %v1141, %v1545
      %v2217 = vsel %vm2209, %v1142, %v1547
      %v2219 = vsel %vm2209, %v1143, %v1549
      %v2221 = vsel %vm2209, %v1144, %v1551
      %v2223 = vsel %vm2209, %v1145, %v1553
      %v2225 = vsel %vm2209, %v1146, %v1555
      %v2227 = vsel %vm2209, %v1147, %v1557
      %v2229 = vsel %vm2209, %v1148, %v1559
      %v2231 = vsel %vm2209, %v1149, %v1561
      %v2233 = vsel %vm2209, %v1150, %v1563
      %v2235 = vsel %vm2209, %v1151, %v1565
      %v2237 = vsel %vm2209, %v1152, %v1567
      %v2239 = vsel %vm2209, %v1153, %v1569
      %v2241 = vsel %vm2209, %v1154, %v1571
      %v2243 = vsel %vm2209, %v1155, %v1573
      %v2245 = vsel %vm2209, %v1156, %v1575
      %v2247 = vsel %vm2209, %v1157, %v1577
      %v2249 = vsel %vm2209, %v1158, %v1579
      %v2251 = vsel %vm2209, %v1159, %v1581
      %v2253 = vsel %vm2209, %v1160, %v1583
      %v2255 = vsel %vm2209, %v1161, %v1585
      %v2257 = vsel %vm2209, %v1162, %v1587
      %v2259 = vsel %vm2209, %v1163, %v1589
      %v2261 = vsel %vm2209, %v1164, %v1591
      %v2263 = vsel %vm2209, %v1165, %v1593
      %v2265 = vsel %vm2209, %v1166, %v1595
      %v2267 = vsel %vm2209, %v1167, %v1597
      %v2269 = vsel %vm2209, %v1168, %v1599
      %v2271 = vsel %vm2209, %v1169, %v1601
      %v2273 = vsel %vm2209, %v1170, %v1603
      %vm2274 = vcmask 130048
      %v2276 = vsel %vm2274, %v2211, %v1686
      %v2278 = vsel %vm2274, %v2213, %v1688
      %v2280 = vsel %vm2274, %v2215, %v1690
      %v2282 = vsel %vm2274, %v2217, %v1692
      %v2284 = vsel %vm2274, %v2219, %v1694
      %v2286 = vsel %vm2274, %v2221, %v1696
      %v2288 = vsel %vm2274, %v2223, %v1698
      %v2290 = vsel %vm2274, %v2225, %v1700
      %v2292 = vsel %vm2274, %v2227, %v1702
      %v2294 = vsel %vm2274, %v2229, %v1704
      %v2296 = vsel %vm2274, %v2231, %v1706
      %v2298 = vsel %vm2274, %v2233, %v1708
      %v2300 = vsel %vm2274, %v2235, %v1710
      %v2302 = vsel %vm2274, %v2237, %v1712
      %v2304 = vsel %vm2274, %v2239, %v1714
      %v2306 = vsel %vm2274, %v2241, %v1716
      %v2308 = vsel %vm2274, %v2243, %v1718
      %v2310 = vsel %vm2274, %v2245, %v1720
      %v2312 = vsel %vm2274, %v2247, %v1722
      %v2314 = vsel %vm2274, %v2249, %v1724
      %v2316 = vsel %vm2274, %v2251, %v1726
      %v2318 = vsel %vm2274, %v2253, %v1728
      %v2320 = vsel %vm2274, %v2255, %v1730
      %v2322 = vsel %vm2274, %v2257, %v1732
      %v2324 = vsel %vm2274, %v2259, %v1734
      %v2326 = vsel %vm2274, %v2261, %v1736
      %v2328 = vsel %vm2274, %v2263, %v1738
      %v2330 = vsel %vm2274, %v2265, %v1740
      %v2332 = vsel %vm2274, %v2267, %v1742
      %v2334 = vsel %vm2274, %v2269, %v1744
      %v2336 = vsel %vm2274, %v2271, %v1746
      %v2338 = vsel %vm2274, %v2273, %v1748
      %vm2339 = vcmask 195584
      %v2341 = vsel %vm2339, %v2276, %v1760
      %v2343 = vsel %vm2339, %v2278, %v1762
      %v2345 = vsel %vm2339, %v2280, %v1764
      %v2347 = vsel %vm2339, %v2282, %v1766
      %v2349 = vsel %vm2339, %v2284, %v1768
      %v2351 = vsel %vm2339, %v2286, %v1770
      %v2353 = vsel %vm2339, %v2288, %v1772
      %v2355 = vsel %vm2339, %v2290, %v1774
      %v2357 = vsel %vm2339, %v2292, %v1776
      %v2359 = vsel %vm2339, %v2294, %v1778
      %v2361 = vsel %vm2339, %v2296, %v1780
      %v2363 = vsel %vm2339, %v2298, %v1782
      %v2365 = vsel %vm2339, %v2300, %v1784
      %v2367 = vsel %vm2339, %v2302, %v1786
      %v2369 = vsel %vm2339, %v2304, %v1788
      %v2371 = vsel %vm2339, %v2306, %v1790
      %v2373 = vsel %vm2339, %v2308, %v1792
      %v2375 = vsel %vm2339, %v2310, %v1794
      %v2377 = vsel %vm2339, %v2312, %v1796
      %v2379 = vsel %vm2339, %v2314, %v1798
      %v2381 = vsel %vm2339, %v2316, %v1800
      %v2383 = vsel %vm2339, %v2318, %v1802
      %v2385 = vsel %vm2339, %v2320, %v1804
      %v2387 = vsel %vm2339, %v2322, %v1806
      %v2389 = vsel %vm2339, %v2324, %v1808
      %v2391 = vsel %vm2339, %v2326, %v1810
      %v2393 = vsel %vm2339, %v2328, %v1812
      %v2395 = vsel %vm2339, %v2330, %v1814
      %v2397 = vsel %vm2339, %v2332, %v1816
      %v2399 = vsel %vm2339, %v2334, %v1818
      %v2401 = vsel %vm2339, %v2336, %v1820
      %v2403 = vsel %vm2339, %v2338, %v1822
      %vm2404 = vcmask 261120
      %v2406 = vsel %vm2404, %v2341, %v1847
      %v2408 = vsel %vm2404, %v2343, %v1849
      %v2410 = vsel %vm2404, %v2345, %v1851
      %v2412 = vsel %vm2404, %v2347, %v1853
      %v2414 = vsel %vm2404, %v2349, %v1855
      %v2416 = vsel %vm2404, %v2351, %v1857
      %v2418 = vsel %vm2404, %v2353, %v1859
      %v2420 = vsel %vm2404, %v2355, %v1861
      %v2422 = vsel %vm2404, %v2357, %v1863
      %v2424 = vsel %vm2404, %v2359, %v1865
      %v2426 = vsel %vm2404, %v2361, %v1867
      %v2428 = vsel %vm2404, %v2363, %v1869
      %v2430 = vsel %vm2404, %v2365, %v1871
      %v2432 = vsel %vm2404, %v2367, %v1873
      %v2434 = vsel %vm2404, %v2369, %v1875
      %v2436 = vsel %vm2404, %v2371, %v1877
      %v2438 = vsel %vm2404, %v2373, %v1879
      %v2440 = vsel %vm2404, %v2375, %v1881
      %v2442 = vsel %vm2404, %v2377, %v1883
      %v2444 = vsel %vm2404, %v2379, %v1885
      %v2446 = vsel %vm2404, %v2381, %v1887
      %v2448 = vsel %vm2404, %v2383, %v1889
      %v2450 = vsel %vm2404, %v2385, %v1891
      %v2452 = vsel %vm2404, %v2387, %v1893
      %v2454 = vsel %vm2404, %v2389, %v1895
      %v2456 = vsel %vm2404, %v2391, %v1897
      %v2458 = vsel %vm2404, %v2393, %v1899
      %v2460 = vsel %vm2404, %v2395, %v1901
      %v2462 = vsel %vm2404, %v2397, %v1903
      %v2464 = vsel %vm2404, %v2399, %v1905
      %v2466 = vsel %vm2404, %v2401, %v1907
      %v2468 = vsel %vm2404, %v2403, %v1909
      %vm2469 = vcmask 326656
      %v2471 = vsel %vm2469, %v2406, %v1916
      %v2473 = vsel %vm2469, %v2408, %v1918
      %v2475 = vsel %vm2469, %v2410, %v1920
      %v2477 = vsel %vm2469, %v2412, %v1922
      %v2479 = vsel %vm2469, %v2414, %v1924
      %v2481 = vsel %vm2469, %v2416, %v1926
      %v2483 = vsel %vm2469, %v2418, %v1928
      %v2485 = vsel %vm2469, %v2420, %v1930
      %v2487 = vsel %vm2469, %v2422, %v1932
      %v2489 = vsel %vm2469, %v2424, %v1934
      %v2491 = vsel %vm2469, %v2426, %v1936
      %v2493 = vsel %vm2469, %v2428, %v1938
      %v2495 = vsel %vm2469, %v2430, %v1940
      %v2497 = vsel %vm2469, %v2432, %v1942
      %v2499 = vsel %vm2469, %v2434, %v1944
      %v2501 = vsel %vm2469, %v2436, %v1946
      %v2503 = vsel %vm2469, %v2438, %v1948
      %v2505 = vsel %vm2469, %v2440, %v1950
      %v2507 = vsel %vm2469, %v2442, %v1952
      %v2509 = vsel %vm2469, %v2444, %v1954
      %v2511 = vsel %vm2469, %v2446, %v1956
      %v2513 = vsel %vm2469, %v2448, %v1958
      %v2515 = vsel %vm2469, %v2450, %v1960
      %v2517 = vsel %vm2469, %v2452, %v1962
      %v2519 = vsel %vm2469, %v2454, %v1964
      %v2521 = vsel %vm2469, %v2456, %v1966
      %v2523 = vsel %vm2469, %v2458, %v1968
      %v2525 = vsel %vm2469, %v2460, %v1970
      %v2527 = vsel %vm2469, %v2462, %v1972
      %v2529 = vsel %vm2469, %v2464, %v1974
      %v2531 = vsel %vm2469, %v2466, %v1976
      %v2533 = vsel %vm2469, %v2468, %v1978
      %vm2534 = vcmask 392192
      %v2536 = vsel %vm2534, %v2471, %v1990
      %v2538 = vsel %vm2534, %v2473, %v1992
      %v2540 = vsel %vm2534, %v2475, %v1994
      %v2542 = vsel %vm2534, %v2477, %v1996
      %v2544 = vsel %vm2534, %v2479, %v1998
      %v2546 = vsel %vm2534, %v2481, %v2000
      %v2548 = vsel %vm2534, %v2483, %v2002
      %v2550 = vsel %vm2534, %v2485, %v2004
      %v2552 = vsel %vm2534, %v2487, %v2006
      %v2554 = vsel %vm2534, %v2489, %v2008
      %v2556 = vsel %vm2534, %v2491, %v2010
      %v2558 = vsel %vm2534, %v2493, %v2012
      %v2560 = vsel %vm2534, %v2495, %v2014
      %v2562 = vsel %vm2534, %v2497, %v2016
      %v2564 = vsel %vm2534, %v2499, %v2018
      %v2566 = vsel %vm2534, %v2501, %v2020
      %v2568 = vsel %vm2534, %v2503, %v2022
      %v2570 = vsel %vm2534, %v2505, %v2024
      %v2572 = vsel %vm2534, %v2507, %v2026
      %v2574 = vsel %vm2534, %v2509, %v2028
      %v2576 = vsel %vm2534, %v2511, %v2030
      %v2578 = vsel %vm2534, %v2513, %v2032
      %v2580 = vsel %vm2534, %v2515, %v2034
      %v2582 = vsel %vm2534, %v2517, %v2036
      %v2584 = vsel %vm2534, %v2519, %v2038
      %v2586 = vsel %vm2534, %v2521, %v2040
      %v2588 = vsel %vm2534, %v2523, %v2042
      %v2590 = vsel %vm2534, %v2525, %v2044
      %v2592 = vsel %vm2534, %v2527, %v2046
      %v2594 = vsel %vm2534, %v2529, %v2048
      %v2596 = vsel %vm2534, %v2531, %v2050
      %v2598 = vsel %vm2534, %v2533, %v2052
      %vm2599 = vcmask 457728
      %v2601 = vsel %vm2599, %v2536, %v2077
      %v2603 = vsel %vm2599, %v2538, %v2079
      %v2605 = vsel %vm2599, %v2540, %v2081
      %v2607 = vsel %vm2599, %v2542, %v2083
      %v2609 = vsel %vm2599, %v2544, %v2085
      %v2611 = vsel %vm2599, %v2546, %v2087
      %v2613 = vsel %vm2599, %v2548, %v2089
      %v2615 = vsel %vm2599, %v2550, %v2091
      %v2617 = vsel %vm2599, %v2552, %v2093
      %v2619 = vsel %vm2599, %v2554, %v2095
      %v2621 = vsel %vm2599, %v2556, %v2097
      %v2623 = vsel %vm2599, %v2558, %v2099
      %v2625 = vsel %vm2599, %v2560, %v2101
      %v2627 = vsel %vm2599, %v2562, %v2103
      %v2629 = vsel %vm2599, %v2564, %v2105
      %v2631 = vsel %vm2599, %v2566, %v2107
      %v2633 = vsel %vm2599, %v2568, %v2109
      %v2635 = vsel %vm2599, %v2570, %v2111
      %v2637 = vsel %vm2599, %v2572, %v2113
      %v2639 = vsel %vm2599, %v2574, %v2115
      %v2641 = vsel %vm2599, %v2576, %v2117
      %v2643 = vsel %vm2599, %v2578, %v2119
      %v2645 = vsel %vm2599, %v2580, %v2121
      %v2647 = vsel %vm2599, %v2582, %v2123
      %v2649 = vsel %vm2599, %v2584, %v2125
      %v2651 = vsel %vm2599, %v2586, %v2127
      %v2653 = vsel %vm2599, %v2588, %v2129
      %v2655 = vsel %vm2599, %v2590, %v2131
      %v2657 = vsel %vm2599, %v2592, %v2133
      %v2659 = vsel %vm2599, %v2594, %v2135
      %v2661 = vsel %vm2599, %v2596, %v2137
      %v2663 = vsel %vm2599, %v2598, %v2139
      %vm2664 = vcmask 523264
      %v2666 = vsel %vm2664, %v2601, %v2146
      %v2668 = vsel %vm2664, %v2603, %v2148
      %v2670 = vsel %vm2664, %v2605, %v2150
      %v2672 = vsel %vm2664, %v2607, %v2152
      %v2674 = vsel %vm2664, %v2609, %v2154
      %v2676 = vsel %vm2664, %v2611, %v2156
      %v2678 = vsel %vm2664, %v2613, %v2158
      %v2680 = vsel %vm2664, %v2615, %v2160
      %v2682 = vsel %vm2664, %v2617, %v2162
      %v2684 = vsel %vm2664, %v2619, %v2164
      %v2686 = vsel %vm2664, %v2621, %v2166
      %v2688 = vsel %vm2664, %v2623, %v2168
      %v2690 = vsel %vm2664, %v2625, %v2170
      %v2692 = vsel %vm2664, %v2627, %v2172
      %v2694 = vsel %vm2664, %v2629, %v2174
      %v2696 = vsel %vm2664, %v2631, %v2176
      %v2698 = vsel %vm2664, %v2633, %v2178
      %v2700 = vsel %vm2664, %v2635, %v2180
      %v2702 = vsel %vm2664, %v2637, %v2182
      %v2704 = vsel %vm2664, %v2639, %v2184
      %v2706 = vsel %vm2664, %v2641, %v2186
      %v2708 = vsel %vm2664, %v2643, %v2188
      %v2710 = vsel %vm2664, %v2645, %v2190
      %v2712 = vsel %vm2664, %v2647, %v2192
      %v2714 = vsel %vm2664, %v2649, %v2194
      %v2716 = vsel %vm2664, %v2651, %v2196
      %v2718 = vsel %vm2664, %v2653, %v2198
      %v2720 = vsel %vm2664, %v2655, %v2200
      %v2722 = vsel %vm2664, %v2657, %v2202
      %v2724 = vsel %vm2664, %v2659, %v2204
      %v2726 = vsel %vm2664, %v2661, %v2206
      %v2728 = vsel %vm2664, %v2663, %v2208
      %v2729 = vld [vmem:[%s2] sm:$0xf]
      %v2730 = vld [vmem:[%s2 + $0x4] sm:$0xf]
      %v2731 = vld [vmem:[%s2 + $0x8] sm:$0xf]
      %v2732 = vld [vmem:[%s2 + $0xc] sm:$0xf]
      %v2733 = vld [vmem:[%s2 + $0x10] sm:$0xf]
      %v2734 = vld [vmem:[%s2 + $0x14] sm:$0xf]
      %v2735 = vld [vmem:[%s2 + $0x18] sm:$0xf]
      %v2736 = vld [vmem:[%s2 + $0x1c] sm:$0xf]
      %v2737 = vld [vmem:[%s2 + $0x20] sm:$0xf]
      %v2738 = vld [vmem:[%s3] sm:$0x1]
      %v2740 = vperm.slane %v2738, 0
      %v2751 = vunpack.c.l.b16 %v2729
      %v2752 = vunpack.c.l.b16 %v2730
      %v2753 = vunpack.c.l.b16 %v2731
      %v2754 = vunpack.c.l.b16 %v2732
      %v2755 = vunpack.c.l.b16 %v2733
      %v2756 = vunpack.c.l.b16 %v2734
      %v2757 = vunpack.c.l.b16 %v2735
      %v2758 = vunpack.c.l.b16 %v2736
      %v2759 = vunpack.c.l.b16 %v2737
      %v2760 = vpack.c.b16 %v2752, %v2751
      %v2761 = vpack.c.b16 %v2754, %v2753
      %v2762 = vpack.c.b16 %v2756, %v2755
      %v2763 = vpack.c.b16 %v2758, %v2757
      %v2764 = vpack.c.b16 %v2759, %v2759
      %vm2769 = vcmask 588800
      %v2770 = vsel %vm2769, %v2666, 0
      %v2772 = vsel %vm2769, %v2668, 0
      %v2774 = vsel %vm2769, %v2670, 0
      %v2776 = vsel %vm2769, %v2672, 0
      %v2778 = vsel %vm2769, %v2674, 0
      %v2780 = vsel %vm2769, %v2676, 0
      %v2782 = vsel %vm2769, %v2678, 0
      %v2784 = vsel %vm2769, %v2680, 0
      %v2786 = vsel %vm2769, %v2682, 0
      %v2788 = vsel %vm2769, %v2684, 0
      %v2790 = vsel %vm2769, %v2686, 0
      %v2792 = vsel %vm2769, %v2688, 0
      %v2794 = vsel %vm2769, %v2690, 0
      %v2796 = vsel %vm2769, %v2692, 0
      %v2798 = vsel %vm2769, %v2694, 0
      %v2800 = vsel %vm2769, %v2696, 0
      %v2802 = vsel %vm2769, %v2698, 0
      %v2804 = vsel %vm2769, %v2700, 0
      %v2806 = vsel %vm2769, %v2702, 0
      %v2808 = vsel %vm2769, %v2704, 0
      %v2810 = vsel %vm2769, %v2706, 0
      %v2812 = vsel %vm2769, %v2708, 0
      %v2814 = vsel %vm2769, %v2710, 0
      %v2816 = vsel %vm2769, %v2712, 0
      %v2818 = vsel %vm2769, %v2714, 0
      %v2820 = vsel %vm2769, %v2716, 0
      %v2822 = vsel %vm2769, %v2718, 0
      %v2824 = vsel %vm2769, %v2720, 0
      %v2826 = vsel %vm2769, %v2722, 0
      %v2828 = vsel %vm2769, %v2724, 0
      %v2830 = vsel %vm2769, %v2726, 0
      %v2832 = vsel %vm2769, %v2728, 0
      %vm2834 = vcmask 1043456
      %v2836 = vsel %vm2834, %v2764, 0
      %2838 = vmatpush.bf16.msra.mxu0 0
      %2839 = vmatpush.bf16.msra.mxu0 0
      %2840 = vmatpush.bf16.msra.mxu0 0
      %2841 = vmatpush.bf16.msra.mxu0 %v2836
      %2842 = vmatpush.bf16.msra.mxu0 %v2763
      %2843 = vmatpush.bf16.msra.mxu0 %v2762
      %2844 = vmatpush.bf16.msra.mxu0 %v2761
      %2845 = vmatpush.bf16.msra.mxu0 %v2760
      %2846 = vmatmul.bf16.gmra.mxu0 %v2770
      %v2847 = vpop.f32.mrf.mxu0
      %v2848 = vadd.f32 %v2740, %v2847
      %v2849 = vpop.f32.mrf.mxu0
      %v2850 = vadd.f32 %v2740, %v2849
      %2851 = vmatmul.bf16.gmra.mxu0 %v2772
      %v2852 = vpop.f32.mrf.mxu0
      %v2853 = vadd.f32 %v2740, %v2852
      %v2854 = vpop.f32.mrf.mxu0
      %v2855 = vadd.f32 %v2740, %v2854
      %2856 = vmatmul.bf16.gmra.mxu0 %v2774
      %v2857 = vpop.f32.mrf.mxu0
      %v2858 = vadd.f32 %v2740, %v2857
      %v2859 = vpop.f32.mrf.mxu0
      %v2860 = vadd.f32 %v2740, %v2859
      %2861 = vmatmul.bf16.gmra.mxu0 %v2776
      %v2862 = vpop.f32.mrf.mxu0
      %v2863 = vadd.f32 %v2740, %v2862
      %v2864 = vpop.f32.mrf.mxu0
      %v2865 = vadd.f32 %v2740, %v2864
      %2866 = vmatmul.bf16.gmra.mxu0 %v2778
      %v2867 = vpop.f32.mrf.mxu0
      %v2868 = vadd.f32 %v2740, %v2867
      %v2869 = vpop.f32.mrf.mxu0
      %v2870 = vadd.f32 %v2740, %v2869
      %2871 = vmatmul.bf16.gmra.mxu0 %v2780
      %v2872 = vpop.f32.mrf.mxu0
      %v2873 = vadd.f32 %v2740, %v2872
      %v2874 = vpop.f32.mrf.mxu0
      %v2875 = vadd.f32 %v2740, %v2874
      %2876 = vmatmul.bf16.gmra.mxu0 %v2782
      %v2877 = vpop.f32.mrf.mxu0
      %v2878 = vadd.f32 %v2740, %v2877
      %v2879 = vpop.f32.mrf.mxu0
      %v2880 = vadd.f32 %v2740, %v2879
      %2881 = vmatmul.bf16.gmra.mxu0 %v2784
      %v2882 = vpop.f32.mrf.mxu0
      %v2883 = vadd.f32 %v2740, %v2882
      %v2884 = vpop.f32.mrf.mxu0
      %v2885 = vadd.f32 %v2740, %v2884
      %2886 = vmatmul.bf16.gmra.mxu0 %v2786
      %v2887 = vpop.f32.mrf.mxu0
      %v2888 = vadd.f32 %v2740, %v2887
      %v2889 = vpop.f32.mrf.mxu0
      %v2890 = vadd.f32 %v2740, %v2889
      %2891 = vmatmul.bf16.gmra.mxu0 %v2788
      %v2892 = vpop.f32.mrf.mxu0
      %v2893 = vadd.f32 %v2740, %v2892
      %v2894 = vpop.f32.mrf.mxu0
      %v2895 = vadd.f32 %v2740, %v2894
      %2896 = vmatmul.bf16.gmra.mxu0 %v2790
      %v2897 = vpop.f32.mrf.mxu0
      %v2898 = vadd.f32 %v2740, %v2897
      %v2899 = vpop.f32.mrf.mxu0
      %v2900 = vadd.f32 %v2740, %v2899
      %2901 = vmatmul.bf16.gmra.mxu0 %v2792
      %v2902 = vpop.f32.mrf.mxu0
      %v2903 = vadd.f32 %v2740, %v2902
      %v2904 = vpop.f32.mrf.mxu0
      %v2905 = vadd.f32 %v2740, %v2904
      %2906 = vmatmul.bf16.gmra.mxu0 %v2794
      %v2907 = vpop.f32.mrf.mxu0
      %v2908 = vadd.f32 %v2740, %v2907
      %v2909 = vpop.f32.mrf.mxu0
      %v2910 = vadd.f32 %v2740, %v2909
      %2911 = vmatmul.bf16.gmra.mxu0 %v2796
      %v2912 = vpop.f32.mrf.mxu0
      %v2913 = vadd.f32 %v2740, %v2912
      %v2914 = vpop.f32.mrf.mxu0
      %v2915 = vadd.f32 %v2740, %v2914
      %2916 = vmatmul.bf16.gmra.mxu0 %v2798
      %v2917 = vpop.f32.mrf.mxu0
      %v2918 = vadd.f32 %v2740, %v2917
      %v2919 = vpop.f32.mrf.mxu0
      %v2920 = vadd.f32 %v2740, %v2919
      %2921 = vmatmul.bf16.gmra.mxu0 %v2800
      %v2922 = vpop.f32.mrf.mxu0
      %v2923 = vadd.f32 %v2740, %v2922
      %v2924 = vpop.f32.mrf.mxu0
      %v2925 = vadd.f32 %v2740, %v2924
      %2926 = vmatmul.bf16.gmra.mxu0 %v2802
      %v2927 = vpop.f32.mrf.mxu0
      %v2928 = vadd.f32 %v2740, %v2927
      %v2929 = vpop.f32.mrf.mxu0
      %v2930 = vadd.f32 %v2740, %v2929
      %2931 = vmatmul.bf16.gmra.mxu0 %v2804
      %v2932 = vpop.f32.mrf.mxu0
      %v2933 = vadd.f32 %v2740, %v2932
      %v2934 = vpop.f32.mrf.mxu0
      %v2935 = vadd.f32 %v2740, %v2934
      %2936 = vmatmul.bf16.gmra.mxu0 %v2806
      %v2937 = vpop.f32.mrf.mxu0
      %v2938 = vadd.f32 %v2740, %v2937
      %v2939 = vpop.f32.mrf.mxu0
      %v2940 = vadd.f32 %v2740, %v2939
      %2941 = vmatmul.bf16.gmra.mxu0 %v2808
      %v2942 = vpop.f32.mrf.mxu0
      %v2943 = vadd.f32 %v2740, %v2942
      %v2944 = vpop.f32.mrf.mxu0
      %v2945 = vadd.f32 %v2740, %v2944
      %2946 = vmatmul.bf16.gmra.mxu0 %v2810
      %v2947 = vpop.f32.mrf.mxu0
      %v2948 = vadd.f32 %v2740, %v2947
      %v2949 = vpop.f32.mrf.mxu0
      %v2950 = vadd.f32 %v2740, %v2949
      %2951 = vmatmul.bf16.gmra.mxu0 %v2812
      %v2952 = vpop.f32.mrf.mxu0
      %v2953 = vadd.f32 %v2740, %v2952
      %v2954 = vpop.f32.mrf.mxu0
      %v2955 = vadd.f32 %v2740, %v2954
      %2956 = vmatmul.bf16.gmra.mxu0 %v2814
      %v2957 = vpop.f32.mrf.mxu0
      %v2958 = vadd.f32 %v2740, %v2957
      %v2959 = vpop.f32.mrf.mxu0
      %v2960 = vadd.f32 %v2740, %v2959
      %2961 = vmatmul.bf16.gmra.mxu0 %v2816
      %v2962 = vpop.f32.mrf.mxu0
      %v2963 = vadd.f32 %v2740, %v2962
      %v2964 = vpop.f32.mrf.mxu0
      %v2965 = vadd.f32 %v2740, %v2964
      %2966 = vmatmul.bf16.gmra.mxu0 %v2818
      %v2967 = vpop.f32.mrf.mxu0
      %v2968 = vadd.f32 %v2740, %v2967
      %v2969 = vpop.f32.mrf.mxu0
      %v2970 = vadd.f32 %v2740, %v2969
      %2971 = vmatmul.bf16.gmra.mxu0 %v2820
      %v2972 = vpop.f32.mrf.mxu0
      %v2973 = vadd.f32 %v2740, %v2972
      %v2974 = vpop.f32.mrf.mxu0
      %v2975 = vadd.f32 %v2740, %v2974
      %2976 = vmatmul.bf16.gmra.mxu0 %v2822
      %v2977 = vpop.f32.mrf.mxu0
      %v2978 = vadd.f32 %v2740, %v2977
      %v2979 = vpop.f32.mrf.mxu0
      %v2980 = vadd.f32 %v2740, %v2979
      %2981 = vmatmul.bf16.gmra.mxu0 %v2824
      %v2982 = vpop.f32.mrf.mxu0
      %v2983 = vadd.f32 %v2740, %v2982
      %v2984 = vpop.f32.mrf.mxu0
      %v2985 = vadd.f32 %v2740, %v2984
      %2986 = vmatmul.bf16.gmra.mxu0 %v2826
      %v2987 = vpop.f32.mrf.mxu0
      %v2988 = vadd.f32 %v2740, %v2987
      %v2989 = vpop.f32.mrf.mxu0
      %v2990 = vadd.f32 %v2740, %v2989
      %2991 = vmatmul.bf16.gmra.mxu0 %v2828
      %v2992 = vpop.f32.mrf.mxu0
      %v2993 = vadd.f32 %v2740, %v2992
      %v2994 = vpop.f32.mrf.mxu0
      %v2995 = vadd.f32 %v2740, %v2994
      %2996 = vmatmul.bf16.gmra.mxu0 %v2830
      %v2997 = vpop.f32.mrf.mxu0
      %v2998 = vadd.f32 %v2740, %v2997
      %v2999 = vpop.f32.mrf.mxu0
      %v3000 = vadd.f32 %v2740, %v2999
      %3001 = vmatmul.bf16.gmra.mxu0 %v2832
      %v3002 = vpop.f32.mrf.mxu0
      %v3003 = vadd.f32 %v2740, %v3002
      %v3004 = vpop.f32.mrf.mxu0
      %v3005 = vadd.f32 %v2740, %v3004
      %3006 = vdwg.mxu0
      %vm3007 = vcmp.ge.f32.partialorder %v2848, 0.0
      %vm3008 = vcmp.ge.f32.partialorder %v2850, 0.0
      %vm3009 = vcmp.ge.f32.partialorder %v2853, 0.0
      %vm3010 = vcmp.ge.f32.partialorder %v2855, 0.0
      %vm3011 = vcmp.ge.f32.partialorder %v2858, 0.0
      %vm3012 = vcmp.ge.f32.partialorder %v2860, 0.0
      %vm3013 = vcmp.ge.f32.partialorder %v2863, 0.0
      %vm3014 = vcmp.ge.f32.partialorder %v2865, 0.0
      %vm3015 = vcmp.ge.f32.partialorder %v2868, 0.0
      %vm3016 = vcmp.ge.f32.partialorder %v2870, 0.0
      %vm3017 = vcmp.ge.f32.partialorder %v2873, 0.0
      %vm3018 = vcmp.ge.f32.partialorder %v2875, 0.0
      %vm3019 = vcmp.ge.f32.partialorder %v2878, 0.0
      %vm3020 = vcmp.ge.f32.partialorder %v2880, 0.0
      %vm3021 = vcmp.ge.f32.partialorder %v2883, 0.0
      %vm3022 = vcmp.ge.f32.partialorder %v2885, 0.0
      %vm3023 = vcmp.ge.f32.partialorder %v2888, 0.0
      %vm3024 = vcmp.ge.f32.partialorder %v2890, 0.0
      %vm3025 = vcmp.ge.f32.partialorder %v2893, 0.0
      %vm3026 = vcmp.ge.f32.partialorder %v2895, 0.0
      %vm3027 = vcmp.ge.f32.partialorder %v2898, 0.0
      %vm3028 = vcmp.ge.f32.partialorder %v2900, 0.0
      %vm3029 = vcmp.ge.f32.partialorder %v2903, 0.0
      %vm3030 = vcmp.ge.f32.partialorder %v2905, 0.0
      %vm3031 = vcmp.ge.f32.partialorder %v2908, 0.0
      %vm3032 = vcmp.ge.f32.partialorder %v2910, 0.0
      %vm3033 = vcmp.ge.f32.partialorder %v2913, 0.0
      %vm3034 = vcmp.ge.f32.partialorder %v2915, 0.0
      %vm3035 = vcmp.ge.f32.partialorder %v2918, 0.0
      %vm3036 = vcmp.ge.f32.partialorder %v2920, 0.0
      %vm3037 = vcmp.ge.f32.partialorder %v2923, 0.0
      %vm3038 = vcmp.ge.f32.partialorder %v2925, 0.0
      %vm3039 = vcmp.ge.f32.partialorder %v2928, 0.0
      %vm3040 = vcmp.ge.f32.partialorder %v2930, 0.0
      %vm3041 = vcmp.ge.f32.partialorder %v2933, 0.0
      %vm3042 = vcmp.ge.f32.partialorder %v2935, 0.0
      %vm3043 = vcmp.ge.f32.partialorder %v2938, 0.0
      %vm3044 = vcmp.ge.f32.partialorder %v2940, 0.0
      %vm3045 = vcmp.ge.f32.partialorder %v2943, 0.0
      %vm3046 = vcmp.ge.f32.partialorder %v2945, 0.0
      %vm3047 = vcmp.ge.f32.partialorder %v2948, 0.0
      %vm3048 = vcmp.ge.f32.partialorder %v2950, 0.0
      %vm3049 = vcmp.ge.f32.partialorder %v2953, 0.0
      %vm3050 = vcmp.ge.f32.partialorder %v2955, 0.0
      %vm3051 = vcmp.ge.f32.partialorder %v2958, 0.0
      %vm3052 = vcmp.ge.f32.partialorder %v2960, 0.0
      %vm3053 = vcmp.ge.f32.partialorder %v2963, 0.0
      %vm3054 = vcmp.ge.f32.partialorder %v2965, 0.0
      %vm3055 = vcmp.ge.f32.partialorder %v2968, 0.0
      %vm3056 = vcmp.ge.f32.partialorder %v2970, 0.0
      %vm3057 = vcmp.ge.f32.partialorder %v2973, 0.0
      %vm3058 = vcmp.ge.f32.partialorder %v2975, 0.0
      %vm3059 = vcmp.ge.f32.partialorder %v2978, 0.0
      %vm3060 = vcmp.ge.f32.partialorder %v2980, 0.0
      %vm3061 = vcmp.ge.f32.partialorder %v2983, 0.0
      %vm3062 = vcmp.ge.f32.partialorder %v2985, 0.0
      %vm3063 = vcmp.ge.f32.partialorder %v2988, 0.0
      %vm3064 = vcmp.ge.f32.partialorder %v2990, 0.0
      %vm3065 = vcmp.ge.f32.partialorder %v2993, 0.0
      %vm3066 = vcmp.ge.f32.partialorder %v2995, 0.0
      %vm3067 = vcmp.ge.f32.partialorder %v2998, 0.0
      %vm3068 = vcmp.ge.f32.partialorder %v3000, 0.0
      %vm3069 = vcmp.ge.f32.partialorder %v3003, 0.0
      %vm3070 = vcmp.ge.f32.partialorder %v3005, 0.0
      %v3071 = vmul.f32 %v2848, 0.01
      %v3072 = vmul.f32 %v2850, 0.01
      %v3073 = vmul.f32 %v2853, 0.01
      %v3074 = vmul.f32 %v2855, 0.01
      %v3075 = vmul.f32 %v2858, 0.01
      %v3076 = vmul.f32 %v2860, 0.01
      %v3077 = vmul.f32 %v2863, 0.01
      %v3078 = vmul.f32 %v2865, 0.01
      %v3079 = vmul.f32 %v2868, 0.01
      %v3080 = vmul.f32 %v2870, 0.01
      %v3081 = vmul.f32 %v2873, 0.01
      %v3082 = vmul.f32 %v2875, 0.01
      %v3083 = vmul.f32 %v2878, 0.01
      %v3084 = vmul.f32 %v2880, 0.01
      %v3085 = vmul.f32 %v2883, 0.01
      %v3086 = vmul.f32 %v2885, 0.01
      %v3087 = vmul.f32 %v2888, 0.01
      %v3088 = vmul.f32 %v2890, 0.01
      %v3089 = vmul.f32 %v2893, 0.01
      %v3090 = vmul.f32 %v2895, 0.01
      %v3091 = vmul.f32 %v2898, 0.01
      %v3092 = vmul.f32 %v2900, 0.01
      %v3093 = vmul.f32 %v2903, 0.01
      %v3094 = vmul.f32 %v2905, 0.01
      %v3095 = vmul.f32 %v2908, 0.01
      %v3096 = vmul.f32 %v2910, 0.01
      %v3097 = vmul.f32 %v2913, 0.01
      %v3098 = vmul.f32 %v2915, 0.01
      %v3099 = vmul.f32 %v2918, 0.01
      %v3100 = vmul.f32 %v2920, 0.01
      %v3101 = vmul.f32 %v2923, 0.01
      %v3102 = vmul.f32 %v2925, 0.01
      %v3103 = vmul.f32 %v2928, 0.01
      %v3104 = vmul.f32 %v2930, 0.01
      %v3105 = vmul.f32 %v2933, 0.01
      %v3106 = vmul.f32 %v2935, 0.01
      %v3107 = vmul.f32 %v2938, 0.01
      %v3108 = vmul.f32 %v2940, 0.01
      %v3109 = vmul.f32 %v2943, 0.01
      %v3110 = vmul.f32 %v2945, 0.01
      %v3111 = vmul.f32 %v2948, 0.01
      %v3112 = vmul.f32 %v2950, 0.01
      %v3113 = vmul.f32 %v2953, 0.01
      %v3114 = vmul.f32 %v2955, 0.01
      %v3115 = vmul.f32 %v2958, 0.01
      %v3116 = vmul.f32 %v2960, 0.01
      %v3117 = vmul.f32 %v2963, 0.01
      %v3118 = vmul.f32 %v2965, 0.01
      %v3119 = vmul.f32 %v2968, 0.01
      %v3120 = vmul.f32 %v2970, 0.01
      %v3121 = vmul.f32 %v2973, 0.01
      %v3122 = vmul.f32 %v2975, 0.01
      %v3123 = vmul.f32 %v2978, 0.01
      %v3124 = vmul.f32 %v2980, 0.01
      %v3125 = vmul.f32 %v2983, 0.01
      %v3126 = vmul.f32 %v2985, 0.01
      %v3127 = vmul.f32 %v2988, 0.01
      %v3128 = vmul.f32 %v2990, 0.01
      %v3129 = vmul.f32 %v2993, 0.01
      %v3130 = vmul.f32 %v2995, 0.01
      %v3131 = vmul.f32 %v2998, 0.01
      %v3132 = vmul.f32 %v3000, 0.01
      %v3133 = vmul.f32 %v3003, 0.01
      %v3134 = vmul.f32 %v3005, 0.01
      %v3135 = vsel %vm3007, %v2848, %v3071
      %v3136 = vsel %vm3008, %v2850, %v3072
      %v3137 = vsel %vm3009, %v2853, %v3073
      %v3138 = vsel %vm3010, %v2855, %v3074
      %v3139 = vsel %vm3011, %v2858, %v3075
      %v3140 = vsel %vm3012, %v2860, %v3076
      %v3141 = vsel %vm3013, %v2863, %v3077
      %v3142 = vsel %vm3014, %v2865, %v3078
      %v3143 = vsel %vm3015, %v2868, %v3079
      %v3144 = vsel %vm3016, %v2870, %v3080
      %v3145 = vsel %vm3017, %v2873, %v3081
      %v3146 = vsel %vm3018, %v2875, %v3082
      %v3147 = vsel %vm3019, %v2878, %v3083
      %v3148 = vsel %vm3020, %v2880, %v3084
      %v3149 = vsel %vm3021, %v2883, %v3085
      %v3150 = vsel %vm3022, %v2885, %v3086
      %v3151 = vsel %vm3023, %v2888, %v3087
      %v3152 = vsel %vm3024, %v2890, %v3088
      %v3153 = vsel %vm3025, %v2893, %v3089
      %v3154 = vsel %vm3026, %v2895, %v3090
      %v3155 = vsel %vm3027, %v2898, %v3091
      %v3156 = vsel %vm3028, %v2900, %v3092
      %v3157 = vsel %vm3029, %v2903, %v3093
      %v3158 = vsel %vm3030, %v2905, %v3094
      %v3159 = vsel %vm3031, %v2908, %v3095
      %v3160 = vsel %vm3032, %v2910, %v3096
      %v3161 = vsel %vm3033, %v2913, %v3097
      %v3162 = vsel %vm3034, %v2915, %v3098
      %v3163 = vsel %vm3035, %v2918, %v3099
      %v3164 = vsel %vm3036, %v2920, %v3100
      %v3165 = vsel %vm3037, %v2923, %v3101
      %v3166 = vsel %vm3038, %v2925, %v3102
      %v3167 = vsel %vm3039, %v2928, %v3103
      %v3168 = vsel %vm3040, %v2930, %v3104
      %v3169 = vsel %vm3041, %v2933, %v3105
      %v3170 = vsel %vm3042, %v2935, %v3106
      %v3171 = vsel %vm3043, %v2938, %v3107
      %v3172 = vsel %vm3044, %v2940, %v3108
      %v3173 = vsel %vm3045, %v2943, %v3109
      %v3174 = vsel %vm3046, %v2945, %v3110
      %v3175 = vsel %vm3047, %v2948, %v3111
      %v3176 = vsel %vm3048, %v2950, %v3112
      %v3177 = vsel %vm3049, %v2953, %v3113
      %v3178 = vsel %vm3050, %v2955, %v3114
      %v3179 = vsel %vm3051, %v2958, %v3115
      %v3180 = vsel %vm3052, %v2960, %v3116
      %v3181 = vsel %vm3053, %v2963, %v3117
      %v3182 = vsel %vm3054, %v2965, %v3118
      %v3183 = vsel %vm3055, %v2968, %v3119
      %v3184 = vsel %vm3056, %v2970, %v3120
      %v3185 = vsel %vm3057, %v2973, %v3121
      %v3186 = vsel %vm3058, %v2975, %v3122
      %v3187 = vsel %vm3059, %v2978, %v3123
      %v3188 = vsel %vm3060, %v2980, %v3124
      %v3189 = vsel %vm3061, %v2983, %v3125
      %v3190 = vsel %vm3062, %v2985, %v3126
      %v3191 = vsel %vm3063, %v2988, %v3127
      %v3192 = vsel %vm3064, %v2990, %v3128
      %v3193 = vsel %vm3065, %v2993, %v3129
      %v3194 = vsel %vm3066, %v2995, %v3130
      %v3195 = vsel %vm3067, %v2998, %v3131
      %v3196 = vsel %vm3068, %v3000, %v3132
      %v3197 = vsel %vm3069, %v3003, %v3133
      %v3198 = vsel %vm3070, %v3005, %v3134
      %v3199 = vld [vmem:[%s249] sm:$0xff]
      %v3200 = vld [vmem:[%s249 + $0x8] sm:$0xff]
      %v3201 = vld [vmem:[%s249 + $0x10] sm:$0xff]
      %v3202 = vld [vmem:[%s249 + $0x18] sm:$0xff]
      %v3203 = vld [vmem:[%s249 + $0x20] sm:$0xff]
      %v3204 = vld [vmem:[%s249 + $0x28] sm:$0xff]
      %v3205 = vld [vmem:[%s249 + $0x30] sm:$0xff]
      %v3206 = vld [vmem:[%s249 + $0x38] sm:$0xff]
      %v3207 = vld [vmem:[%s249 + $0x40] sm:$0xff]
      %v3208 = vld [vmem:[%s249 + $0x48] sm:$0xff]
      %v3209 = vld [vmem:[%s249 + $0x50] sm:$0xff]
      %v3210 = vld [vmem:[%s249 + $0x58] sm:$0xff]
      %v3211 = vld [vmem:[%s249 + $0x60] sm:$0xff]
      %v3212 = vld [vmem:[%s249 + $0x68] sm:$0xff]
      %v3213 = vld [vmem:[%s249 + $0x70] sm:$0xff]
      %v3214 = vld [vmem:[%s249 + $0x78] sm:$0xff]
      %v3215 = vld [vmem:[%s249 + $0x80] sm:$0xff]
      %v3216 = vld [vmem:[%s249 + $0x88] sm:$0xff]
      %v3217 = vld [vmem:[%s249 + $0x90] sm:$0xff]
      %v3218 = vld [vmem:[%s249 + $0x98] sm:$0xff]
      %v3219 = vld [vmem:[%s249 + $0xa0] sm:$0xff]
      %v3220 = vld [vmem:[%s249 + $0xa8] sm:$0xff]
      %v3221 = vld [vmem:[%s249 + $0xb0] sm:$0xff]
      %v3222 = vld [vmem:[%s249 + $0xb8] sm:$0xff]
      %v3223 = vld [vmem:[%s249 + $0xc0] sm:$0xff]
      %v3224 = vld [vmem:[%s249 + $0xc8] sm:$0xff]
      %v3225 = vld [vmem:[%s249 + $0xd0] sm:$0xff]
      %v3226 = vld [vmem:[%s249 + $0xd8] sm:$0xff]
      %v3227 = vld [vmem:[%s249 + $0xe0] sm:$0xff]
      %v3228 = vld [vmem:[%s249 + $0xe8] sm:$0xff]
      %v3229 = vld [vmem:[%s249 + $0xf0] sm:$0xff]
      %v3230 = vld [vmem:[%s249 + $0xf8] sm:$0xff]
      %v3231 = vld [vmem:[%s249 + $0x100] sm:$0xff]
      %v3232 = vld [vmem:[%s249 + $0x108] sm:$0xff]
      %v3233 = vld [vmem:[%s249 + $0x110] sm:$0xff]
      %v3234 = vld [vmem:[%s249 + $0x118] sm:$0xff]
      %v3235 = vld [vmem:[%s249 + $0x120] sm:$0xff]
      %v3236 = vld [vmem:[%s249 + $0x128] sm:$0xff]
      %v3237 = vld [vmem:[%s249 + $0x130] sm:$0xff]
      %v3238 = vld [vmem:[%s249 + $0x138] sm:$0xff]
      %v3239 = vld [vmem:[%s249 + $0x140] sm:$0xff]
      %v3240 = vld [vmem:[%s249 + $0x148] sm:$0xff]
      %v3241 = vld [vmem:[%s249 + $0x150] sm:$0xff]
      %v3242 = vld [vmem:[%s249 + $0x158] sm:$0xff]
      %v3243 = vld [vmem:[%s249 + $0x160] sm:$0xff]
      %v3244 = vld [vmem:[%s249 + $0x168] sm:$0xff]
      %v3245 = vld [vmem:[%s249 + $0x170] sm:$0xff]
      %v3246 = vld [vmem:[%s249 + $0x178] sm:$0xff]
      %v3247 = vld [vmem:[%s249 + $0x180] sm:$0xff]
      %v3248 = vld [vmem:[%s249 + $0x188] sm:$0xff]
      %v3249 = vld [vmem:[%s249 + $0x190] sm:$0xff]
      %v3250 = vld [vmem:[%s249 + $0x198] sm:$0xff]
      %v3251 = vld [vmem:[%s249 + $0x1a0] sm:$0xff]
      %v3252 = vld [vmem:[%s249 + $0x1a8] sm:$0xff]
      %v3253 = vld [vmem:[%s249 + $0x1b0] sm:$0xff]
      %v3254 = vld [vmem:[%s249 + $0x1b8] sm:$0xff]
      %v3255 = vld [vmem:[%s249 + $0x1c0] sm:$0xff]
      %v3256 = vld [vmem:[%s249 + $0x1c8] sm:$0xff]
      %v3257 = vld [vmem:[%s249 + $0x1d0] sm:$0xff]
      %v3258 = vld [vmem:[%s249 + $0x1d8] sm:$0xff]
      %v3259 = vld [vmem:[%s249 + $0x1e0] sm:$0xff]
      %v3260 = vld [vmem:[%s249 + $0x1e8] sm:$0xff]
      %v3261 = vld [vmem:[%s249 + $0x1f0] sm:$0xff]
      %v3262 = vld [vmem:[%s249 + $0x1f8] sm:$0xff]
      %3327 = vrot.lane.b32.xlu0 %v3199, 8
      %v3328 = vpop.permute.xlu0 %3327
      %3329 = vrot.lane.b32.xlu0 %v3200, 8
      %v3330 = vpop.permute.xlu0 %3329
      %3331 = vrot.lane.b32.xlu0 %v3201, 8
      %v3332 = vpop.permute.xlu0 %3331
      %3333 = vrot.lane.b32.xlu0 %v3202, 8
      %v3334 = vpop.permute.xlu0 %3333
      %3335 = vrot.lane.b32.xlu0 %v3203, 8
      %v3336 = vpop.permute.xlu0 %3335
      %3337 = vrot.lane.b32.xlu0 %v3204, 8
      %v3338 = vpop.permute.xlu0 %3337
      %3339 = vrot.lane.b32.xlu0 %v3205, 8
      %v3340 = vpop.permute.xlu0 %3339
      %3341 = vrot.lane.b32.xlu0 %v3206, 8
      %v3342 = vpop.permute.xlu0 %3341
      %3343 = vrot.lane.b32.xlu0 %v3207, 8
      %v3344 = vpop.permute.xlu0 %3343
      %3345 = vrot.lane.b32.xlu0 %v3208, 8
      %v3346 = vpop.permute.xlu0 %3345
      %3347 = vrot.lane.b32.xlu0 %v3209, 8
      %v3348 = vpop.permute.xlu0 %3347
      %3349 = vrot.lane.b32.xlu0 %v3210, 8
      %v3350 = vpop.permute.xlu0 %3349
      %3351 = vrot.lane.b32.xlu0 %v3211, 8
      %v3352 = vpop.permute.xlu0 %3351
      %3353 = vrot.lane.b32.xlu0 %v3212, 8
      %v3354 = vpop.permute.xlu0 %3353
      %3355 = vrot.lane.b32.xlu0 %v3213, 8
      %v3356 = vpop.permute.xlu0 %3355
      %3357 = vrot.lane.b32.xlu0 %v3214, 8
      %v3358 = vpop.permute.xlu0 %3357
      %3359 = vrot.lane.b32.xlu0 %v3215, 8
      %v3360 = vpop.permute.xlu0 %3359
      %3361 = vrot.lane.b32.xlu0 %v3216, 8
      %v3362 = vpop.permute.xlu0 %3361
      %3363 = vrot.lane.b32.xlu0 %v3217, 8
      %v3364 = vpop.permute.xlu0 %3363
      %3365 = vrot.lane.b32.xlu0 %v3218, 8
      %v3366 = vpop.permute.xlu0 %3365
      %3367 = vrot.lane.b32.xlu0 %v3219, 8
      %v3368 = vpop.permute.xlu0 %3367
      %3369 = vrot.lane.b32.xlu0 %v3220, 8
      %v3370 = vpop.permute.xlu0 %3369
      %3371 = vrot.lane.b32.xlu0 %v3221, 8
      %v3372 = vpop.permute.xlu0 %3371
      %3373 = vrot.lane.b32.xlu0 %v3222, 8
      %v3374 = vpop.permute.xlu0 %3373
      %3375 = vrot.lane.b32.xlu0 %v3223, 8
      %v3376 = vpop.permute.xlu0 %3375
      %3377 = vrot.lane.b32.xlu0 %v3224, 8
      %v3378 = vpop.permute.xlu0 %3377
      %3379 = vrot.lane.b32.xlu0 %v3225, 8
      %v3380 = vpop.permute.xlu0 %3379
      %3381 = vrot.lane.b32.xlu0 %v3226, 8
      %v3382 = vpop.permute.xlu0 %3381
      %3383 = vrot.lane.b32.xlu0 %v3227, 8
      %v3384 = vpop.permute.xlu0 %3383
      %3385 = vrot.lane.b32.xlu0 %v3228, 8
      %v3386 = vpop.permute.xlu0 %3385
      %3387 = vrot.lane.b32.xlu0 %v3229, 8
      %v3388 = vpop.permute.xlu0 %3387
      %3389 = vrot.lane.b32.xlu0 %v3230, 8
      %v3390 = vpop.permute.xlu0 %3389
      %3391 = vrot.lane.b32.xlu0 %v3231, 8
      %v3392 = vpop.permute.xlu0 %3391
      %3393 = vrot.lane.b32.xlu0 %v3232, 8
      %v3394 = vpop.permute.xlu0 %3393
      %3395 = vrot.lane.b32.xlu0 %v3233, 8
      %v3396 = vpop.permute.xlu0 %3395
      %3397 = vrot.lane.b32.xlu0 %v3234, 8
      %v3398 = vpop.permute.xlu0 %3397
      %3399 = vrot.lane.b32.xlu0 %v3235, 8
      %v3400 = vpop.permute.xlu0 %3399
      %3401 = vrot.lane.b32.xlu0 %v3236, 8
      %v3402 = vpop.permute.xlu0 %3401
      %3403 = vrot.lane.b32.xlu0 %v3237, 8
      %v3404 = vpop.permute.xlu0 %3403
      %3405 = vrot.lane.b32.xlu0 %v3238, 8
      %v3406 = vpop.permute.xlu0 %3405
      %3407 = vrot.lane.b32.xlu0 %v3239, 8
      %v3408 = vpop.permute.xlu0 %3407
      %3409 = vrot.lane.b32.xlu0 %v3240, 8
      %v3410 = vpop.permute.xlu0 %3409
      %3411 = vrot.lane.b32.xlu0 %v3241, 8
      %v3412 = vpop.permute.xlu0 %3411
      %3413 = vrot.lane.b32.xlu0 %v3242, 8
      %v3414 = vpop.permute.xlu0 %3413
      %3415 = vrot.lane.b32.xlu0 %v3243, 8
      %v3416 = vpop.permute.xlu0 %3415
      %3417 = vrot.lane.b32.xlu0 %v3244, 8
      %v3418 = vpop.permute.xlu0 %3417
      %3419 = vrot.lane.b32.xlu0 %v3245, 8
      %v3420 = vpop.permute.xlu0 %3419
      %3421 = vrot.lane.b32.xlu0 %v3246, 8
      %v3422 = vpop.permute.xlu0 %3421
      %3423 = vrot.lane.b32.xlu0 %v3247, 8
      %v3424 = vpop.permute.xlu0 %3423
      %3425 = vrot.lane.b32.xlu0 %v3248, 8
      %v3426 = vpop.permute.xlu0 %3425
      %3427 = vrot.lane.b32.xlu0 %v3249, 8
      %v3428 = vpop.permute.xlu0 %3427
      %3429 = vrot.lane.b32.xlu0 %v3250, 8
      %v3430 = vpop.permute.xlu0 %3429
      %3431 = vrot.lane.b32.xlu0 %v3251, 8
      %v3432 = vpop.permute.xlu0 %3431
      %3433 = vrot.lane.b32.xlu0 %v3252, 8
      %v3434 = vpop.permute.xlu0 %3433
      %3435 = vrot.lane.b32.xlu0 %v3253, 8
      %v3436 = vpop.permute.xlu0 %3435
      %3437 = vrot.lane.b32.xlu0 %v3254, 8
      %v3438 = vpop.permute.xlu0 %3437
      %3439 = vrot.lane.b32.xlu0 %v3255, 8
      %v3440 = vpop.permute.xlu0 %3439
      %3441 = vrot.lane.b32.xlu0 %v3256, 8
      %v3442 = vpop.permute.xlu0 %3441
      %3443 = vrot.lane.b32.xlu0 %v3257, 8
      %v3444 = vpop.permute.xlu0 %3443
      %3445 = vrot.lane.b32.xlu0 %v3258, 8
      %v3446 = vpop.permute.xlu0 %3445
      %3447 = vrot.lane.b32.xlu0 %v3259, 8
      %v3448 = vpop.permute.xlu0 %3447
      %3449 = vrot.lane.b32.xlu0 %v3260, 8
      %v3450 = vpop.permute.xlu0 %3449
      %3451 = vrot.lane.b32.xlu0 %v3261, 8
      %v3452 = vpop.permute.xlu0 %3451
      %3453 = vrot.lane.b32.xlu0 %v3262, 8
      %v3454 = vpop.permute.xlu0 %3453
      %v3519 = vsel %vm2209, 0.0, %v3328
      %v3520 = vsel %vm2209, 0.0, %v3330
      %v3521 = vsel %vm2209, 0.0, %v3332
      %v3522 = vsel %vm2209, 0.0, %v3334
      %v3523 = vsel %vm2209, 0.0, %v3336
      %v3524 = vsel %vm2209, 0.0, %v3338
      %v3525 = vsel %vm2209, 0.0, %v3340
      %v3526 = vsel %vm2209, 0.0, %v3342
      %v3527 = vsel %vm2209, 0.0, %v3344
      %v3528 = vsel %vm2209, 0.0, %v3346
      %v3529 = vsel %vm2209, 0.0, %v3348
      %v3530 = vsel %vm2209, 0.0, %v3350
      %v3531 = vsel %vm2209, 0.0, %v3352
      %v3532 = vsel %vm2209, 0.0, %v3354
      %v3533 = vsel %vm2209, 0.0, %v3356
      %v3534 = vsel %vm2209, 0.0, %v3358
      %v3535 = vsel %vm2209, 0.0, %v3360
      %v3536 = vsel %vm2209, 0.0, %v3362
      %v3537 = vsel %vm2209, 0.0, %v3364
      %v3538 = vsel %vm2209, 0.0, %v3366
      %v3539 = vsel %vm2209, 0.0, %v3368
      %v3540 = vsel %vm2209, 0.0, %v3370
      %v3541 = vsel %vm2209, 0.0, %v3372
      %v3542 = vsel %vm2209, 0.0, %v3374
      %v3543 = vsel %vm2209, 0.0, %v3376
      %v3544 = vsel %vm2209, 0.0, %v3378
      %v3545 = vsel %vm2209, 0.0, %v3380
      %v3546 = vsel %vm2209, 0.0, %v3382
      %v3547 = vsel %vm2209, 0.0, %v3384
      %v3548 = vsel %vm2209, 0.0, %v3386
      %v3549 = vsel %vm2209, 0.0, %v3388
      %v3550 = vsel %vm2209, 0.0, %v3390
      %v3551 = vsel %vm2209, 0.0, %v3392
      %v3552 = vsel %vm2209, 0.0, %v3394
      %v3553 = vsel %vm2209, 0.0, %v3396
      %v3554 = vsel %vm2209, 0.0, %v3398
      %v3555 = vsel %vm2209, 0.0, %v3400
      %v3556 = vsel %vm2209, 0.0, %v3402
      %v3557 = vsel %vm2209, 0.0, %v3404
      %v3558 = vsel %vm2209, 0.0, %v3406
      %v3559 = vsel %vm2209, 0.0, %v3408
      %v3560 = vsel %vm2209, 0.0, %v3410
      %v3561 = vsel %vm2209, 0.0, %v3412
      %v3562 = vsel %vm2209, 0.0, %v3414
      %v3563 = vsel %vm2209, 0.0, %v3416
      %v3564 = vsel %vm2209, 0.0, %v3418
      %v3565 = vsel %vm2209, 0.0, %v3420
      %v3566 = vsel %vm2209, 0.0, %v3422
      %v3567 = vsel %vm2209, 0.0, %v3424
      %v3568 = vsel %vm2209, 0.0, %v3426
      %v3569 = vsel %vm2209, 0.0, %v3428
      %v3570 = vsel %vm2209, 0.0, %v3430
      %v3571 = vsel %vm2209, 0.0, %v3432
      %v3572 = vsel %vm2209, 0.0, %v3434
      %v3573 = vsel %vm2209, 0.0, %v3436
      %v3574 = vsel %vm2209, 0.0, %v3438
      %v3575 = vsel %vm2209, 0.0, %v3440
      %v3576 = vsel %vm2209, 0.0, %v3442
      %v3577 = vsel %vm2209, 0.0, %v3444
      %v3578 = vsel %vm2209, 0.0, %v3446
      %v3579 = vsel %vm2209, 0.0, %v3448
      %v3580 = vsel %vm2209, 0.0, %v3450
      %v3581 = vsel %vm2209, 0.0, %v3452
      %v3582 = vsel %vm2209, 0.0, %v3454
      %vm3583 = vcmask 97280
      %v3584 = vsel %vm3583, %v3519, 0.0
      %v3585 = vsel %vm3583, %v3520, 0.0
      %v3586 = vsel %vm3583, %v3521, 0.0
      %v3587 = vsel %vm3583, %v3522, 0.0
      %v3588 = vsel %vm3583, %v3523, 0.0
      %v3589 = vsel %vm3583, %v3524, 0.0
      %v3590 = vsel %vm3583, %v3525, 0.0
      %v3591 = vsel %vm3583, %v3526, 0.0
      %v3592 = vsel %vm3583, %v3527, 0.0
      %v3593 = vsel %vm3583, %v3528, 0.0
      %v3594 = vsel %vm3583, %v3529, 0.0
      %v3595 = vsel %vm3583, %v3530, 0.0
      %v3596 = vsel %vm3583, %v3531, 0.0
      %v3597 = vsel %vm3583, %v3532, 0.0
      %v3598 = vsel %vm3583, %v3533, 0.0
      %v3599 = vsel %vm3583, %v3534, 0.0
      %v3600 = vsel %vm3583, %v3535, 0.0
      %v3601 = vsel %vm3583, %v3536, 0.0
      %v3602 = vsel %vm3583, %v3537, 0.0
      %v3603 = vsel %vm3583, %v3538, 0.0
      %v3604 = vsel %vm3583, %v3539, 0.0
      %v3605 = vsel %vm3583, %v3540, 0.0
      %v3606 = vsel %vm3583, %v3541, 0.0
      %v3607 = vsel %vm3583, %v3542, 0.0
      %v3608 = vsel %vm3583, %v3543, 0.0
      %v3609 = vsel %vm3583, %v3544, 0.0
      %v3610 = vsel %vm3583, %v3545, 0.0
      %v3611 = vsel %vm3583, %v3546, 0.0
      %v3612 = vsel %vm3583, %v3547, 0.0
      %v3613 = vsel %vm3583, %v3548, 0.0
      %v3614 = vsel %vm3583, %v3549, 0.0
      %v3615 = vsel %vm3583, %v3550, 0.0
      %v3616 = vsel %vm3583, %v3551, 0.0
      %v3617 = vsel %vm3583, %v3552, 0.0
      %v3618 = vsel %vm3583, %v3553, 0.0
      %v3619 = vsel %vm3583, %v3554, 0.0
      %v3620 = vsel %vm3583, %v3555, 0.0
      %v3621 = vsel %vm3583, %v3556, 0.0
      %v3622 = vsel %vm3583, %v3557, 0.0
      %v3623 = vsel %vm3583, %v3558, 0.0
      %v3624 = vsel %vm3583, %v3559, 0.0
      %v3625 = vsel %vm3583, %v3560, 0.0
      %v3626 = vsel %vm3583, %v3561, 0.0
      %v3627 = vsel %vm3583, %v3562, 0.0
      %v3628 = vsel %vm3583, %v3563, 0.0
      %v3629 = vsel %vm3583, %v3564, 0.0
      %v3630 = vsel %vm3583, %v3565, 0.0
      %v3631 = vsel %vm3583, %v3566, 0.0
      %v3632 = vsel %vm3583, %v3567, 0.0
      %v3633 = vsel %vm3583, %v3568, 0.0
      %v3634 = vsel %vm3583, %v3569, 0.0
      %v3635 = vsel %vm3583, %v3570, 0.0
      %v3636 = vsel %vm3583, %v3571, 0.0
      %v3637 = vsel %vm3583, %v3572, 0.0
      %v3638 = vsel %vm3583, %v3573, 0.0
      %v3639 = vsel %vm3583, %v3574, 0.0
      %v3640 = vsel %vm3583, %v3575, 0.0
      %v3641 = vsel %vm3583, %v3576, 0.0
      %v3642 = vsel %vm3583, %v3577, 0.0
      %v3643 = vsel %vm3583, %v3578, 0.0
      %v3644 = vsel %vm3583, %v3579, 0.0
      %v3645 = vsel %vm3583, %v3580, 0.0
      %v3646 = vsel %vm3583, %v3581, 0.0
      %v3647 = vsel %vm3583, %v3582, 0.0
      %v3648 = vadd.f32 %v3135, %v3584
      %v3649 = vadd.f32 %v3136, %v3585
      %v3650 = vadd.f32 %v3137, %v3586
      %v3651 = vadd.f32 %v3138, %v3587
      %v3652 = vadd.f32 %v3139, %v3588
      %v3653 = vadd.f32 %v3140, %v3589
      %v3654 = vadd.f32 %v3141, %v3590
      %v3655 = vadd.f32 %v3142, %v3591
      %v3656 = vadd.f32 %v3143, %v3592
      %v3657 = vadd.f32 %v3144, %v3593
      %v3658 = vadd.f32 %v3145, %v3594
      %v3659 = vadd.f32 %v3146, %v3595
      %v3660 = vadd.f32 %v3147, %v3596
      %v3661 = vadd.f32 %v3148, %v3597
      %v3662 = vadd.f32 %v3149, %v3598
      %v3663 = vadd.f32 %v3150, %v3599
      %v3664 = vadd.f32 %v3151, %v3600
      %v3665 = vadd.f32 %v3152, %v3601
      %v3666 = vadd.f32 %v3153, %v3602
      %v3667 = vadd.f32 %v3154, %v3603
      %v3668 = vadd.f32 %v3155, %v3604
      %v3669 = vadd.f32 %v3156, %v3605
      %v3670 = vadd.f32 %v3157, %v3606
      %v3671 = vadd.f32 %v3158, %v3607
      %v3672 = vadd.f32 %v3159, %v3608
      %v3673 = vadd.f32 %v3160, %v3609
      %v3674 = vadd.f32 %v3161, %v3610
      %v3675 = vadd.f32 %v3162, %v3611
      %v3676 = vadd.f32 %v3163, %v3612
      %v3677 = vadd.f32 %v3164, %v3613
      %v3678 = vadd.f32 %v3165, %v3614
      %v3679 = vadd.f32 %v3166, %v3615
      %v3680 = vadd.f32 %v3167, %v3616
      %v3681 = vadd.f32 %v3168, %v3617
      %v3682 = vadd.f32 %v3169, %v3618
      %v3683 = vadd.f32 %v3170, %v3619
      %v3684 = vadd.f32 %v3171, %v3620
      %v3685 = vadd.f32 %v3172, %v3621
      %v3686 = vadd.f32 %v3173, %v3622
      %v3687 = vadd.f32 %v3174, %v3623
      %v3688 = vadd.f32 %v3175, %v3624
      %v3689 = vadd.f32 %v3176, %v3625
      %v3690 = vadd.f32 %v3177, %v3626
      %v3691 = vadd.f32 %v3178, %v3627
      %v3692 = vadd.f32 %v3179, %v3628
      %v3693 = vadd.f32 %v3180, %v3629
      %v3694 = vadd.f32 %v3181, %v3630
      %v3695 = vadd.f32 %v3182, %v3631
      %v3696 = vadd.f32 %v3183, %v3632
      %v3697 = vadd.f32 %v3184, %v3633
      %v3698 = vadd.f32 %v3185, %v3634
      %v3699 = vadd.f32 %v3186, %v3635
      %v3700 = vadd.f32 %v3187, %v3636
      %v3701 = vadd.f32 %v3188, %v3637
      %v3702 = vadd.f32 %v3189, %v3638
      %v3703 = vadd.f32 %v3190, %v3639
      %v3704 = vadd.f32 %v3191, %v3640
      %v3705 = vadd.f32 %v3192, %v3641
      %v3706 = vadd.f32 %v3193, %v3642
      %v3707 = vadd.f32 %v3194, %v3643
      %v3708 = vadd.f32 %v3195, %v3644
      %v3709 = vadd.f32 %v3196, %v3645
      %v3710 = vadd.f32 %v3197, %v3646
      %v3711 = vadd.f32 %v3198, %v3647
      %v3712 = vpack.c.bf16 %v3648, %v3648
      %v3713 = vpack.c.bf16 %v3649, %v3649
      %v3714 = vpack.c.bf16 %v3650, %v3650
      %v3715 = vpack.c.bf16 %v3651, %v3651
      %v3716 = vpack.c.bf16 %v3652, %v3652
      %v3717 = vpack.c.bf16 %v3653, %v3653
      %v3718 = vpack.c.bf16 %v3654, %v3654
      %v3719 = vpack.c.bf16 %v3655, %v3655
      %v3720 = vpack.c.bf16 %v3656, %v3656
      %v3721 = vpack.c.bf16 %v3657, %v3657
      %v3722 = vpack.c.bf16 %v3658, %v3658
      %v3723 = vpack.c.bf16 %v3659, %v3659
      %v3724 = vpack.c.bf16 %v3660, %v3660
      %v3725 = vpack.c.bf16 %v3661, %v3661
      %v3726 = vpack.c.bf16 %v3662, %v3662
      %v3727 = vpack.c.bf16 %v3663, %v3663
      %v3728 = vpack.c.bf16 %v3664, %v3664
      %v3729 = vpack.c.bf16 %v3665, %v3665
      %v3730 = vpack.c.bf16 %v3666, %v3666
      %v3731 = vpack.c.bf16 %v3667, %v3667
      %v3732 = vpack.c.bf16 %v3668, %v3668
      %v3733 = vpack.c.bf16 %v3669, %v3669
      %v3734 = vpack.c.bf16 %v3670, %v3670
      %v3735 = vpack.c.bf16 %v3671, %v3671
      %v3736 = vpack.c.bf16 %v3672, %v3672
      %v3737 = vpack.c.bf16 %v3673, %v3673
      %v3738 = vpack.c.bf16 %v3674, %v3674
      %v3739 = vpack.c.bf16 %v3675, %v3675
      %v3740 = vpack.c.bf16 %v3676, %v3676
      %v3741 = vpack.c.bf16 %v3677, %v3677
      %v3742 = vpack.c.bf16 %v3678, %v3678
      %v3743 = vpack.c.bf16 %v3679, %v3679
      %v3744 = vpack.c.bf16 %v3680, %v3680
      %v3745 = vpack.c.bf16 %v3681, %v3681
      %v3746 = vpack.c.bf16 %v3682, %v3682
      %v3747 = vpack.c.bf16 %v3683, %v3683
      %v3748 = vpack.c.bf16 %v3684, %v3684
      %v3749 = vpack.c.bf16 %v3685, %v3685
      %v3750 = vpack.c.bf16 %v3686, %v3686
      %v3751 = vpack.c.bf16 %v3687, %v3687
      %v3752 = vpack.c.bf16 %v3688, %v3688
      %v3753 = vpack.c.bf16 %v3689, %v3689
      %v3754 = vpack.c.bf16 %v3690, %v3690
      %v3755 = vpack.c.bf16 %v3691, %v3691
      %v3756 = vpack.c.bf16 %v3692, %v3692
      %v3757 = vpack.c.bf16 %v3693, %v3693
      %v3758 = vpack.c.bf16 %v3694, %v3694
      %v3759 = vpack.c.bf16 %v3695, %v3695
      %v3760 = vpack.c.bf16 %v3696, %v3696
      %v3761 = vpack.c.bf16 %v3697, %v3697
      %v3762 = vpack.c.bf16 %v3698, %v3698
      %v3763 = vpack.c.bf16 %v3699, %v3699
      %v3764 = vpack.c.bf16 %v3700, %v3700
      %v3765 = vpack.c.bf16 %v3701, %v3701
      %v3766 = vpack.c.bf16 %v3702, %v3702
      %v3767 = vpack.c.bf16 %v3703, %v3703
      %v3768 = vpack.c.bf16 %v3704, %v3704
      %v3769 = vpack.c.bf16 %v3705, %v3705
      %v3770 = vpack.c.bf16 %v3706, %v3706
      %v3771 = vpack.c.bf16 %v3707, %v3707
      %v3772 = vpack.c.bf16 %v3708, %v3708
      %v3773 = vpack.c.bf16 %v3709, %v3709
      %v3774 = vpack.c.bf16 %v3710, %v3710
      %v3775 = vpack.c.bf16 %v3711, %v3711
      %3776 = vst [vmem:[%s260] sm:$0xf] %v3712
      %3777 = vst [vmem:[%s260 + $0x4] sm:$0xf] %v3713
      %3778 = vst [vmem:[%s260 + $0x8] sm:$0xf] %v3714
      %3779 = vst [vmem:[%s260 + $0xc] sm:$0xf] %v3715
      %3780 = vst [vmem:[%s260 + $0x10] sm:$0xf] %v3716
      %3781 = vst [vmem:[%s260 + $0x14] sm:$0xf] %v3717
      %3782 = vst [vmem:[%s260 + $0x18] sm:$0xf] %v3718
      %3783 = vst [vmem:[%s260 + $0x1c] sm:$0xf] %v3719
      %3784 = vst [vmem:[%s260 + $0x20] sm:$0xf] %v3720
      %3785 = vst [vmem:[%s260 + $0x24] sm:$0xf] %v3721
      %3786 = vst [vmem:[%s260 + $0x28] sm:$0xf] %v3722
      %3787 = vst [vmem:[%s260 + $0x2c] sm:$0xf] %v3723
      %3788 = vst [vmem:[%s260 + $0x30] sm:$0xf] %v3724
      %3789 = vst [vmem:[%s260 + $0x34] sm:$0xf] %v3725
      %3790 = vst [vmem:[%s260 + $0x38] sm:$0xf] %v3726
      %3791 = vst [vmem:[%s260 + $0x3c] sm:$0xf] %v3727
      %3792 = vst [vmem:[%s260 + $0x40] sm:$0xf] %v3728
      %3793 = vst [vmem:[%s260 + $0x44] sm:$0xf] %v3729
      %3794 = vst [vmem:[%s260 + $0x48] sm:$0xf] %v3730
      %3795 = vst [vmem:[%s260 + $0x4c] sm:$0xf] %v3731
      %3796 = vst [vmem:[%s260 + $0x50] sm:$0xf] %v3732
      %3797 = vst [vmem:[%s260 + $0x54] sm:$0xf] %v3733
      %3798 = vst [vmem:[%s260 + $0x58] sm:$0xf] %v3734
      %3799 = vst [vmem:[%s260 + $0x5c] sm:$0xf] %v3735
      %3800 = vst [vmem:[%s260 + $0x60] sm:$0xf] %v3736
      %3801 = vst [vmem:[%s260 + $0x64] sm:$0xf] %v3737
      %3802 = vst [vmem:[%s260 + $0x68] sm:$0xf] %v3738
      %3803 = vst [vmem:[%s260 + $0x6c] sm:$0xf] %v3739
      %3804 = vst [vmem:[%s260 + $0x70] sm:$0xf] %v3740
      %3805 = vst [vmem:[%s260 + $0x74] sm:$0xf] %v3741
      %3806 = vst [vmem:[%s260 + $0x78] sm:$0xf] %v3742
      %3807 = vst [vmem:[%s260 + $0x7c] sm:$0xf] %v3743
      %3808 = vst [vmem:[%s260 + $0x80] sm:$0xf] %v3744
      %3809 = vst [vmem:[%s260 + $0x84] sm:$0xf] %v3745
      %3810 = vst [vmem:[%s260 + $0x88] sm:$0xf] %v3746
      %3811 = vst [vmem:[%s260 + $0x8c] sm:$0xf] %v3747
      %3812 = vst [vmem:[%s260 + $0x90] sm:$0xf] %v3748
      %3813 = vst [vmem:[%s260 + $0x94] sm:$0xf] %v3749
      %3814 = vst [vmem:[%s260 + $0x98] sm:$0xf] %v3750
      %3815 = vst [vmem:[%s260 + $0x9c] sm:$0xf] %v3751
      %3816 = vst [vmem:[%s260 + $0xa0] sm:$0xf] %v3752
      %3817 = vst [vmem:[%s260 + $0xa4] sm:$0xf] %v3753
      %3818 = vst [vmem:[%s260 + $0xa8] sm:$0xf] %v3754
      %3819 = vst [vmem:[%s260 + $0xac] sm:$0xf] %v3755
      %3820 = vst [vmem:[%s260 + $0xb0] sm:$0xf] %v3756
      %3821 = vst [vmem:[%s260 + $0xb4] sm:$0xf] %v3757
      %3822 = vst [vmem:[%s260 + $0xb8] sm:$0xf] %v3758
      %3823 = vst [vmem:[%s260 + $0xbc] sm:$0xf] %v3759
      %3824 = vst [vmem:[%s260 + $0xc0] sm:$0xf] %v3760
      %3825 = vst [vmem:[%s260 + $0xc4] sm:$0xf] %v3761
      %3826 = vst [vmem:[%s260 + $0xc8] sm:$0xf] %v3762
      %3827 = vst [vmem:[%s260 + $0xcc] sm:$0xf] %v3763
      %3828 = vst [vmem:[%s260 + $0xd0] sm:$0xf] %v3764
      %3829 = vst [vmem:[%s260 + $0xd4] sm:$0xf] %v3765
      %3830 = vst [vmem:[%s260 + $0xd8] sm:$0xf] %v3766
      %3831 = vst [vmem:[%s260 + $0xdc] sm:$0xf] %v3767
      %3832 = vst [vmem:[%s260 + $0xe0] sm:$0xf] %v3768
      %3833 = vst [vmem:[%s260 + $0xe4] sm:$0xf] %v3769
      %3834 = vst [vmem:[%s260 + $0xe8] sm:$0xf] %v3770
      %3835 = vst [vmem:[%s260 + $0xec] sm:$0xf] %v3771
      %3836 = vst [vmem:[%s260 + $0xf0] sm:$0xf] %v3772
      %3837 = vst [vmem:[%s260 + $0xf4] sm:$0xf] %v3773
      %3838 = vst [vmem:[%s260 + $0xf8] sm:$0xf] %v3774
      %3839 = vst [vmem:[%s260 + $0xfc] sm:$0xf] %v3775
      %s3840 = smul.u32 16, %s20
      %p3841 = scmp.lt.s32.totalorder %s19, 1
      %s3842 = scalar_select %p3841, %s19, 1
      %p3843 = scmp.lt.s32.totalorder %s3840, 31
      %s3844 = scalar_select %p3843, %s3840, 31
      %s3845 = smul.addr %s3844, 4
      %s3846 = smul.addr %s3842, 128
      %s3847 = sadd.s32 %s3845, %s3846
      %s3848 = smul.addr %s3847, 4
      %s3849 = scalar_lea.vmem %s4, %s3848
      // Predicated region
      $region37: #{unet_up_forward.2} parent=35 // pred_check
        %p3850 = pneg %p143
      $region38: #{unet_up_forward.2} parent=35 // pred_check_branch
        %3852 = sbr.rel (%p3850) target = $region40
      $region39: #{unet_up_forward.2} parent=35 // pred_region
        %s3853 = smul.u32 16, %s20
      $region40: #{unet_up_forward.2} parent=35 // pred_fallthru
        _
    $region36: #{unet_up_forward.2} parent=5 // pred_fallthru
      _
    %p3854 = scmp.le.s32.totalorder 2, %s10
    // Predicated region
    $region41: #{unet_up_forward.2} parent=5 // pred_check
      %p3855 = pneg %p3854
    $region42: #{unet_up_forward.2} parent=5 // pred_check_branch
      %3857 = sbr.rel (%p3855) target = $region44
    $region43: #{unet_up_forward.2} parent=5 // pred_region
      %s3858 = ssub.s32 %s10, 2
      // Predicated region
      $region45: #{unet_up_forward.2} parent=43 // pred_check
        %p3859 = pneg %p149
      $region46: #{unet_up_forward.2} parent=43 // pred_check_branch
        %3861 = sbr.rel (%p3859) target = $region48
      $region47: #{unet_up_forward.2} parent=43 // pred_region
        %s3862 = smul.u32 16, %s22
        %p3863 = scmp.lt.s32.totalorder %s21, 1
        %s3864 = scalar_select %p3863, %s21, 1
        %p3865 = scmp.lt.s32.totalorder %s3862, 31
        %s3866 = scalar_select %p3865, %s3862, 31
        %s3867 = smul.addr %s3866, 4
        %s3868 = smul.addr %s3864, 128
        %s3869 = sadd.s32 %s3867, %s3868
        %s3870 = smul.addr %s3869, 4
        %s3871 = scalar_lea.vmem %s4, %s3870
      $region48: #{unet_up_forward.2} parent=43 // pred_fallthru
        _
    $region44: #{unet_up_forward.2} parent=5 // pred_fallthru
      _
  $region6: #{unet_up_forward.2} parent=0 // loop_footer
    %s14 = sadd.s32 1, %s10
  $region7: #{unet_up_forward.2} parent=0 // loop_footer_branch
    %9 = sbr.rel target = $region3
  $region8: #{unet_up_forward.2} parent=0 // loop_exit
    _

// kernel: unet_up_forward.3
$region0: #{unet_up_forward.3}
  #allocation0 [shape = 'u32[]', space=smem, size = 0x4, offset = 0x4, fixed_abs, tag = 'smem constant byte address 0x4 - core index']
  #allocation1 [shape = 'u32[72,128]{1,0:T(1,128)}', space=vmem, size = 0x9000, scoped, tag = 'internal scratch']
  #allocation2 [shape = 'f32[512,128]{1,0:T(8,128)}', space=vmem, size = 0x40000, scoped, tag = 'scratch operand']
  %s0 = inlined_call_operand.vmem [shape: bf16[2,32,32,128], index: 0, kind: input, shape index: {}]
  %s1 = inlined_call_operand.vmem [shape: bf16[2,2,32,128], index: 1, kind: input, shape index: {}]
  %s2 = inlined_call_operand.vmem [shape: bf16[2,2,32,128], index: 2, kind: input, shape index: {}]
  %s3 = inlined_call_operand.vmem [shape: bf16[3,384,128], index: 3, kind: input, shape index: {}]
  %s4 = inlined_call_operand.vmem [shape: f32[1,128], index: 4, kind: input, shape index: {}]
  %s5 = inlined_call_operand.vmem [shape: f32[2,32,32,128], index: 5, kind: output, shape index: {}]
  %s6 = sld [smem:[#allocation0]]
  $region53: #{unet_up_forward.3} parent=0
    _
  %s8 = ssub.s32 1, %s6
  %s9 = scalar_select 0, %s8, %s6
  loop: start=0, step=1, limit=6
  $region2: #{unet_up_forward.3} parent=0 // loop_pre_header
    _
  $region3: #{unet_up_forward.3} parent=0 // loop_header
    %s11 = sphi 0, %s15
    %p12 = scmp.ge.s32.totalorder %s11, 6
    %s18 = sphi 0, %s30
    %s19 = sphi 0, %s26
    %s20 = sphi 0, %s18
    %s21 = sphi 0, %s19
    %s22 = sphi 0, %s20
    %s23 = sphi 0, %s21
    %s35 = sphi 0, %s37
    %s38 = sphi 0, %s35
    %s39 = sphi 0, %s38
    %s55 = sphi 0, %s39
    %s63 = sphi 0, %s65
    %s66 = sphi 0, %s63
    %s67 = sphi 0, %s66
    %s83 = sphi 0, %s67
    %s91 = sphi 0, %s93
    %s94 = sphi 0, %s91
    %s95 = sphi 0, %s94
    %s111 = sphi 0, %s95
    %s115 = sphi 0, %s115
    %s117 = sphi 0, %s115
    %s118 = sphi 0, %s117
    %s132 = sphi 0, %s118
    %s136 = sphi 0, %s136
    %s138 = sphi 0, %s136
    %s139 = sphi 0, %s138
    %s153 = sphi 0, %s139
    %s161 = sphi 0, %s163
    %s164 = sphi 0, %s161
    %s165 = sphi 0, %s164
    %s181 = sphi 0, %s165
  $region4: #{unet_up_forward.3} parent=0 // loop_header_branch
    %14 = sbr.rel (%p12) target = $region8
  $region5: #{unet_up_forward.3} parent=0 // loop_body
    %s16 = ssub.s32 %s11, 1
    %s17 = ssub.s32 %s11, 2
    %s24 = sadd.s32 1, %s19
    %p25 = scmp.ge.s32.totalorder %s24, 2
    %s26 = scalar_select %p25, 0, %s24
    %s27 = sadd.s32 1, %s18
    %s28 = scalar_select %p25, %s27, %s18
    %p29 = scmp.ge.s32.totalorder %s28, 2
    %s30 = scalar_select %p29, 0, %s28
    %s31 = ssub.s32 %s18, %s30
    %s32 = ssub.s32 %s19, %s26
    %s33 = sor.u32 %s31, %s32
    %p34 = scmp.eq.s32.totalorder %s33, 0
    %s36 = sadd.s32 %s35, 1
    %s37 = scalar_select %p34, %s35, %s36
    %p40 = pneg %p34
    %p41 = scmp.eq.s32.totalorder %s11, 3
    %p42 = por %p40, %p41
    %p43 = scmp.ne.s32.totalorder %s35, %s38
    %p44 = scmp.eq.s32.totalorder %s11, 0
    %p45 = por %p43, %p44
    %p46 = scmp.ne.s32.totalorder %s35, %s38
    %p47 = scmp.eq.s32.totalorder %s16, 3
    %p48 = por %p46, %p47
    %p49 = scmp.ne.s32.totalorder %s38, %s39
    %p50 = scmp.eq.s32.totalorder %s16, 0
    %p51 = por %p49, %p50
    %p52 = scmp.ne.s32.totalorder %s38, %s39
    %p53 = scmp.eq.s32.totalorder %s17, 3
    %p54 = por %p52, %p53
    %p56 = scmp.ne.s32.totalorder %s39, %s55
    %p57 = scmp.eq.s32.totalorder %s17, 0
    %p58 = por %p56, %p57
    %s59 = ssub.s32 %s18, %s30
    %s60 = ssub.s32 %s19, %s26
    %s61 = sor.u32 %s59, %s60
    %p62 = scmp.eq.s32.totalorder %s61, 0
    %s64 = sadd.s32 %s63, 1
    %s65 = scalar_select %p62, %s63, %s64
    %p68 = pneg %p62
    %p69 = scmp.eq.s32.totalorder %s11, 3
    %p70 = por %p68, %p69
    %p71 = scmp.ne.s32.totalorder %s63, %s66
    %p72 = scmp.eq.s32.totalorder %s11, 0
    %p73 = por %p71, %p72
    %p74 = scmp.ne.s32.totalorder %s63, %s66
    %p75 = scmp.eq.s32.totalorder %s16, 3
    %p76 = por %p74, %p75
    %p77 = scmp.ne.s32.totalorder %s66, %s67
    %p78 = scmp.eq.s32.totalorder %s16, 0
    %p79 = por %p77, %p78
    %p80 = scmp.ne.s32.totalorder %s66, %s67
    %p81 = scmp.eq.s32.totalorder %s17, 3
    %p82 = por %p80, %p81
    %p84 = scmp.ne.s32.totalorder %s67, %s83
    %p85 = scmp.eq.s32.totalorder %s17, 0
    %p86 = por %p84, %p85
    %s87 = ssub.s32 %s18, %s30
    %s88 = ssub.s32 %s19, %s26
    %s89 = sor.u32 %s87, %s88
    %p90 = scmp.eq.s32.totalorder %s89, 0
    %s92 = sadd.s32 %s91, 1
    %s93 = scalar_select %p90, %s91, %s92
    %p96 = pneg %p90
    %p97 = scmp.eq.s32.totalorder %s11, 3
    %p98 = por %p96, %p97
    %p99 = scmp.ne.s32.totalorder %s91, %s94
    %p100 = scmp.eq.s32.totalorder %s11, 0
    %p101 = por %p99, %p100
    %p102 = scmp.ne.s32.totalorder %s91, %s94
    %p103 = scmp.eq.s32.totalorder %s16, 3
    %p104 = por %p102, %p103
    %p105 = scmp.ne.s32.totalorder %s94, %s95
    %p106 = scmp.eq.s32.totalorder %s16, 0
    %p107 = por %p105, %p106
    %p108 = scmp.ne.s32.totalorder %s94, %s95
    %p109 = scmp.eq.s32.totalorder %s17, 3
    %p110 = por %p108, %p109
    %p112 = scmp.ne.s32.totalorder %s95, %s111
    %p113 = scmp.eq.s32.totalorder %s17, 0
    %p114 = por %p112, %p113
    %s116 = sadd.s32 %s115, 1
    %p119 = scmp.eq.s32.totalorder %s11, 3
    %p120 = scmp.ne.s32.totalorder %s115, %s117
    %p121 = scmp.eq.s32.totalorder %s11, 0
    %p122 = por %p120, %p121
    %p123 = scmp.ne.s32.totalorder %s115, %s117
    %p124 = scmp.eq.s32.totalorder %s16, 3
    %p125 = por %p123, %p124
    %p126 = scmp.ne.s32.totalorder %s117, %s118
    %p127 = scmp.eq.s32.totalorder %s16, 0
    %p128 = por %p126, %p127
    %p129 = scmp.ne.s32.totalorder %s117, %s118
    %p130 = scmp.eq.s32.totalorder %s17, 3
    %p131 = por %p129, %p130
    %p133 = scmp.ne.s32.totalorder %s118, %s132
    %p134 = scmp.eq.s32.totalorder %s17, 0
    %p135 = por %p133, %p134
    %s137 = sadd.s32 %s136, 1
    %p140 = scmp.eq.s32.totalorder %s11, 3
    %p141 = scmp.ne.s32.totalorder %s136, %s138
    %p142 = scmp.eq.s32.totalorder %s11, 0
    %p143 = por %p141, %p142
    %p144 = scmp.ne.s32.totalorder %s136, %s138
    %p145 = scmp.eq.s32.totalorder %s16, 3
    %p146 = por %p144, %p145
    %p147 = scmp.ne.s32.totalorder %s138, %s139
    %p148 = scmp.eq.s32.totalorder %s16, 0
    %p149 = por %p147, %p148
    %p150 = scmp.ne.s32.totalorder %s138, %s139
    %p151 = scmp.eq.s32.totalorder %s17, 3
    %p152 = por %p150, %p151
    %p154 = scmp.ne.s32.totalorder %s139, %s153
    %p155 = scmp.eq.s32.totalorder %s17, 0
    %p156 = por %p154, %p155
    %s157 = ssub.s32 %s18, %s30
    %s158 = ssub.s32 %s19, %s26
    %s159 = sor.u32 %s157, %s158
    %p160 = scmp.eq.s32.totalorder %s159, 0
    %s162 = sadd.s32 %s161, 1
    %s163 = scalar_select %p160, %s161, %s162
    %p166 = pneg %p160
    %p167 = scmp.eq.s32.totalorder %s11, 3
    %p168 = por %p166, %p167
    %p169 = scmp.ne.s32.totalorder %s161, %s164
    %p170 = scmp.eq.s32.totalorder %s11, 0
    %p171 = por %p169, %p170
    %p172 = scmp.ne.s32.totalorder %s161, %s164
    %p173 = scmp.eq.s32.totalorder %s16, 3
    %p174 = por %p172, %p173
    %p175 = scmp.ne.s32.totalorder %s164, %s165
    %p176 = scmp.eq.s32.totalorder %s16, 0
    %p177 = por %p175, %p176
    %p178 = scmp.ne.s32.totalorder %s164, %s165
    %p179 = scmp.eq.s32.totalorder %s17, 3
    %p180 = por %p178, %p179
    %p182 = scmp.ne.s32.totalorder %s165, %s181
    %p183 = scmp.eq.s32.totalorder %s17, 0
    %p184 = por %p182, %p183
    %p185 = scmp.le.s32.totalorder 1, %s11
    %p186 = scmp.lt.s32.totalorder %s11, 5
    %p187 = pnand %p185, %p186
    %p188 = pneg %p187
    // Predicated region
    $region9: #{unet_up_forward.3} parent=5 // pred_check
      _
    $region10: #{unet_up_forward.3} parent=5 // pred_check_branch
      %190 = sbr.rel (%p187) target = $region12
    $region11: #{unet_up_forward.3} parent=5 // pred_region
      %s191 = ssub.s32 %s11, 1
      // Predicated region
      $region13: #{unet_up_forward.3} parent=11 // pred_check
        %p192 = pneg %p128
      $region14: #{unet_up_forward.3} parent=11 // pred_check_branch
        %194 = sbr.rel (%p192) target = $region16
      $region15: #{unet_up_forward.3} parent=11 // pred_region
        _
      $region16: #{unet_up_forward.3} parent=11 // pred_fallthru
        _
      // Predicated region
      $region17: #{unet_up_forward.3} parent=11 // pred_check
        %p195 = pneg %p149
      $region18: #{unet_up_forward.3} parent=11 // pred_check_branch
        %197 = sbr.rel (%p195) target = $region20
      $region19: #{unet_up_forward.3} parent=11 // pred_region
        _
      $region20: #{unet_up_forward.3} parent=11 // pred_fallthru
        _
    $region12: #{unet_up_forward.3} parent=5 // pred_fallthru
      _
    %p198 = scmp.lt.s32.totalorder %s11, 4
    // Predicated region
    $region21: #{unet_up_forward.3} parent=5 // pred_check
      %p199 = pneg %p198
    $region22: #{unet_up_forward.3} parent=5 // pred_check_branch
      %201 = sbr.rel (%p199) target = $region24
    $region23: #{unet_up_forward.3} parent=5 // pred_region
      // Predicated region
      $region25: #{unet_up_forward.3} parent=23 // pred_check
        %p202 = pneg %p45
      $region26: #{unet_up_forward.3} parent=23 // pred_check_branch
        %204 = sbr.rel (%p202) target = $region28
      $region27: #{unet_up_forward.3} parent=23 // pred_region
        %s205 = smul.u32 16, %s19
        %p206 = scmp.lt.s32.totalorder %s18, 1
        %s207 = scalar_select %p206, %s18, 1
        %p208 = scmp.lt.s32.totalorder %s205, 31
        %s209 = scalar_select %p208, %s205, 31
        %s210 = smul.addr %s209, 4
        %s211 = smul.addr %s207, 128
        %s212 = sadd.s32 %s210, %s211
        %s213 = smul.addr %s212, 4
        %s214 = scalar_lea.vmem %s0, %s213
        %s215 = smul.u32 16, %s19
      $region28: #{unet_up_forward.3} parent=23 // pred_fallthru
        _
      // Predicated region
      $region29: #{unet_up_forward.3} parent=23 // pred_check
        %p216 = pneg %p73
      $region30: #{unet_up_forward.3} parent=23 // pred_check_branch
        %218 = sbr.rel (%p216) target = $region32
      $region31: #{unet_up_forward.3} parent=23 // pred_region
        %p219 = scmp.lt.s32.totalorder %s18, 1
        %s220 = scalar_select %p219, %s18, 1
        %p221 = scmp.lt.s32.totalorder %s19, 1
        %s222 = scalar_select %p221, %s19, 1
        %s223 = smul.addr %s222, 4
        %s224 = smul.addr %s220, 8
        %s225 = sadd.s32 %s223, %s224
        %s226 = smul.addr %s225, 4
        %s227 = scalar_lea.vmem %s1, %s226
      $region32: #{unet_up_forward.3} parent=23 // pred_fallthru
        _
      // Predicated region
      $region33: #{unet_up_forward.3} parent=23 // pred_check
        %p228 = pneg %p101
      $region34: #{unet_up_forward.3} parent=23 // pred_check_branch
        %230 = sbr.rel (%p228) target = $region36
      $region35: #{unet_up_forward.3} parent=23 // pred_region
        %p231 = scmp.lt.s32.totalorder %s18, 1
        %s232 = scalar_select %p231, %s18, 1
        %p233 = scmp.lt.s32.totalorder %s19, 1
        %s234 = scalar_select %p233, %s19, 1
        %s235 = smul.addr %s234, 4
        %s236 = smul.addr %s232, 8
        %s237 = sadd.s32 %s235, %s236
        %s238 = smul.addr %s237, 4
        %s239 = scalar_lea.vmem %s2, %s238
      $region36: #{unet_up_forward.3} parent=23 // pred_fallthru
        _
    $region24: #{unet_up_forward.3} parent=5 // pred_fallthru
      _
    %p240 = scmp.le.s32.totalorder 1, %s11
    %p241 = scmp.lt.s32.totalorder %s11, 5
    %p242 = pnand %p240, %p241
    %p243 = pneg %p242
    // Predicated region
    $region37: #{unet_up_forward.3} parent=5 // pred_check
      _
    $region38: #{unet_up_forward.3} parent=5 // pred_check_branch
      %245 = sbr.rel (%p242) target = $region40
    $region39: #{unet_up_forward.3} parent=5 // pred_region
      %s246 = ssub.s32 %s11, 1
      %s247 = smul.u32 16, %s21
      %p248 = scmp.lt.s32.totalorder %s20, 1
      %s249 = scalar_select %p248, %s20, 1
      %p250 = scmp.lt.s32.totalorder %s247, 31
      %s251 = scalar_select %p250, %s247, 31
      %s252 = smul.addr %s251, 4
      %s253 = smul.addr %s249, 128
      %s254 = sadd.s32 %s252, %s253
      %s255 = smul.addr %s254, 4
      %s256 = scalar_lea.vmem %s0, %s255
      %p257 = pneg %p51
      %p258 = pneg %p48
      %p259 = scmp.lt.s32.totalorder %s20, 1
      %s260 = scalar_select %p259, %s20, 1
      %p261 = scmp.lt.s32.totalorder %s21, 1
      %s262 = scalar_select %p261, %s21, 1
      %s263 = smul.addr %s262, 4
      %s264 = smul.addr %s260, 8
      %s265 = sadd.s32 %s263, %s264
      %s266 = smul.addr %s265, 4
      %s267 = scalar_lea.vmem %s1, %s266
      %p268 = pneg %p79
      %p269 = pneg %p76
      %p270 = scmp.lt.s32.totalorder %s20, 1
      %s271 = scalar_select %p270, %s20, 1
      %p272 = scmp.lt.s32.totalorder %s21, 1
      %s273 = scalar_select %p272, %s21, 1
      %s274 = smul.addr %s273, 4
      %s275 = smul.addr %s271, 8
      %s276 = sadd.s32 %s274, %s275
      %s277 = smul.addr %s276, 4
      %s278 = scalar_lea.vmem %s2, %s277
      %p279 = pneg %p107
      %p280 = pneg %p104
      %p281 = pneg %p128
      %p282 = pneg %p125
      %p283 = pneg %p149
      %p284 = pneg %p146
      %p285 = pneg %p177
      %p286 = pneg %p174
      %s287 = smul.u32 16, %s21
      %p288 = scmp.lt.s32.totalorder %s20, 1
      %s289 = scalar_select %p288, %s20, 1
      %p290 = scmp.lt.s32.totalorder %s287, 31
      %s291 = scalar_select %p290, %s287, 31
      %s292 = smul.addr %s291, 4
      %s293 = smul.addr %s289, 128
      %s294 = sadd.s32 %s292, %s293
      %s295 = smul.addr %s294, 8
      %s296 = scalar_lea.vmem %s5, %s295
      %s297 = smul.u32 16, %s21
      %p298 = scmp.lt.s32.totalorder %s20, 1
      %s299 = scalar_select %p298, %s20, 1
      %p300 = scmp.lt.s32.totalorder %s297, 31
      %s301 = scalar_select %p300, %s297, 31
      %s302 = smul.addr %s301, 4
      %s303 = smul.addr %s299, 128
      %s304 = sadd.s32 %s302, %s303
      %s305 = smul.addr %s304, 4
      %s306 = scalar_lea.vmem %s0, %s305
      %s307 = smul.u32 16, %s21
      %p308 = scmp.lt.s32.totalorder %s20, 1
      %s309 = scalar_select %p308, %s20, 1
      %p310 = scmp.lt.s32.totalorder %s21, 1
      %s311 = scalar_select %p310, %s21, 1
      %s312 = smul.addr %s311, 4
      %s313 = smul.addr %s309, 8
      %s314 = sadd.s32 %s312, %s313
      %s315 = smul.addr %s314, 4
      %s316 = scalar_lea.vmem %s1, %s315
      %p317 = scmp.lt.s32.totalorder %s20, 1
      %s318 = scalar_select %p317, %s20, 1
      %p319 = scmp.lt.s32.totalorder %s21, 1
      %s320 = scalar_select %p319, %s21, 1
      %s321 = smul.addr %s320, 4
      %s322 = smul.addr %s318, 8
      %s323 = sadd.s32 %s321, %s322
      %s324 = smul.addr %s323, 4
      %s325 = scalar_lea.vmem %s2, %s324
      %s326 = smul.u32 16, %s21
      %p327 = scmp.lt.s32.totalorder %s20, 1
      %s328 = scalar_select %p327, %s20, 1
      %p329 = scmp.lt.s32.totalorder %s326, 31
      %s330 = scalar_select %p329, %s326, 31
      %s331 = smul.addr %s330, 4
      %s332 = smul.addr %s328, 128
      %s333 = sadd.s32 %s331, %s332
      %s334 = smul.addr %s333, 8
      %s335 = scalar_lea.vmem %s5, %s334
      %s336 = smul.u32 16, %s21
      %v338 = vld [vmem:[%s316] sm:$0xf]
      %v339 = vld [vmem:[%s316 + $0x4] sm:$0xf]
      %v340 = vld [vmem:[%s316 + $0x8] sm:$0xf]
      %v341 = vld [vmem:[%s316 + $0xc] sm:$0xf]
      %v342 = vld [vmem:[%s306] sm:$0xf]
      %v343 = vld [vmem:[%s306 + $0x4] sm:$0xf]
      %v344 = vld [vmem:[%s306 + $0x8] sm:$0xf]
      %v345 = vld [vmem:[%s306 + $0xc] sm:$0xf]
      %v346 = vld [vmem:[%s306 + $0x10] sm:$0xf]
      %v347 = vld [vmem:[%s306 + $0x14] sm:$0xf]
      %v348 = vld [vmem:[%s306 + $0x18] sm:$0xf]
      %v349 = vld [vmem:[%s306 + $0x1c] sm:$0xf]
      %v350 = vld [vmem:[%s306 + $0x20] sm:$0xf]
      %v351 = vld [vmem:[%s306 + $0x24] sm:$0xf]
      %v352 = vld [vmem:[%s306 + $0x28] sm:$0xf]
      %v353 = vld [vmem:[%s306 + $0x2c] sm:$0xf]
      %v354 = vld [vmem:[%s306 + $0x30] sm:$0xf]
      %v355 = vld [vmem:[%s306 + $0x34] sm:$0xf]
      %v356 = vld [vmem:[%s306 + $0x38] sm:$0xf]
      %v357 = vld [vmem:[%s306 + $0x3c] sm:$0xf]
      %v358 = vld [vmem:[%s306 + $0x40] sm:$0xf]
      %v359 = vld [vmem:[%s306 + $0x44] sm:$0xf]
      %v360 = vld [vmem:[%s306 + $0x48] sm:$0xf]
      %v361 = vld [vmem:[%s306 + $0x4c] sm:$0xf]
      %v362 = vld [vmem:[%s306 + $0x50] sm:$0xf]
      %v363 = vld [vmem:[%s306 + $0x54] sm:$0xf]
      %v364 = vld [vmem:[%s306 + $0x58] sm:$0xf]
      %v365 = vld [vmem:[%s306 + $0x5c] sm:$0xf]
      %v366 = vld [vmem:[%s306 + $0x60] sm:$0xf]
      %v367 = vld [vmem:[%s306 + $0x64] sm:$0xf]
      %v368 = vld [vmem:[%s306 + $0x68] sm:$0xf]
      %v369 = vld [vmem:[%s306 + $0x6c] sm:$0xf]
      %v370 = vld [vmem:[%s306 + $0x70] sm:$0xf]
      %v371 = vld [vmem:[%s306 + $0x74] sm:$0xf]
      %v372 = vld [vmem:[%s306 + $0x78] sm:$0xf]
      %v373 = vld [vmem:[%s306 + $0x7c] sm:$0xf]
      %v374 = vld [vmem:[%s306 + $0x80] sm:$0xf]
      %v375 = vld [vmem:[%s306 + $0x84] sm:$0xf]
      %v376 = vld [vmem:[%s306 + $0x88] sm:$0xf]
      %v377 = vld [vmem:[%s306 + $0x8c] sm:$0xf]
      %v378 = vld [vmem:[%s306 + $0x90] sm:$0xf]
      %v379 = vld [vmem:[%s306 + $0x94] sm:$0xf]
      %v380 = vld [vmem:[%s306 + $0x98] sm:$0xf]
      %v381 = vld [vmem:[%s306 + $0x9c] sm:$0xf]
      %v382 = vld [vmem:[%s306 + $0xa0] sm:$0xf]
      %v383 = vld [vmem:[%s306 + $0xa4] sm:$0xf]
      %v384 = vld [vmem:[%s306 + $0xa8] sm:$0xf]
      %v385 = vld [vmem:[%s306 + $0xac] sm:$0xf]
      %v386 = vld [vmem:[%s306 + $0xb0] sm:$0xf]
      %v387 = vld [vmem:[%s306 + $0xb4] sm:$0xf]
      %v388 = vld [vmem:[%s306 + $0xb8] sm:$0xf]
      %v389 = vld [vmem:[%s306 + $0xbc] sm:$0xf]
      %v390 = vld [vmem:[%s306 + $0xc0] sm:$0xf]
      %v391 = vld [vmem:[%s306 + $0xc4] sm:$0xf]
      %v392 = vld [vmem:[%s306 + $0xc8] sm:$0xf]
      %v393 = vld [vmem:[%s306 + $0xcc] sm:$0xf]
      %v394 = vld [vmem:[%s306 + $0xd0] sm:$0xf]
      %v395 = vld [vmem:[%s306 + $0xd4] sm:$0xf]
      %v396 = vld [vmem:[%s306 + $0xd8] sm:$0xf]
      %v397 = vld [vmem:[%s306 + $0xdc] sm:$0xf]
      %v398 = vld [vmem:[%s306 + $0xe0] sm:$0xf]
      %v399 = vld [vmem:[%s306 + $0xe4] sm:$0xf]
      %v400 = vld [vmem:[%s306 + $0xe8] sm:$0xf]
      %v401 = vld [vmem:[%s306 + $0xec] sm:$0xf]
      %v402 = vld [vmem:[%s306 + $0xf0] sm:$0xf]
      %v403 = vld [vmem:[%s306 + $0xf4] sm:$0xf]
      %v404 = vld [vmem:[%s306 + $0xf8] sm:$0xf]
      %v405 = vld [vmem:[%s306 + $0xfc] sm:$0xf]
      %v406 = vld [vmem:[%s325] sm:$0xf]
      %v407 = vld [vmem:[%s325 + $0x4] sm:$0xf]
      %v408 = vld [vmem:[%s325 + $0x8] sm:$0xf]
      %v409 = vld [vmem:[%s325 + $0xc] sm:$0xf]
      %v482 = vunpack.c.l.b16 %v338
      %v483 = vunpack.c.l.b16 %v339
      %v484 = vunpack.c.l.b16 %v340
      %v485 = vunpack.c.l.b16 %v341
      %v486 = vunpack.c.l.b16 %v342
      %v487 = vunpack.c.l.b16 %v343
      %v488 = vunpack.c.l.b16 %v344
      %v489 = vunpack.c.l.b16 %v345
      %v490 = vunpack.c.l.b16 %v346
      %v491 = vunpack.c.l.b16 %v347
      %v492 = vunpack.c.l.b16 %v348
      %v493 = vunpack.c.l.b16 %v349
      %v494 = vunpack.c.l.b16 %v350
      %v495 = vunpack.c.l.b16 %v351
      %v496 = vunpack.c.l.b16 %v352
      %v497 = vunpack.c.l.b16 %v353
      %v498 = vunpack.c.l.b16 %v354
      %v499 = vunpack.c.l.b16 %v355
      %v500 = vunpack.c.l.b16 %v356
      %v501 = vunpack.c.l.b16 %v357
      %v502 = vunpack.c.l.b16 %v358
      %v503 = vunpack.c.l.b16 %v359
      %v504 = vunpack.c.l.b16 %v360
      %v505 = vunpack.c.l.b16 %v361
      %v506 = vunpack.c.l.b16 %v362
      %v507 = vunpack.c.l.b16 %v363
      %v508 = vunpack.c.l.b16 %v364
      %v509 = vunpack.c.l.b16 %v365
      %v510 = vunpack.c.l.b16 %v366
      %v511 = vunpack.c.l.b16 %v367
      %v512 = vunpack.c.l.b16 %v368
      %v513 = vunpack.c.l.b16 %v369
      %v514 = vunpack.c.l.b16 %v370
      %v515 = vunpack.c.l.b16 %v371
      %v516 = vunpack.c.l.b16 %v372
      %v517 = vunpack.c.l.b16 %v373
      %v518 = vunpack.c.l.b16 %v374
      %v519 = vunpack.c.l.b16 %v375
      %v520 = vunpack.c.l.b16 %v376
      %v521 = vunpack.c.l.b16 %v377
      %v522 = vunpack.c.l.b16 %v378
      %v523 = vunpack.c.l.b16 %v379
      %v524 = vunpack.c.l.b16 %v380
      %v525 = vunpack.c.l.b16 %v381
      %v526 = vunpack.c.l.b16 %v382
      %v527 = vunpack.c.l.b16 %v383
      %v528 = vunpack.c.l.b16 %v384
      %v529 = vunpack.c.l.b16 %v385
      %v530 = vunpack.c.l.b16 %v386
      %v531 = vunpack.c.l.b16 %v387
      %v532 = vunpack.c.l.b16 %v388
      %v533 = vunpack.c.l.b16 %v389
      %v534 = vunpack.c.l.b16 %v390
      %v535 = vunpack.c.l.b16 %v391
      %v536 = vunpack.c.l.b16 %v392
      %v537 = vunpack.c.l.b16 %v393
      %v538 = vunpack.c.l.b16 %v394
      %v539 = vunpack.c.l.b16 %v395
      %v540 = vunpack.c.l.b16 %v396
      %v541 = vunpack.c.l.b16 %v397
      %v542 = vunpack.c.l.b16 %v398
      %v543 = vunpack.c.l.b16 %v399
      %v544 = vunpack.c.l.b16 %v400
      %v545 = vunpack.c.l.b16 %v401
      %v546 = vunpack.c.l.b16 %v402
      %v547 = vunpack.c.l.b16 %v403
      %v548 = vunpack.c.l.b16 %v404
      %v549 = vunpack.c.l.b16 %v405
      %v550 = vunpack.c.l.b16 %v406
      %v551 = vunpack.c.l.b16 %v407
      %v552 = vunpack.c.l.b16 %v408
      %v553 = vunpack.c.l.b16 %v409
      %v554 = vpack.c.b16 %v483, %v482
      %v555 = vpack.c.b16 %v485, %v484
      %v556 = vpack.c.b16 %v487, %v486
      %v557 = vpack.c.b16 %v489, %v488
      %v558 = vpack.c.b16 %v491, %v490
      %v559 = vpack.c.b16 %v493, %v492
      %v560 = vpack.c.b16 %v495, %v494
      %v561 = vpack.c.b16 %v497, %v496
      %v562 = vpack.c.b16 %v499, %v498
      %v563 = vpack.c.b16 %v501, %v500
      %v564 = vpack.c.b16 %v503, %v502
      %v565 = vpack.c.b16 %v505, %v504
      %v566 = vpack.c.b16 %v507, %v506
      %v567 = vpack.c.b16 %v509, %v508
      %v568 = vpack.c.b16 %v511, %v510
      %v569 = vpack.c.b16 %v513, %v512
      %v570 = vpack.c.b16 %v515, %v514
      %v571 = vpack.c.b16 %v517, %v516
      %v572 = vpack.c.b16 %v519, %v518
      %v573 = vpack.c.b16 %v521, %v520
      %v574 = vpack.c.b16 %v523, %v522
      %v575 = vpack.c.b16 %v525, %v524
      %v576 = vpack.c.b16 %v527, %v526
      %v577 = vpack.c.b16 %v529, %v528
      %v578 = vpack.c.b16 %v531, %v530
      %v579 = vpack.c.b16 %v533, %v532
      %v580 = vpack.c.b16 %v535, %v534
      %v581 = vpack.c.b16 %v537, %v536
      %v582 = vpack.c.b16 %v539, %v538
      %v583 = vpack.c.b16 %v541, %v540
      %v584 = vpack.c.b16 %v543, %v542
      %v585 = vpack.c.b16 %v545, %v544
      %v586 = vpack.c.b16 %v547, %v546
      %v587 = vpack.c.b16 %v549, %v548
      %v588 = vpack.c.b16 %v551, %v550
      %v589 = vpack.c.b16 %v553, %v552
      %vm590 = vsmask.f32 256
      %v592 = vshrl.u32 %v554, 16
      %v594 = vrot.slane %v592, 7
      %v595 = vshll.u32 %v554, 16
      %v597 = vor.u32 %v594, %v595
      %v599 = vshrl.u32 %v555, 16
      %v601 = vrot.slane %v599, 7
      %v602 = vshll.u32 %v555, 16
      %v604 = vor.u32 %v601, %v602
      %v605 = vsel %vm590, %v594, %v604
      %v607 = vshrl.u32 %v556, 16
      %v609 = vrot.slane %v607, 7
      %v610 = vshll.u32 %v556, 16
      %v612 = vor.u32 %v609, %v610
      %v614 = vshrl.u32 %v557, 16
      %v616 = vrot.slane %v614, 7
      %v617 = vshll.u32 %v557, 16
      %v619 = vor.u32 %v616, %v617
      %v620 = vsel %vm590, %v609, %v619
      %v622 = vshrl.u32 %v558, 16
      %v624 = vrot.slane %v622, 7
      %v625 = vshll.u32 %v558, 16
      %v627 = vor.u32 %v624, %v625
      %v629 = vshrl.u32 %v559, 16
      %v631 = vrot.slane %v629, 7
      %v632 = vshll.u32 %v559, 16
      %v634 = vor.u32 %v631, %v632
      %v635 = vsel %vm590, %v624, %v634
      %v637 = vshrl.u32 %v560, 16
      %v639 = vrot.slane %v637, 7
      %v640 = vshll.u32 %v560, 16
      %v642 = vor.u32 %v639, %v640
      %v644 = vshrl.u32 %v561, 16
      %v646 = vrot.slane %v644, 7
      %v647 = vshll.u32 %v561, 16
      %v649 = vor.u32 %v646, %v647
      %v650 = vsel %vm590, %v639, %v649
      %v652 = vshrl.u32 %v562, 16
      %v654 = vrot.slane %v652, 7
      %v655 = vshll.u32 %v562, 16
      %v657 = vor.u32 %v654, %v655
      %v659 = vshrl.u32 %v563, 16
      %v661 = vrot.slane %v659, 7
      %v662 = vshll.u32 %v563, 16
      %v664 = vor.u32 %v661, %v662
      %v665 = vsel %vm590, %v654, %v664
      %v667 = vshrl.u32 %v564, 16
      %v669 = vrot.slane %v667, 7
      %v670 = vshll.u32 %v564, 16
      %v672 = vor.u32 %v669, %v670
      %v674 = vshrl.u32 %v565, 16
      %v676 = vrot.slane %v674, 7
      %v677 = vshll.u32 %v565, 16
      %v679 = vor.u32 %v676, %v677
      %v680 = vsel %vm590, %v669, %v679
      %v682 = vshrl.u32 %v566, 16
      %v684 = vrot.slane %v682, 7
      %v685 = vshll.u32 %v566, 16
      %v687 = vor.u32 %v684, %v685
      %v689 = vshrl.u32 %v567, 16
      %v691 = vrot.slane %v689, 7
      %v692 = vshll.u32 %v567, 16
      %v694 = vor.u32 %v691, %v692
      %v695 = vsel %vm590, %v684, %v694
      %v697 = vshrl.u32 %v568, 16
      %v699 = vrot.slane %v697, 7
      %v700 = vshll.u32 %v568, 16
      %v702 = vor.u32 %v699, %v700
      %v704 = vshrl.u32 %v569, 16
      %v706 = vrot.slane %v704, 7
      %v707 = vshll.u32 %v569, 16
      %v709 = vor.u32 %v706, %v707
      %v710 = vsel %vm590, %v699, %v709
      %v712 = vshrl.u32 %v570, 16
      %v714 = vrot.slane %v712, 7
      %v715 = vshll.u32 %v570, 16
      %v717 = vor.u32 %v714, %v715
      %v719 = vshrl.u32 %v571, 16
      %v721 = vrot.slane %v719, 7
      %v722 = vshll.u32 %v571, 16
      %v724 = vor.u32 %v721, %v722
      %v725 = vsel %vm590, %v714, %v724
      %v727 = vshrl.u32 %v572, 16
      %v729 = vrot.slane %v727, 7
      %v730 = vshll.u32 %v572, 16
      %v732 = vor.u32 %v729, %v730
      %v734 = vshrl.u32 %v573, 16
      %v736 = vrot.slane %v734, 7
      %v737 = vshll.u32 %v573, 16
      %v739 = vor.u32 %v736, %v737
      %v740 = vsel %vm590, %v729, %v739
      %v742 = vshrl.u32 %v574, 16
      %v744 = vrot.slane %v742, 7
      %v745 = vshll.u32 %v574, 16
      %v747 = vor.u32 %v744, %v745
      %v749 = vshrl.u32 %v575, 16
      %v751 = vrot.slane %v749, 7
      %v752 = vshll.u32 %v575, 16
      %v754 = vor.u32 %v751, %v752
      %v755 = vsel %vm590, %v744, %v754
      %v757 = vshrl.u32 %v576, 16
      %v759 = vrot.slane %v757, 7
      %v760 = vshll.u32 %v576, 16
      %v762 = vor.u32 %v759, %v760
      %v764 = vshrl.u32 %v577, 16
      %v766 = vrot.slane %v764, 7
      %v767 = vshll.u32 %v577, 16
      %v769 = vor.u32 %v766, %v767
      %v770 = vsel %vm590, %v759, %v769
      %v772 = vshrl.u32 %v578, 16
      %v774 = vrot.slane %v772, 7
      %v775 = vshll.u32 %v578, 16
      %v777 = vor.u32 %v774, %v775
      %v779 = vshrl.u32 %v579, 16
      %v781 = vrot.slane %v779, 7
      %v782 = vshll.u32 %v579, 16
      %v784 = vor.u32 %v781, %v782
      %v785 = vsel %vm590, %v774, %v784
      %v787 = vshrl.u32 %v580, 16
      %v789 = vrot.slane %v787, 7
      %v790 = vshll.u32 %v580, 16
      %v792 = vor.u32 %v789, %v790
      %v794 = vshrl.u32 %v581, 16
      %v796 = vrot.slane %v794, 7
      %v797 = vshll.u32 %v581, 16
      %v799 = vor.u32 %v796, %v797
      %v800 = vsel %vm590, %v789, %v799
      %v802 = vshrl.u32 %v582, 16
      %v804 = vrot.slane %v802, 7
      %v805 = vshll.u32 %v582, 16
      %v807 = vor.u32 %v804, %v805
      %v809 = vshrl.u32 %v583, 16
      %v811 = vrot.slane %v809, 7
      %v812 = vshll.u32 %v583, 16
      %v814 = vor.u32 %v811, %v812
      %v815 = vsel %vm590, %v804, %v814
      %v817 = vshrl.u32 %v584, 16
      %v819 = vrot.slane %v817, 7
      %v820 = vshll.u32 %v584, 16
      %v822 = vor.u32 %v819, %v820
      %v824 = vshrl.u32 %v585, 16
      %v826 = vrot.slane %v824, 7
      %v827 = vshll.u32 %v585, 16
      %v829 = vor.u32 %v826, %v827
      %v830 = vsel %vm590, %v819, %v829
      %v832 = vshrl.u32 %v586, 16
      %v834 = vrot.slane %v832, 7
      %v835 = vshll.u32 %v586, 16
      %v837 = vor.u32 %v834, %v835
      %v839 = vshrl.u32 %v587, 16
      %v841 = vrot.slane %v839, 7
      %v842 = vshll.u32 %v587, 16
      %v844 = vor.u32 %v841, %v842
      %v845 = vsel %vm590, %v834, %v844
      %v847 = vshrl.u32 %v588, 16
      %v849 = vrot.slane %v847, 7
      %v850 = vshll.u32 %v588, 16
      %v852 = vor.u32 %v849, %v850
      %v854 = vshrl.u32 %v589, 16
      %v856 = vrot.slane %v854, 7
      %v857 = vshll.u32 %v589, 16
      %v859 = vor.u32 %v856, %v857
      %v860 = vsel %vm590, %v849, %v859
      %vm915 = vcmask 1040384
      %vm916 = vmand %vm915, %vm590
      %v917 = vsel %vm916, 0, %v597
      %v918 = vsel %vm916, 0, %v612
      %v919 = vsel %vm916, 0, %v627
      %v920 = vsel %vm916, 0, %v642
      %v921 = vsel %vm916, 0, %v657
      %v922 = vsel %vm916, 0, %v672
      %v923 = vsel %vm916, 0, %v687
      %v924 = vsel %vm916, 0, %v702
      %v925 = vsel %vm916, 0, %v717
      %v926 = vsel %vm916, 0, %v732
      %v927 = vsel %vm916, 0, %v747
      %v928 = vsel %vm916, 0, %v762
      %v929 = vsel %vm916, 0, %v777
      %v930 = vsel %vm916, 0, %v792
      %v931 = vsel %vm916, 0, %v807
      %v932 = vsel %vm916, 0, %v822
      %v933 = vsel %vm916, 0, %v837
      %v934 = vsel %vm916, 0, %v852
      %v935 = vsel %vm916, %v601, 0
      %v936 = vsel %vm916, %v616, 0
      %v937 = vsel %vm916, %v631, 0
      %v938 = vsel %vm916, %v646, 0
      %v939 = vsel %vm916, %v661, 0
      %v940 = vsel %vm916, %v676, 0
      %v941 = vsel %vm916, %v691, 0
      %v942 = vsel %vm916, %v706, 0
      %v943 = vsel %vm916, %v721, 0
      %v944 = vsel %vm916, %v736, 0
      %v945 = vsel %vm916, %v751, 0
      %v946 = vsel %vm916, %v766, 0
      %v947 = vsel %vm916, %v781, 0
      %v948 = vsel %vm916, %v796, 0
      %v949 = vsel %vm916, %v811, 0
      %v950 = vsel %vm916, %v826, 0
      %v951 = vsel %vm916, %v841, 0
      %v952 = vsel %vm916, %v856, 0
      %v953 = vld [vmem:[%s4] sm:$0x1]
      %v955 = vperm.slane %v953, 0
      %957 = vst [vmem:[#allocation2] sm:$0xff] %v955
      %958 = vst [vmem:[#allocation2 + $0x8] sm:$0xff] %v955
      %959 = vst [vmem:[#allocation2 + $0x10] sm:$0xff] %v955
      %960 = vst [vmem:[#allocation2 + $0x18] sm:$0xff] %v955
      %961 = vst [vmem:[#allocation2 + $0x20] sm:$0xff] %v955
      %962 = vst [vmem:[#allocation2 + $0x28] sm:$0xff] %v955
      %963 = vst [vmem:[#allocation2 + $0x30] sm:$0xff] %v955
      %964 = vst [vmem:[#allocation2 + $0x38] sm:$0xff] %v955
      %965 = vst [vmem:[#allocation2 + $0x40] sm:$0xff] %v955
      %966 = vst [vmem:[#allocation2 + $0x48] sm:$0xff] %v955
      %967 = vst [vmem:[#allocation2 + $0x50] sm:$0xff] %v955
      %968 = vst [vmem:[#allocation2 + $0x58] sm:$0xff] %v955
      %969 = vst [vmem:[#allocation2 + $0x60] sm:$0xff] %v955
      %970 = vst [vmem:[#allocation2 + $0x68] sm:$0xff] %v955
      %971 = vst [vmem:[#allocation2 + $0x70] sm:$0xff] %v955
      %972 = vst [vmem:[#allocation2 + $0x78] sm:$0xff] %v955
      %973 = vst [vmem:[#allocation2 + $0x80] sm:$0xff] %v955
      %974 = vst [vmem:[#allocation2 + $0x88] sm:$0xff] %v955
      %975 = vst [vmem:[#allocation2 + $0x90] sm:$0xff] %v955
      %976 = vst [vmem:[#allocation2 + $0x98] sm:$0xff] %v955
      %977 = vst [vmem:[#allocation2 + $0xa0] sm:$0xff] %v955
      %978 = vst [vmem:[#allocation2 + $0xa8] sm:$0xff] %v955
      %979 = vst [vmem:[#allocation2 + $0xb0] sm:$0xff] %v955
      %980 = vst [vmem:[#allocation2 + $0xb8] sm:$0xff] %v955
      %981 = vst [vmem:[#allocation2 + $0xc0] sm:$0xff] %v955
      %982 = vst [vmem:[#allocation2 + $0xc8] sm:$0xff] %v955
      %983 = vst [vmem:[#allocation2 + $0xd0] sm:$0xff] %v955
      %984 = vst [vmem:[#allocation2 + $0xd8] sm:$0xff] %v955
      %985 = vst [vmem:[#allocation2 + $0xe0] sm:$0xff] %v955
      %986 = vst [vmem:[#allocation2 + $0xe8] sm:$0xff] %v955
      %987 = vst [vmem:[#allocation2 + $0xf0] sm:$0xff] %v955
      %988 = vst [vmem:[#allocation2 + $0xf8] sm:$0xff] %v955
      %989 = vst [vmem:[#allocation2 + $0x100] sm:$0xff] %v955
      %990 = vst [vmem:[#allocation2 + $0x108] sm:$0xff] %v955
      %991 = vst [vmem:[#allocation2 + $0x110] sm:$0xff] %v955
      %992 = vst [vmem:[#allocation2 + $0x118] sm:$0xff] %v955
      %993 = vst [vmem:[#allocation2 + $0x120] sm:$0xff] %v955
      %994 = vst [vmem:[#allocation2 + $0x128] sm:$0xff] %v955
      %995 = vst [vmem:[#allocation2 + $0x130] sm:$0xff] %v955
      %996 = vst [vmem:[#allocation2 + $0x138] sm:$0xff] %v955
      %997 = vst [vmem:[#allocation2 + $0x140] sm:$0xff] %v955
      %998 = vst [vmem:[#allocation2 + $0x148] sm:$0xff] %v955
      %999 = vst [vmem:[#allocation2 + $0x150] sm:$0xff] %v955
      %1000 = vst [vmem:[#allocation2 + $0x158] sm:$0xff] %v955
      %1001 = vst [vmem:[#allocation2 + $0x160] sm:$0xff] %v955
      %1002 = vst [vmem:[#allocation2 + $0x168] sm:$0xff] %v955
      %1003 = vst [vmem:[#allocation2 + $0x170] sm:$0xff] %v955
      %1004 = vst [vmem:[#allocation2 + $0x178] sm:$0xff] %v955
      %1005 = vst [vmem:[#allocation2 + $0x180] sm:$0xff] %v955
      %1006 = vst [vmem:[#allocation2 + $0x188] sm:$0xff] %v955
      %1007 = vst [vmem:[#allocation2 + $0x190] sm:$0xff] %v955
      %1008 = vst [vmem:[#allocation2 + $0x198] sm:$0xff] %v955
      %1009 = vst [vmem:[#allocation2 + $0x1a0] sm:$0xff] %v955
      %1010 = vst [vmem:[#allocation2 + $0x1a8] sm:$0xff] %v955
      %1011 = vst [vmem:[#allocation2 + $0x1b0] sm:$0xff] %v955
      %1012 = vst [vmem:[#allocation2 + $0x1b8] sm:$0xff] %v955
      %1013 = vst [vmem:[#allocation2 + $0x1c0] sm:$0xff] %v955
      %1014 = vst [vmem:[#allocation2 + $0x1c8] sm:$0xff] %v955
      %1015 = vst [vmem:[#allocation2 + $0x1d0] sm:$0xff] %v955
      %1016 = vst [vmem:[#allocation2 + $0x1d8] sm:$0xff] %v955
      %1017 = vst [vmem:[#allocation2 + $0x1e0] sm:$0xff] %v955
      %1018 = vst [vmem:[#allocation2 + $0x1e8] sm:$0xff] %v955
      %1019 = vst [vmem:[#allocation2 + $0x1f0] sm:$0xff] %v955
      %1020 = vst [vmem:[#allocation2 + $0x1f8] sm:$0xff] %v955
      %vm1021 = vsmask.f32 7424
      %v1023 = vshrl.u32 %v917, 16
      %v1025 = vshll.u32 %v917, 16
      %v1027 = vrot.slane %v1025, 1
      %v1028 = vor.u32 %v1023, %v1027
      %v1030 = vshll.u32 %v605, 16
      %v1032 = vrot.slane %v1030, 1
      %v1033 = vsel %vm1021, %v1028, %v1032
      %v1034 = vshrl.u32 %v605, 16
      %v1036 = vor.u32 %v1034, %v1032
      %v1038 = vshll.u32 %v935, 16
      %v1040 = vrot.slane %v1038, 1
      %v1041 = vsel %vm1021, %v1036, %v1040
      %v1043 = vshrl.u32 %v918, 16
      %v1045 = vshll.u32 %v918, 16
      %v1047 = vrot.slane %v1045, 1
      %v1048 = vor.u32 %v1043, %v1047
      %v1050 = vshll.u32 %v620, 16
      %v1052 = vrot.slane %v1050, 1
      %v1053 = vsel %vm1021, %v1048, %v1052
      %v1054 = vshrl.u32 %v620, 16
      %v1056 = vor.u32 %v1054, %v1052
      %v1058 = vshll.u32 %v936, 16
      %v1060 = vrot.slane %v1058, 1
      %v1061 = vsel %vm1021, %v1056, %v1060
      %v1063 = vshrl.u32 %v919, 16
      %v1065 = vshll.u32 %v919, 16
      %v1067 = vrot.slane %v1065, 1
      %v1068 = vor.u32 %v1063, %v1067
      %v1070 = vshll.u32 %v635, 16
      %v1072 = vrot.slane %v1070, 1
      %v1073 = vsel %vm1021, %v1068, %v1072
      %v1074 = vshrl.u32 %v635, 16
      %v1076 = vor.u32 %v1074, %v1072
      %v1078 = vshll.u32 %v937, 16
      %v1080 = vrot.slane %v1078, 1
      %v1081 = vsel %vm1021, %v1076, %v1080
      %v1083 = vshrl.u32 %v920, 16
      %v1085 = vshll.u32 %v920, 16
      %v1087 = vrot.slane %v1085, 1
      %v1088 = vor.u32 %v1083, %v1087
      %v1090 = vshll.u32 %v650, 16
      %v1092 = vrot.slane %v1090, 1
      %v1093 = vsel %vm1021, %v1088, %v1092
      %v1094 = vshrl.u32 %v650, 16
      %v1096 = vor.u32 %v1094, %v1092
      %v1098 = vshll.u32 %v938, 16
      %v1100 = vrot.slane %v1098, 1
      %v1101 = vsel %vm1021, %v1096, %v1100
      %v1103 = vshrl.u32 %v921, 16
      %v1105 = vshll.u32 %v921, 16
      %v1107 = vrot.slane %v1105, 1
      %v1108 = vor.u32 %v1103, %v1107
      %v1110 = vshll.u32 %v665, 16
      %v1112 = vrot.slane %v1110, 1
      %v1113 = vsel %vm1021, %v1108, %v1112
      %v1114 = vshrl.u32 %v665, 16
      %v1116 = vor.u32 %v1114, %v1112
      %v1118 = vshll.u32 %v939, 16
      %v1120 = vrot.slane %v1118, 1
      %v1121 = vsel %vm1021, %v1116, %v1120
      %v1123 = vshrl.u32 %v922, 16
      %v1125 = vshll.u32 %v922, 16
      %v1127 = vrot.slane %v1125, 1
      %v1128 = vor.u32 %v1123, %v1127
      %v1130 = vshll.u32 %v680, 16
      %v1132 = vrot.slane %v1130, 1
      %v1133 = vsel %vm1021, %v1128, %v1132
      %v1134 = vshrl.u32 %v680, 16
      %v1136 = vor.u32 %v1134, %v1132
      %v1138 = vshll.u32 %v940, 16
      %v1140 = vrot.slane %v1138, 1
      %v1141 = vsel %vm1021, %v1136, %v1140
      %v1143 = vshrl.u32 %v923, 16
      %v1145 = vshll.u32 %v923, 16
      %v1147 = vrot.slane %v1145, 1
      %v1148 = vor.u32 %v1143, %v1147
      %v1150 = vshll.u32 %v695, 16
      %v1152 = vrot.slane %v1150, 1
      %v1153 = vsel %vm1021, %v1148, %v1152
      %v1154 = vshrl.u32 %v695, 16
      %v1156 = vor.u32 %v1154, %v1152
      %v1158 = vshll.u32 %v941, 16
      %v1160 = vrot.slane %v1158, 1
      %v1161 = vsel %vm1021, %v1156, %v1160
      %v1163 = vshrl.u32 %v924, 16
      %v1165 = vshll.u32 %v924, 16
      %v1167 = vrot.slane %v1165, 1
      %v1168 = vor.u32 %v1163, %v1167
      %v1170 = vshll.u32 %v710, 16
      %v1172 = vrot.slane %v1170, 1
      %v1173 = vsel %vm1021, %v1168, %v1172
      %v1174 = vshrl.u32 %v710, 16
      %v1176 = vor.u32 %v1174, %v1172
      %v1178 = vshll.u32 %v942, 16
      %v1180 = vrot.slane %v1178, 1
      %v1181 = vsel %vm1021, %v1176, %v1180
      %v1183 = vshrl.u32 %v925, 16
      %v1185 = vshll.u32 %v925, 16
      %v1187 = vrot.slane %v1185, 1
      %v1188 = vor.u32 %v1183, %v1187
      %v1190 = vshll.u32 %v725, 16
      %v1192 = vrot.slane %v1190, 1
      %v1193 = vsel %vm1021, %v1188, %v1192
      %v1194 = vshrl.u32 %v725, 16
      %v1196 = vor.u32 %v1194, %v1192
      %v1198 = vshll.u32 %v943, 16
      %v1200 = vrot.slane %v1198, 1
      %v1201 = vsel %vm1021, %v1196, %v1200
      %v1203 = vshrl.u32 %v926, 16
      %v1205 = vshll.u32 %v926, 16
      %v1207 = vrot.slane %v1205, 1
      %v1208 = vor.u32 %v1203, %v1207
      %v1210 = vshll.u32 %v740, 16
      %v1212 = vrot.slane %v1210, 1
      %v1213 = vsel %vm1021, %v1208, %v1212
      %v1214 = vshrl.u32 %v740, 16
      %v1216 = vor.u32 %v1214, %v1212
      %v1218 = vshll.u32 %v944, 16
      %v1220 = vrot.slane %v1218, 1
      %v1221 = vsel %vm1021, %v1216, %v1220
      %v1223 = vshrl.u32 %v927, 16
      %v1225 = vshll.u32 %v927, 16
      %v1227 = vrot.slane %v1225, 1
      %v1228 = vor.u32 %v1223, %v1227
      %v1230 = vshll.u32 %v755, 16
      %v1232 = vrot.slane %v1230, 1
      %v1233 = vsel %vm1021, %v1228, %v1232
      %v1234 = vshrl.u32 %v755, 16
      %v1236 = vor.u32 %v1234, %v1232
      %v1238 = vshll.u32 %v945, 16
      %v1240 = vrot.slane %v1238, 1
      %v1241 = vsel %vm1021, %v1236, %v1240
      %v1243 = vshrl.u32 %v928, 16
      %v1245 = vshll.u32 %v928, 16
      %v1247 = vrot.slane %v1245, 1
      %v1248 = vor.u32 %v1243, %v1247
      %v1250 = vshll.u32 %v770, 16
      %v1252 = vrot.slane %v1250, 1
      %v1253 = vsel %vm1021, %v1248, %v1252
      %v1254 = vshrl.u32 %v770, 16
      %v1256 = vor.u32 %v1254, %v1252
      %v1258 = vshll.u32 %v946, 16
      %v1260 = vrot.slane %v1258, 1
      %v1261 = vsel %vm1021, %v1256, %v1260
      %v1263 = vshrl.u32 %v929, 16
      %v1265 = vshll.u32 %v929, 16
      %v1267 = vrot.slane %v1265, 1
      %v1268 = vor.u32 %v1263, %v1267
      %v1270 = vshll.u32 %v785, 16
      %v1272 = vrot.slane %v1270, 1
      %v1273 = vsel %vm1021, %v1268, %v1272
      %v1274 = vshrl.u32 %v785, 16
      %v1276 = vor.u32 %v1274, %v1272
      %v1278 = vshll.u32 %v947, 16
      %v1280 = vrot.slane %v1278, 1
      %v1281 = vsel %vm1021, %v1276, %v1280
      %v1283 = vshrl.u32 %v930, 16
      %v1285 = vshll.u32 %v930, 16
      %v1287 = vrot.slane %v1285, 1
      %v1288 = vor.u32 %v1283, %v1287
      %v1290 = vshll.u32 %v800, 16
      %v1292 = vrot.slane %v1290, 1
      %v1293 = vsel %vm1021, %v1288, %v1292
      %v1294 = vshrl.u32 %v800, 16
      %v1296 = vor.u32 %v1294, %v1292
      %v1298 = vshll.u32 %v948, 16
      %v1300 = vrot.slane %v1298, 1
      %v1301 = vsel %vm1021, %v1296, %v1300
      %v1303 = vshrl.u32 %v931, 16
      %v1305 = vshll.u32 %v931, 16
      %v1307 = vrot.slane %v1305, 1
      %v1308 = vor.u32 %v1303, %v1307
      %v1310 = vshll.u32 %v815, 16
      %v1312 = vrot.slane %v1310, 1
      %v1313 = vsel %vm1021, %v1308, %v1312
      %v1314 = vshrl.u32 %v815, 16
      %v1316 = vor.u32 %v1314, %v1312
      %v1318 = vshll.u32 %v949, 16
      %v1320 = vrot.slane %v1318, 1
      %v1321 = vsel %vm1021, %v1316, %v1320
      %v1323 = vshrl.u32 %v932, 16
      %v1325 = vshll.u32 %v932, 16
      %v1327 = vrot.slane %v1325, 1
      %v1328 = vor.u32 %v1323, %v1327
      %v1330 = vshll.u32 %v830, 16
      %v1332 = vrot.slane %v1330, 1
      %v1333 = vsel %vm1021, %v1328, %v1332
      %v1334 = vshrl.u32 %v830, 16
      %v1336 = vor.u32 %v1334, %v1332
      %v1338 = vshll.u32 %v950, 16
      %v1340 = vrot.slane %v1338, 1
      %v1341 = vsel %vm1021, %v1336, %v1340
      %vm1406 = vcmask 1046528
      %v1407 = vrot.slane %v917, 1
      %v1408 = vrot.slane %v605, 1
      %v1409 = vsel %vm1406, %v1407, %v1408
      %v1410 = vrot.slane %v935, 1
      %v1411 = vsel %vm1406, %v1408, %v1410
      %v1412 = vrot.slane %v918, 1
      %v1413 = vrot.slane %v620, 1
      %v1414 = vsel %vm1406, %v1412, %v1413
      %v1415 = vrot.slane %v936, 1
      %v1416 = vsel %vm1406, %v1413, %v1415
      %v1417 = vrot.slane %v919, 1
      %v1418 = vrot.slane %v635, 1
      %v1419 = vsel %vm1406, %v1417, %v1418
      %v1420 = vrot.slane %v937, 1
      %v1421 = vsel %vm1406, %v1418, %v1420
      %v1422 = vrot.slane %v920, 1
      %v1423 = vrot.slane %v650, 1
      %v1424 = vsel %vm1406, %v1422, %v1423
      %v1425 = vrot.slane %v938, 1
      %v1426 = vsel %vm1406, %v1423, %v1425
      %v1427 = vrot.slane %v921, 1
      %v1428 = vrot.slane %v665, 1
      %v1429 = vsel %vm1406, %v1427, %v1428
      %v1430 = vrot.slane %v939, 1
      %v1431 = vsel %vm1406, %v1428, %v1430
      %v1432 = vrot.slane %v922, 1
      %v1433 = vrot.slane %v680, 1
      %v1434 = vsel %vm1406, %v1432, %v1433
      %v1435 = vrot.slane %v940, 1
      %v1436 = vsel %vm1406, %v1433, %v1435
      %v1437 = vrot.slane %v923, 1
      %v1438 = vrot.slane %v695, 1
      %v1439 = vsel %vm1406, %v1437, %v1438
      %v1440 = vrot.slane %v941, 1
      %v1441 = vsel %vm1406, %v1438, %v1440
      %v1442 = vrot.slane %v924, 1
      %v1443 = vrot.slane %v710, 1
      %v1444 = vsel %vm1406, %v1442, %v1443
      %v1445 = vrot.slane %v942, 1
      %v1446 = vsel %vm1406, %v1443, %v1445
      %v1447 = vrot.slane %v925, 1
      %v1448 = vrot.slane %v725, 1
      %v1449 = vsel %vm1406, %v1447, %v1448
      %v1450 = vrot.slane %v943, 1
      %v1451 = vsel %vm1406, %v1448, %v1450
      %v1452 = vrot.slane %v926, 1
      %v1453 = vrot.slane %v740, 1
      %v1454 = vsel %vm1406, %v1452, %v1453
      %v1455 = vrot.slane %v944, 1
      %v1456 = vsel %vm1406, %v1453, %v1455
      %v1457 = vrot.slane %v927, 1
      %v1458 = vrot.slane %v755, 1
      %v1459 = vsel %vm1406, %v1457, %v1458
      %v1460 = vrot.slane %v945, 1
      %v1461 = vsel %vm1406, %v1458, %v1460
      %v1462 = vrot.slane %v928, 1
      %v1463 = vrot.slane %v770, 1
      %v1464 = vsel %vm1406, %v1462, %v1463
      %v1465 = vrot.slane %v946, 1
      %v1466 = vsel %vm1406, %v1463, %v1465
      %v1467 = vrot.slane %v929, 1
      %v1468 = vrot.slane %v785, 1
      %v1469 = vsel %vm1406, %v1467, %v1468
      %v1470 = vrot.slane %v947, 1
      %v1471 = vsel %vm1406, %v1468, %v1470
      %v1472 = vrot.slane %v930, 1
      %v1473 = vrot.slane %v800, 1
      %v1474 = vsel %vm1406, %v1472, %v1473
      %v1475 = vrot.slane %v948, 1
      %v1476 = vsel %vm1406, %v1473, %v1475
      %v1477 = vrot.slane %v931, 1
      %v1478 = vrot.slane %v815, 1
      %v1479 = vsel %vm1406, %v1477, %v1478
      %v1480 = vrot.slane %v949, 1
      %v1481 = vsel %vm1406, %v1478, %v1480
      %v1482 = vrot.slane %v932, 1
      %v1483 = vrot.slane %v830, 1
      %v1484 = vsel %vm1406, %v1482, %v1483
      %v1485 = vrot.slane %v950, 1
      %v1486 = vsel %vm1406, %v1483, %v1485
      %v1519 = vld [vmem:[#allocation2] sm:$0xff]
      %v1520 = vld [vmem:[#allocation2 + $0x8] sm:$0xff]
      %v1521 = vld [vmem:[#allocation2 + $0x10] sm:$0xff]
      %v1522 = vld [vmem:[#allocation2 + $0x18] sm:$0xff]
      %v1523 = vld [vmem:[#allocation2 + $0x20] sm:$0xff]
      %v1524 = vld [vmem:[#allocation2 + $0x28] sm:$0xff]
      %v1525 = vld [vmem:[#allocation2 + $0x30] sm:$0xff]
      %v1526 = vld [vmem:[#allocation2 + $0x38] sm:$0xff]
      %v1527 = vld [vmem:[#allocation2 + $0x40] sm:$0xff]
      %v1528 = vld [vmem:[#allocation2 + $0x48] sm:$0xff]
      %v1529 = vld [vmem:[#allocation2 + $0x50] sm:$0xff]
      %v1530 = vld [vmem:[#allocation2 + $0x58] sm:$0xff]
      %v1531 = vld [vmem:[#allocation2 + $0x60] sm:$0xff]
      %v1532 = vld [vmem:[#allocation2 + $0x68] sm:$0xff]
      %v1533 = vld [vmem:[#allocation2 + $0x70] sm:$0xff]
      %v1534 = vld [vmem:[#allocation2 + $0x78] sm:$0xff]
      %v1535 = vld [vmem:[#allocation2 + $0x80] sm:$0xff]
      %v1536 = vld [vmem:[#allocation2 + $0x88] sm:$0xff]
      %v1537 = vld [vmem:[#allocation2 + $0x90] sm:$0xff]
      %v1538 = vld [vmem:[#allocation2 + $0x98] sm:$0xff]
      %v1539 = vld [vmem:[#allocation2 + $0xa0] sm:$0xff]
      %v1540 = vld [vmem:[#allocation2 + $0xa8] sm:$0xff]
      %v1541 = vld [vmem:[#allocation2 + $0xb0] sm:$0xff]
      %v1542 = vld [vmem:[#allocation2 + $0xb8] sm:$0xff]
      %v1543 = vld [vmem:[#allocation2 + $0xc0] sm:$0xff]
      %v1544 = vld [vmem:[#allocation2 + $0xc8] sm:$0xff]
      %v1545 = vld [vmem:[#allocation2 + $0xd0] sm:$0xff]
      %v1546 = vld [vmem:[#allocation2 + $0xd8] sm:$0xff]
      %v1547 = vld [vmem:[#allocation2 + $0xe0] sm:$0xff]
      %v1548 = vld [vmem:[#allocation2 + $0xe8] sm:$0xff]
      %v1549 = vld [vmem:[#allocation2 + $0xf0] sm:$0xff]
      %v1550 = vld [vmem:[#allocation2 + $0xf8] sm:$0xff]
      %v1551 = vld [vmem:[#allocation2 + $0x100] sm:$0xff]
      %v1552 = vld [vmem:[#allocation2 + $0x108] sm:$0xff]
      %v1553 = vld [vmem:[#allocation2 + $0x110] sm:$0xff]
      %v1554 = vld [vmem:[#allocation2 + $0x118] sm:$0xff]
      %v1555 = vld [vmem:[#allocation2 + $0x120] sm:$0xff]
      %v1556 = vld [vmem:[#allocation2 + $0x128] sm:$0xff]
      %v1557 = vld [vmem:[#allocation2 + $0x130] sm:$0xff]
      %v1558 = vld [vmem:[#allocation2 + $0x138] sm:$0xff]
      %v1559 = vld [vmem:[#allocation2 + $0x140] sm:$0xff]
      %v1560 = vld [vmem:[#allocation2 + $0x148] sm:$0xff]
      %v1561 = vld [vmem:[#allocation2 + $0x150] sm:$0xff]
      %v1562 = vld [vmem:[#allocation2 + $0x158] sm:$0xff]
      %v1563 = vld [vmem:[#allocation2 + $0x160] sm:$0xff]
      %v1564 = vld [vmem:[#allocation2 + $0x168] sm:$0xff]
      %v1565 = vld [vmem:[#allocation2 + $0x170] sm:$0xff]
      %v1566 = vld [vmem:[#allocation2 + $0x178] sm:$0xff]
      %v1567 = vld [vmem:[#allocation2 + $0x180] sm:$0xff]
      %v1568 = vld [vmem:[#allocation2 + $0x188] sm:$0xff]
      %v1569 = vld [vmem:[#allocation2 + $0x190] sm:$0xff]
      %v1570 = vld [vmem:[#allocation2 + $0x198] sm:$0xff]
      %v1571 = vld [vmem:[#allocation2 + $0x1a0] sm:$0xff]
      %v1572 = vld [vmem:[#allocation2 + $0x1a8] sm:$0xff]
      %v1573 = vld [vmem:[#allocation2 + $0x1b0] sm:$0xff]
      %v1574 = vld [vmem:[#allocation2 + $0x1b8] sm:$0xff]
      %v1575 = vld [vmem:[#allocation2 + $0x1c0] sm:$0xff]
      %v1576 = vld [vmem:[#allocation2 + $0x1c8] sm:$0xff]
      %v1577 = vld [vmem:[#allocation2 + $0x1d0] sm:$0xff]
      %v1578 = vld [vmem:[#allocation2 + $0x1d8] sm:$0xff]
      %v1579 = vld [vmem:[#allocation2 + $0x1e0] sm:$0xff]
      %v1580 = vld [vmem:[#allocation2 + $0x1e8] sm:$0xff]
      %v1581 = vld [vmem:[#allocation2 + $0x1f0] sm:$0xff]
      %v1582 = vld [vmem:[#allocation2 + $0x1f8] sm:$0xff]
      %v1583 = vld [vmem:[%s3] sm:$0xf]
      %v1584 = vld [vmem:[%s3 + $0x4] sm:$0xf]
      %v1585 = vld [vmem:[%s3 + $0x8] sm:$0xf]
      %v1586 = vld [vmem:[%s3 + $0xc] sm:$0xf]
      %v1587 = vld [vmem:[%s3 + $0x10] sm:$0xf]
      %v1588 = vld [vmem:[%s3 + $0x14] sm:$0xf]
      %v1589 = vld [vmem:[%s3 + $0x18] sm:$0xf]
      %v1590 = vld [vmem:[%s3 + $0x1c] sm:$0xf]
      %v1591 = vld [vmem:[%s3 + $0x20] sm:$0xf]
      %v1592 = vld [vmem:[%s3 + $0x24] sm:$0xf]
      %v1593 = vld [vmem:[%s3 + $0x28] sm:$0xf]
      %v1594 = vld [vmem:[%s3 + $0x2c] sm:$0xf]
      %v1595 = vld [vmem:[%s3 + $0x30] sm:$0xf]
      %v1596 = vld [vmem:[%s3 + $0x34] sm:$0xf]
      %v1597 = vld [vmem:[%s3 + $0x38] sm:$0xf]
      %v1598 = vld [vmem:[%s3 + $0x3c] sm:$0xf]
      %v1599 = vld [vmem:[%s3 + $0x40] sm:$0xf]
      %v1600 = vld [vmem:[%s3 + $0x44] sm:$0xf]
      %v1601 = vld [vmem:[%s3 + $0x48] sm:$0xf]
      %v1602 = vld [vmem:[%s3 + $0x4c] sm:$0xf]
      %v1603 = vld [vmem:[%s3 + $0x50] sm:$0xf]
      %v1604 = vld [vmem:[%s3 + $0x54] sm:$0xf]
      %v1605 = vld [vmem:[%s3 + $0x58] sm:$0xf]
      %v1606 = vld [vmem:[%s3 + $0x5c] sm:$0xf]
      %v1607 = vld [vmem:[%s3 + $0x60] sm:$0xf]
      %v1608 = vld [vmem:[%s3 + $0x64] sm:$0xf]
      %v1609 = vld [vmem:[%s3 + $0x68] sm:$0xf]
      %v1610 = vld [vmem:[%s3 + $0x6c] sm:$0xf]
      %v1611 = vld [vmem:[%s3 + $0x70] sm:$0xf]
      %v1612 = vld [vmem:[%s3 + $0x74] sm:$0xf]
      %v1613 = vld [vmem:[%s3 + $0x78] sm:$0xf]
      %v1614 = vld [vmem:[%s3 + $0x7c] sm:$0xf]
      %v1615 = vld [vmem:[%s3 + $0x80] sm:$0xf]
      %v1616 = vld [vmem:[%s3 + $0x84] sm:$0xf]
      %v1617 = vld [vmem:[%s3 + $0x88] sm:$0xf]
      %v1618 = vld [vmem:[%s3 + $0x8c] sm:$0xf]
      %v1619 = vld [vmem:[%s3 + $0x90] sm:$0xf]
      %v1620 = vld [vmem:[%s3 + $0x94] sm:$0xf]
      %v1621 = vld [vmem:[%s3 + $0x98] sm:$0xf]
      %v1622 = vld [vmem:[%s3 + $0x9c] sm:$0xf]
      %v1623 = vld [vmem:[%s3 + $0xa0] sm:$0xf]
      %v1624 = vld [vmem:[%s3 + $0xa4] sm:$0xf]
      %v1625 = vld [vmem:[%s3 + $0xa8] sm:$0xf]
      %v1626 = vld [vmem:[%s3 + $0xac] sm:$0xf]
      %v1627 = vld [vmem:[%s3 + $0xb0] sm:$0xf]
      %v1628 = vld [vmem:[%s3 + $0xb4] sm:$0xf]
      %v1629 = vld [vmem:[%s3 + $0xb8] sm:$0xf]
      %v1630 = vld [vmem:[%s3 + $0xbc] sm:$0xf]
      %v1679 = vunpack.c.l.b16 %v1583
      %v1680 = vunpack.c.l.b16 %v1584
      %v1681 = vunpack.c.l.b16 %v1585
      %v1682 = vunpack.c.l.b16 %v1586
      %v1683 = vunpack.c.l.b16 %v1587
      %v1684 = vunpack.c.l.b16 %v1588
      %v1685 = vunpack.c.l.b16 %v1589
      %v1686 = vunpack.c.l.b16 %v1590
      %v1687 = vunpack.c.l.b16 %v1591
      %v1688 = vunpack.c.l.b16 %v1592
      %v1689 = vunpack.c.l.b16 %v1593
      %v1690 = vunpack.c.l.b16 %v1594
      %v1691 = vunpack.c.l.b16 %v1595
      %v1692 = vunpack.c.l.b16 %v1596
      %v1693 = vunpack.c.l.b16 %v1597
      %v1694 = vunpack.c.l.b16 %v1598
      %v1695 = vunpack.c.l.b16 %v1599
      %v1696 = vunpack.c.l.b16 %v1600
      %v1697 = vunpack.c.l.b16 %v1601
      %v1698 = vunpack.c.l.b16 %v1602
      %v1699 = vunpack.c.l.b16 %v1603
      %v1700 = vunpack.c.l.b16 %v1604
      %v1701 = vunpack.c.l.b16 %v1605
      %v1702 = vunpack.c.l.b16 %v1606
      %v1703 = vunpack.c.l.b16 %v1607
      %v1704 = vunpack.c.l.b16 %v1608
      %v1705 = vunpack.c.l.b16 %v1609
      %v1706 = vunpack.c.l.b16 %v1610
      %v1707 = vunpack.c.l.b16 %v1611
      %v1708 = vunpack.c.l.b16 %v1612
      %v1709 = vunpack.c.l.b16 %v1613
      %v1710 = vunpack.c.l.b16 %v1614
      %v1711 = vunpack.c.l.b16 %v1615
      %v1712 = vunpack.c.l.b16 %v1616
      %v1713 = vunpack.c.l.b16 %v1617
      %v1714 = vunpack.c.l.b16 %v1618
      %v1715 = vunpack.c.l.b16 %v1619
      %v1716 = vunpack.c.l.b16 %v1620
      %v1717 = vunpack.c.l.b16 %v1621
      %v1718 = vunpack.c.l.b16 %v1622
      %v1719 = vunpack.c.l.b16 %v1623
      %v1720 = vunpack.c.l.b16 %v1624
      %v1721 = vunpack.c.l.b16 %v1625
      %v1722 = vunpack.c.l.b16 %v1626
      %v1723 = vunpack.c.l.b16 %v1627
      %v1724 = vunpack.c.l.b16 %v1628
      %v1725 = vunpack.c.l.b16 %v1629
      %v1726 = vunpack.c.l.b16 %v1630
      %v1727 = vpack.c.b16 %v1680, %v1679
      %v1728 = vpack.c.b16 %v1682, %v1681
      %v1729 = vpack.c.b16 %v1684, %v1683
      %v1730 = vpack.c.b16 %v1686, %v1685
      %v1731 = vpack.c.b16 %v1688, %v1687
      %v1732 = vpack.c.b16 %v1690, %v1689
      %v1733 = vpack.c.b16 %v1692, %v1691
      %v1734 = vpack.c.b16 %v1694, %v1693
      %v1735 = vpack.c.b16 %v1696, %v1695
      %v1736 = vpack.c.b16 %v1698, %v1697
      %v1737 = vpack.c.b16 %v1700, %v1699
      %v1738 = vpack.c.b16 %v1702, %v1701
      %v1739 = vpack.c.b16 %v1704, %v1703
      %v1740 = vpack.c.b16 %v1706, %v1705
      %v1741 = vpack.c.b16 %v1708, %v1707
      %v1742 = vpack.c.b16 %v1710, %v1709
      %v1743 = vpack.c.b16 %v1712, %v1711
      %v1744 = vpack.c.b16 %v1714, %v1713
      %v1745 = vpack.c.b16 %v1716, %v1715
      %v1746 = vpack.c.b16 %v1718, %v1717
      %v1747 = vpack.c.b16 %v1720, %v1719
      %v1748 = vpack.c.b16 %v1722, %v1721
      %v1749 = vpack.c.b16 %v1724, %v1723
      %v1750 = vpack.c.b16 %v1726, %v1725
      %1775 = vmatpush.bf16.msra.mxu0 %v1734
      %1776 = vmatpush.bf16.msra.mxu0 %v1733
      %1777 = vmatpush.bf16.msra.mxu0 %v1732
      %1778 = vmatpush.bf16.msra.mxu0 %v1731
      %1779 = vmatpush.bf16.msra.mxu0 %v1730
      %1780 = vmatpush.bf16.msra.mxu0 %v1729
      %1781 = vmatpush.bf16.msra.mxu0 %v1728
      %1782 = vmatpush.bf16.msra.mxu0 %v1727
      %1783 = vmatmul.bf16.gmra.mxu0 %v917
      %v1784 = vpop.f32.mrf.mxu0
      %v1785 = vadd.f32 0.0, %v1784
      %v1786 = vpop.f32.mrf.mxu0
      %v1787 = vadd.f32 0.0, %v1786
      %1788 = vmatmul.bf16.gmra.mxu0 %v605
      %v1789 = vpop.f32.mrf.mxu0
      %v1790 = vadd.f32 0.0, %v1789
      %v1791 = vpop.f32.mrf.mxu0
      %v1792 = vadd.f32 0.0, %v1791
      %1793 = vmatmul.bf16.gmra.mxu0 %v918
      %v1794 = vpop.f32.mrf.mxu0
      %v1795 = vadd.f32 0.0, %v1794
      %v1796 = vpop.f32.mrf.mxu0
      %v1797 = vadd.f32 0.0, %v1796
      %1798 = vmatmul.bf16.gmra.mxu0 %v620
      %v1799 = vpop.f32.mrf.mxu0
      %v1800 = vadd.f32 0.0, %v1799
      %v1801 = vpop.f32.mrf.mxu0
      %v1802 = vadd.f32 0.0, %v1801
      %1803 = vmatmul.bf16.gmra.mxu0 %v919
      %v1804 = vpop.f32.mrf.mxu0
      %v1805 = vadd.f32 0.0, %v1804
      %v1806 = vpop.f32.mrf.mxu0
      %v1807 = vadd.f32 0.0, %v1806
      %1808 = vmatmul.bf16.gmra.mxu0 %v635
      %v1809 = vpop.f32.mrf.mxu0
      %v1810 = vadd.f32 0.0, %v1809
      %v1811 = vpop.f32.mrf.mxu0
      %v1812 = vadd.f32 0.0, %v1811
      %1813 = vmatmul.bf16.gmra.mxu0 %v920
      %v1814 = vpop.f32.mrf.mxu0
      %v1815 = vadd.f32 0.0, %v1814
      %v1816 = vpop.f32.mrf.mxu0
      %v1817 = vadd.f32 0.0, %v1816
      %1818 = vmatmul.bf16.gmra.mxu0 %v650
      %v1819 = vpop.f32.mrf.mxu0
      %v1820 = vadd.f32 0.0, %v1819
      %v1821 = vpop.f32.mrf.mxu0
      %v1822 = vadd.f32 0.0, %v1821
      %1823 = vmatmul.bf16.gmra.mxu0 %v921
      %v1824 = vpop.f32.mrf.mxu0
      %v1825 = vadd.f32 0.0, %v1824
      %v1826 = vpop.f32.mrf.mxu0
      %v1827 = vadd.f32 0.0, %v1826
      %1828 = vmatmul.bf16.gmra.mxu0 %v665
      %v1829 = vpop.f32.mrf.mxu0
      %v1830 = vadd.f32 0.0, %v1829
      %v1831 = vpop.f32.mrf.mxu0
      %v1832 = vadd.f32 0.0, %v1831
      %1833 = vmatmul.bf16.gmra.mxu0 %v922
      %v1834 = vpop.f32.mrf.mxu0
      %v1835 = vadd.f32 0.0, %v1834
      %v1836 = vpop.f32.mrf.mxu0
      %v1837 = vadd.f32 0.0, %v1836
      %1838 = vmatmul.bf16.gmra.mxu0 %v680
      %v1839 = vpop.f32.mrf.mxu0
      %v1840 = vadd.f32 0.0, %v1839
      %v1841 = vpop.f32.mrf.mxu0
      %v1842 = vadd.f32 0.0, %v1841
      %1843 = vmatmul.bf16.gmra.mxu0 %v923
      %v1844 = vpop.f32.mrf.mxu0
      %v1845 = vadd.f32 0.0, %v1844
      %v1846 = vpop.f32.mrf.mxu0
      %v1847 = vadd.f32 0.0, %v1846
      %1848 = vmatmul.bf16.gmra.mxu0 %v695
      %v1849 = vpop.f32.mrf.mxu0
      %v1850 = vadd.f32 0.0, %v1849
      %v1851 = vpop.f32.mrf.mxu0
      %v1852 = vadd.f32 0.0, %v1851
      %1853 = vmatmul.bf16.gmra.mxu0 %v924
      %v1854 = vpop.f32.mrf.mxu0
      %v1855 = vadd.f32 0.0, %v1854
      %v1856 = vpop.f32.mrf.mxu0
      %v1857 = vadd.f32 0.0, %v1856
      %1858 = vmatmul.bf16.gmra.mxu0 %v710
      %v1859 = vpop.f32.mrf.mxu0
      %v1860 = vadd.f32 0.0, %v1859
      %v1861 = vpop.f32.mrf.mxu0
      %v1862 = vadd.f32 0.0, %v1861
      %1863 = vmatmul.bf16.gmra.mxu0 %v925
      %v1864 = vpop.f32.mrf.mxu0
      %v1865 = vadd.f32 0.0, %v1864
      %v1866 = vpop.f32.mrf.mxu0
      %v1867 = vadd.f32 0.0, %v1866
      %1868 = vmatmul.bf16.gmra.mxu0 %v725
      %v1869 = vpop.f32.mrf.mxu0
      %v1870 = vadd.f32 0.0, %v1869
      %v1871 = vpop.f32.mrf.mxu0
      %v1872 = vadd.f32 0.0, %v1871
      %1873 = vmatmul.bf16.gmra.mxu0 %v926
      %v1874 = vpop.f32.mrf.mxu0
      %v1875 = vadd.f32 0.0, %v1874
      %v1876 = vpop.f32.mrf.mxu0
      %v1877 = vadd.f32 0.0, %v1876
      %1878 = vmatmul.bf16.gmra.mxu0 %v740
      %v1879 = vpop.f32.mrf.mxu0
      %v1880 = vadd.f32 0.0, %v1879
      %v1881 = vpop.f32.mrf.mxu0
      %v1882 = vadd.f32 0.0, %v1881
      %1883 = vmatmul.bf16.gmra.mxu0 %v927
      %v1884 = vpop.f32.mrf.mxu0
      %v1885 = vadd.f32 0.0, %v1884
      %v1886 = vpop.f32.mrf.mxu0
      %v1887 = vadd.f32 0.0, %v1886
      %1888 = vmatmul.bf16.gmra.mxu0 %v755
      %v1889 = vpop.f32.mrf.mxu0
      %v1890 = vadd.f32 0.0, %v1889
      %v1891 = vpop.f32.mrf.mxu0
      %v1892 = vadd.f32 0.0, %v1891
      %1893 = vmatmul.bf16.gmra.mxu0 %v928
      %v1894 = vpop.f32.mrf.mxu0
      %v1895 = vadd.f32 0.0, %v1894
      %v1896 = vpop.f32.mrf.mxu0
      %v1897 = vadd.f32 0.0, %v1896
      %1898 = vmatmul.bf16.gmra.mxu0 %v770
      %v1899 = vpop.f32.mrf.mxu0
      %v1900 = vadd.f32 0.0, %v1899
      %v1901 = vpop.f32.mrf.mxu0
      %v1902 = vadd.f32 0.0, %v1901
      %1903 = vmatmul.bf16.gmra.mxu0 %v929
      %v1904 = vpop.f32.mrf.mxu0
      %v1905 = vadd.f32 0.0, %v1904
      %v1906 = vpop.f32.mrf.mxu0
      %v1907 = vadd.f32 0.0, %v1906
      %1908 = vmatmul.bf16.gmra.mxu0 %v785
      %v1909 = vpop.f32.mrf.mxu0
      %v1910 = vadd.f32 0.0, %v1909
      %v1911 = vpop.f32.mrf.mxu0
      %v1912 = vadd.f32 0.0, %v1911
      %1913 = vmatmul.bf16.gmra.mxu0 %v930
      %v1914 = vpop.f32.mrf.mxu0
      %v1915 = vadd.f32 0.0, %v1914
      %v1916 = vpop.f32.mrf.mxu0
      %v1917 = vadd.f32 0.0, %v1916
      %1918 = vmatmul.bf16.gmra.mxu0 %v800
      %v1919 = vpop.f32.mrf.mxu0
      %v1920 = vadd.f32 0.0, %v1919
      %v1921 = vpop.f32.mrf.mxu0
      %v1922 = vadd.f32 0.0, %v1921
      %1923 = vmatmul.bf16.gmra.mxu0 %v931
      %v1924 = vpop.f32.mrf.mxu0
      %v1925 = vadd.f32 0.0, %v1924
      %v1926 = vpop.f32.mrf.mxu0
      %v1927 = vadd.f32 0.0, %v1926
      %1928 = vmatmul.bf16.gmra.mxu0 %v815
      %v1929 = vpop.f32.mrf.mxu0
      %v1930 = vadd.f32 0.0, %v1929
      %v1931 = vpop.f32.mrf.mxu0
      %v1932 = vadd.f32 0.0, %v1931
      %1933 = vmatmul.bf16.gmra.mxu0 %v932
      %v1934 = vpop.f32.mrf.mxu0
      %v1935 = vadd.f32 0.0, %v1934
      %v1936 = vpop.f32.mrf.mxu0
      %v1937 = vadd.f32 0.0, %v1936
      %1938 = vmatmul.bf16.gmra.mxu0 %v830
      %v1939 = vpop.f32.mrf.mxu0
      %v1940 = vadd.f32 0.0, %v1939
      %v1941 = vpop.f32.mrf.mxu0
      %v1942 = vadd.f32 0.0, %v1941
      %1943 = vdwg.mxu0
      %1944 = vmatpush.bf16.msra.mxu0 %v1742
      %1945 = vmatpush.bf16.msra.mxu0 %v1741
      %1946 = vmatpush.bf16.msra.mxu0 %v1740
      %1947 = vmatpush.bf16.msra.mxu0 %v1739
      %1948 = vmatpush.bf16.msra.mxu0 %v1738
      %1949 = vmatpush.bf16.msra.mxu0 %v1737
      %1950 = vmatpush.bf16.msra.mxu0 %v1736
      %1951 = vmatpush.bf16.msra.mxu0 %v1735
      %1952 = vmatmul.bf16.gmra.mxu0 %v1033
      %v1953 = vpop.f32.mrf.mxu0
      %v1954 = vadd.f32 %v1785, %v1953
      %v1955 = vpop.f32.mrf.mxu0
      %v1956 = vadd.f32 %v1787, %v1955
      %1957 = vmatmul.bf16.gmra.mxu0 %v1041
      %v1958 = vpop.f32.mrf.mxu0
      %v1959 = vadd.f32 %v1790, %v1958
      %v1960 = vpop.f32.mrf.mxu0
      %v1961 = vadd.f32 %v1792, %v1960
      %1962 = vmatmul.bf16.gmra.mxu0 %v1053
      %v1963 = vpop.f32.mrf.mxu0
      %v1964 = vadd.f32 %v1795, %v1963
      %v1965 = vpop.f32.mrf.mxu0
      %v1966 = vadd.f32 %v1797, %v1965
      %1967 = vmatmul.bf16.gmra.mxu0 %v1061
      %v1968 = vpop.f32.mrf.mxu0
      %v1969 = vadd.f32 %v1800, %v1968
      %v1970 = vpop.f32.mrf.mxu0
      %v1971 = vadd.f32 %v1802, %v1970
      %1972 = vmatmul.bf16.gmra.mxu0 %v1073
      %v1973 = vpop.f32.mrf.mxu0
      %v1974 = vadd.f32 %v1805, %v1973
      %v1975 = vpop.f32.mrf.mxu0
      %v1976 = vadd.f32 %v1807, %v1975
      %1977 = vmatmul.bf16.gmra.mxu0 %v1081
      %v1978 = vpop.f32.mrf.mxu0
      %v1979 = vadd.f32 %v1810, %v1978
      %v1980 = vpop.f32.mrf.mxu0
      %v1981 = vadd.f32 %v1812, %v1980
      %1982 = vmatmul.bf16.gmra.mxu0 %v1093
      %v1983 = vpop.f32.mrf.mxu0
      %v1984 = vadd.f32 %v1815, %v1983
      %v1985 = vpop.f32.mrf.mxu0
      %v1986 = vadd.f32 %v1817, %v1985
      %1987 = vmatmul.bf16.gmra.mxu0 %v1101
      %v1988 = vpop.f32.mrf.mxu0
      %v1989 = vadd.f32 %v1820, %v1988
      %v1990 = vpop.f32.mrf.mxu0
      %v1991 = vadd.f32 %v1822, %v1990
      %1992 = vmatmul.bf16.gmra.mxu0 %v1113
      %v1993 = vpop.f32.mrf.mxu0
      %v1994 = vadd.f32 %v1825, %v1993
      %v1995 = vpop.f32.mrf.mxu0
      %v1996 = vadd.f32 %v1827, %v1995
      %1997 = vmatmul.bf16.gmra.mxu0 %v1121
      %v1998 = vpop.f32.mrf.mxu0
      %v1999 = vadd.f32 %v1830, %v1998
      %v2000 = vpop.f32.mrf.mxu0
      %v2001 = vadd.f32 %v1832, %v2000
      %2002 = vmatmul.bf16.gmra.mxu0 %v1133
      %v2003 = vpop.f32.mrf.mxu0
      %v2004 = vadd.f32 %v1835, %v2003
      %v2005 = vpop.f32.mrf.mxu0
      %v2006 = vadd.f32 %v1837, %v2005
      %2007 = vmatmul.bf16.gmra.mxu0 %v1141
      %v2008 = vpop.f32.mrf.mxu0
      %v2009 = vadd.f32 %v1840, %v2008
      %v2010 = vpop.f32.mrf.mxu0
      %v2011 = vadd.f32 %v1842, %v2010
      %2012 = vmatmul.bf16.gmra.mxu0 %v1153
      %v2013 = vpop.f32.mrf.mxu0
      %v2014 = vadd.f32 %v1845, %v2013
      %v2015 = vpop.f32.mrf.mxu0
      %v2016 = vadd.f32 %v1847, %v2015
      %2017 = vmatmul.bf16.gmra.mxu0 %v1161
      %v2018 = vpop.f32.mrf.mxu0
      %v2019 = vadd.f32 %v1850, %v2018
      %v2020 = vpop.f32.mrf.mxu0
      %v2021 = vadd.f32 %v1852, %v2020
      %2022 = vmatmul.bf16.gmra.mxu0 %v1173
      %v2023 = vpop.f32.mrf.mxu0
      %v2024 = vadd.f32 %v1855, %v2023
      %v2025 = vpop.f32.mrf.mxu0
      %v2026 = vadd.f32 %v1857, %v2025
      %2027 = vmatmul.bf16.gmra.mxu0 %v1181
      %v2028 = vpop.f32.mrf.mxu0
      %v2029 = vadd.f32 %v1860, %v2028
      %v2030 = vpop.f32.mrf.mxu0
      %v2031 = vadd.f32 %v1862, %v2030
      %2032 = vmatmul.bf16.gmra.mxu0 %v1193
      %v2033 = vpop.f32.mrf.mxu0
      %v2034 = vadd.f32 %v1865, %v2033
      %v2035 = vpop.f32.mrf.mxu0
      %v2036 = vadd.f32 %v1867, %v2035
      %2037 = vmatmul.bf16.gmra.mxu0 %v1201
      %v2038 = vpop.f32.mrf.mxu0
      %v2039 = vadd.f32 %v1870, %v2038
      %v2040 = vpop.f32.mrf.mxu0
      %v2041 = vadd.f32 %v1872, %v2040
      %2042 = vmatmul.bf16.gmra.mxu0 %v1213
      %v2043 = vpop.f32.mrf.mxu0
      %v2044 = vadd.f32 %v1875, %v2043
      %v2045 = vpop.f32.mrf.mxu0
      %v2046 = vadd.f32 %v1877, %v2045
      %2047 = vmatmul.bf16.gmra.mxu0 %v1221
      %v2048 = vpop.f32.mrf.mxu0
      %v2049 = vadd.f32 %v1880, %v2048
      %v2050 = vpop.f32.mrf.mxu0
      %v2051 = vadd.f32 %v1882, %v2050
      %2052 = vmatmul.bf16.gmra.mxu0 %v1233
      %v2053 = vpop.f32.mrf.mxu0
      %v2054 = vadd.f32 %v1885, %v2053
      %v2055 = vpop.f32.mrf.mxu0
      %v2056 = vadd.f32 %v1887, %v2055
      %2057 = vmatmul.bf16.gmra.mxu0 %v1241
      %v2058 = vpop.f32.mrf.mxu0
      %v2059 = vadd.f32 %v1890, %v2058
      %v2060 = vpop.f32.mrf.mxu0
      %v2061 = vadd.f32 %v1892, %v2060
      %2062 = vmatmul.bf16.gmra.mxu0 %v1253
      %v2063 = vpop.f32.mrf.mxu0
      %v2064 = vadd.f32 %v1895, %v2063
      %v2065 = vpop.f32.mrf.mxu0
      %v2066 = vadd.f32 %v1897, %v2065
      %2067 = vmatmul.bf16.gmra.mxu0 %v1261
      %v2068 = vpop.f32.mrf.mxu0
      %v2069 = vadd.f32 %v1900, %v2068
      %v2070 = vpop.f32.mrf.mxu0
      %v2071 = vadd.f32 %v1902, %v2070
      %2072 = vmatmul.bf16.gmra.mxu0 %v1273
      %v2073 = vpop.f32.mrf.mxu0
      %v2074 = vadd.f32 %v1905, %v2073
      %v2075 = vpop.f32.mrf.mxu0
      %v2076 = vadd.f32 %v1907, %v2075
      %2077 = vmatmul.bf16.gmra.mxu0 %v1281
      %v2078 = vpop.f32.mrf.mxu0
      %v2079 = vadd.f32 %v1910, %v2078
      %v2080 = vpop.f32.mrf.mxu0
      %v2081 = vadd.f32 %v1912, %v2080
      %2082 = vmatmul.bf16.gmra.mxu0 %v1293
      %v2083 = vpop.f32.mrf.mxu0
      %v2084 = vadd.f32 %v1915, %v2083
      %v2085 = vpop.f32.mrf.mxu0
      %v2086 = vadd.f32 %v1917, %v2085
      %2087 = vmatmul.bf16.gmra.mxu0 %v1301
      %v2088 = vpop.f32.mrf.mxu0
      %v2089 = vadd.f32 %v1920, %v2088
      %v2090 = vpop.f32.mrf.mxu0
      %v2091 = vadd.f32 %v1922, %v2090
      %2092 = vmatmul.bf16.gmra.mxu0 %v1313
      %v2093 = vpop.f32.mrf.mxu0
      %v2094 = vadd.f32 %v1925, %v2093
      %v2095 = vpop.f32.mrf.mxu0
      %v2096 = vadd.f32 %v1927, %v2095
      %2097 = vmatmul.bf16.gmra.mxu0 %v1321
      %v2098 = vpop.f32.mrf.mxu0
      %v2099 = vadd.f32 %v1930, %v2098
      %v2100 = vpop.f32.mrf.mxu0
      %v2101 = vadd.f32 %v1932, %v2100
      %2102 = vmatmul.bf16.gmra.mxu0 %v1333
      %v2103 = vpop.f32.mrf.mxu0
      %v2104 = vadd.f32 %v1935, %v2103
      %v2105 = vpop.f32.mrf.mxu0
      %v2106 = vadd.f32 %v1937, %v2105
      %2107 = vmatmul.bf16.gmra.mxu0 %v1341
      %v2108 = vpop.f32.mrf.mxu0
      %v2109 = vadd.f32 %v1940, %v2108
      %v2110 = vpop.f32.mrf.mxu0
      %v2111 = vadd.f32 %v1942, %v2110
      %2112 = vdwg.mxu0
      %2113 = vmatpush.bf16.msra.mxu0 %v1750
      %2114 = vmatpush.bf16.msra.mxu0 %v1749
      %2115 = vmatpush.bf16.msra.mxu0 %v1748
      %2116 = vmatpush.bf16.msra.mxu0 %v1747
      %2117 = vmatpush.bf16.msra.mxu0 %v1746
      %2118 = vmatpush.bf16.msra.mxu0 %v1745
      %2119 = vmatpush.bf16.msra.mxu0 %v1744
      %2120 = vmatpush.bf16.msra.mxu0 %v1743
      %2121 = vmatmul.bf16.gmra.mxu0 %v1409
      %v2122 = vpop.f32.mrf.mxu0
      %v2123 = vadd.f32 %v1954, %v2122
      %v2124 = vpop.f32.mrf.mxu0
      %v2125 = vadd.f32 %v1956, %v2124
      %2126 = vmatmul.bf16.gmra.mxu0 %v1411
      %v2127 = vpop.f32.mrf.mxu0
      %v2128 = vadd.f32 %v1959, %v2127
      %v2129 = vpop.f32.mrf.mxu0
      %v2130 = vadd.f32 %v1961, %v2129
      %2131 = vmatmul.bf16.gmra.mxu0 %v1414
      %v2132 = vpop.f32.mrf.mxu0
      %v2133 = vadd.f32 %v1964, %v2132
      %v2134 = vpop.f32.mrf.mxu0
      %v2135 = vadd.f32 %v1966, %v2134
      %2136 = vmatmul.bf16.gmra.mxu0 %v1416
      %v2137 = vpop.f32.mrf.mxu0
      %v2138 = vadd.f32 %v1969, %v2137
      %v2139 = vpop.f32.mrf.mxu0
      %v2140 = vadd.f32 %v1971, %v2139
      %2141 = vmatmul.bf16.gmra.mxu0 %v1419
      %v2142 = vpop.f32.mrf.mxu0
      %v2143 = vadd.f32 %v1974, %v2142
      %v2144 = vpop.f32.mrf.mxu0
      %v2145 = vadd.f32 %v1976, %v2144
      %2146 = vmatmul.bf16.gmra.mxu0 %v1421
      %v2147 = vpop.f32.mrf.mxu0
      %v2148 = vadd.f32 %v1979, %v2147
      %v2149 = vpop.f32.mrf.mxu0
      %v2150 = vadd.f32 %v1981, %v2149
      %2151 = vmatmul.bf16.gmra.mxu0 %v1424
      %v2152 = vpop.f32.mrf.mxu0
      %v2153 = vadd.f32 %v1984, %v2152
      %v2154 = vpop.f32.mrf.mxu0
      %v2155 = vadd.f32 %v1986, %v2154
      %2156 = vmatmul.bf16.gmra.mxu0 %v1426
      %v2157 = vpop.f32.mrf.mxu0
      %v2158 = vadd.f32 %v1989, %v2157
      %v2159 = vpop.f32.mrf.mxu0
      %v2160 = vadd.f32 %v1991, %v2159
      %2161 = vmatmul.bf16.gmra.mxu0 %v1429
      %v2162 = vpop.f32.mrf.mxu0
      %v2163 = vadd.f32 %v1994, %v2162
      %v2164 = vpop.f32.mrf.mxu0
      %v2165 = vadd.f32 %v1996, %v2164
      %2166 = vmatmul.bf16.gmra.mxu0 %v1431
      %v2167 = vpop.f32.mrf.mxu0
      %v2168 = vadd.f32 %v1999, %v2167
      %v2169 = vpop.f32.mrf.mxu0
      %v2170 = vadd.f32 %v2001, %v2169
      %2171 = vmatmul.bf16.gmra.mxu0 %v1434
      %v2172 = vpop.f32.mrf.mxu0
      %v2173 = vadd.f32 %v2004, %v2172
      %v2174 = vpop.f32.mrf.mxu0
      %v2175 = vadd.f32 %v2006, %v2174
      %2176 = vmatmul.bf16.gmra.mxu0 %v1436
      %v2177 = vpop.f32.mrf.mxu0
      %v2178 = vadd.f32 %v2009, %v2177
      %v2179 = vpop.f32.mrf.mxu0
      %v2180 = vadd.f32 %v2011, %v2179
      %2181 = vmatmul.bf16.gmra.mxu0 %v1439
      %v2182 = vpop.f32.mrf.mxu0
      %v2183 = vadd.f32 %v2014, %v2182
      %v2184 = vpop.f32.mrf.mxu0
      %v2185 = vadd.f32 %v2016, %v2184
      %2186 = vmatmul.bf16.gmra.mxu0 %v1441
      %v2187 = vpop.f32.mrf.mxu0
      %v2188 = vadd.f32 %v2019, %v2187
      %v2189 = vpop.f32.mrf.mxu0
      %v2190 = vadd.f32 %v2021, %v2189
      %2191 = vmatmul.bf16.gmra.mxu0 %v1444
      %v2192 = vpop.f32.mrf.mxu0
      %v2193 = vadd.f32 %v2024, %v2192
      %v2194 = vpop.f32.mrf.mxu0
      %v2195 = vadd.f32 %v2026, %v2194
      %2196 = vmatmul.bf16.gmra.mxu0 %v1446
      %v2197 = vpop.f32.mrf.mxu0
      %v2198 = vadd.f32 %v2029, %v2197
      %v2199 = vpop.f32.mrf.mxu0
      %v2200 = vadd.f32 %v2031, %v2199
      %2201 = vmatmul.bf16.gmra.mxu0 %v1449
      %v2202 = vpop.f32.mrf.mxu0
      %v2203 = vadd.f32 %v2034, %v2202
      %v2204 = vpop.f32.mrf.mxu0
      %v2205 = vadd.f32 %v2036, %v2204
      %2206 = vmatmul.bf16.gmra.mxu0 %v1451
      %v2207 = vpop.f32.mrf.mxu0
      %v2208 = vadd.f32 %v2039, %v2207
      %v2209 = vpop.f32.mrf.mxu0
      %v2210 = vadd.f32 %v2041, %v2209
      %2211 = vmatmul.bf16.gmra.mxu0 %v1454
      %v2212 = vpop.f32.mrf.mxu0
      %v2213 = vadd.f32 %v2044, %v2212
      %v2214 = vpop.f32.mrf.mxu0
      %v2215 = vadd.f32 %v2046, %v2214
      %2216 = vmatmul.bf16.gmra.mxu0 %v1456
      %v2217 = vpop.f32.mrf.mxu0
      %v2218 = vadd.f32 %v2049, %v2217
      %v2219 = vpop.f32.mrf.mxu0
      %v2220 = vadd.f32 %v2051, %v2219
      %2221 = vmatmul.bf16.gmra.mxu0 %v1459
      %v2222 = vpop.f32.mrf.mxu0
      %v2223 = vadd.f32 %v2054, %v2222
      %v2224 = vpop.f32.mrf.mxu0
      %v2225 = vadd.f32 %v2056, %v2224
      %2226 = vmatmul.bf16.gmra.mxu0 %v1461
      %v2227 = vpop.f32.mrf.mxu0
      %v2228 = vadd.f32 %v2059, %v2227
      %v2229 = vpop.f32.mrf.mxu0
      %v2230 = vadd.f32 %v2061, %v2229
      %2231 = vmatmul.bf16.gmra.mxu0 %v1464
      %v2232 = vpop.f32.mrf.mxu0
      %v2233 = vadd.f32 %v2064, %v2232
      %v2234 = vpop.f32.mrf.mxu0
      %v2235 = vadd.f32 %v2066, %v2234
      %2236 = vmatmul.bf16.gmra.mxu0 %v1466
      %v2237 = vpop.f32.mrf.mxu0
      %v2238 = vadd.f32 %v2069, %v2237
      %v2239 = vpop.f32.mrf.mxu0
      %v2240 = vadd.f32 %v2071, %v2239
      %2241 = vmatmul.bf16.gmra.mxu0 %v1469
      %v2242 = vpop.f32.mrf.mxu0
      %v2243 = vadd.f32 %v2074, %v2242
      %v2244 = vpop.f32.mrf.mxu0
      %v2245 = vadd.f32 %v2076, %v2244
      %2246 = vmatmul.bf16.gmra.mxu0 %v1471
      %v2247 = vpop.f32.mrf.mxu0
      %v2248 = vadd.f32 %v2079, %v2247
      %v2249 = vpop.f32.mrf.mxu0
      %v2250 = vadd.f32 %v2081, %v2249
      %2251 = vmatmul.bf16.gmra.mxu0 %v1474
      %v2252 = vpop.f32.mrf.mxu0
      %v2253 = vadd.f32 %v2084, %v2252
      %v2254 = vpop.f32.mrf.mxu0
      %v2255 = vadd.f32 %v2086, %v2254
      %2256 = vmatmul.bf16.gmra.mxu0 %v1476
      %v2257 = vpop.f32.mrf.mxu0
      %v2258 = vadd.f32 %v2089, %v2257
      %v2259 = vpop.f32.mrf.mxu0
      %v2260 = vadd.f32 %v2091, %v2259
      %2261 = vmatmul.bf16.gmra.mxu0 %v1479
      %v2262 = vpop.f32.mrf.mxu0
      %v2263 = vadd.f32 %v2094, %v2262
      %v2264 = vpop.f32.mrf.mxu0
      %v2265 = vadd.f32 %v2096, %v2264
      %2266 = vmatmul.bf16.gmra.mxu0 %v1481
      %v2267 = vpop.f32.mrf.mxu0
      %v2268 = vadd.f32 %v2099, %v2267
      %v2269 = vpop.f32.mrf.mxu0
      %v2270 = vadd.f32 %v2101, %v2269
      %2271 = vmatmul.bf16.gmra.mxu0 %v1484
      %v2272 = vpop.f32.mrf.mxu0
      %v2273 = vadd.f32 %v2104, %v2272
      %v2274 = vpop.f32.mrf.mxu0
      %v2275 = vadd.f32 %v2106, %v2274
      %2276 = vmatmul.bf16.gmra.mxu0 %v1486
      %v2277 = vpop.f32.mrf.mxu0
      %v2278 = vadd.f32 %v2109, %v2277
      %v2279 = vpop.f32.mrf.mxu0
      %v2280 = vadd.f32 %v2111, %v2279
      %2281 = vdwg.mxu0
      %v2282 = vadd.f32 %v1519, %v2123
      %v2283 = vadd.f32 %v1520, %v2125
      %v2284 = vadd.f32 %v1521, %v2128
      %v2285 = vadd.f32 %v1522, %v2130
      %v2286 = vadd.f32 %v1523, %v2133
      %v2287 = vadd.f32 %v1524, %v2135
      %v2288 = vadd.f32 %v1525, %v2138
      %v2289 = vadd.f32 %v1526, %v2140
      %v2290 = vadd.f32 %v1527, %v2143
      %v2291 = vadd.f32 %v1528, %v2145
      %v2292 = vadd.f32 %v1529, %v2148
      %v2293 = vadd.f32 %v1530, %v2150
      %v2294 = vadd.f32 %v1531, %v2153
      %v2295 = vadd.f32 %v1532, %v2155
      %v2296 = vadd.f32 %v1533, %v2158
      %v2297 = vadd.f32 %v1534, %v2160
      %v2298 = vadd.f32 %v1535, %v2163
      %v2299 = vadd.f32 %v1536, %v2165
      %v2300 = vadd.f32 %v1537, %v2168
      %v2301 = vadd.f32 %v1538, %v2170
      %v2302 = vadd.f32 %v1539, %v2173
      %v2303 = vadd.f32 %v1540, %v2175
      %v2304 = vadd.f32 %v1541, %v2178
      %v2305 = vadd.f32 %v1542, %v2180
      %v2306 = vadd.f32 %v1543, %v2183
      %v2307 = vadd.f32 %v1544, %v2185
      %v2308 = vadd.f32 %v1545, %v2188
      %v2309 = vadd.f32 %v1546, %v2190
      %v2310 = vadd.f32 %v1547, %v2193
      %v2311 = vadd.f32 %v1548, %v2195
      %v2312 = vadd.f32 %v1549, %v2198
      %v2313 = vadd.f32 %v1550, %v2200
      %v2314 = vadd.f32 %v1551, %v2203
      %v2315 = vadd.f32 %v1552, %v2205
      %v2316 = vadd.f32 %v1553, %v2208
      %v2317 = vadd.f32 %v1554, %v2210
      %v2318 = vadd.f32 %v1555, %v2213
      %v2319 = vadd.f32 %v1556, %v2215
      %v2320 = vadd.f32 %v1557, %v2218
      %v2321 = vadd.f32 %v1558, %v2220
      %v2322 = vadd.f32 %v1559, %v2223
      %v2323 = vadd.f32 %v1560, %v2225
      %v2324 = vadd.f32 %v1561, %v2228
      %v2325 = vadd.f32 %v1562, %v2230
      %v2326 = vadd.f32 %v1563, %v2233
      %v2327 = vadd.f32 %v1564, %v2235
      %v2328 = vadd.f32 %v1565, %v2238
      %v2329 = vadd.f32 %v1566, %v2240
      %v2330 = vadd.f32 %v1567, %v2243
      %v2331 = vadd.f32 %v1568, %v2245
      %v2332 = vadd.f32 %v1569, %v2248
      %v2333 = vadd.f32 %v1570, %v2250
      %v2334 = vadd.f32 %v1571, %v2253
      %v2335 = vadd.f32 %v1572, %v2255
      %v2336 = vadd.f32 %v1573, %v2258
      %v2337 = vadd.f32 %v1574, %v2260
      %v2338 = vadd.f32 %v1575, %v2263
      %v2339 = vadd.f32 %v1576, %v2265
      %v2340 = vadd.f32 %v1577, %v2268
      %v2341 = vadd.f32 %v1578, %v2270
      %v2342 = vadd.f32 %v1579, %v2273
      %v2343 = vadd.f32 %v1580, %v2275
      %v2344 = vadd.f32 %v1581, %v2278
      %v2345 = vadd.f32 %v1582, %v2280
      %2346 = vst [vmem:[#allocation2] sm:$0xff] %v2282
      %2347 = vst [vmem:[#allocation2 + $0x8] sm:$0xff] %v2283
      %2348 = vst [vmem:[#allocation2 + $0x10] sm:$0xff] %v2284
      %2349 = vst [vmem:[#allocation2 + $0x18] sm:$0xff] %v2285
      %2350 = vst [vmem:[#allocation2 + $0x20] sm:$0xff] %v2286
      %2351 = vst [vmem:[#allocation2 + $0x28] sm:$0xff] %v2287
      %2352 = vst [vmem:[#allocation2 + $0x30] sm:$0xff] %v2288
      %2353 = vst [vmem:[#allocation2 + $0x38] sm:$0xff] %v2289
      %2354 = vst [vmem:[#allocation2 + $0x40] sm:$0xff] %v2290
      %2355 = vst [vmem:[#allocation2 + $0x48] sm:$0xff] %v2291
      %2356 = vst [vmem:[#allocation2 + $0x50] sm:$0xff] %v2292
      %2357 = vst [vmem:[#allocation2 + $0x58] sm:$0xff] %v2293
      %2358 = vst [vmem:[#allocation2 + $0x60] sm:$0xff] %v2294
      %2359 = vst [vmem:[#allocation2 + $0x68] sm:$0xff] %v2295
      %2360 = vst [vmem:[#allocation2 + $0x70] sm:$0xff] %v2296
      %2361 = vst [vmem:[#allocation2 + $0x78] sm:$0xff] %v2297
      %2362 = vst [vmem:[#allocation2 + $0x80] sm:$0xff] %v2298
      %2363 = vst [vmem:[#allocation2 + $0x88] sm:$0xff] %v2299
      %2364 = vst [vmem:[#allocation2 + $0x90] sm:$0xff] %v2300
      %2365 = vst [vmem:[#allocation2 + $0x98] sm:$0xff] %v2301
      %2366 = vst [vmem:[#allocation2 + $0xa0] sm:$0xff] %v2302
      %2367 = vst [vmem:[#allocation2 + $0xa8] sm:$0xff] %v2303
      %2368 = vst [vmem:[#allocation2 + $0xb0] sm:$0xff] %v2304
      %2369 = vst [vmem:[#allocation2 + $0xb8] sm:$0xff] %v2305
      %2370 = vst [vmem:[#allocation2 + $0xc0] sm:$0xff] %v2306
      %2371 = vst [vmem:[#allocation2 + $0xc8] sm:$0xff] %v2307
      %2372 = vst [vmem:[#allocation2 + $0xd0] sm:$0xff] %v2308
      %2373 = vst [vmem:[#allocation2 + $0xd8] sm:$0xff] %v2309
      %2374 = vst [vmem:[#allocation2 + $0xe0] sm:$0xff] %v2310
      %2375 = vst [vmem:[#allocation2 + $0xe8] sm:$0xff] %v2311
      %2376 = vst [vmem:[#allocation2 + $0xf0] sm:$0xff] %v2312
      %2377 = vst [vmem:[#allocation2 + $0xf8] sm:$0xff] %v2313
      %2378 = vst [vmem:[#allocation2 + $0x100] sm:$0xff] %v2314
      %2379 = vst [vmem:[#allocation2 + $0x108] sm:$0xff] %v2315
      %2380 = vst [vmem:[#allocation2 + $0x110] sm:$0xff] %v2316
      %2381 = vst [vmem:[#allocation2 + $0x118] sm:$0xff] %v2317
      %2382 = vst [vmem:[#allocation2 + $0x120] sm:$0xff] %v2318
      %2383 = vst [vmem:[#allocation2 + $0x128] sm:$0xff] %v2319
      %2384 = vst [vmem:[#allocation2 + $0x130] sm:$0xff] %v2320
      %2385 = vst [vmem:[#allocation2 + $0x138] sm:$0xff] %v2321
      %2386 = vst [vmem:[#allocation2 + $0x140] sm:$0xff] %v2322
      %2387 = vst [vmem:[#allocation2 + $0x148] sm:$0xff] %v2323
      %2388 = vst [vmem:[#allocation2 + $0x150] sm:$0xff] %v2324
      %2389 = vst [vmem:[#allocation2 + $0x158] sm:$0xff] %v2325
      %2390 = vst [vmem:[#allocation2 + $0x160] sm:$0xff] %v2326
      %2391 = vst [vmem:[#allocation2 + $0x168] sm:$0xff] %v2327
      %2392 = vst [vmem:[#allocation2 + $0x170] sm:$0xff] %v2328
      %2393 = vst [vmem:[#allocation2 + $0x178] sm:$0xff] %v2329
      %2394 = vst [vmem:[#allocation2 + $0x180] sm:$0xff] %v2330
      %2395 = vst [vmem:[#allocation2 + $0x188] sm:$0xff] %v2331
      %2396 = vst [vmem:[#allocation2 + $0x190] sm:$0xff] %v2332
      %2397 = vst [vmem:[#allocation2 + $0x198] sm:$0xff] %v2333
      %2398 = vst [vmem:[#allocation2 + $0x1a0] sm:$0xff] %v2334
      %2399 = vst [vmem:[#allocation2 + $0x1a8] sm:$0xff] %v2335
      %2400 = vst [vmem:[#allocation2 + $0x1b0] sm:$0xff] %v2336
      %2401 = vst [vmem:[#allocation2 + $0x1b8] sm:$0xff] %v2337
      %2402 = vst [vmem:[#allocation2 + $0x1c0] sm:$0xff] %v2338
      %2403 = vst [vmem:[#allocation2 + $0x1c8] sm:$0xff] %v2339
      %2404 = vst [vmem:[#allocation2 + $0x1d0] sm:$0xff] %v2340
      %2405 = vst [vmem:[#allocation2 + $0x1d8] sm:$0xff] %v2341
      %2406 = vst [vmem:[#allocation2 + $0x1e0] sm:$0xff] %v2342
      %2407 = vst [vmem:[#allocation2 + $0x1e8] sm:$0xff] %v2343
      %2408 = vst [vmem:[#allocation2 + $0x1f0] sm:$0xff] %v2344
      %2409 = vst [vmem:[#allocation2 + $0x1f8] sm:$0xff] %v2345
      %v2411 = vshrl.u32 %v933, 16
      %v2413 = vshll.u32 %v933, 16
      %v2415 = vrot.slane %v2413, 1
      %v2416 = vor.u32 %v2411, %v2415
      %v2418 = vshll.u32 %v845, 16
      %v2420 = vrot.slane %v2418, 1
      %v2421 = vsel %vm1021, %v2416, %v2420
      %v2422 = vshrl.u32 %v845, 16
      %v2424 = vor.u32 %v2422, %v2420
      %v2426 = vshll.u32 %v951, 16
      %v2428 = vrot.slane %v2426, 1
      %v2429 = vsel %vm1021, %v2424, %v2428
      %v2434 = vrot.slane %v933, 1
      %v2435 = vrot.slane %v845, 1
      %v2436 = vsel %vm1406, %v2434, %v2435
      %v2437 = vrot.slane %v951, 1
      %v2438 = vsel %vm1406, %v2435, %v2437
      %v2441 = vld [vmem:[#allocation2] sm:$0xff]
      %v2442 = vld [vmem:[#allocation2 + $0x8] sm:$0xff]
      %v2443 = vld [vmem:[#allocation2 + $0x10] sm:$0xff]
      %v2444 = vld [vmem:[#allocation2 + $0x18] sm:$0xff]
      %v2445 = vld [vmem:[#allocation2 + $0x20] sm:$0xff]
      %v2446 = vld [vmem:[#allocation2 + $0x28] sm:$0xff]
      %v2447 = vld [vmem:[#allocation2 + $0x30] sm:$0xff]
      %v2448 = vld [vmem:[#allocation2 + $0x38] sm:$0xff]
      %v2449 = vld [vmem:[#allocation2 + $0x40] sm:$0xff]
      %v2450 = vld [vmem:[#allocation2 + $0x48] sm:$0xff]
      %v2451 = vld [vmem:[#allocation2 + $0x50] sm:$0xff]
      %v2452 = vld [vmem:[#allocation2 + $0x58] sm:$0xff]
      %v2453 = vld [vmem:[#allocation2 + $0x60] sm:$0xff]
      %v2454 = vld [vmem:[#allocation2 + $0x68] sm:$0xff]
      %v2455 = vld [vmem:[#allocation2 + $0x70] sm:$0xff]
      %v2456 = vld [vmem:[#allocation2 + $0x78] sm:$0xff]
      %v2457 = vld [vmem:[#allocation2 + $0x80] sm:$0xff]
      %v2458 = vld [vmem:[#allocation2 + $0x88] sm:$0xff]
      %v2459 = vld [vmem:[#allocation2 + $0x90] sm:$0xff]
      %v2460 = vld [vmem:[#allocation2 + $0x98] sm:$0xff]
      %v2461 = vld [vmem:[#allocation2 + $0xa0] sm:$0xff]
      %v2462 = vld [vmem:[#allocation2 + $0xa8] sm:$0xff]
      %v2463 = vld [vmem:[#allocation2 + $0xb0] sm:$0xff]
      %v2464 = vld [vmem:[#allocation2 + $0xb8] sm:$0xff]
      %v2465 = vld [vmem:[#allocation2 + $0xc0] sm:$0xff]
      %v2466 = vld [vmem:[#allocation2 + $0xc8] sm:$0xff]
      %v2467 = vld [vmem:[#allocation2 + $0xd0] sm:$0xff]
      %v2468 = vld [vmem:[#allocation2 + $0xd8] sm:$0xff]
      %v2469 = vld [vmem:[#allocation2 + $0xe0] sm:$0xff]
      %v2470 = vld [vmem:[#allocation2 + $0xe8] sm:$0xff]
      %v2471 = vld [vmem:[#allocation2 + $0xf0] sm:$0xff]
      %v2472 = vld [vmem:[#allocation2 + $0xf8] sm:$0xff]
      %v2473 = vld [vmem:[#allocation2 + $0x100] sm:$0xff]
      %v2474 = vld [vmem:[#allocation2 + $0x108] sm:$0xff]
      %v2475 = vld [vmem:[#allocation2 + $0x110] sm:$0xff]
      %v2476 = vld [vmem:[#allocation2 + $0x118] sm:$0xff]
      %v2477 = vld [vmem:[#allocation2 + $0x120] sm:$0xff]
      %v2478 = vld [vmem:[#allocation2 + $0x128] sm:$0xff]
      %v2479 = vld [vmem:[#allocation2 + $0x130] sm:$0xff]
      %v2480 = vld [vmem:[#allocation2 + $0x138] sm:$0xff]
      %v2481 = vld [vmem:[#allocation2 + $0x140] sm:$0xff]
      %v2482 = vld [vmem:[#allocation2 + $0x148] sm:$0xff]
      %v2483 = vld [vmem:[#allocation2 + $0x150] sm:$0xff]
      %v2484 = vld [vmem:[#allocation2 + $0x158] sm:$0xff]
      %v2485 = vld [vmem:[#allocation2 + $0x160] sm:$0xff]
      %v2486 = vld [vmem:[#allocation2 + $0x168] sm:$0xff]
      %v2487 = vld [vmem:[#allocation2 + $0x170] sm:$0xff]
      %v2488 = vld [vmem:[#allocation2 + $0x178] sm:$0xff]
      %v2489 = vld [vmem:[#allocation2 + $0x180] sm:$0xff]
      %v2490 = vld [vmem:[#allocation2 + $0x188] sm:$0xff]
      %v2491 = vld [vmem:[#allocation2 + $0x190] sm:$0xff]
      %v2492 = vld [vmem:[#allocation2 + $0x198] sm:$0xff]
      %v2493 = vld [vmem:[#allocation2 + $0x1a0] sm:$0xff]
      %v2494 = vld [vmem:[#allocation2 + $0x1a8] sm:$0xff]
      %v2495 = vld [vmem:[#allocation2 + $0x1b0] sm:$0xff]
      %v2496 = vld [vmem:[#allocation2 + $0x1b8] sm:$0xff]
      %v2497 = vld [vmem:[#allocation2 + $0x1c0] sm:$0xff]
      %v2498 = vld [vmem:[#allocation2 + $0x1c8] sm:$0xff]
      %v2499 = vld [vmem:[#allocation2 + $0x1d0] sm:$0xff]
      %v2500 = vld [vmem:[#allocation2 + $0x1d8] sm:$0xff]
      %v2501 = vld [vmem:[#allocation2 + $0x1e0] sm:$0xff]
      %v2502 = vld [vmem:[#allocation2 + $0x1e8] sm:$0xff]
      %v2503 = vld [vmem:[#allocation2 + $0x1f0] sm:$0xff]
      %v2504 = vld [vmem:[#allocation2 + $0x1f8] sm:$0xff]
      %s2505 = scalar_lea.vmem %s3, 192
      %v2506 = vld [vmem:[%s2505] sm:$0xf]
      %v2507 = vld [vmem:[%s2505 + $0x4] sm:$0xf]
      %v2508 = vld [vmem:[%s2505 + $0x8] sm:$0xf]
      %v2509 = vld [vmem:[%s2505 + $0xc] sm:$0xf]
      %v2510 = vld [vmem:[%s2505 + $0x10] sm:$0xf]
      %v2511 = vld [vmem:[%s2505 + $0x14] sm:$0xf]
      %v2512 = vld [vmem:[%s2505 + $0x18] sm:$0xf]
      %v2513 = vld [vmem:[%s2505 + $0x1c] sm:$0xf]
      %v2514 = vld [vmem:[%s2505 + $0x20] sm:$0xf]
      %v2515 = vld [vmem:[%s2505 + $0x24] sm:$0xf]
      %v2516 = vld [vmem:[%s2505 + $0x28] sm:$0xf]
      %v2517 = vld [vmem:[%s2505 + $0x2c] sm:$0xf]
      %v2518 = vld [vmem:[%s2505 + $0x30] sm:$0xf]
      %v2519 = vld [vmem:[%s2505 + $0x34] sm:$0xf]
      %v2520 = vld [vmem:[%s2505 + $0x38] sm:$0xf]
      %v2521 = vld [vmem:[%s2505 + $0x3c] sm:$0xf]
      %v2522 = vld [vmem:[%s2505 + $0x40] sm:$0xf]
      %v2523 = vld [vmem:[%s2505 + $0x44] sm:$0xf]
      %v2524 = vld [vmem:[%s2505 + $0x48] sm:$0xf]
      %v2525 = vld [vmem:[%s2505 + $0x4c] sm:$0xf]
      %v2526 = vld [vmem:[%s2505 + $0x50] sm:$0xf]
      %v2527 = vld [vmem:[%s2505 + $0x54] sm:$0xf]
      %v2528 = vld [vmem:[%s2505 + $0x58] sm:$0xf]
      %v2529 = vld [vmem:[%s2505 + $0x5c] sm:$0xf]
      %v2530 = vld [vmem:[%s2505 + $0x60] sm:$0xf]
      %v2531 = vld [vmem:[%s2505 + $0x64] sm:$0xf]
      %v2532 = vld [vmem:[%s2505 + $0x68] sm:$0xf]
      %v2533 = vld [vmem:[%s2505 + $0x6c] sm:$0xf]
      %v2534 = vld [vmem:[%s2505 + $0x70] sm:$0xf]
      %v2535 = vld [vmem:[%s2505 + $0x74] sm:$0xf]
      %v2536 = vld [vmem:[%s2505 + $0x78] sm:$0xf]
      %v2537 = vld [vmem:[%s2505 + $0x7c] sm:$0xf]
      %v2538 = vld [vmem:[%s2505 + $0x80] sm:$0xf]
      %v2539 = vld [vmem:[%s2505 + $0x84] sm:$0xf]
      %v2540 = vld [vmem:[%s2505 + $0x88] sm:$0xf]
      %v2541 = vld [vmem:[%s2505 + $0x8c] sm:$0xf]
      %v2542 = vld [vmem:[%s2505 + $0x90] sm:$0xf]
      %v2543 = vld [vmem:[%s2505 + $0x94] sm:$0xf]
      %v2544 = vld [vmem:[%s2505 + $0x98] sm:$0xf]
      %v2545 = vld [vmem:[%s2505 + $0x9c] sm:$0xf]
      %v2546 = vld [vmem:[%s2505 + $0xa0] sm:$0xf]
      %v2547 = vld [vmem:[%s2505 + $0xa4] sm:$0xf]
      %v2548 = vld [vmem:[%s2505 + $0xa8] sm:$0xf]
      %v2549 = vld [vmem:[%s2505 + $0xac] sm:$0xf]
      %v2550 = vld [vmem:[%s2505 + $0xb0] sm:$0xf]
      %v2551 = vld [vmem:[%s2505 + $0xb4] sm:$0xf]
      %v2552 = vld [vmem:[%s2505 + $0xb8] sm:$0xf]
      %v2553 = vld [vmem:[%s2505 + $0xbc] sm:$0xf]
      %v2602 = vunpack.c.l.b16 %v2506
      %v2603 = vunpack.c.l.b16 %v2507
      %v2604 = vunpack.c.l.b16 %v2508
      %v2605 = vunpack.c.l.b16 %v2509
      %v2606 = vunpack.c.l.b16 %v2510
      %v2607 = vunpack.c.l.b16 %v2511
      %v2608 = vunpack.c.l.b16 %v2512
      %v2609 = vunpack.c.l.b16 %v2513
      %v2610 = vunpack.c.l.b16 %v2514
      %v2611 = vunpack.c.l.b16 %v2515
      %v2612 = vunpack.c.l.b16 %v2516
      %v2613 = vunpack.c.l.b16 %v2517
      %v2614 = vunpack.c.l.b16 %v2518
      %v2615 = vunpack.c.l.b16 %v2519
      %v2616 = vunpack.c.l.b16 %v2520
      %v2617 = vunpack.c.l.b16 %v2521
      %v2618 = vunpack.c.l.b16 %v2522
      %v2619 = vunpack.c.l.b16 %v2523
      %v2620 = vunpack.c.l.b16 %v2524
      %v2621 = vunpack.c.l.b16 %v2525
      %v2622 = vunpack.c.l.b16 %v2526
      %v2623 = vunpack.c.l.b16 %v2527
      %v2624 = vunpack.c.l.b16 %v2528
      %v2625 = vunpack.c.l.b16 %v2529
      %v2626 = vunpack.c.l.b16 %v2530
      %v2627 = vunpack.c.l.b16 %v2531
      %v2628 = vunpack.c.l.b16 %v2532
      %v2629 = vunpack.c.l.b16 %v2533
      %v2630 = vunpack.c.l.b16 %v2534
      %v2631 = vunpack.c.l.b16 %v2535
      %v2632 = vunpack.c.l.b16 %v2536
      %v2633 = vunpack.c.l.b16 %v2537
      %v2634 = vunpack.c.l.b16 %v2538
      %v2635 = vunpack.c.l.b16 %v2539
      %v2636 = vunpack.c.l.b16 %v2540
      %v2637 = vunpack.c.l.b16 %v2541
      %v2638 = vunpack.c.l.b16 %v2542
      %v2639 = vunpack.c.l.b16 %v2543
      %v2640 = vunpack.c.l.b16 %v2544
      %v2641 = vunpack.c.l.b16 %v2545
      %v2642 = vunpack.c.l.b16 %v2546
      %v2643 = vunpack.c.l.b16 %v2547
      %v2644 = vunpack.c.l.b16 %v2548
      %v2645 = vunpack.c.l.b16 %v2549
      %v2646 = vunpack.c.l.b16 %v2550
      %v2647 = vunpack.c.l.b16 %v2551
      %v2648 = vunpack.c.l.b16 %v2552
      %v2649 = vunpack.c.l.b16 %v2553
      %v2650 = vpack.c.b16 %v2603, %v2602
      %v2651 = vpack.c.b16 %v2605, %v2604
      %v2652 = vpack.c.b16 %v2607, %v2606
      %v2653 = vpack.c.b16 %v2609, %v2608
      %v2654 = vpack.c.b16 %v2611, %v2610
      %v2655 = vpack.c.b16 %v2613, %v2612
      %v2656 = vpack.c.b16 %v2615, %v2614
      %v2657 = vpack.c.b16 %v2617, %v2616
      %v2658 = vpack.c.b16 %v2619, %v2618
      %v2659 = vpack.c.b16 %v2621, %v2620
      %v2660 = vpack.c.b16 %v2623, %v2622
      %v2661 = vpack.c.b16 %v2625, %v2624
      %v2662 = vpack.c.b16 %v2627, %v2626
      %v2663 = vpack.c.b16 %v2629, %v2628
      %v2664 = vpack.c.b16 %v2631, %v2630
      %v2665 = vpack.c.b16 %v2633, %v2632
      %v2666 = vpack.c.b16 %v2635, %v2634
      %v2667 = vpack.c.b16 %v2637, %v2636
      %v2668 = vpack.c.b16 %v2639, %v2638
      %v2669 = vpack.c.b16 %v2641, %v2640
      %v2670 = vpack.c.b16 %v2643, %v2642
      %v2671 = vpack.c.b16 %v2645, %v2644
      %v2672 = vpack.c.b16 %v2647, %v2646
      %v2673 = vpack.c.b16 %v2649, %v2648
      %2698 = vmatpush.bf16.msra.mxu0 %v2657
      %2699 = vmatpush.bf16.msra.mxu0 %v2656
      %2700 = vmatpush.bf16.msra.mxu0 %v2655
      %2701 = vmatpush.bf16.msra.mxu0 %v2654
      %2702 = vmatpush.bf16.msra.mxu0 %v2653
      %2703 = vmatpush.bf16.msra.mxu0 %v2652
      %2704 = vmatpush.bf16.msra.mxu0 %v2651
      %2705 = vmatpush.bf16.msra.mxu0 %v2650
      %2706 = vmatmul.bf16.gmra.mxu0 %v918
      %v2707 = vpop.f32.mrf.mxu0
      %v2708 = vadd.f32 0.0, %v2707
      %v2709 = vpop.f32.mrf.mxu0
      %v2710 = vadd.f32 0.0, %v2709
      %2711 = vmatmul.bf16.gmra.mxu0 %v620
      %v2712 = vpop.f32.mrf.mxu0
      %v2713 = vadd.f32 0.0, %v2712
      %v2714 = vpop.f32.mrf.mxu0
      %v2715 = vadd.f32 0.0, %v2714
      %2716 = vmatmul.bf16.gmra.mxu0 %v919
      %v2717 = vpop.f32.mrf.mxu0
      %v2718 = vadd.f32 0.0, %v2717
      %v2719 = vpop.f32.mrf.mxu0
      %v2720 = vadd.f32 0.0, %v2719
      %2721 = vmatmul.bf16.gmra.mxu0 %v635
      %v2722 = vpop.f32.mrf.mxu0
      %v2723 = vadd.f32 0.0, %v2722
      %v2724 = vpop.f32.mrf.mxu0
      %v2725 = vadd.f32 0.0, %v2724
      %2726 = vmatmul.bf16.gmra.mxu0 %v920
      %v2727 = vpop.f32.mrf.mxu0
      %v2728 = vadd.f32 0.0, %v2727
      %v2729 = vpop.f32.mrf.mxu0
      %v2730 = vadd.f32 0.0, %v2729
      %2731 = vmatmul.bf16.gmra.mxu0 %v650
      %v2732 = vpop.f32.mrf.mxu0
      %v2733 = vadd.f32 0.0, %v2732
      %v2734 = vpop.f32.mrf.mxu0
      %v2735 = vadd.f32 0.0, %v2734
      %2736 = vmatmul.bf16.gmra.mxu0 %v921
      %v2737 = vpop.f32.mrf.mxu0
      %v2738 = vadd.f32 0.0, %v2737
      %v2739 = vpop.f32.mrf.mxu0
      %v2740 = vadd.f32 0.0, %v2739
      %2741 = vmatmul.bf16.gmra.mxu0 %v665
      %v2742 = vpop.f32.mrf.mxu0
      %v2743 = vadd.f32 0.0, %v2742
      %v2744 = vpop.f32.mrf.mxu0
      %v2745 = vadd.f32 0.0, %v2744
      %2746 = vmatmul.bf16.gmra.mxu0 %v922
      %v2747 = vpop.f32.mrf.mxu0
      %v2748 = vadd.f32 0.0, %v2747
      %v2749 = vpop.f32.mrf.mxu0
      %v2750 = vadd.f32 0.0, %v2749
      %2751 = vmatmul.bf16.gmra.mxu0 %v680
      %v2752 = vpop.f32.mrf.mxu0
      %v2753 = vadd.f32 0.0, %v2752
      %v2754 = vpop.f32.mrf.mxu0
      %v2755 = vadd.f32 0.0, %v2754
      %2756 = vmatmul.bf16.gmra.mxu0 %v923
      %v2757 = vpop.f32.mrf.mxu0
      %v2758 = vadd.f32 0.0, %v2757
      %v2759 = vpop.f32.mrf.mxu0
      %v2760 = vadd.f32 0.0, %v2759
      %2761 = vmatmul.bf16.gmra.mxu0 %v695
      %v2762 = vpop.f32.mrf.mxu0
      %v2763 = vadd.f32 0.0, %v2762
      %v2764 = vpop.f32.mrf.mxu0
      %v2765 = vadd.f32 0.0, %v2764
      %2766 = vmatmul.bf16.gmra.mxu0 %v924
      %v2767 = vpop.f32.mrf.mxu0
      %v2768 = vadd.f32 0.0, %v2767
      %v2769 = vpop.f32.mrf.mxu0
      %v2770 = vadd.f32 0.0, %v2769
      %2771 = vmatmul.bf16.gmra.mxu0 %v710
      %v2772 = vpop.f32.mrf.mxu0
      %v2773 = vadd.f32 0.0, %v2772
      %v2774 = vpop.f32.mrf.mxu0
      %v2775 = vadd.f32 0.0, %v2774
      %2776 = vmatmul.bf16.gmra.mxu0 %v925
      %v2777 = vpop.f32.mrf.mxu0
      %v2778 = vadd.f32 0.0, %v2777
      %v2779 = vpop.f32.mrf.mxu0
      %v2780 = vadd.f32 0.0, %v2779
      %2781 = vmatmul.bf16.gmra.mxu0 %v725
      %v2782 = vpop.f32.mrf.mxu0
      %v2783 = vadd.f32 0.0, %v2782
      %v2784 = vpop.f32.mrf.mxu0
      %v2785 = vadd.f32 0.0, %v2784
      %2786 = vmatmul.bf16.gmra.mxu0 %v926
      %v2787 = vpop.f32.mrf.mxu0
      %v2788 = vadd.f32 0.0, %v2787
      %v2789 = vpop.f32.mrf.mxu0
      %v2790 = vadd.f32 0.0, %v2789
      %2791 = vmatmul.bf16.gmra.mxu0 %v740
      %v2792 = vpop.f32.mrf.mxu0
      %v2793 = vadd.f32 0.0, %v2792
      %v2794 = vpop.f32.mrf.mxu0
      %v2795 = vadd.f32 0.0, %v2794
      %2796 = vmatmul.bf16.gmra.mxu0 %v927
      %v2797 = vpop.f32.mrf.mxu0
      %v2798 = vadd.f32 0.0, %v2797
      %v2799 = vpop.f32.mrf.mxu0
      %v2800 = vadd.f32 0.0, %v2799
      %2801 = vmatmul.bf16.gmra.mxu0 %v755
      %v2802 = vpop.f32.mrf.mxu0
      %v2803 = vadd.f32 0.0, %v2802
      %v2804 = vpop.f32.mrf.mxu0
      %v2805 = vadd.f32 0.0, %v2804
      %2806 = vmatmul.bf16.gmra.mxu0 %v928
      %v2807 = vpop.f32.mrf.mxu0
      %v2808 = vadd.f32 0.0, %v2807
      %v2809 = vpop.f32.mrf.mxu0
      %v2810 = vadd.f32 0.0, %v2809
      %2811 = vmatmul.bf16.gmra.mxu0 %v770
      %v2812 = vpop.f32.mrf.mxu0
      %v2813 = vadd.f32 0.0, %v2812
      %v2814 = vpop.f32.mrf.mxu0
      %v2815 = vadd.f32 0.0, %v2814
      %2816 = vmatmul.bf16.gmra.mxu0 %v929
      %v2817 = vpop.f32.mrf.mxu0
      %v2818 = vadd.f32 0.0, %v2817
      %v2819 = vpop.f32.mrf.mxu0
      %v2820 = vadd.f32 0.0, %v2819
      %2821 = vmatmul.bf16.gmra.mxu0 %v785
      %v2822 = vpop.f32.mrf.mxu0
      %v2823 = vadd.f32 0.0, %v2822
      %v2824 = vpop.f32.mrf.mxu0
      %v2825 = vadd.f32 0.0, %v2824
      %2826 = vmatmul.bf16.gmra.mxu0 %v930
      %v2827 = vpop.f32.mrf.mxu0
      %v2828 = vadd.f32 0.0, %v2827
      %v2829 = vpop.f32.mrf.mxu0
      %v2830 = vadd.f32 0.0, %v2829
      %2831 = vmatmul.bf16.gmra.mxu0 %v800
      %v2832 = vpop.f32.mrf.mxu0
      %v2833 = vadd.f32 0.0, %v2832
      %v2834 = vpop.f32.mrf.mxu0
      %v2835 = vadd.f32 0.0, %v2834
      %2836 = vmatmul.bf16.gmra.mxu0 %v931
      %v2837 = vpop.f32.mrf.mxu0
      %v2838 = vadd.f32 0.0, %v2837
      %v2839 = vpop.f32.mrf.mxu0
      %v2840 = vadd.f32 0.0, %v2839
      %2841 = vmatmul.bf16.gmra.mxu0 %v815
      %v2842 = vpop.f32.mrf.mxu0
      %v2843 = vadd.f32 0.0, %v2842
      %v2844 = vpop.f32.mrf.mxu0
      %v2845 = vadd.f32 0.0, %v2844
      %2846 = vmatmul.bf16.gmra.mxu0 %v932
      %v2847 = vpop.f32.mrf.mxu0
      %v2848 = vadd.f32 0.0, %v2847
      %v2849 = vpop.f32.mrf.mxu0
      %v2850 = vadd.f32 0.0, %v2849
      %2851 = vmatmul.bf16.gmra.mxu0 %v830
      %v2852 = vpop.f32.mrf.mxu0
      %v2853 = vadd.f32 0.0, %v2852
      %v2854 = vpop.f32.mrf.mxu0
      %v2855 = vadd.f32 0.0, %v2854
      %2856 = vmatmul.bf16.gmra.mxu0 %v933
      %v2857 = vpop.f32.mrf.mxu0
      %v2858 = vadd.f32 0.0, %v2857
      %v2859 = vpop.f32.mrf.mxu0
      %v2860 = vadd.f32 0.0, %v2859
      %2861 = vmatmul.bf16.gmra.mxu0 %v845
      %v2862 = vpop.f32.mrf.mxu0
      %v2863 = vadd.f32 0.0, %v2862
      %v2864 = vpop.f32.mrf.mxu0
      %v2865 = vadd.f32 0.0, %v2864
      %2866 = vdwg.mxu0
      %2867 = vmatpush.bf16.msra.mxu0 %v2665
      %2868 = vmatpush.bf16.msra.mxu0 %v2664
      %2869 = vmatpush.bf16.msra.mxu0 %v2663
      %2870 = vmatpush.bf16.msra.mxu0 %v2662
      %2871 = vmatpush.bf16.msra.mxu0 %v2661
      %2872 = vmatpush.bf16.msra.mxu0 %v2660
      %2873 = vmatpush.bf16.msra.mxu0 %v2659
      %2874 = vmatpush.bf16.msra.mxu0 %v2658
      %2875 = vmatmul.bf16.gmra.mxu0 %v1053
      %v2876 = vpop.f32.mrf.mxu0
      %v2877 = vadd.f32 %v2708, %v2876
      %v2878 = vpop.f32.mrf.mxu0
      %v2879 = vadd.f32 %v2710, %v2878
      %2880 = vmatmul.bf16.gmra.mxu0 %v1061
      %v2881 = vpop.f32.mrf.mxu0
      %v2882 = vadd.f32 %v2713, %v2881
      %v2883 = vpop.f32.mrf.mxu0
      %v2884 = vadd.f32 %v2715, %v2883
      %2885 = vmatmul.bf16.gmra.mxu0 %v1073
      %v2886 = vpop.f32.mrf.mxu0
      %v2887 = vadd.f32 %v2718, %v2886
      %v2888 = vpop.f32.mrf.mxu0
      %v2889 = vadd.f32 %v2720, %v2888
      %2890 = vmatmul.bf16.gmra.mxu0 %v1081
      %v2891 = vpop.f32.mrf.mxu0
      %v2892 = vadd.f32 %v2723, %v2891
      %v2893 = vpop.f32.mrf.mxu0
      %v2894 = vadd.f32 %v2725, %v2893
      %2895 = vmatmul.bf16.gmra.mxu0 %v1093
      %v2896 = vpop.f32.mrf.mxu0
      %v2897 = vadd.f32 %v2728, %v2896
      %v2898 = vpop.f32.mrf.mxu0
      %v2899 = vadd.f32 %v2730, %v2898
      %2900 = vmatmul.bf16.gmra.mxu0 %v1101
      %v2901 = vpop.f32.mrf.mxu0
      %v2902 = vadd.f32 %v2733, %v2901
      %v2903 = vpop.f32.mrf.mxu0
      %v2904 = vadd.f32 %v2735, %v2903
      %2905 = vmatmul.bf16.gmra.mxu0 %v1113
      %v2906 = vpop.f32.mrf.mxu0
      %v2907 = vadd.f32 %v2738, %v2906
      %v2908 = vpop.f32.mrf.mxu0
      %v2909 = vadd.f32 %v2740, %v2908
      %2910 = vmatmul.bf16.gmra.mxu0 %v1121
      %v2911 = vpop.f32.mrf.mxu0
      %v2912 = vadd.f32 %v2743, %v2911
      %v2913 = vpop.f32.mrf.mxu0
      %v2914 = vadd.f32 %v2745, %v2913
      %2915 = vmatmul.bf16.gmra.mxu0 %v1133
      %v2916 = vpop.f32.mrf.mxu0
      %v2917 = vadd.f32 %v2748, %v2916
      %v2918 = vpop.f32.mrf.mxu0
      %v2919 = vadd.f32 %v2750, %v2918
      %2920 = vmatmul.bf16.gmra.mxu0 %v1141
      %v2921 = vpop.f32.mrf.mxu0
      %v2922 = vadd.f32 %v2753, %v2921
      %v2923 = vpop.f32.mrf.mxu0
      %v2924 = vadd.f32 %v2755, %v2923
      %2925 = vmatmul.bf16.gmra.mxu0 %v1153
      %v2926 = vpop.f32.mrf.mxu0
      %v2927 = vadd.f32 %v2758, %v2926
      %v2928 = vpop.f32.mrf.mxu0
      %v2929 = vadd.f32 %v2760, %v2928
      %2930 = vmatmul.bf16.gmra.mxu0 %v1161
      %v2931 = vpop.f32.mrf.mxu0
      %v2932 = vadd.f32 %v2763, %v2931
      %v2933 = vpop.f32.mrf.mxu0
      %v2934 = vadd.f32 %v2765, %v2933
      %2935 = vmatmul.bf16.gmra.mxu0 %v1173
      %v2936 = vpop.f32.mrf.mxu0
      %v2937 = vadd.f32 %v2768, %v2936
      %v2938 = vpop.f32.mrf.mxu0
      %v2939 = vadd.f32 %v2770, %v2938
      %2940 = vmatmul.bf16.gmra.mxu0 %v1181
      %v2941 = vpop.f32.mrf.mxu0
      %v2942 = vadd.f32 %v2773, %v2941
      %v2943 = vpop.f32.mrf.mxu0
      %v2944 = vadd.f32 %v2775, %v2943
      %2945 = vmatmul.bf16.gmra.mxu0 %v1193
      %v2946 = vpop.f32.mrf.mxu0
      %v2947 = vadd.f32 %v2778, %v2946
      %v2948 = vpop.f32.mrf.mxu0
      %v2949 = vadd.f32 %v2780, %v2948
      %2950 = vmatmul.bf16.gmra.mxu0 %v1201
      %v2951 = vpop.f32.mrf.mxu0
      %v2952 = vadd.f32 %v2783, %v2951
      %v2953 = vpop.f32.mrf.mxu0
      %v2954 = vadd.f32 %v2785, %v2953
      %2955 = vmatmul.bf16.gmra.mxu0 %v1213
      %v2956 = vpop.f32.mrf.mxu0
      %v2957 = vadd.f32 %v2788, %v2956
      %v2958 = vpop.f32.mrf.mxu0
      %v2959 = vadd.f32 %v2790, %v2958
      %2960 = vmatmul.bf16.gmra.mxu0 %v1221
      %v2961 = vpop.f32.mrf.mxu0
      %v2962 = vadd.f32 %v2793, %v2961
      %v2963 = vpop.f32.mrf.mxu0
      %v2964 = vadd.f32 %v2795, %v2963
      %2965 = vmatmul.bf16.gmra.mxu0 %v1233
      %v2966 = vpop.f32.mrf.mxu0
      %v2967 = vadd.f32 %v2798, %v2966
      %v2968 = vpop.f32.mrf.mxu0
      %v2969 = vadd.f32 %v2800, %v2968
      %2970 = vmatmul.bf16.gmra.mxu0 %v1241
      %v2971 = vpop.f32.mrf.mxu0
      %v2972 = vadd.f32 %v2803, %v2971
      %v2973 = vpop.f32.mrf.mxu0
      %v2974 = vadd.f32 %v2805, %v2973
      %2975 = vmatmul.bf16.gmra.mxu0 %v1253
      %v2976 = vpop.f32.mrf.mxu0
      %v2977 = vadd.f32 %v2808, %v2976
      %v2978 = vpop.f32.mrf.mxu0
      %v2979 = vadd.f32 %v2810, %v2978
      %2980 = vmatmul.bf16.gmra.mxu0 %v1261
      %v2981 = vpop.f32.mrf.mxu0
      %v2982 = vadd.f32 %v2813, %v2981
      %v2983 = vpop.f32.mrf.mxu0
      %v2984 = vadd.f32 %v2815, %v2983
      %2985 = vmatmul.bf16.gmra.mxu0 %v1273
      %v2986 = vpop.f32.mrf.mxu0
      %v2987 = vadd.f32 %v2818, %v2986
      %v2988 = vpop.f32.mrf.mxu0
      %v2989 = vadd.f32 %v2820, %v2988
      %2990 = vmatmul.bf16.gmra.mxu0 %v1281
      %v2991 = vpop.f32.mrf.mxu0
      %v2992 = vadd.f32 %v2823, %v2991
      %v2993 = vpop.f32.mrf.mxu0
      %v2994 = vadd.f32 %v2825, %v2993
      %2995 = vmatmul.bf16.gmra.mxu0 %v1293
      %v2996 = vpop.f32.mrf.mxu0
      %v2997 = vadd.f32 %v2828, %v2996
      %v2998 = vpop.f32.mrf.mxu0
      %v2999 = vadd.f32 %v2830, %v2998
      %3000 = vmatmul.bf16.gmra.mxu0 %v1301
      %v3001 = vpop.f32.mrf.mxu0
      %v3002 = vadd.f32 %v2833, %v3001
      %v3003 = vpop.f32.mrf.mxu0
      %v3004 = vadd.f32 %v2835, %v3003
      %3005 = vmatmul.bf16.gmra.mxu0 %v1313
      %v3006 = vpop.f32.mrf.mxu0
      %v3007 = vadd.f32 %v2838, %v3006
      %v3008 = vpop.f32.mrf.mxu0
      %v3009 = vadd.f32 %v2840, %v3008
      %3010 = vmatmul.bf16.gmra.mxu0 %v1321
      %v3011 = vpop.f32.mrf.mxu0
      %v3012 = vadd.f32 %v2843, %v3011
      %v3013 = vpop.f32.mrf.mxu0
      %v3014 = vadd.f32 %v2845, %v3013
      %3015 = vmatmul.bf16.gmra.mxu0 %v1333
      %v3016 = vpop.f32.mrf.mxu0
      %v3017 = vadd.f32 %v2848, %v3016
      %v3018 = vpop.f32.mrf.mxu0
      %v3019 = vadd.f32 %v2850, %v3018
      %3020 = vmatmul.bf16.gmra.mxu0 %v1341
      %v3021 = vpop.f32.mrf.mxu0
      %v3022 = vadd.f32 %v2853, %v3021
      %v3023 = vpop.f32.mrf.mxu0
      %v3024 = vadd.f32 %v2855, %v3023
      %3025 = vmatmul.bf16.gmra.mxu0 %v2421
      %v3026 = vpop.f32.mrf.mxu0
      %v3027 = vadd.f32 %v2858, %v3026
      %v3028 = vpop.f32.mrf.mxu0
      %v3029 = vadd.f32 %v2860, %v3028
      %3030 = vmatmul.bf16.gmra.mxu0 %v2429
      %v3031 = vpop.f32.mrf.mxu0
      %v3032 = vadd.f32 %v2863, %v3031
      %v3033 = vpop.f32.mrf.mxu0
      %v3034 = vadd.f32 %v2865, %v3033
      %3035 = vdwg.mxu0
      %3036 = vmatpush.bf16.msra.mxu0 %v2673
      %3037 = vmatpush.bf16.msra.mxu0 %v2672
      %3038 = vmatpush.bf16.msra.mxu0 %v2671
      %3039 = vmatpush.bf16.msra.mxu0 %v2670
      %3040 = vmatpush.bf16.msra.mxu0 %v2669
      %3041 = vmatpush.bf16.msra.mxu0 %v2668
      %3042 = vmatpush.bf16.msra.mxu0 %v2667
      %3043 = vmatpush.bf16.msra.mxu0 %v2666
      %3044 = vmatmul.bf16.gmra.mxu0 %v1414
      %v3045 = vpop.f32.mrf.mxu0
      %v3046 = vadd.f32 %v2877, %v3045
      %v3047 = vpop.f32.mrf.mxu0
      %v3048 = vadd.f32 %v2879, %v3047
      %3049 = vmatmul.bf16.gmra.mxu0 %v1416
      %v3050 = vpop.f32.mrf.mxu0
      %v3051 = vadd.f32 %v2882, %v3050
      %v3052 = vpop.f32.mrf.mxu0
      %v3053 = vadd.f32 %v2884, %v3052
      %3054 = vmatmul.bf16.gmra.mxu0 %v1419
      %v3055 = vpop.f32.mrf.mxu0
      %v3056 = vadd.f32 %v2887, %v3055
      %v3057 = vpop.f32.mrf.mxu0
      %v3058 = vadd.f32 %v2889, %v3057
      %3059 = vmatmul.bf16.gmra.mxu0 %v1421
      %v3060 = vpop.f32.mrf.mxu0
      %v3061 = vadd.f32 %v2892, %v3060
      %v3062 = vpop.f32.mrf.mxu0
      %v3063 = vadd.f32 %v2894, %v3062
      %3064 = vmatmul.bf16.gmra.mxu0 %v1424
      %v3065 = vpop.f32.mrf.mxu0
      %v3066 = vadd.f32 %v2897, %v3065
      %v3067 = vpop.f32.mrf.mxu0
      %v3068 = vadd.f32 %v2899, %v3067
      %3069 = vmatmul.bf16.gmra.mxu0 %v1426
      %v3070 = vpop.f32.mrf.mxu0
      %v3071 = vadd.f32 %v2902, %v3070
      %v3072 = vpop.f32.mrf.mxu0
      %v3073 = vadd.f32 %v2904, %v3072
      %3074 = vmatmul.bf16.gmra.mxu0 %v1429
      %v3075 = vpop.f32.mrf.mxu0
      %v3076 = vadd.f32 %v2907, %v3075
      %v3077 = vpop.f32.mrf.mxu0
      %v3078 = vadd.f32 %v2909, %v3077
      %3079 = vmatmul.bf16.gmra.mxu0 %v1431
      %v3080 = vpop.f32.mrf.mxu0
      %v3081 = vadd.f32 %v2912, %v3080
      %v3082 = vpop.f32.mrf.mxu0
      %v3083 = vadd.f32 %v2914, %v3082
      %3084 = vmatmul.bf16.gmra.mxu0 %v1434
      %v3085 = vpop.f32.mrf.mxu0
      %v3086 = vadd.f32 %v2917, %v3085
      %v3087 = vpop.f32.mrf.mxu0
      %v3088 = vadd.f32 %v2919, %v3087
      %3089 = vmatmul.bf16.gmra.mxu0 %v1436
      %v3090 = vpop.f32.mrf.mxu0
      %v3091 = vadd.f32 %v2922, %v3090
      %v3092 = vpop.f32.mrf.mxu0
      %v3093 = vadd.f32 %v2924, %v3092
      %3094 = vmatmul.bf16.gmra.mxu0 %v1439
      %v3095 = vpop.f32.mrf.mxu0
      %v3096 = vadd.f32 %v2927, %v3095
      %v3097 = vpop.f32.mrf.mxu0
      %v3098 = vadd.f32 %v2929, %v3097
      %3099 = vmatmul.bf16.gmra.mxu0 %v1441
      %v3100 = vpop.f32.mrf.mxu0
      %v3101 = vadd.f32 %v2932, %v3100
      %v3102 = vpop.f32.mrf.mxu0
      %v3103 = vadd.f32 %v2934, %v3102
      %3104 = vmatmul.bf16.gmra.mxu0 %v1444
      %v3105 = vpop.f32.mrf.mxu0
      %v3106 = vadd.f32 %v2937, %v3105
      %v3107 = vpop.f32.mrf.mxu0
      %v3108 = vadd.f32 %v2939, %v3107
      %3109 = vmatmul.bf16.gmra.mxu0 %v1446
      %v3110 = vpop.f32.mrf.mxu0
      %v3111 = vadd.f32 %v2942, %v3110
      %v3112 = vpop.f32.mrf.mxu0
      %v3113 = vadd.f32 %v2944, %v3112
      %3114 = vmatmul.bf16.gmra.mxu0 %v1449
      %v3115 = vpop.f32.mrf.mxu0
      %v3116 = vadd.f32 %v2947, %v3115
      %v3117 = vpop.f32.mrf.mxu0
      %v3118 = vadd.f32 %v2949, %v3117
      %3119 = vmatmul.bf16.gmra.mxu0 %v1451
      %v3120 = vpop.f32.mrf.mxu0
      %v3121 = vadd.f32 %v2952, %v3120
      %v3122 = vpop.f32.mrf.mxu0
      %v3123 = vadd.f32 %v2954, %v3122
      %3124 = vmatmul.bf16.gmra.mxu0 %v1454
      %v3125 = vpop.f32.mrf.mxu0
      %v3126 = vadd.f32 %v2957, %v3125
      %v3127 = vpop.f32.mrf.mxu0
      %v3128 = vadd.f32 %v2959, %v3127
      %3129 = vmatmul.bf16.gmra.mxu0 %v1456
      %v3130 = vpop.f32.mrf.mxu0
      %v3131 = vadd.f32 %v2962, %v3130
      %v3132 = vpop.f32.mrf.mxu0
      %v3133 = vadd.f32 %v2964, %v3132
      %3134 = vmatmul.bf16.gmra.mxu0 %v1459
      %v3135 = vpop.f32.mrf.mxu0
      %v3136 = vadd.f32 %v2967, %v3135
      %v3137 = vpop.f32.mrf.mxu0
      %v3138 = vadd.f32 %v2969, %v3137
      %3139 = vmatmul.bf16.gmra.mxu0 %v1461
      %v3140 = vpop.f32.mrf.mxu0
      %v3141 = vadd.f32 %v2972, %v3140
      %v3142 = vpop.f32.mrf.mxu0
      %v3143 = vadd.f32 %v2974, %v3142
      %3144 = vmatmul.bf16.gmra.mxu0 %v1464
      %v3145 = vpop.f32.mrf.mxu0
      %v3146 = vadd.f32 %v2977, %v3145
      %v3147 = vpop.f32.mrf.mxu0
      %v3148 = vadd.f32 %v2979, %v3147
      %3149 = vmatmul.bf16.gmra.mxu0 %v1466
      %v3150 = vpop.f32.mrf.mxu0
      %v3151 = vadd.f32 %v2982, %v3150
      %v3152 = vpop.f32.mrf.mxu0
      %v3153 = vadd.f32 %v2984, %v3152
      %3154 = vmatmul.bf16.gmra.mxu0 %v1469
      %v3155 = vpop.f32.mrf.mxu0
      %v3156 = vadd.f32 %v2987, %v3155
      %v3157 = vpop.f32.mrf.mxu0
      %v3158 = vadd.f32 %v2989, %v3157
      %3159 = vmatmul.bf16.gmra.mxu0 %v1471
      %v3160 = vpop.f32.mrf.mxu0
      %v3161 = vadd.f32 %v2992, %v3160
      %v3162 = vpop.f32.mrf.mxu0
      %v3163 = vadd.f32 %v2994, %v3162
      %3164 = vmatmul.bf16.gmra.mxu0 %v1474
      %v3165 = vpop.f32.mrf.mxu0
      %v3166 = vadd.f32 %v2997, %v3165
      %v3167 = vpop.f32.mrf.mxu0
      %v3168 = vadd.f32 %v2999, %v3167
      %3169 = vmatmul.bf16.gmra.mxu0 %v1476
      %v3170 = vpop.f32.mrf.mxu0
      %v3171 = vadd.f32 %v3002, %v3170
      %v3172 = vpop.f32.mrf.mxu0
      %v3173 = vadd.f32 %v3004, %v3172
      %3174 = vmatmul.bf16.gmra.mxu0 %v1479
      %v3175 = vpop.f32.mrf.mxu0
      %v3176 = vadd.f32 %v3007, %v3175
      %v3177 = vpop.f32.mrf.mxu0
      %v3178 = vadd.f32 %v3009, %v3177
      %3179 = vmatmul.bf16.gmra.mxu0 %v1481
      %v3180 = vpop.f32.mrf.mxu0
      %v3181 = vadd.f32 %v3012, %v3180
      %v3182 = vpop.f32.mrf.mxu0
      %v3183 = vadd.f32 %v3014, %v3182
      %3184 = vmatmul.bf16.gmra.mxu0 %v1484
      %v3185 = vpop.f32.mrf.mxu0
      %v3186 = vadd.f32 %v3017, %v3185
      %v3187 = vpop.f32.mrf.mxu0
      %v3188 = vadd.f32 %v3019, %v3187
      %3189 = vmatmul.bf16.gmra.mxu0 %v1486
      %v3190 = vpop.f32.mrf.mxu0
      %v3191 = vadd.f32 %v3022, %v3190
      %v3192 = vpop.f32.mrf.mxu0
      %v3193 = vadd.f32 %v3024, %v3192
      %3194 = vmatmul.bf16.gmra.mxu0 %v2436
      %v3195 = vpop.f32.mrf.mxu0
      %v3196 = vadd.f32 %v3027, %v3195
      %v3197 = vpop.f32.mrf.mxu0
      %v3198 = vadd.f32 %v3029, %v3197
      %3199 = vmatmul.bf16.gmra.mxu0 %v2438
      %v3200 = vpop.f32.mrf.mxu0
      %v3201 = vadd.f32 %v3032, %v3200
      %v3202 = vpop.f32.mrf.mxu0
      %v3203 = vadd.f32 %v3034, %v3202
      %3204 = vdwg.mxu0
      %v3205 = vadd.f32 %v2441, %v3046
      %v3206 = vadd.f32 %v2442, %v3048
      %v3207 = vadd.f32 %v2443, %v3051
      %v3208 = vadd.f32 %v2444, %v3053
      %v3209 = vadd.f32 %v2445, %v3056
      %v3210 = vadd.f32 %v2446, %v3058
      %v3211 = vadd.f32 %v2447, %v3061
      %v3212 = vadd.f32 %v2448, %v3063
      %v3213 = vadd.f32 %v2449, %v3066
      %v3214 = vadd.f32 %v2450, %v3068
      %v3215 = vadd.f32 %v2451, %v3071
      %v3216 = vadd.f32 %v2452, %v3073
      %v3217 = vadd.f32 %v2453, %v3076
      %v3218 = vadd.f32 %v2454, %v3078
      %v3219 = vadd.f32 %v2455, %v3081
      %v3220 = vadd.f32 %v2456, %v3083
      %v3221 = vadd.f32 %v2457, %v3086
      %v3222 = vadd.f32 %v2458, %v3088
      %v3223 = vadd.f32 %v2459, %v3091
      %v3224 = vadd.f32 %v2460, %v3093
      %v3225 = vadd.f32 %v2461, %v3096
      %v3226 = vadd.f32 %v2462, %v3098
      %v3227 = vadd.f32 %v2463, %v3101
      %v3228 = vadd.f32 %v2464, %v3103
      %v3229 = vadd.f32 %v2465, %v3106
      %v3230 = vadd.f32 %v2466, %v3108
      %v3231 = vadd.f32 %v2467, %v3111
      %v3232 = vadd.f32 %v2468, %v3113
      %v3233 = vadd.f32 %v2469, %v3116
      %v3234 = vadd.f32 %v2470, %v3118
      %v3235 = vadd.f32 %v2471, %v3121
      %v3236 = vadd.f32 %v2472, %v3123
      %v3237 = vadd.f32 %v2473, %v3126
      %v3238 = vadd.f32 %v2474, %v3128
      %v3239 = vadd.f32 %v2475, %v3131
      %v3240 = vadd.f32 %v2476, %v3133
      %v3241 = vadd.f32 %v2477, %v3136
      %v3242 = vadd.f32 %v2478, %v3138
      %v3243 = vadd.f32 %v2479, %v3141
      %v3244 = vadd.f32 %v2480, %v3143
      %v3245 = vadd.f32 %v2481, %v3146
      %v3246 = vadd.f32 %v2482, %v3148
      %v3247 = vadd.f32 %v2483, %v3151
      %v3248 = vadd.f32 %v2484, %v3153
      %v3249 = vadd.f32 %v2485, %v3156
      %v3250 = vadd.f32 %v2486, %v3158
      %v3251 = vadd.f32 %v2487, %v3161
      %v3252 = vadd.f32 %v2488, %v3163
      %v3253 = vadd.f32 %v2489, %v3166
      %v3254 = vadd.f32 %v2490, %v3168
      %v3255 = vadd.f32 %v2491, %v3171
      %v3256 = vadd.f32 %v2492, %v3173
      %v3257 = vadd.f32 %v2493, %v3176
      %v3258 = vadd.f32 %v2494, %v3178
      %v3259 = vadd.f32 %v2495, %v3181
      %v3260 = vadd.f32 %v2496, %v3183
      %v3261 = vadd.f32 %v2497, %v3186
      %v3262 = vadd.f32 %v2498, %v3188
      %v3263 = vadd.f32 %v2499, %v3191
      %v3264 = vadd.f32 %v2500, %v3193
      %v3265 = vadd.f32 %v2501, %v3196
      %v3266 = vadd.f32 %v2502, %v3198
      %v3267 = vadd.f32 %v2503, %v3201
      %v3268 = vadd.f32 %v2504, %v3203
      %3269 = vst [vmem:[#allocation2] sm:$0xff] %v3205
      %3270 = vst [vmem:[#allocation2 + $0x8] sm:$0xff] %v3206
      %3271 = vst [vmem:[#allocation2 + $0x10] sm:$0xff] %v3207
      %3272 = vst [vmem:[#allocation2 + $0x18] sm:$0xff] %v3208
      %3273 = vst [vmem:[#allocation2 + $0x20] sm:$0xff] %v3209
      %3274 = vst [vmem:[#allocation2 + $0x28] sm:$0xff] %v3210
      %3275 = vst [vmem:[#allocation2 + $0x30] sm:$0xff] %v3211
      %3276 = vst [vmem:[#allocation2 + $0x38] sm:$0xff] %v3212
      %3277 = vst [vmem:[#allocation2 + $0x40] sm:$0xff] %v3213
      %3278 = vst [vmem:[#allocation2 + $0x48] sm:$0xff] %v3214
      %3279 = vst [vmem:[#allocation2 + $0x50] sm:$0xff] %v3215
      %3280 = vst [vmem:[#allocation2 + $0x58] sm:$0xff] %v3216
      %3281 = vst [vmem:[#allocation2 + $0x60] sm:$0xff] %v3217
      %3282 = vst [vmem:[#allocation2 + $0x68] sm:$0xff] %v3218
      %3283 = vst [vmem:[#allocation2 + $0x70] sm:$0xff] %v3219
      %3284 = vst [vmem:[#allocation2 + $0x78] sm:$0xff] %v3220
      %3285 = vst [vmem:[#allocation2 + $0x80] sm:$0xff] %v3221
      %3286 = vst [vmem:[#allocation2 + $0x88] sm:$0xff] %v3222
      %3287 = vst [vmem:[#allocation2 + $0x90] sm:$0xff] %v3223
      %3288 = vst [vmem:[#allocation2 + $0x98] sm:$0xff] %v3224
      %3289 = vst [vmem:[#allocation2 + $0xa0] sm:$0xff] %v3225
      %3290 = vst [vmem:[#allocation2 + $0xa8] sm:$0xff] %v3226
      %3291 = vst [vmem:[#allocation2 + $0xb0] sm:$0xff] %v3227
      %3292 = vst [vmem:[#allocation2 + $0xb8] sm:$0xff] %v3228
      %3293 = vst [vmem:[#allocation2 + $0xc0] sm:$0xff] %v3229
      %3294 = vst [vmem:[#allocation2 + $0xc8] sm:$0xff] %v3230
      %3295 = vst [vmem:[#allocation2 + $0xd0] sm:$0xff] %v3231
      %3296 = vst [vmem:[#allocation2 + $0xd8] sm:$0xff] %v3232
      %3297 = vst [vmem:[#allocation2 + $0xe0] sm:$0xff] %v3233
      %3298 = vst [vmem:[#allocation2 + $0xe8] sm:$0xff] %v3234
      %3299 = vst [vmem:[#allocation2 + $0xf0] sm:$0xff] %v3235
      %3300 = vst [vmem:[#allocation2 + $0xf8] sm:$0xff] %v3236
      %3301 = vst [vmem:[#allocation2 + $0x100] sm:$0xff] %v3237
      %3302 = vst [vmem:[#allocation2 + $0x108] sm:$0xff] %v3238
      %3303 = vst [vmem:[#allocation2 + $0x110] sm:$0xff] %v3239
      %3304 = vst [vmem:[#allocation2 + $0x118] sm:$0xff] %v3240
      %3305 = vst [vmem:[#allocation2 + $0x120] sm:$0xff] %v3241
      %3306 = vst [vmem:[#allocation2 + $0x128] sm:$0xff] %v3242
      %3307 = vst [vmem:[#allocation2 + $0x130] sm:$0xff] %v3243
      %3308 = vst [vmem:[#allocation2 + $0x138] sm:$0xff] %v3244
      %3309 = vst [vmem:[#allocation2 + $0x140] sm:$0xff] %v3245
      %3310 = vst [vmem:[#allocation2 + $0x148] sm:$0xff] %v3246
      %3311 = vst [vmem:[#allocation2 + $0x150] sm:$0xff] %v3247
      %3312 = vst [vmem:[#allocation2 + $0x158] sm:$0xff] %v3248
      %3313 = vst [vmem:[#allocation2 + $0x160] sm:$0xff] %v3249
      %3314 = vst [vmem:[#allocation2 + $0x168] sm:$0xff] %v3250
      %3315 = vst [vmem:[#allocation2 + $0x170] sm:$0xff] %v3251
      %3316 = vst [vmem:[#allocation2 + $0x178] sm:$0xff] %v3252
      %3317 = vst [vmem:[#allocation2 + $0x180] sm:$0xff] %v3253
      %3318 = vst [vmem:[#allocation2 + $0x188] sm:$0xff] %v3254
      %3319 = vst [vmem:[#allocation2 + $0x190] sm:$0xff] %v3255
      %3320 = vst [vmem:[#allocation2 + $0x198] sm:$0xff] %v3256
      %3321 = vst [vmem:[#allocation2 + $0x1a0] sm:$0xff] %v3257
      %3322 = vst [vmem:[#allocation2 + $0x1a8] sm:$0xff] %v3258
      %3323 = vst [vmem:[#allocation2 + $0x1b0] sm:$0xff] %v3259
      %3324 = vst [vmem:[#allocation2 + $0x1b8] sm:$0xff] %v3260
      %3325 = vst [vmem:[#allocation2 + $0x1c0] sm:$0xff] %v3261
      %3326 = vst [vmem:[#allocation2 + $0x1c8] sm:$0xff] %v3262
      %3327 = vst [vmem:[#allocation2 + $0x1d0] sm:$0xff] %v3263
      %3328 = vst [vmem:[#allocation2 + $0x1d8] sm:$0xff] %v3264
      %3329 = vst [vmem:[#allocation2 + $0x1e0] sm:$0xff] %v3265
      %3330 = vst [vmem:[#allocation2 + $0x1e8] sm:$0xff] %v3266
      %3331 = vst [vmem:[#allocation2 + $0x1f0] sm:$0xff] %v3267
      %3332 = vst [vmem:[#allocation2 + $0x1f8] sm:$0xff] %v3268
      %v3334 = vshrl.u32 %v934, 16
      %v3336 = vshll.u32 %v934, 16
      %v3338 = vrot.slane %v3336, 1
      %v3339 = vor.u32 %v3334, %v3338
      %v3341 = vshll.u32 %v860, 16
      %v3343 = vrot.slane %v3341, 1
      %v3344 = vsel %vm1021, %v3339, %v3343
      %v3345 = vshrl.u32 %v860, 16
      %v3347 = vor.u32 %v3345, %v3343
      %v3349 = vshll.u32 %v952, 16
      %v3351 = vrot.slane %v3349, 1
      %v3352 = vsel %vm1021, %v3347, %v3351
      %v3357 = vrot.slane %v934, 1
      %v3358 = vrot.slane %v860, 1
      %v3359 = vsel %vm1406, %v3357, %v3358
      %v3360 = vrot.slane %v952, 1
      %v3361 = vsel %vm1406, %v3358, %v3360
      %v3364 = vld [vmem:[#allocation2] sm:$0xff]
      %v3365 = vld [vmem:[#allocation2 + $0x8] sm:$0xff]
      %v3366 = vld [vmem:[#allocation2 + $0x10] sm:$0xff]
      %v3367 = vld [vmem:[#allocation2 + $0x18] sm:$0xff]
      %v3368 = vld [vmem:[#allocation2 + $0x20] sm:$0xff]
      %v3369 = vld [vmem:[#allocation2 + $0x28] sm:$0xff]
      %v3370 = vld [vmem:[#allocation2 + $0x30] sm:$0xff]
      %v3371 = vld [vmem:[#allocation2 + $0x38] sm:$0xff]
      %v3372 = vld [vmem:[#allocation2 + $0x40] sm:$0xff]
      %v3373 = vld [vmem:[#allocation2 + $0x48] sm:$0xff]
      %v3374 = vld [vmem:[#allocation2 + $0x50] sm:$0xff]
      %v3375 = vld [vmem:[#allocation2 + $0x58] sm:$0xff]
      %v3376 = vld [vmem:[#allocation2 + $0x60] sm:$0xff]
      %v3377 = vld [vmem:[#allocation2 + $0x68] sm:$0xff]
      %v3378 = vld [vmem:[#allocation2 + $0x70] sm:$0xff]
      %v3379 = vld [vmem:[#allocation2 + $0x78] sm:$0xff]
      %v3380 = vld [vmem:[#allocation2 + $0x80] sm:$0xff]
      %v3381 = vld [vmem:[#allocation2 + $0x88] sm:$0xff]
      %v3382 = vld [vmem:[#allocation2 + $0x90] sm:$0xff]
      %v3383 = vld [vmem:[#allocation2 + $0x98] sm:$0xff]
      %v3384 = vld [vmem:[#allocation2 + $0xa0] sm:$0xff]
      %v3385 = vld [vmem:[#allocation2 + $0xa8] sm:$0xff]
      %v3386 = vld [vmem:[#allocation2 + $0xb0] sm:$0xff]
      %v3387 = vld [vmem:[#allocation2 + $0xb8] sm:$0xff]
      %v3388 = vld [vmem:[#allocation2 + $0xc0] sm:$0xff]
      %v3389 = vld [vmem:[#allocation2 + $0xc8] sm:$0xff]
      %v3390 = vld [vmem:[#allocation2 + $0xd0] sm:$0xff]
      %v3391 = vld [vmem:[#allocation2 + $0xd8] sm:$0xff]
      %v3392 = vld [vmem:[#allocation2 + $0xe0] sm:$0xff]
      %v3393 = vld [vmem:[#allocation2 + $0xe8] sm:$0xff]
      %v3394 = vld [vmem:[#allocation2 + $0xf0] sm:$0xff]
      %v3395 = vld [vmem:[#allocation2 + $0xf8] sm:$0xff]
      %v3396 = vld [vmem:[#allocation2 + $0x100] sm:$0xff]
      %v3397 = vld [vmem:[#allocation2 + $0x108] sm:$0xff]
      %v3398 = vld [vmem:[#allocation2 + $0x110] sm:$0xff]
      %v3399 = vld [vmem:[#allocation2 + $0x118] sm:$0xff]
      %v3400 = vld [vmem:[#allocation2 + $0x120] sm:$0xff]
      %v3401 = vld [vmem:[#allocation2 + $0x128] sm:$0xff]
      %v3402 = vld [vmem:[#allocation2 + $0x130] sm:$0xff]
      %v3403 = vld [vmem:[#allocation2 + $0x138] sm:$0xff]
      %v3404 = vld [vmem:[#allocation2 + $0x140] sm:$0xff]
      %v3405 = vld [vmem:[#allocation2 + $0x148] sm:$0xff]
      %v3406 = vld [vmem:[#allocation2 + $0x150] sm:$0xff]
      %v3407 = vld [vmem:[#allocation2 + $0x158] sm:$0xff]
      %v3408 = vld [vmem:[#allocation2 + $0x160] sm:$0xff]
      %v3409 = vld [vmem:[#allocation2 + $0x168] sm:$0xff]
      %v3410 = vld [vmem:[#allocation2 + $0x170] sm:$0xff]
      %v3411 = vld [vmem:[#allocation2 + $0x178] sm:$0xff]
      %v3412 = vld [vmem:[#allocation2 + $0x180] sm:$0xff]
      %v3413 = vld [vmem:[#allocation2 + $0x188] sm:$0xff]
      %v3414 = vld [vmem:[#allocation2 + $0x190] sm:$0xff]
      %v3415 = vld [vmem:[#allocation2 + $0x198] sm:$0xff]
      %v3416 = vld [vmem:[#allocation2 + $0x1a0] sm:$0xff]
      %v3417 = vld [vmem:[#allocation2 + $0x1a8] sm:$0xff]
      %v3418 = vld [vmem:[#allocation2 + $0x1b0] sm:$0xff]
      %v3419 = vld [vmem:[#allocation2 + $0x1b8] sm:$0xff]
      %v3420 = vld [vmem:[#allocation2 + $0x1c0] sm:$0xff]
      %v3421 = vld [vmem:[#allocation2 + $0x1c8] sm:$0xff]
      %v3422 = vld [vmem:[#allocation2 + $0x1d0] sm:$0xff]
      %v3423 = vld [vmem:[#allocation2 + $0x1d8] sm:$0xff]
      %v3424 = vld [vmem:[#allocation2 + $0x1e0] sm:$0xff]
      %v3425 = vld [vmem:[#allocation2 + $0x1e8] sm:$0xff]
      %v3426 = vld [vmem:[#allocation2 + $0x1f0] sm:$0xff]
      %v3427 = vld [vmem:[#allocation2 + $0x1f8] sm:$0xff]
      %s3428 = scalar_lea.vmem %s3, 384
      %v3429 = vld [vmem:[%s3428] sm:$0xf]
      %v3430 = vld [vmem:[%s3428 + $0x4] sm:$0xf]
      %v3431 = vld [vmem:[%s3428 + $0x8] sm:$0xf]
      %v3432 = vld [vmem:[%s3428 + $0xc] sm:$0xf]
      %v3433 = vld [vmem:[%s3428 + $0x10] sm:$0xf]
      %v3434 = vld [vmem:[%s3428 + $0x14] sm:$0xf]
      %v3435 = vld [vmem:[%s3428 + $0x18] sm:$0xf]
      %v3436 = vld [vmem:[%s3428 + $0x1c] sm:$0xf]
      %v3437 = vld [vmem:[%s3428 + $0x20] sm:$0xf]
      %v3438 = vld [vmem:[%s3428 + $0x24] sm:$0xf]
      %v3439 = vld [vmem:[%s3428 + $0x28] sm:$0xf]
      %v3440 = vld [vmem:[%s3428 + $0x2c] sm:$0xf]
      %v3441 = vld [vmem:[%s3428 + $0x30] sm:$0xf]
      %v3442 = vld [vmem:[%s3428 + $0x34] sm:$0xf]
      %v3443 = vld [vmem:[%s3428 + $0x38] sm:$0xf]
      %v3444 = vld [vmem:[%s3428 + $0x3c] sm:$0xf]
      %v3445 = vld [vmem:[%s3428 + $0x40] sm:$0xf]
      %v3446 = vld [vmem:[%s3428 + $0x44] sm:$0xf]
      %v3447 = vld [vmem:[%s3428 + $0x48] sm:$0xf]
      %v3448 = vld [vmem:[%s3428 + $0x4c] sm:$0xf]
      %v3449 = vld [vmem:[%s3428 + $0x50] sm:$0xf]
      %v3450 = vld [vmem:[%s3428 + $0x54] sm:$0xf]
      %v3451 = vld [vmem:[%s3428 + $0x58] sm:$0xf]
      %v3452 = vld [vmem:[%s3428 + $0x5c] sm:$0xf]
      %v3453 = vld [vmem:[%s3428 + $0x60] sm:$0xf]
      %v3454 = vld [vmem:[%s3428 + $0x64] sm:$0xf]
      %v3455 = vld [vmem:[%s3428 + $0x68] sm:$0xf]
      %v3456 = vld [vmem:[%s3428 + $0x6c] sm:$0xf]
      %v3457 = vld [vmem:[%s3428 + $0x70] sm:$0xf]
      %v3458 = vld [vmem:[%s3428 + $0x74] sm:$0xf]
      %v3459 = vld [vmem:[%s3428 + $0x78] sm:$0xf]
      %v3460 = vld [vmem:[%s3428 + $0x7c] sm:$0xf]
      %v3461 = vld [vmem:[%s3428 + $0x80] sm:$0xf]
      %v3462 = vld [vmem:[%s3428 + $0x84] sm:$0xf]
      %v3463 = vld [vmem:[%s3428 + $0x88] sm:$0xf]
      %v3464 = vld [vmem:[%s3428 + $0x8c] sm:$0xf]
      %v3465 = vld [vmem:[%s3428 + $0x90] sm:$0xf]
      %v3466 = vld [vmem:[%s3428 + $0x94] sm:$0xf]
      %v3467 = vld [vmem:[%s3428 + $0x98] sm:$0xf]
      %v3468 = vld [vmem:[%s3428 + $0x9c] sm:$0xf]
      %v3469 = vld [vmem:[%s3428 + $0xa0] sm:$0xf]
      %v3470 = vld [vmem:[%s3428 + $0xa4] sm:$0xf]
      %v3471 = vld [vmem:[%s3428 + $0xa8] sm:$0xf]
      %v3472 = vld [vmem:[%s3428 + $0xac] sm:$0xf]
      %v3473 = vld [vmem:[%s3428 + $0xb0] sm:$0xf]
      %v3474 = vld [vmem:[%s3428 + $0xb4] sm:$0xf]
      %v3475 = vld [vmem:[%s3428 + $0xb8] sm:$0xf]
      %v3476 = vld [vmem:[%s3428 + $0xbc] sm:$0xf]
      %v3525 = vunpack.c.l.b16 %v3429
      %v3526 = vunpack.c.l.b16 %v3430
      %v3527 = vunpack.c.l.b16 %v3431
      %v3528 = vunpack.c.l.b16 %v3432
      %v3529 = vunpack.c.l.b16 %v3433
      %v3530 = vunpack.c.l.b16 %v3434
      %v3531 = vunpack.c.l.b16 %v3435
      %v3532 = vunpack.c.l.b16 %v3436
      %v3533 = vunpack.c.l.b16 %v3437
      %v3534 = vunpack.c.l.b16 %v3438
      %v3535 = vunpack.c.l.b16 %v3439
      %v3536 = vunpack.c.l.b16 %v3440
      %v3537 = vunpack.c.l.b16 %v3441
      %v3538 = vunpack.c.l.b16 %v3442
      %v3539 = vunpack.c.l.b16 %v3443
      %v3540 = vunpack.c.l.b16 %v3444
      %v3541 = vunpack.c.l.b16 %v3445
      %v3542 = vunpack.c.l.b16 %v3446
      %v3543 = vunpack.c.l.b16 %v3447
      %v3544 = vunpack.c.l.b16 %v3448
      %v3545 = vunpack.c.l.b16 %v3449
      %v3546 = vunpack.c.l.b16 %v3450
      %v3547 = vunpack.c.l.b16 %v3451
      %v3548 = vunpack.c.l.b16 %v3452
      %v3549 = vunpack.c.l.b16 %v3453
      %v3550 = vunpack.c.l.b16 %v3454
      %v3551 = vunpack.c.l.b16 %v3455
      %v3552 = vunpack.c.l.b16 %v3456
      %v3553 = vunpack.c.l.b16 %v3457
      %v3554 = vunpack.c.l.b16 %v3458
      %v3555 = vunpack.c.l.b16 %v3459
      %v3556 = vunpack.c.l.b16 %v3460
      %v3557 = vunpack.c.l.b16 %v3461
      %v3558 = vunpack.c.l.b16 %v3462
      %v3559 = vunpack.c.l.b16 %v3463
      %v3560 = vunpack.c.l.b16 %v3464
      %v3561 = vunpack.c.l.b16 %v3465
      %v3562 = vunpack.c.l.b16 %v3466
      %v3563 = vunpack.c.l.b16 %v3467
      %v3564 = vunpack.c.l.b16 %v3468
      %v3565 = vunpack.c.l.b16 %v3469
      %v3566 = vunpack.c.l.b16 %v3470
      %v3567 = vunpack.c.l.b16 %v3471
      %v3568 = vunpack.c.l.b16 %v3472
      %v3569 = vunpack.c.l.b16 %v3473
      %v3570 = vunpack.c.l.b16 %v3474
      %v3571 = vunpack.c.l.b16 %v3475
      %v3572 = vunpack.c.l.b16 %v3476
      %v3573 = vpack.c.b16 %v3526, %v3525
      %v3574 = vpack.c.b16 %v3528, %v3527
      %v3575 = vpack.c.b16 %v3530, %v3529
      %v3576 = vpack.c.b16 %v3532, %v3531
      %v3577 = vpack.c.b16 %v3534, %v3533
      %v3578 = vpack.c.b16 %v3536, %v3535
      %v3579 = vpack.c.b16 %v3538, %v3537
      %v3580 = vpack.c.b16 %v3540, %v3539
      %v3581 = vpack.c.b16 %v3542, %v3541
      %v3582 = vpack.c.b16 %v3544, %v3543
      %v3583 = vpack.c.b16 %v3546, %v3545
      %v3584 = vpack.c.b16 %v3548, %v3547
      %v3585 = vpack.c.b16 %v3550, %v3549
      %v3586 = vpack.c.b16 %v3552, %v3551
      %v3587 = vpack.c.b16 %v3554, %v3553
      %v3588 = vpack.c.b16 %v3556, %v3555
      %v3589 = vpack.c.b16 %v3558, %v3557
      %v3590 = vpack.c.b16 %v3560, %v3559
      %v3591 = vpack.c.b16 %v3562, %v3561
      %v3592 = vpack.c.b16 %v3564, %v3563
      %v3593 = vpack.c.b16 %v3566, %v3565
      %v3594 = vpack.c.b16 %v3568, %v3567
      %v3595 = vpack.c.b16 %v3570, %v3569
      %v3596 = vpack.c.b16 %v3572, %v3571
      %3621 = vmatpush.bf16.msra.mxu0 %v3580
      %3622 = vmatpush.bf16.msra.mxu0 %v3579
      %3623 = vmatpush.bf16.msra.mxu0 %v3578
      %3624 = vmatpush.bf16.msra.mxu0 %v3577
      %3625 = vmatpush.bf16.msra.mxu0 %v3576
      %3626 = vmatpush.bf16.msra.mxu0 %v3575
      %3627 = vmatpush.bf16.msra.mxu0 %v3574
      %3628 = vmatpush.bf16.msra.mxu0 %v3573
      %3629 = vmatmul.bf16.gmra.mxu0 %v919
      %v3630 = vpop.f32.mrf.mxu0
      %v3631 = vadd.f32 0.0, %v3630
      %v3632 = vpop.f32.mrf.mxu0
      %v3633 = vadd.f32 0.0, %v3632
      %3634 = vmatmul.bf16.gmra.mxu0 %v635
      %v3635 = vpop.f32.mrf.mxu0
      %v3636 = vadd.f32 0.0, %v3635
      %v3637 = vpop.f32.mrf.mxu0
      %v3638 = vadd.f32 0.0, %v3637
      %3639 = vmatmul.bf16.gmra.mxu0 %v920
      %v3640 = vpop.f32.mrf.mxu0
      %v3641 = vadd.f32 0.0, %v3640
      %v3642 = vpop.f32.mrf.mxu0
      %v3643 = vadd.f32 0.0, %v3642
      %3644 = vmatmul.bf16.gmra.mxu0 %v650
      %v3645 = vpop.f32.mrf.mxu0
      %v3646 = vadd.f32 0.0, %v3645
      %v3647 = vpop.f32.mrf.mxu0
      %v3648 = vadd.f32 0.0, %v3647
      %3649 = vmatmul.bf16.gmra.mxu0 %v921
      %v3650 = vpop.f32.mrf.mxu0
      %v3651 = vadd.f32 0.0, %v3650
      %v3652 = vpop.f32.mrf.mxu0
      %v3653 = vadd.f32 0.0, %v3652
      %3654 = vmatmul.bf16.gmra.mxu0 %v665
      %v3655 = vpop.f32.mrf.mxu0
      %v3656 = vadd.f32 0.0, %v3655
      %v3657 = vpop.f32.mrf.mxu0
      %v3658 = vadd.f32 0.0, %v3657
      %3659 = vmatmul.bf16.gmra.mxu0 %v922
      %v3660 = vpop.f32.mrf.mxu0
      %v3661 = vadd.f32 0.0, %v3660
      %v3662 = vpop.f32.mrf.mxu0
      %v3663 = vadd.f32 0.0, %v3662
      %3664 = vmatmul.bf16.gmra.mxu0 %v680
      %v3665 = vpop.f32.mrf.mxu0
      %v3666 = vadd.f32 0.0, %v3665
      %v3667 = vpop.f32.mrf.mxu0
      %v3668 = vadd.f32 0.0, %v3667
      %3669 = vmatmul.bf16.gmra.mxu0 %v923
      %v3670 = vpop.f32.mrf.mxu0
      %v3671 = vadd.f32 0.0, %v3670
      %v3672 = vpop.f32.mrf.mxu0
      %v3673 = vadd.f32 0.0, %v3672
      %3674 = vmatmul.bf16.gmra.mxu0 %v695
      %v3675 = vpop.f32.mrf.mxu0
      %v3676 = vadd.f32 0.0, %v3675
      %v3677 = vpop.f32.mrf.mxu0
      %v3678 = vadd.f32 0.0, %v3677
      %3679 = vmatmul.bf16.gmra.mxu0 %v924
      %v3680 = vpop.f32.mrf.mxu0
      %v3681 = vadd.f32 0.0, %v3680
      %v3682 = vpop.f32.mrf.mxu0
      %v3683 = vadd.f32 0.0, %v3682
      %3684 = vmatmul.bf16.gmra.mxu0 %v710
      %v3685 = vpop.f32.mrf.mxu0
      %v3686 = vadd.f32 0.0, %v3685
      %v3687 = vpop.f32.mrf.mxu0
      %v3688 = vadd.f32 0.0, %v3687
      %3689 = vmatmul.bf16.gmra.mxu0 %v925
      %v3690 = vpop.f32.mrf.mxu0
      %v3691 = vadd.f32 0.0, %v3690
      %v3692 = vpop.f32.mrf.mxu0
      %v3693 = vadd.f32 0.0, %v3692
      %3694 = vmatmul.bf16.gmra.mxu0 %v725
      %v3695 = vpop.f32.mrf.mxu0
      %v3696 = vadd.f32 0.0, %v3695
      %v3697 = vpop.f32.mrf.mxu0
      %v3698 = vadd.f32 0.0, %v3697
      %3699 = vmatmul.bf16.gmra.mxu0 %v926
      %v3700 = vpop.f32.mrf.mxu0
      %v3701 = vadd.f32 0.0, %v3700
      %v3702 = vpop.f32.mrf.mxu0
      %v3703 = vadd.f32 0.0, %v3702
      %3704 = vmatmul.bf16.gmra.mxu0 %v740
      %v3705 = vpop.f32.mrf.mxu0
      %v3706 = vadd.f32 0.0, %v3705
      %v3707 = vpop.f32.mrf.mxu0
      %v3708 = vadd.f32 0.0, %v3707
      %3709 = vmatmul.bf16.gmra.mxu0 %v927
      %v3710 = vpop.f32.mrf.mxu0
      %v3711 = vadd.f32 0.0, %v3710
      %v3712 = vpop.f32.mrf.mxu0
      %v3713 = vadd.f32 0.0, %v3712
      %3714 = vmatmul.bf16.gmra.mxu0 %v755
      %v3715 = vpop.f32.mrf.mxu0
      %v3716 = vadd.f32 0.0, %v3715
      %v3717 = vpop.f32.mrf.mxu0
      %v3718 = vadd.f32 0.0, %v3717
      %3719 = vmatmul.bf16.gmra.mxu0 %v928
      %v3720 = vpop.f32.mrf.mxu0
      %v3721 = vadd.f32 0.0, %v3720
      %v3722 = vpop.f32.mrf.mxu0
      %v3723 = vadd.f32 0.0, %v3722
      %3724 = vmatmul.bf16.gmra.mxu0 %v770
      %v3725 = vpop.f32.mrf.mxu0
      %v3726 = vadd.f32 0.0, %v3725
      %v3727 = vpop.f32.mrf.mxu0
      %v3728 = vadd.f32 0.0, %v3727
      %3729 = vmatmul.bf16.gmra.mxu0 %v929
      %v3730 = vpop.f32.mrf.mxu0
      %v3731 = vadd.f32 0.0, %v3730
      %v3732 = vpop.f32.mrf.mxu0
      %v3733 = vadd.f32 0.0, %v3732
      %3734 = vmatmul.bf16.gmra.mxu0 %v785
      %v3735 = vpop.f32.mrf.mxu0
      %v3736 = vadd.f32 0.0, %v3735
      %v3737 = vpop.f32.mrf.mxu0
      %v3738 = vadd.f32 0.0, %v3737
      %3739 = vmatmul.bf16.gmra.mxu0 %v930
      %v3740 = vpop.f32.mrf.mxu0
      %v3741 = vadd.f32 0.0, %v3740
      %v3742 = vpop.f32.mrf.mxu0
      %v3743 = vadd.f32 0.0, %v3742
      %3744 = vmatmul.bf16.gmra.mxu0 %v800
      %v3745 = vpop.f32.mrf.mxu0
      %v3746 = vadd.f32 0.0, %v3745
      %v3747 = vpop.f32.mrf.mxu0
      %v3748 = vadd.f32 0.0, %v3747
      %3749 = vmatmul.bf16.gmra.mxu0 %v931
      %v3750 = vpop.f32.mrf.mxu0
      %v3751 = vadd.f32 0.0, %v3750
      %v3752 = vpop.f32.mrf.mxu0
      %v3753 = vadd.f32 0.0, %v3752
      %3754 = vmatmul.bf16.gmra.mxu0 %v815
      %v3755 = vpop.f32.mrf.mxu0
      %v3756 = vadd.f32 0.0, %v3755
      %v3757 = vpop.f32.mrf.mxu0
      %v3758 = vadd.f32 0.0, %v3757
      %3759 = vmatmul.bf16.gmra.mxu0 %v932
      %v3760 = vpop.f32.mrf.mxu0
      %v3761 = vadd.f32 0.0, %v3760
      %v3762 = vpop.f32.mrf.mxu0
      %v3763 = vadd.f32 0.0, %v3762
      %3764 = vmatmul.bf16.gmra.mxu0 %v830
      %v3765 = vpop.f32.mrf.mxu0
      %v3766 = vadd.f32 0.0, %v3765
      %v3767 = vpop.f32.mrf.mxu0
      %v3768 = vadd.f32 0.0, %v3767
      %3769 = vmatmul.bf16.gmra.mxu0 %v933
      %v3770 = vpop.f32.mrf.mxu0
      %v3771 = vadd.f32 0.0, %v3770
      %v3772 = vpop.f32.mrf.mxu0
      %v3773 = vadd.f32 0.0, %v3772
      %3774 = vmatmul.bf16.gmra.mxu0 %v845
      %v3775 = vpop.f32.mrf.mxu0
      %v3776 = vadd.f32 0.0, %v3775
      %v3777 = vpop.f32.mrf.mxu0
      %v3778 = vadd.f32 0.0, %v3777
      %3779 = vmatmul.bf16.gmra.mxu0 %v934
      %v3780 = vpop.f32.mrf.mxu0
      %v3781 = vadd.f32 0.0, %v3780
      %v3782 = vpop.f32.mrf.mxu0
      %v3783 = vadd.f32 0.0, %v3782
      %3784 = vmatmul.bf16.gmra.mxu0 %v860
      %v3785 = vpop.f32.mrf.mxu0
      %v3786 = vadd.f32 0.0, %v3785
      %v3787 = vpop.f32.mrf.mxu0
      %v3788 = vadd.f32 0.0, %v3787
      %3789 = vdwg.mxu0
      %3790 = vmatpush.bf16.msra.mxu0 %v3588
      %3791 = vmatpush.bf16.msra.mxu0 %v3587
      %3792 = vmatpush.bf16.msra.mxu0 %v3586
      %3793 = vmatpush.bf16.msra.mxu0 %v3585
      %3794 = vmatpush.bf16.msra.mxu0 %v3584
      %3795 = vmatpush.bf16.msra.mxu0 %v3583
      %3796 = vmatpush.bf16.msra.mxu0 %v3582
      %3797 = vmatpush.bf16.msra.mxu0 %v3581
      %3798 = vmatmul.bf16.gmra.mxu0 %v1073
      %v3799 = vpop.f32.mrf.mxu0
      %v3800 = vadd.f32 %v3631, %v3799
      %v3801 = vpop.f32.mrf.mxu0
      %v3802 = vadd.f32 %v3633, %v3801
      %3803 = vmatmul.bf16.gmra.mxu0 %v1081
      %v3804 = vpop.f32.mrf.mxu0
      %v3805 = vadd.f32 %v3636, %v3804
      %v3806 = vpop.f32.mrf.mxu0
      %v3807 = vadd.f32 %v3638, %v3806
      %3808 = vmatmul.bf16.gmra.mxu0 %v1093
      %v3809 = vpop.f32.mrf.mxu0
      %v3810 = vadd.f32 %v3641, %v3809
      %v3811 = vpop.f32.mrf.mxu0
      %v3812 = vadd.f32 %v3643, %v3811
      %3813 = vmatmul.bf16.gmra.mxu0 %v1101
      %v3814 = vpop.f32.mrf.mxu0
      %v3815 = vadd.f32 %v3646, %v3814
      %v3816 = vpop.f32.mrf.mxu0
      %v3817 = vadd.f32 %v3648, %v3816
      %3818 = vmatmul.bf16.gmra.mxu0 %v1113
      %v3819 = vpop.f32.mrf.mxu0
      %v3820 = vadd.f32 %v3651, %v3819
      %v3821 = vpop.f32.mrf.mxu0
      %v3822 = vadd.f32 %v3653, %v3821
      %3823 = vmatmul.bf16.gmra.mxu0 %v1121
      %v3824 = vpop.f32.mrf.mxu0
      %v3825 = vadd.f32 %v3656, %v3824
      %v3826 = vpop.f32.mrf.mxu0
      %v3827 = vadd.f32 %v3658, %v3826
      %3828 = vmatmul.bf16.gmra.mxu0 %v1133
      %v3829 = vpop.f32.mrf.mxu0
      %v3830 = vadd.f32 %v3661, %v3829
      %v3831 = vpop.f32.mrf.mxu0
      %v3832 = vadd.f32 %v3663, %v3831
      %3833 = vmatmul.bf16.gmra.mxu0 %v1141
      %v3834 = vpop.f32.mrf.mxu0
      %v3835 = vadd.f32 %v3666, %v3834
      %v3836 = vpop.f32.mrf.mxu0
      %v3837 = vadd.f32 %v3668, %v3836
      %3838 = vmatmul.bf16.gmra.mxu0 %v1153
      %v3839 = vpop.f32.mrf.mxu0
      %v3840 = vadd.f32 %v3671, %v3839
      %v3841 = vpop.f32.mrf.mxu0
      %v3842 = vadd.f32 %v3673, %v3841
      %3843 = vmatmul.bf16.gmra.mxu0 %v1161
      %v3844 = vpop.f32.mrf.mxu0
      %v3845 = vadd.f32 %v3676, %v3844
      %v3846 = vpop.f32.mrf.mxu0
      %v3847 = vadd.f32 %v3678, %v3846
      %3848 = vmatmul.bf16.gmra.mxu0 %v1173
      %v3849 = vpop.f32.mrf.mxu0
      %v3850 = vadd.f32 %v3681, %v3849
      %v3851 = vpop.f32.mrf.mxu0
      %v3852 = vadd.f32 %v3683, %v3851
      %3853 = vmatmul.bf16.gmra.mxu0 %v1181
      %v3854 = vpop.f32.mrf.mxu0
      %v3855 = vadd.f32 %v3686, %v3854
      %v3856 = vpop.f32.mrf.mxu0
      %v3857 = vadd.f32 %v3688, %v3856
      %3858 = vmatmul.bf16.gmra.mxu0 %v1193
      %v3859 = vpop.f32.mrf.mxu0
      %v3860 = vadd.f32 %v3691, %v3859
      %v3861 = vpop.f32.mrf.mxu0
      %v3862 = vadd.f32 %v3693, %v3861
      %3863 = vmatmul.bf16.gmra.mxu0 %v1201
      %v3864 = vpop.f32.mrf.mxu0
      %v3865 = vadd.f32 %v3696, %v3864
      %v3866 = vpop.f32.mrf.mxu0
      %v3867 = vadd.f32 %v3698, %v3866
      %3868 = vmatmul.bf16.gmra.mxu0 %v1213
      %v3869 = vpop.f32.mrf.mxu0
      %v3870 = vadd.f32 %v3701, %v3869
      %v3871 = vpop.f32.mrf.mxu0
      %v3872 = vadd.f32 %v3703, %v3871
      %3873 = vmatmul.bf16.gmra.mxu0 %v1221
      %v3874 = vpop.f32.mrf.mxu0
      %v3875 = vadd.f32 %v3706, %v3874
      %v3876 = vpop.f32.mrf.mxu0
      %v3877 = vadd.f32 %v3708, %v3876
      %3878 = vmatmul.bf16.gmra.mxu0 %v1233
      %v3879 = vpop.f32.mrf.mxu0
      %v3880 = vadd.f32 %v3711, %v3879
      %v3881 = vpop.f32.mrf.mxu0
      %v3882 = vadd.f32 %v3713, %v3881
      %3883 = vmatmul.bf16.gmra.mxu0 %v1241
      %v3884 = vpop.f32.mrf.mxu0
      %v3885 = vadd.f32 %v3716, %v3884
      %v3886 = vpop.f32.mrf.mxu0
      %v3887 = vadd.f32 %v3718, %v3886
      %3888 = vmatmul.bf16.gmra.mxu0 %v1253
      %v3889 = vpop.f32.mrf.mxu0
      %v3890 = vadd.f32 %v3721, %v3889
      %v3891 = vpop.f32.mrf.mxu0
      %v3892 = vadd.f32 %v3723, %v3891
      %3893 = vmatmul.bf16.gmra.mxu0 %v1261
      %v3894 = vpop.f32.mrf.mxu0
      %v3895 = vadd.f32 %v3726, %v3894
      %v3896 = vpop.f32.mrf.mxu0
      %v3897 = vadd.f32 %v3728, %v3896
      %3898 = vmatmul.bf16.gmra.mxu0 %v1273
      %v3899 = vpop.f32.mrf.mxu0
      %v3900 = vadd.f32 %v3731, %v3899
      %v3901 = vpop.f32.mrf.mxu0
      %v3902 = vadd.f32 %v3733, %v3901
      %3903 = vmatmul.bf16.gmra.mxu0 %v1281
      %v3904 = vpop.f32.mrf.mxu0
      %v3905 = vadd.f32 %v3736, %v3904
      %v3906 = vpop.f32.mrf.mxu0
      %v3907 = vadd.f32 %v3738, %v3906
      %3908 = vmatmul.bf16.gmra.mxu0 %v1293
      %v3909 = vpop.f32.mrf.mxu0
      %v3910 = vadd.f32 %v3741, %v3909
      %v3911 = vpop.f32.mrf.mxu0
      %v3912 = vadd.f32 %v3743, %v3911
      %3913 = vmatmul.bf16.gmra.mxu0 %v1301
      %v3914 = vpop.f32.mrf.mxu0
      %v3915 = vadd.f32 %v3746, %v3914
      %v3916 = vpop.f32.mrf.mxu0
      %v3917 = vadd.f32 %v3748, %v3916
      %3918 = vmatmul.bf16.gmra.mxu0 %v1313
      %v3919 = vpop.f32.mrf.mxu0
      %v3920 = vadd.f32 %v3751, %v3919
      %v3921 = vpop.f32.mrf.mxu0
      %v3922 = vadd.f32 %v3753, %v3921
      %3923 = vmatmul.bf16.gmra.mxu0 %v1321
      %v3924 = vpop.f32.mrf.mxu0
      %v3925 = vadd.f32 %v3756, %v3924
      %v3926 = vpop.f32.mrf.mxu0
      %v3927 = vadd.f32 %v3758, %v3926
      %3928 = vmatmul.bf16.gmra.mxu0 %v1333
      %v3929 = vpop.f32.mrf.mxu0
      %v3930 = vadd.f32 %v3761, %v3929
      %v3931 = vpop.f32.mrf.mxu0
      %v3932 = vadd.f32 %v3763, %v3931
      %3933 = vmatmul.bf16.gmra.mxu0 %v1341
      %v3934 = vpop.f32.mrf.mxu0
      %v3935 = vadd.f32 %v3766, %v3934
      %v3936 = vpop.f32.mrf.mxu0
      %v3937 = vadd.f32 %v3768, %v3936
      %3938 = vmatmul.bf16.gmra.mxu0 %v2421
      %v3939 = vpop.f32.mrf.mxu0
      %v3940 = vadd.f32 %v3771, %v3939
      %v3941 = vpop.f32.mrf.mxu0
      %v3942 = vadd.f32 %v3773, %v3941
      %3943 = vmatmul.bf16.gmra.mxu0 %v2429
      %v3944 = vpop.f32.mrf.mxu0
      %v3945 = vadd.f32 %v3776, %v3944
      %v3946 = vpop.f32.mrf.mxu0
      %v3947 = vadd.f32 %v3778, %v3946
      %3948 = vmatmul.bf16.gmra.mxu0 %v3344
      %v3949 = vpop.f32.mrf.mxu0
      %v3950 = vadd.f32 %v3781, %v3949
      %v3951 = vpop.f32.mrf.mxu0
      %v3952 = vadd.f32 %v3783, %v3951
      %3953 = vmatmul.bf16.gmra.mxu0 %v3352
      %v3954 = vpop.f32.mrf.mxu0
      %v3955 = vadd.f32 %v3786, %v3954
      %v3956 = vpop.f32.mrf.mxu0
      %v3957 = vadd.f32 %v3788, %v3956
      %3958 = vdwg.mxu0
      %3959 = vmatpush.bf16.msra.mxu0 %v3596
      %3960 = vmatpush.bf16.msra.mxu0 %v3595
      %3961 = vmatpush.bf16.msra.mxu0 %v3594
      %3962 = vmatpush.bf16.msra.mxu0 %v3593
      %3963 = vmatpush.bf16.msra.mxu0 %v3592
      %3964 = vmatpush.bf16.msra.mxu0 %v3591
      %3965 = vmatpush.bf16.msra.mxu0 %v3590
      %3966 = vmatpush.bf16.msra.mxu0 %v3589
      %3967 = vmatmul.bf16.gmra.mxu0 %v1419
      %v3968 = vpop.f32.mrf.mxu0
      %v3969 = vadd.f32 %v3800, %v3968
      %v3970 = vpop.f32.mrf.mxu0
      %v3971 = vadd.f32 %v3802, %v3970
      %3972 = vmatmul.bf16.gmra.mxu0 %v1421
      %v3973 = vpop.f32.mrf.mxu0
      %v3974 = vadd.f32 %v3805, %v3973
      %v3975 = vpop.f32.mrf.mxu0
      %v3976 = vadd.f32 %v3807, %v3975
      %3977 = vmatmul.bf16.gmra.mxu0 %v1424
      %v3978 = vpop.f32.mrf.mxu0
      %v3979 = vadd.f32 %v3810, %v3978
      %v3980 = vpop.f32.mrf.mxu0
      %v3981 = vadd.f32 %v3812, %v3980
      %3982 = vmatmul.bf16.gmra.mxu0 %v1426
      %v3983 = vpop.f32.mrf.mxu0
      %v3984 = vadd.f32 %v3815, %v3983
      %v3985 = vpop.f32.mrf.mxu0
      %v3986 = vadd.f32 %v3817, %v3985
      %3987 = vmatmul.bf16.gmra.mxu0 %v1429
      %v3988 = vpop.f32.mrf.mxu0
      %v3989 = vadd.f32 %v3820, %v3988
      %v3990 = vpop.f32.mrf.mxu0
      %v3991 = vadd.f32 %v3822, %v3990
      %3992 = vmatmul.bf16.gmra.mxu0 %v1431
      %v3993 = vpop.f32.mrf.mxu0
      %v3994 = vadd.f32 %v3825, %v3993
      %v3995 = vpop.f32.mrf.mxu0
      %v3996 = vadd.f32 %v3827, %v3995
      %3997 = vmatmul.bf16.gmra.mxu0 %v1434
      %v3998 = vpop.f32.mrf.mxu0
      %v3999 = vadd.f32 %v3830, %v3998
      %v4000 = vpop.f32.mrf.mxu0
      %v4001 = vadd.f32 %v3832, %v4000
      %4002 = vmatmul.bf16.gmra.mxu0 %v1436
      %v4003 = vpop.f32.mrf.mxu0
      %v4004 = vadd.f32 %v3835, %v4003
      %v4005 = vpop.f32.mrf.mxu0
      %v4006 = vadd.f32 %v3837, %v4005
      %4007 = vmatmul.bf16.gmra.mxu0 %v1439
      %v4008 = vpop.f32.mrf.mxu0
      %v4009 = vadd.f32 %v3840, %v4008
      %v4010 = vpop.f32.mrf.mxu0
      %v4011 = vadd.f32 %v3842, %v4010
      %4012 = vmatmul.bf16.gmra.mxu0 %v1441
      %v4013 = vpop.f32.mrf.mxu0
      %v4014 = vadd.f32 %v3845, %v4013
      %v4015 = vpop.f32.mrf.mxu0
      %v4016 = vadd.f32 %v3847, %v4015
      %4017 = vmatmul.bf16.gmra.mxu0 %v1444
      %v4018 = vpop.f32.mrf.mxu0
      %v4019 = vadd.f32 %v3850, %v4018
      %v4020 = vpop.f32.mrf.mxu0
      %v4021 = vadd.f32 %v3852, %v4020
      %4022 = vmatmul.bf16.gmra.mxu0 %v1446
      %v4023 = vpop.f32.mrf.mxu0
      %v4024 = vadd.f32 %v3855, %v4023
      %v4025 = vpop.f32.mrf.mxu0
      %v4026 = vadd.f32 %v3857, %v4025
      %4027 = vmatmul.bf16.gmra.mxu0 %v1449
      %v4028 = vpop.f32.mrf.mxu0
      %v4029 = vadd.f32 %v3860, %v4028
      %v4030 = vpop.f32.mrf.mxu0
      %v4031 = vadd.f32 %v3862, %v4030
      %4032 = vmatmul.bf16.gmra.mxu0 %v1451
      %v4033 = vpop.f32.mrf.mxu0
      %v4034 = vadd.f32 %v3865, %v4033
      %v4035 = vpop.f32.mrf.mxu0
      %v4036 = vadd.f32 %v3867, %v4035
      %4037 = vmatmul.bf16.gmra.mxu0 %v1454
      %v4038 = vpop.f32.mrf.mxu0
      %v4039 = vadd.f32 %v3870, %v4038
      %v4040 = vpop.f32.mrf.mxu0
      %v4041 = vadd.f32 %v3872, %v4040
      %4042 = vmatmul.bf16.gmra.mxu0 %v1456
      %v4043 = vpop.f32.mrf.mxu0
      %v4044 = vadd.f32 %v3875, %v4043
      %v4045 = vpop.f32.mrf.mxu0
      %v4046 = vadd.f32 %v3877, %v4045
      %4047 = vmatmul.bf16.gmra.mxu0 %v1459
      %v4048 = vpop.f32.mrf.mxu0
      %v4049 = vadd.f32 %v3880, %v4048
      %v4050 = vpop.f32.mrf.mxu0
      %v4051 = vadd.f32 %v3882, %v4050
      %4052 = vmatmul.bf16.gmra.mxu0 %v1461
      %v4053 = vpop.f32.mrf.mxu0
      %v4054 = vadd.f32 %v3885, %v4053
      %v4055 = vpop.f32.mrf.mxu0
      %v4056 = vadd.f32 %v3887, %v4055
      %4057 = vmatmul.bf16.gmra.mxu0 %v1464
      %v4058 = vpop.f32.mrf.mxu0
      %v4059 = vadd.f32 %v3890, %v4058
      %v4060 = vpop.f32.mrf.mxu0
      %v4061 = vadd.f32 %v3892, %v4060
      %4062 = vmatmul.bf16.gmra.mxu0 %v1466
      %v4063 = vpop.f32.mrf.mxu0
      %v4064 = vadd.f32 %v3895, %v4063
      %v4065 = vpop.f32.mrf.mxu0
      %v4066 = vadd.f32 %v3897, %v4065
      %4067 = vmatmul.bf16.gmra.mxu0 %v1469
      %v4068 = vpop.f32.mrf.mxu0
      %v4069 = vadd.f32 %v3900, %v4068
      %v4070 = vpop.f32.mrf.mxu0
      %v4071 = vadd.f32 %v3902, %v4070
      %4072 = vmatmul.bf16.gmra.mxu0 %v1471
      %v4073 = vpop.f32.mrf.mxu0
      %v4074 = vadd.f32 %v3905, %v4073
      %v4075 = vpop.f32.mrf.mxu0
      %v4076 = vadd.f32 %v3907, %v4075
      %4077 = vmatmul.bf16.gmra.mxu0 %v1474
      %v4078 = vpop.f32.mrf.mxu0
      %v4079 = vadd.f32 %v3910, %v4078
      %v4080 = vpop.f32.mrf.mxu0
      %v4081 = vadd.f32 %v3912, %v4080
      %4082 = vmatmul.bf16.gmra.mxu0 %v1476
      %v4083 = vpop.f32.mrf.mxu0
      %v4084 = vadd.f32 %v3915, %v4083
      %v4085 = vpop.f32.mrf.mxu0
      %v4086 = vadd.f32 %v3917, %v4085
      %4087 = vmatmul.bf16.gmra.mxu0 %v1479
      %v4088 = vpop.f32.mrf.mxu0
      %v4089 = vadd.f32 %v3920, %v4088
      %v4090 = vpop.f32.mrf.mxu0
      %v4091 = vadd.f32 %v3922, %v4090
      %4092 = vmatmul.bf16.gmra.mxu0 %v1481
      %v4093 = vpop.f32.mrf.mxu0
      %v4094 = vadd.f32 %v3925, %v4093
      %v4095 = vpop.f32.mrf.mxu0
      %v4096 = vadd.f32 %v3927, %v4095
      %4097 = vmatmul.bf16.gmra.mxu0 %v1484
      %v4098 = vpop.f32.mrf.mxu0
      %v4099 = vadd.f32 %v3930, %v4098
      %v4100 = vpop.f32.mrf.mxu0
      %v4101 = vadd.f32 %v3932, %v4100
      %4102 = vmatmul.bf16.gmra.mxu0 %v1486
      %v4103 = vpop.f32.mrf.mxu0
      %v4104 = vadd.f32 %v3935, %v4103
      %v4105 = vpop.f32.mrf.mxu0
      %v4106 = vadd.f32 %v3937, %v4105
      %4107 = vmatmul.bf16.gmra.mxu0 %v2436
      %v4108 = vpop.f32.mrf.mxu0
      %v4109 = vadd.f32 %v3940, %v4108
      %v4110 = vpop.f32.mrf.mxu0
      %v4111 = vadd.f32 %v3942, %v4110
      %4112 = vmatmul.bf16.gmra.mxu0 %v2438
      %v4113 = vpop.f32.mrf.mxu0
      %v4114 = vadd.f32 %v3945, %v4113
      %v4115 = vpop.f32.mrf.mxu0
      %v4116 = vadd.f32 %v3947, %v4115
      %4117 = vmatmul.bf16.gmra.mxu0 %v3359
      %v4118 = vpop.f32.mrf.mxu0
      %v4119 = vadd.f32 %v3950, %v4118
      %v4120 = vpop.f32.mrf.mxu0
      %v4121 = vadd.f32 %v3952, %v4120
      %4122 = vmatmul.bf16.gmra.mxu0 %v3361
      %v4123 = vpop.f32.mrf.mxu0
      %v4124 = vadd.f32 %v3955, %v4123
      %v4125 = vpop.f32.mrf.mxu0
      %v4126 = vadd.f32 %v3957, %v4125
      %4127 = vdwg.mxu0
      %v4128 = vadd.f32 %v3364, %v3969
      %v4129 = vadd.f32 %v3365, %v3971
      %v4130 = vadd.f32 %v3366, %v3974
      %v4131 = vadd.f32 %v3367, %v3976
      %v4132 = vadd.f32 %v3368, %v3979
      %v4133 = vadd.f32 %v3369, %v3981
      %v4134 = vadd.f32 %v3370, %v3984
      %v4135 = vadd.f32 %v3371, %v3986
      %v4136 = vadd.f32 %v3372, %v3989
      %v4137 = vadd.f32 %v3373, %v3991
      %v4138 = vadd.f32 %v3374, %v3994
      %v4139 = vadd.f32 %v3375, %v3996
      %v4140 = vadd.f32 %v3376, %v3999
      %v4141 = vadd.f32 %v3377, %v4001
      %v4142 = vadd.f32 %v3378, %v4004
      %v4143 = vadd.f32 %v3379, %v4006
      %v4144 = vadd.f32 %v3380, %v4009
      %v4145 = vadd.f32 %v3381, %v4011
      %v4146 = vadd.f32 %v3382, %v4014
      %v4147 = vadd.f32 %v3383, %v4016
      %v4148 = vadd.f32 %v3384, %v4019
      %v4149 = vadd.f32 %v3385, %v4021
      %v4150 = vadd.f32 %v3386, %v4024
      %v4151 = vadd.f32 %v3387, %v4026
      %v4152 = vadd.f32 %v3388, %v4029
      %v4153 = vadd.f32 %v3389, %v4031
      %v4154 = vadd.f32 %v3390, %v4034
      %v4155 = vadd.f32 %v3391, %v4036
      %v4156 = vadd.f32 %v3392, %v4039
      %v4157 = vadd.f32 %v3393, %v4041
      %v4158 = vadd.f32 %v3394, %v4044
      %v4159 = vadd.f32 %v3395, %v4046
      %v4160 = vadd.f32 %v3396, %v4049
      %v4161 = vadd.f32 %v3397, %v4051
      %v4162 = vadd.f32 %v3398, %v4054
      %v4163 = vadd.f32 %v3399, %v4056
      %v4164 = vadd.f32 %v3400, %v4059
      %v4165 = vadd.f32 %v3401, %v4061
      %v4166 = vadd.f32 %v3402, %v4064
      %v4167 = vadd.f32 %v3403, %v4066
      %v4168 = vadd.f32 %v3404, %v4069
      %v4169 = vadd.f32 %v3405, %v4071
      %v4170 = vadd.f32 %v3406, %v4074
      %v4171 = vadd.f32 %v3407, %v4076
      %v4172 = vadd.f32 %v3408, %v4079
      %v4173 = vadd.f32 %v3409, %v4081
      %v4174 = vadd.f32 %v3410, %v4084
      %v4175 = vadd.f32 %v3411, %v4086
      %v4176 = vadd.f32 %v3412, %v4089
      %v4177 = vadd.f32 %v3413, %v4091
      %v4178 = vadd.f32 %v3414, %v4094
      %v4179 = vadd.f32 %v3415, %v4096
      %v4180 = vadd.f32 %v3416, %v4099
      %v4181 = vadd.f32 %v3417, %v4101
      %v4182 = vadd.f32 %v3418, %v4104
      %v4183 = vadd.f32 %v3419, %v4106
      %v4184 = vadd.f32 %v3420, %v4109
      %v4185 = vadd.f32 %v3421, %v4111
      %v4186 = vadd.f32 %v3422, %v4114
      %v4187 = vadd.f32 %v3423, %v4116
      %v4188 = vadd.f32 %v3424, %v4119
      %v4189 = vadd.f32 %v3425, %v4121
      %v4190 = vadd.f32 %v3426, %v4124
      %v4191 = vadd.f32 %v3427, %v4126
      %4192 = vst [vmem:[#allocation2] sm:$0xff] %v4128
      %4193 = vst [vmem:[#allocation2 + $0x8] sm:$0xff] %v4129
      %4194 = vst [vmem:[#allocation2 + $0x10] sm:$0xff] %v4130
      %4195 = vst [vmem:[#allocation2 + $0x18] sm:$0xff] %v4131
      %4196 = vst [vmem:[#allocation2 + $0x20] sm:$0xff] %v4132
      %4197 = vst [vmem:[#allocation2 + $0x28] sm:$0xff] %v4133
      %4198 = vst [vmem:[#allocation2 + $0x30] sm:$0xff] %v4134
      %4199 = vst [vmem:[#allocation2 + $0x38] sm:$0xff] %v4135
      %4200 = vst [vmem:[#allocation2 + $0x40] sm:$0xff] %v4136
      %4201 = vst [vmem:[#allocation2 + $0x48] sm:$0xff] %v4137
      %4202 = vst [vmem:[#allocation2 + $0x50] sm:$0xff] %v4138
      %4203 = vst [vmem:[#allocation2 + $0x58] sm:$0xff] %v4139
      %4204 = vst [vmem:[#allocation2 + $0x60] sm:$0xff] %v4140
      %4205 = vst [vmem:[#allocation2 + $0x68] sm:$0xff] %v4141
      %4206 = vst [vmem:[#allocation2 + $0x70] sm:$0xff] %v4142
      %4207 = vst [vmem:[#allocation2 + $0x78] sm:$0xff] %v4143
      %4208 = vst [vmem:[#allocation2 + $0x80] sm:$0xff] %v4144
      %4209 = vst [vmem:[#allocation2 + $0x88] sm:$0xff] %v4145
      %4210 = vst [vmem:[#allocation2 + $0x90] sm:$0xff] %v4146
      %4211 = vst [vmem:[#allocation2 + $0x98] sm:$0xff] %v4147
      %4212 = vst [vmem:[#allocation2 + $0xa0] sm:$0xff] %v4148
      %4213 = vst [vmem:[#allocation2 + $0xa8] sm:$0xff] %v4149
      %4214 = vst [vmem:[#allocation2 + $0xb0] sm:$0xff] %v4150
      %4215 = vst [vmem:[#allocation2 + $0xb8] sm:$0xff] %v4151
      %4216 = vst [vmem:[#allocation2 + $0xc0] sm:$0xff] %v4152
      %4217 = vst [vmem:[#allocation2 + $0xc8] sm:$0xff] %v4153
      %4218 = vst [vmem:[#allocation2 + $0xd0] sm:$0xff] %v4154
      %4219 = vst [vmem:[#allocation2 + $0xd8] sm:$0xff] %v4155
      %4220 = vst [vmem:[#allocation2 + $0xe0] sm:$0xff] %v4156
      %4221 = vst [vmem:[#allocation2 + $0xe8] sm:$0xff] %v4157
      %4222 = vst [vmem:[#allocation2 + $0xf0] sm:$0xff] %v4158
      %4223 = vst [vmem:[#allocation2 + $0xf8] sm:$0xff] %v4159
      %4224 = vst [vmem:[#allocation2 + $0x100] sm:$0xff] %v4160
      %4225 = vst [vmem:[#allocation2 + $0x108] sm:$0xff] %v4161
      %4226 = vst [vmem:[#allocation2 + $0x110] sm:$0xff] %v4162
      %4227 = vst [vmem:[#allocation2 + $0x118] sm:$0xff] %v4163
      %4228 = vst [vmem:[#allocation2 + $0x120] sm:$0xff] %v4164
      %4229 = vst [vmem:[#allocation2 + $0x128] sm:$0xff] %v4165
      %4230 = vst [vmem:[#allocation2 + $0x130] sm:$0xff] %v4166
      %4231 = vst [vmem:[#allocation2 + $0x138] sm:$0xff] %v4167
      %4232 = vst [vmem:[#allocation2 + $0x140] sm:$0xff] %v4168
      %4233 = vst [vmem:[#allocation2 + $0x148] sm:$0xff] %v4169
      %4234 = vst [vmem:[#allocation2 + $0x150] sm:$0xff] %v4170
      %4235 = vst [vmem:[#allocation2 + $0x158] sm:$0xff] %v4171
      %4236 = vst [vmem:[#allocation2 + $0x160] sm:$0xff] %v4172
      %4237 = vst [vmem:[#allocation2 + $0x168] sm:$0xff] %v4173
      %4238 = vst [vmem:[#allocation2 + $0x170] sm:$0xff] %v4174
      %4239 = vst [vmem:[#allocation2 + $0x178] sm:$0xff] %v4175
      %4240 = vst [vmem:[#allocation2 + $0x180] sm:$0xff] %v4176
      %4241 = vst [vmem:[#allocation2 + $0x188] sm:$0xff] %v4177
      %4242 = vst [vmem:[#allocation2 + $0x190] sm:$0xff] %v4178
      %4243 = vst [vmem:[#allocation2 + $0x198] sm:$0xff] %v4179
      %4244 = vst [vmem:[#allocation2 + $0x1a0] sm:$0xff] %v4180
      %4245 = vst [vmem:[#allocation2 + $0x1a8] sm:$0xff] %v4181
      %4246 = vst [vmem:[#allocation2 + $0x1b0] sm:$0xff] %v4182
      %4247 = vst [vmem:[#allocation2 + $0x1b8] sm:$0xff] %v4183
      %4248 = vst [vmem:[#allocation2 + $0x1c0] sm:$0xff] %v4184
      %4249 = vst [vmem:[#allocation2 + $0x1c8] sm:$0xff] %v4185
      %4250 = vst [vmem:[#allocation2 + $0x1d0] sm:$0xff] %v4186
      %4251 = vst [vmem:[#allocation2 + $0x1d8] sm:$0xff] %v4187
      %4252 = vst [vmem:[#allocation2 + $0x1e0] sm:$0xff] %v4188
      %4253 = vst [vmem:[#allocation2 + $0x1e8] sm:$0xff] %v4189
      %4254 = vst [vmem:[#allocation2 + $0x1f0] sm:$0xff] %v4190
      %4255 = vst [vmem:[#allocation2 + $0x1f8] sm:$0xff] %v4191
      %v4256 = vld [vmem:[#allocation2] sm:$0xff]
      %v4257 = vld [vmem:[#allocation2 + $0x8] sm:$0xff]
      %v4258 = vld [vmem:[#allocation2 + $0x10] sm:$0xff]
      %v4259 = vld [vmem:[#allocation2 + $0x18] sm:$0xff]
      %v4260 = vld [vmem:[#allocation2 + $0x20] sm:$0xff]
      %v4261 = vld [vmem:[#allocation2 + $0x28] sm:$0xff]
      %v4262 = vld [vmem:[#allocation2 + $0x30] sm:$0xff]
      %v4263 = vld [vmem:[#allocation2 + $0x38] sm:$0xff]
      %v4264 = vld [vmem:[#allocation2 + $0x40] sm:$0xff]
      %v4265 = vld [vmem:[#allocation2 + $0x48] sm:$0xff]
      %v4266 = vld [vmem:[#allocation2 + $0x50] sm:$0xff]
      %v4267 = vld [vmem:[#allocation2 + $0x58] sm:$0xff]
      %v4268 = vld [vmem:[#allocation2 + $0x60] sm:$0xff]
      %v4269 = vld [vmem:[#allocation2 + $0x68] sm:$0xff]
      %v4270 = vld [vmem:[#allocation2 + $0x70] sm:$0xff]
      %v4271 = vld [vmem:[#allocation2 + $0x78] sm:$0xff]
      %v4272 = vld [vmem:[#allocation2 + $0x80] sm:$0xff]
      %v4273 = vld [vmem:[#allocation2 + $0x88] sm:$0xff]
      %v4274 = vld [vmem:[#allocation2 + $0x90] sm:$0xff]
      %v4275 = vld [vmem:[#allocation2 + $0x98] sm:$0xff]
      %v4276 = vld [vmem:[#allocation2 + $0xa0] sm:$0xff]
      %v4277 = vld [vmem:[#allocation2 + $0xa8] sm:$0xff]
      %v4278 = vld [vmem:[#allocation2 + $0xb0] sm:$0xff]
      %v4279 = vld [vmem:[#allocation2 + $0xb8] sm:$0xff]
      %v4280 = vld [vmem:[#allocation2 + $0xc0] sm:$0xff]
      %v4281 = vld [vmem:[#allocation2 + $0xc8] sm:$0xff]
      %v4282 = vld [vmem:[#allocation2 + $0xd0] sm:$0xff]
      %v4283 = vld [vmem:[#allocation2 + $0xd8] sm:$0xff]
      %v4284 = vld [vmem:[#allocation2 + $0xe0] sm:$0xff]
      %v4285 = vld [vmem:[#allocation2 + $0xe8] sm:$0xff]
      %v4286 = vld [vmem:[#allocation2 + $0xf0] sm:$0xff]
      %v4287 = vld [vmem:[#allocation2 + $0xf8] sm:$0xff]
      %v4288 = vld [vmem:[#allocation2 + $0x100] sm:$0xff]
      %v4289 = vld [vmem:[#allocation2 + $0x108] sm:$0xff]
      %v4290 = vld [vmem:[#allocation2 + $0x110] sm:$0xff]
      %v4291 = vld [vmem:[#allocation2 + $0x118] sm:$0xff]
      %v4292 = vld [vmem:[#allocation2 + $0x120] sm:$0xff]
      %v4293 = vld [vmem:[#allocation2 + $0x128] sm:$0xff]
      %v4294 = vld [vmem:[#allocation2 + $0x130] sm:$0xff]
      %v4295 = vld [vmem:[#allocation2 + $0x138] sm:$0xff]
      %v4296 = vld [vmem:[#allocation2 + $0x140] sm:$0xff]
      %v4297 = vld [vmem:[#allocation2 + $0x148] sm:$0xff]
      %v4298 = vld [vmem:[#allocation2 + $0x150] sm:$0xff]
      %v4299 = vld [vmem:[#allocation2 + $0x158] sm:$0xff]
      %v4300 = vld [vmem:[#allocation2 + $0x160] sm:$0xff]
      %v4301 = vld [vmem:[#allocation2 + $0x168] sm:$0xff]
      %v4302 = vld [vmem:[#allocation2 + $0x170] sm:$0xff]
      %v4303 = vld [vmem:[#allocation2 + $0x178] sm:$0xff]
      %v4304 = vld [vmem:[#allocation2 + $0x180] sm:$0xff]
      %v4305 = vld [vmem:[#allocation2 + $0x188] sm:$0xff]
      %v4306 = vld [vmem:[#allocation2 + $0x190] sm:$0xff]
      %v4307 = vld [vmem:[#allocation2 + $0x198] sm:$0xff]
      %v4308 = vld [vmem:[#allocation2 + $0x1a0] sm:$0xff]
      %v4309 = vld [vmem:[#allocation2 + $0x1a8] sm:$0xff]
      %v4310 = vld [vmem:[#allocation2 + $0x1b0] sm:$0xff]
      %v4311 = vld [vmem:[#allocation2 + $0x1b8] sm:$0xff]
      %v4312 = vld [vmem:[#allocation2 + $0x1c0] sm:$0xff]
      %v4313 = vld [vmem:[#allocation2 + $0x1c8] sm:$0xff]
      %v4314 = vld [vmem:[#allocation2 + $0x1d0] sm:$0xff]
      %v4315 = vld [vmem:[#allocation2 + $0x1d8] sm:$0xff]
      %v4316 = vld [vmem:[#allocation2 + $0x1e0] sm:$0xff]
      %v4317 = vld [vmem:[#allocation2 + $0x1e8] sm:$0xff]
      %v4318 = vld [vmem:[#allocation2 + $0x1f0] sm:$0xff]
      %v4319 = vld [vmem:[#allocation2 + $0x1f8] sm:$0xff]
      %vm4320 = vcmp.ge.f32.partialorder %v4256, 0.0
      %vm4321 = vcmp.ge.f32.partialorder %v4257, 0.0
      %vm4322 = vcmp.ge.f32.partialorder %v4258, 0.0
      %vm4323 = vcmp.ge.f32.partialorder %v4259, 0.0
      %vm4324 = vcmp.ge.f32.partialorder %v4260, 0.0
      %vm4325 = vcmp.ge.f32.partialorder %v4261, 0.0
      %vm4326 = vcmp.ge.f32.partialorder %v4262, 0.0
      %vm4327 = vcmp.ge.f32.partialorder %v4263, 0.0
      %vm4328 = vcmp.ge.f32.partialorder %v4264, 0.0
      %vm4329 = vcmp.ge.f32.partialorder %v4265, 0.0
      %vm4330 = vcmp.ge.f32.partialorder %v4266, 0.0
      %vm4331 = vcmp.ge.f32.partialorder %v4267, 0.0
      %vm4332 = vcmp.ge.f32.partialorder %v4268, 0.0
      %vm4333 = vcmp.ge.f32.partialorder %v4269, 0.0
      %vm4334 = vcmp.ge.f32.partialorder %v4270, 0.0
      %vm4335 = vcmp.ge.f32.partialorder %v4271, 0.0
      %vm4336 = vcmp.ge.f32.partialorder %v4272, 0.0
      %vm4337 = vcmp.ge.f32.partialorder %v4273, 0.0
      %vm4338 = vcmp.ge.f32.partialorder %v4274, 0.0
      %vm4339 = vcmp.ge.f32.partialorder %v4275, 0.0
      %vm4340 = vcmp.ge.f32.partialorder %v4276, 0.0
      %vm4341 = vcmp.ge.f32.partialorder %v4277, 0.0
      %vm4342 = vcmp.ge.f32.partialorder %v4278, 0.0
      %vm4343 = vcmp.ge.f32.partialorder %v4279, 0.0
      %vm4344 = vcmp.ge.f32.partialorder %v4280, 0.0
      %vm4345 = vcmp.ge.f32.partialorder %v4281, 0.0
      %vm4346 = vcmp.ge.f32.partialorder %v4282, 0.0
      %vm4347 = vcmp.ge.f32.partialorder %v4283, 0.0
      %vm4348 = vcmp.ge.f32.partialorder %v4284, 0.0
      %vm4349 = vcmp.ge.f32.partialorder %v4285, 0.0
      %vm4350 = vcmp.ge.f32.partialorder %v4286, 0.0
      %vm4351 = vcmp.ge.f32.partialorder %v4287, 0.0
      %vm4352 = vcmp.ge.f32.partialorder %v4288, 0.0
      %vm4353 = vcmp.ge.f32.partialorder %v4289, 0.0
      %vm4354 = vcmp.ge.f32.partialorder %v4290, 0.0
      %vm4355 = vcmp.ge.f32.partialorder %v4291, 0.0
      %vm4356 = vcmp.ge.f32.partialorder %v4292, 0.0
      %vm4357 = vcmp.ge.f32.partialorder %v4293, 0.0
      %vm4358 = vcmp.ge.f32.partialorder %v4294, 0.0
      %vm4359 = vcmp.ge.f32.partialorder %v4295, 0.0
      %vm4360 = vcmp.ge.f32.partialorder %v4296, 0.0
      %vm4361 = vcmp.ge.f32.partialorder %v4297, 0.0
      %vm4362 = vcmp.ge.f32.partialorder %v4298, 0.0
      %vm4363 = vcmp.ge.f32.partialorder %v4299, 0.0
      %vm4364 = vcmp.ge.f32.partialorder %v4300, 0.0
      %vm4365 = vcmp.ge.f32.partialorder %v4301, 0.0
      %vm4366 = vcmp.ge.f32.partialorder %v4302, 0.0
      %vm4367 = vcmp.ge.f32.partialorder %v4303, 0.0
      %vm4368 = vcmp.ge.f32.partialorder %v4304, 0.0
      %vm4369 = vcmp.ge.f32.partialorder %v4305, 0.0
      %vm4370 = vcmp.ge.f32.partialorder %v4306, 0.0
      %vm4371 = vcmp.ge.f32.partialorder %v4307, 0.0
      %vm4372 = vcmp.ge.f32.partialorder %v4308, 0.0
      %vm4373 = vcmp.ge.f32.partialorder %v4309, 0.0
      %vm4374 = vcmp.ge.f32.partialorder %v4310, 0.0
      %vm4375 = vcmp.ge.f32.partialorder %v4311, 0.0
      %vm4376 = vcmp.ge.f32.partialorder %v4312, 0.0
      %vm4377 = vcmp.ge.f32.partialorder %v4313, 0.0
      %vm4378 = vcmp.ge.f32.partialorder %v4314, 0.0
      %vm4379 = vcmp.ge.f32.partialorder %v4315, 0.0
      %vm4380 = vcmp.ge.f32.partialorder %v4316, 0.0
      %vm4381 = vcmp.ge.f32.partialorder %v4317, 0.0
      %vm4382 = vcmp.ge.f32.partialorder %v4318, 0.0
      %vm4383 = vcmp.ge.f32.partialorder %v4319, 0.0
      %v4384 = vmul.f32 %v4256, 0.01
      %v4385 = vmul.f32 %v4257, 0.01
      %v4386 = vmul.f32 %v4258, 0.01
      %v4387 = vmul.f32 %v4259, 0.01
      %v4388 = vmul.f32 %v4260, 0.01
      %v4389 = vmul.f32 %v4261, 0.01
      %v4390 = vmul.f32 %v4262, 0.01
      %v4391 = vmul.f32 %v4263, 0.01
      %v4392 = vmul.f32 %v4264, 0.01
      %v4393 = vmul.f32 %v4265, 0.01
      %v4394 = vmul.f32 %v4266, 0.01
      %v4395 = vmul.f32 %v4267, 0.01
      %v4396 = vmul.f32 %v4268, 0.01
      %v4397 = vmul.f32 %v4269, 0.01
      %v4398 = vmul.f32 %v4270, 0.01
      %v4399 = vmul.f32 %v4271, 0.01
      %v4400 = vmul.f32 %v4272, 0.01
      %v4401 = vmul.f32 %v4273, 0.01
      %v4402 = vmul.f32 %v4274, 0.01
      %v4403 = vmul.f32 %v4275, 0.01
      %v4404 = vmul.f32 %v4276, 0.01
      %v4405 = vmul.f32 %v4277, 0.01
      %v4406 = vmul.f32 %v4278, 0.01
      %v4407 = vmul.f32 %v4279, 0.01
      %v4408 = vmul.f32 %v4280, 0.01
      %v4409 = vmul.f32 %v4281, 0.01
      %v4410 = vmul.f32 %v4282, 0.01
      %v4411 = vmul.f32 %v4283, 0.01
      %v4412 = vmul.f32 %v4284, 0.01
      %v4413 = vmul.f32 %v4285, 0.01
      %v4414 = vmul.f32 %v4286, 0.01
      %v4415 = vmul.f32 %v4287, 0.01
      %v4416 = vmul.f32 %v4288, 0.01
      %v4417 = vmul.f32 %v4289, 0.01
      %v4418 = vmul.f32 %v4290, 0.01
      %v4419 = vmul.f32 %v4291, 0.01
      %v4420 = vmul.f32 %v4292, 0.01
      %v4421 = vmul.f32 %v4293, 0.01
      %v4422 = vmul.f32 %v4294, 0.01
      %v4423 = vmul.f32 %v4295, 0.01
      %v4424 = vmul.f32 %v4296, 0.01
      %v4425 = vmul.f32 %v4297, 0.01
      %v4426 = vmul.f32 %v4298, 0.01
      %v4427 = vmul.f32 %v4299, 0.01
      %v4428 = vmul.f32 %v4300, 0.01
      %v4429 = vmul.f32 %v4301, 0.01
      %v4430 = vmul.f32 %v4302, 0.01
      %v4431 = vmul.f32 %v4303, 0.01
      %v4432 = vmul.f32 %v4304, 0.01
      %v4433 = vmul.f32 %v4305, 0.01
      %v4434 = vmul.f32 %v4306, 0.01
      %v4435 = vmul.f32 %v4307, 0.01
      %v4436 = vmul.f32 %v4308, 0.01
      %v4437 = vmul.f32 %v4309, 0.01
      %v4438 = vmul.f32 %v4310, 0.01
      %v4439 = vmul.f32 %v4311, 0.01
      %v4440 = vmul.f32 %v4312, 0.01
      %v4441 = vmul.f32 %v4313, 0.01
      %v4442 = vmul.f32 %v4314, 0.01
      %v4443 = vmul.f32 %v4315, 0.01
      %v4444 = vmul.f32 %v4316, 0.01
      %v4445 = vmul.f32 %v4317, 0.01
      %v4446 = vmul.f32 %v4318, 0.01
      %v4447 = vmul.f32 %v4319, 0.01
      %v4448 = vsel %vm4320, %v4256, %v4384
      %v4449 = vsel %vm4321, %v4257, %v4385
      %v4450 = vsel %vm4322, %v4258, %v4386
      %v4451 = vsel %vm4323, %v4259, %v4387
      %v4452 = vsel %vm4324, %v4260, %v4388
      %v4453 = vsel %vm4325, %v4261, %v4389
      %v4454 = vsel %vm4326, %v4262, %v4390
      %v4455 = vsel %vm4327, %v4263, %v4391
      %v4456 = vsel %vm4328, %v4264, %v4392
      %v4457 = vsel %vm4329, %v4265, %v4393
      %v4458 = vsel %vm4330, %v4266, %v4394
      %v4459 = vsel %vm4331, %v4267, %v4395
      %v4460 = vsel %vm4332, %v4268, %v4396
      %v4461 = vsel %vm4333, %v4269, %v4397
      %v4462 = vsel %vm4334, %v4270, %v4398
      %v4463 = vsel %vm4335, %v4271, %v4399
      %v4464 = vsel %vm4336, %v4272, %v4400
      %v4465 = vsel %vm4337, %v4273, %v4401
      %v4466 = vsel %vm4338, %v4274, %v4402
      %v4467 = vsel %vm4339, %v4275, %v4403
      %v4468 = vsel %vm4340, %v4276, %v4404
      %v4469 = vsel %vm4341, %v4277, %v4405
      %v4470 = vsel %vm4342, %v4278, %v4406
      %v4471 = vsel %vm4343, %v4279, %v4407
      %v4472 = vsel %vm4344, %v4280, %v4408
      %v4473 = vsel %vm4345, %v4281, %v4409
      %v4474 = vsel %vm4346, %v4282, %v4410
      %v4475 = vsel %vm4347, %v4283, %v4411
      %v4476 = vsel %vm4348, %v4284, %v4412
      %v4477 = vsel %vm4349, %v4285, %v4413
      %v4478 = vsel %vm4350, %v4286, %v4414
      %v4479 = vsel %vm4351, %v4287, %v4415
      %v4480 = vsel %vm4352, %v4288, %v4416
      %v4481 = vsel %vm4353, %v4289, %v4417
      %v4482 = vsel %vm4354, %v4290, %v4418
      %v4483 = vsel %vm4355, %v4291, %v4419
      %v4484 = vsel %vm4356, %v4292, %v4420
      %v4485 = vsel %vm4357, %v4293, %v4421
      %v4486 = vsel %vm4358, %v4294, %v4422
      %v4487 = vsel %vm4359, %v4295, %v4423
      %v4488 = vsel %vm4360, %v4296, %v4424
      %v4489 = vsel %vm4361, %v4297, %v4425
      %v4490 = vsel %vm4362, %v4298, %v4426
      %v4491 = vsel %vm4363, %v4299, %v4427
      %v4492 = vsel %vm4364, %v4300, %v4428
      %v4493 = vsel %vm4365, %v4301, %v4429
      %v4494 = vsel %vm4366, %v4302, %v4430
      %v4495 = vsel %vm4367, %v4303, %v4431
      %v4496 = vsel %vm4368, %v4304, %v4432
      %v4497 = vsel %vm4369, %v4305, %v4433
      %v4498 = vsel %vm4370, %v4306, %v4434
      %v4499 = vsel %vm4371, %v4307, %v4435
      %v4500 = vsel %vm4372, %v4308, %v4436
      %v4501 = vsel %vm4373, %v4309, %v4437
      %v4502 = vsel %vm4374, %v4310, %v4438
      %v4503 = vsel %vm4375, %v4311, %v4439
      %v4504 = vsel %vm4376, %v4312, %v4440
      %v4505 = vsel %vm4377, %v4313, %v4441
      %v4506 = vsel %vm4378, %v4314, %v4442
      %v4507 = vsel %vm4379, %v4315, %v4443
      %v4508 = vsel %vm4380, %v4316, %v4444
      %v4509 = vsel %vm4381, %v4317, %v4445
      %v4510 = vsel %vm4382, %v4318, %v4446
      %v4511 = vsel %vm4383, %v4319, %v4447
      %4512 = vst [vmem:[%s335] sm:$0xff] %v4448
      %4513 = vst [vmem:[%s335 + $0x8] sm:$0xff] %v4449
      %4514 = vst [vmem:[%s335 + $0x10] sm:$0xff] %v4450
      %4515 = vst [vmem:[%s335 + $0x18] sm:$0xff] %v4451
      %4516 = vst [vmem:[%s335 + $0x20] sm:$0xff] %v4452
      %4517 = vst [vmem:[%s335 + $0x28] sm:$0xff] %v4453
      %4518 = vst [vmem:[%s335 + $0x30] sm:$0xff] %v4454
      %4519 = vst [vmem:[%s335 + $0x38] sm:$0xff] %v4455
      %4520 = vst [vmem:[%s335 + $0x40] sm:$0xff] %v4456
      %4521 = vst [vmem:[%s335 + $0x48] sm:$0xff] %v4457
      %4522 = vst [vmem:[%s335 + $0x50] sm:$0xff] %v4458
      %4523 = vst [vmem:[%s335 + $0x58] sm:$0xff] %v4459
      %4524 = vst [vmem:[%s335 + $0x60] sm:$0xff] %v4460
      %4525 = vst [vmem:[%s335 + $0x68] sm:$0xff] %v4461
      %4526 = vst [vmem:[%s335 + $0x70] sm:$0xff] %v4462
      %4527 = vst [vmem:[%s335 + $0x78] sm:$0xff] %v4463
      %4528 = vst [vmem:[%s335 + $0x80] sm:$0xff] %v4464
      %4529 = vst [vmem:[%s335 + $0x88] sm:$0xff] %v4465
      %4530 = vst [vmem:[%s335 + $0x90] sm:$0xff] %v4466
      %4531 = vst [vmem:[%s335 + $0x98] sm:$0xff] %v4467
      %4532 = vst [vmem:[%s335 + $0xa0] sm:$0xff] %v4468
      %4533 = vst [vmem:[%s335 + $0xa8] sm:$0xff] %v4469
      %4534 = vst [vmem:[%s335 + $0xb0] sm:$0xff] %v4470
      %4535 = vst [vmem:[%s335 + $0xb8] sm:$0xff] %v4471
      %4536 = vst [vmem:[%s335 + $0xc0] sm:$0xff] %v4472
      %4537 = vst [vmem:[%s335 + $0xc8] sm:$0xff] %v4473
      %4538 = vst [vmem:[%s335 + $0xd0] sm:$0xff] %v4474
      %4539 = vst [vmem:[%s335 + $0xd8] sm:$0xff] %v4475
      %4540 = vst [vmem:[%s335 + $0xe0] sm:$0xff] %v4476
      %4541 = vst [vmem:[%s335 + $0xe8] sm:$0xff] %v4477
      %4542 = vst [vmem:[%s335 + $0xf0] sm:$0xff] %v4478
      %4543 = vst [vmem:[%s335 + $0xf8] sm:$0xff] %v4479
      %4544 = vst [vmem:[%s335 + $0x100] sm:$0xff] %v4480
      %4545 = vst [vmem:[%s335 + $0x108] sm:$0xff] %v4481
      %4546 = vst [vmem:[%s335 + $0x110] sm:$0xff] %v4482
      %4547 = vst [vmem:[%s335 + $0x118] sm:$0xff] %v4483
      %4548 = vst [vmem:[%s335 + $0x120] sm:$0xff] %v4484
      %4549 = vst [vmem:[%s335 + $0x128] sm:$0xff] %v4485
      %4550 = vst [vmem:[%s335 + $0x130] sm:$0xff] %v4486
      %4551 = vst [vmem:[%s335 + $0x138] sm:$0xff] %v4487
      %4552 = vst [vmem:[%s335 + $0x140] sm:$0xff] %v4488
      %4553 = vst [vmem:[%s335 + $0x148] sm:$0xff] %v4489
      %4554 = vst [vmem:[%s335 + $0x150] sm:$0xff] %v4490
      %4555 = vst [vmem:[%s335 + $0x158] sm:$0xff] %v4491
      %4556 = vst [vmem:[%s335 + $0x160] sm:$0xff] %v4492
      %4557 = vst [vmem:[%s335 + $0x168] sm:$0xff] %v4493
      %4558 = vst [vmem:[%s335 + $0x170] sm:$0xff] %v4494
      %4559 = vst [vmem:[%s335 + $0x178] sm:$0xff] %v4495
      %4560 = vst [vmem:[%s335 + $0x180] sm:$0xff] %v4496
      %4561 = vst [vmem:[%s335 + $0x188] sm:$0xff] %v4497
      %4562 = vst [vmem:[%s335 + $0x190] sm:$0xff] %v4498
      %4563 = vst [vmem:[%s335 + $0x198] sm:$0xff] %v4499
      %4564 = vst [vmem:[%s335 + $0x1a0] sm:$0xff] %v4500
      %4565 = vst [vmem:[%s335 + $0x1a8] sm:$0xff] %v4501
      %4566 = vst [vmem:[%s335 + $0x1b0] sm:$0xff] %v4502
      %4567 = vst [vmem:[%s335 + $0x1b8] sm:$0xff] %v4503
      %4568 = vst [vmem:[%s335 + $0x1c0] sm:$0xff] %v4504
      %4569 = vst [vmem:[%s335 + $0x1c8] sm:$0xff] %v4505
      %4570 = vst [vmem:[%s335 + $0x1d0] sm:$0xff] %v4506
      %4571 = vst [vmem:[%s335 + $0x1d8] sm:$0xff] %v4507
      %4572 = vst [vmem:[%s335 + $0x1e0] sm:$0xff] %v4508
      %4573 = vst [vmem:[%s335 + $0x1e8] sm:$0xff] %v4509
      %4574 = vst [vmem:[%s335 + $0x1f0] sm:$0xff] %v4510
      %4575 = vst [vmem:[%s335 + $0x1f8] sm:$0xff] %v4511
      %s4576 = smul.u32 16, %s21
      %p4577 = scmp.lt.s32.totalorder %s20, 1
      %s4578 = scalar_select %p4577, %s20, 1
      %p4579 = scmp.lt.s32.totalorder %s4576, 31
      %s4580 = scalar_select %p4579, %s4576, 31
      %s4581 = smul.addr %s4580, 4
      %s4582 = smul.addr %s4578, 128
      %s4583 = sadd.s32 %s4581, %s4582
      %s4584 = smul.addr %s4583, 8
      %s4585 = scalar_lea.vmem %s5, %s4584
      // Predicated region
      $region41: #{unet_up_forward.3} parent=39 // pred_check
        %p4586 = pneg %p174
      $region42: #{unet_up_forward.3} parent=39 // pred_check_branch
        %4588 = sbr.rel (%p4586) target = $region44
      $region43: #{unet_up_forward.3} parent=39 // pred_region
        %s4589 = smul.u32 16, %s21
      $region44: #{unet_up_forward.3} parent=39 // pred_fallthru
        _
    $region40: #{unet_up_forward.3} parent=5 // pred_fallthru
      _
    %p4590 = scmp.le.s32.totalorder 2, %s11
    // Predicated region
    $region45: #{unet_up_forward.3} parent=5 // pred_check
      %p4591 = pneg %p4590
    $region46: #{unet_up_forward.3} parent=5 // pred_check_branch
      %4593 = sbr.rel (%p4591) target = $region48
    $region47: #{unet_up_forward.3} parent=5 // pred_region
      %s4594 = ssub.s32 %s11, 2
      // Predicated region
      $region49: #{unet_up_forward.3} parent=47 // pred_check
        %p4595 = pneg %p180
      $region50: #{unet_up_forward.3} parent=47 // pred_check_branch
        %4597 = sbr.rel (%p4595) target = $region52
      $region51: #{unet_up_forward.3} parent=47 // pred_region
        %s4598 = smul.u32 16, %s23
        %p4599 = scmp.lt.s32.totalorder %s22, 1
        %s4600 = scalar_select %p4599, %s22, 1
        %p4601 = scmp.lt.s32.totalorder %s4598, 31
        %s4602 = scalar_select %p4601, %s4598, 31
        %s4603 = smul.addr %s4602, 4
        %s4604 = smul.addr %s4600, 128
        %s4605 = sadd.s32 %s4603, %s4604
        %s4606 = smul.addr %s4605, 8
        %s4607 = scalar_lea.vmem %s5, %s4606
      $region52: #{unet_up_forward.3} parent=47 // pred_fallthru
        _
    $region48: #{unet_up_forward.3} parent=5 // pred_fallthru
      _
  $region6: #{unet_up_forward.3} parent=0 // loop_footer
    %s15 = sadd.s32 1, %s11
  $region7: #{unet_up_forward.3} parent=0 // loop_footer_branch
    %10 = sbr.rel target = $region3
  $region8: #{unet_up_forward.3} parent=0 // loop_exit
    _

</llo_original>
